<compile_context>
chip_gen: v7x
topology: tpu7x:2x2x1
jax: 0.10.0
libtpu: 0.0.40
codegen_flags: <defaults>
</compile_context>

<pallas_src>
import jax
import jax.numpy as jnp
from jax import lax
from jax.experimental import pallas as pl
from jax.experimental.pallas import tpu as pltpu


# ------------------------------ fused kernel ------------------------------- #

def _fused_lightnn_kernel(
    x_ref,     # [Bt*34, 128] bf16 : padded images stacked on the sublane axis
    w1_ref,    # [3, 128, 512] bf16 : conv1 per-dy banded weights
    b1_ref,    # [1, 512]      f32  : conv1 bias tiled over w
    s1_ref,    # [Bt*18+8, Bt*34-3] bf16 : pool1 row compaction + pad-row insert
    w2_ref,    # [3, 496, 256] bf16 : conv2 per-dy banded weights
    b2_ref,    # [1, 256]      f32  : conv2 bias tiled over w
    s2_ref,    # [Bt*8, Bt*18-1] bf16 : pool2 row compaction (h-major output)
    wfc1_ref,  # [240, 2048]   bf16 : fc1 (lane-compaction + flatten perm folded)
    bfc1_ref,  # [1, 256]      f32
    wfc2_ref,  # [256, 128]    bf16 : fc2, columns zero-padded 10 -> 128
    bfc2_ref,  # [1, 128]      f32
    out_ref,   # [Bt, 128]     f32
):
    f32, bf16 = jnp.float32, jnp.bfloat16
    bt = out_ref.shape[0]
    m1 = x_ref.shape[0] - 2       # conv1 output rows (32 data + 2 junk per image)
    r2 = bt * 18                  # conv2 output rows (16 data + 2 junk per image)

    # ---- conv1 (3->16, 3x3, pad=1): 3 banded matmuls, contiguous acc chain -- #
    acc1 = jnp.dot(x_ref[0:m1, :], w1_ref[0], preferred_element_type=f32)
    acc1 = acc1 + jnp.dot(x_ref[1:1 + m1, :], w1_ref[1], preferred_element_type=f32)
    acc1 = acc1 + jnp.dot(x_ref[2:2 + m1, :], w1_ref[2], preferred_element_type=f32)
    y1 = jnp.maximum(acc1 + b1_ref[...], 0.0)                        # [m1, 512]

    # ---- maxpool1: row-pair max (shifted slice) + row-compaction matmul ----- #
    m1r = jnp.maximum(y1[:-1, :], y1[1:, :]).astype(bf16)            # [m1-1, 512]
    rows1 = jnp.dot(s1_ref[...], m1r, preferred_element_type=f32)    # [Bt*18+8, 512]
    #      lane-pair max; compaction to 16 groups is folded into w2.
    m1l = jnp.maximum(rows1[:, :-16], rows1[:, 16:]).astype(bf16)    # [Bt*18+8, 496]

    # ---- conv2 (16->16, 3x3, pad=1): 3 banded matmuls ----------------------- #
    acc2 = jnp.dot(m1l[0:r2, :], w2_ref[0], preferred_element_type=f32)
    acc2 = acc2 + jnp.dot(m1l[1:1 + r2, :], w2_ref[1], preferred_element_type=f32)
    acc2 = acc2 + jnp.dot(m1l[2:2 + r2, :], w2_ref[2], preferred_element_type=f32)
    y2 = jnp.maximum(acc2 + b2_ref[...], 0.0)                        # [r2, 256]

    # ---- maxpool2 ----------------------------------------------------------- #
    m2r = jnp.maximum(y2[:-1, :], y2[1:, :]).astype(bf16)            # [r2-1, 256]
    rows2 = jnp.dot(s2_ref[...], m2r, preferred_element_type=f32)    # [Bt*8, 256]
    feat = jnp.maximum(rows2[:, :-16], rows2[:, 16:]).astype(bf16)   # [Bt*8, 240]

    # ---- classifier: fc1 (single M=Bt*8 matmul) -> ReLU -> Dropout -> fc2 --- #
    big = jnp.dot(feat, wfc1_ref[...], preferred_element_type=f32)   # [Bt*8, 2048]
    h1 = bfc1_ref[...]
    for hh in range(8):                                              # aligned slices
        h1 = h1 + big[hh * bt:(hh + 1) * bt, hh * 256:(hh + 1) * 256]
    h1 = jnp.maximum(h1, 0.0).astype(bf16)                           # [Bt, 256]
    # TODO(synk): Dropout(0.1) is identity in eval mode; train-mode masking not implemented.
    logits = jnp.dot(h1, wfc2_ref[...], preferred_element_type=f32) + bfc2_ref[...]
    out_ref[...] = logits


# --------------------------- one-time weight prep --------------------------- #

def prepare_params(params, block_batch=8):
    """Transform torch-layout params into kernel-ready banded/folded tensors."""
    f32, bf16 = jnp.float32, jnp.bfloat16
    bt = int(block_batch)
    assert bt >= 1

    dx = jnp.arange(3)

    # conv1: per-dy banded weights.  Row = 3*p + ci (p = padded column, 0..33,
    # zero-padded to 128 rows); col = 16*w_out + co.
    taps1 = jnp.transpose(params["w_conv1"].astype(f32), (2, 3, 1, 0))   # [dy,dx,ci,co]
    p = jnp.arange(34)
    wo = jnp.arange(32)
    sel1 = (p[None, :, None] == wo[:, None, None] + dx[None, None, :]).astype(f32)
    band1 = jnp.einsum('wpd,ydio->ypiwo', sel1, taps1).reshape(3, 34 * 3, 32 * 16)
    w1 = jnp.zeros((3, 128, 512), f32).at[:, :102, :].set(band1).astype(bf16)

    # conv2: per-dy banded weights with the pool1 lane compaction folded in.
    # Row = 32*w_pool + ci (un-compacted even lane groups, 496 rows);
    # col = 16*w_out + co.
    taps2 = jnp.transpose(params["w_conv2"].astype(f32), (2, 3, 1, 0))   # [dy,dx,ci,co]
    wp = jnp.arange(16)
    wo2 = jnp.arange(16)
    sel2 = (wp[None, :, None] == wo2[:, None, None] + dx[None, None, :] - 1).astype(f32)
    band2 = jnp.einsum('awd,ydio->ywiao', sel2, taps2)                   # [3,wp,ci,wo,co]
    w2full = jnp.zeros((3, 16, 32, 16, 16), f32).at[:, :, :16, :, :].set(band2)
    w2 = w2full.reshape(3, 512, 256)[:, :496, :].astype(bf16)

    # pool row-compaction selectors (exact 0/1 matrices).
    b_idx = jnp.arange(bt)[:, None]
    hh16 = jnp.arange(16)[None, :]
    s1 = (jnp.zeros((bt * 18 + 8, bt * 34 - 3), f32)
          .at[(b_idx * 18 + 1 + hh16).reshape(-1),
              (b_idx * 34 + 2 * hh16).reshape(-1)].set(1.0)).astype(bf16)
    hh8 = jnp.arange(8)[None, :]
    s2 = (jnp.zeros((bt * 8, bt * 18 - 1), f32)
          .at[(hh8 * bt + b_idx).reshape(-1),
              (b_idx * 18 + 2 * hh8).reshape(-1)].set(1.0)).astype(bf16)

    # fc1: pool2 lane compaction + torch flatten order (c*64 + h*8 + w) folded
    # into a single [240, 8*256] weight whose column blocks are the 8 h-slices.
    wfc1 = params["w_fc1"].astype(f32).reshape(256, 16, 8, 8)            # [n, c, h, w]
    a = jnp.transpose(wfc1, (3, 1, 2, 0))                                # [w, c, h, n]
    afull = jnp.zeros((8, 32, 8, 256), f32).at[:, :16, :, :].set(a)
    wfc1k = afull.reshape(256, 8, 256)[:240].reshape(240, 8 * 256).astype(bf16)

    b1 = jnp.tile(params["b_conv1"].astype(f32), 32)[None, :]            # [1, 512]
    b2 = jnp.tile(params["b_conv2"].astype(f32), 16)[None, :]            # [1, 256]
    bfc1 = params["b_fc1"].astype(f32)[None, :]                          # [1, 256]
    nc = params["w_fc2"].shape[0]
    wfc2 = (jnp.zeros((256, 128), f32)
            .at[:, :nc].set(params["w_fc2"].astype(f32).T)).astype(bf16)
    bfc2 = jnp.zeros((1, 128), f32).at[0, :nc].set(params["b_fc2"].astype(f32))

    return {"w1": w1, "b1": b1, "s1": s1, "w2": w2, "b2": b2, "s2": s2,
            "wfc1": wfc1k, "bfc1": bfc1, "wfc2": wfc2, "bfc2": bfc2}


# --------------------------------- forward ---------------------------------- #

def light_nn_forward(prepped, x_nchw, num_classes=10):
    """Forward pass of LightNN.  x_nchw: [B, 3, 32, 32] (NCHW, like PyTorch)."""
    B = x_nchw.shape[0]
    assert x_nchw.shape[1:] == (3, 32, 32)
    bt = prepped["s2"].shape[0] // 8            # batch-block size baked into selectors
    bpad = ((B + bt - 1) // bt) * bt

    # Tiny XLA glue: NCHW -> lane-dense [rows = b*34 + padded_h, lanes = 3*p + ci],
    # zero-padded, cast to bf16 once (halves the per-step input DMA).
    x = jnp.transpose(x_nchw, (0, 2, 3, 1)).reshape(B, 32, 96)
    x = jnp.pad(x, ((0, bpad - B), (1, 1), (3, 29))).astype(jnp.bfloat16)
    x = x.reshape(bpad * 34, 128)

    def const_spec(arr):
        return pl.BlockSpec(arr.shape, lambda i, z=(0,) * arr.ndim: z)

    out = pl.pallas_call(
        _fused_lightnn_kernel,
        out_shape=jax.ShapeDtypeStruct((bpad, 128), jnp.float32),
        grid=(bpad // bt,),
        in_specs=[
            pl.BlockSpec((bt * 34, 128), lambda i: (i, 0)),
            const_spec(prepped["w1"]), const_spec(prepped["b1"]),
            const_spec(prepped["s1"]),
            const_spec(prepped["w2"]), const_spec(prepped["b2"]),
            const_spec(prepped["s2"]),
            const_spec(prepped["wfc1"]), const_spec(prepped["bfc1"]),
            const_spec(prepped["wfc2"]), const_spec(prepped["bfc2"]),
        ],
        out_specs=pl.BlockSpec((bt, 128), lambda i: (i, 0)),
        compiler_params=pltpu.CompilerParams(
            dimension_semantics=("parallel",),
            vmem_limit_bytes=32 * 1024 * 1024,
        ),
    )(x, prepped["w1"], prepped["b1"], prepped["s1"], prepped["w2"],
      prepped["b2"], prepped["s2"], prepped["wfc1"], prepped["bfc1"],
      prepped["wfc2"], prepped["bfc2"])
    return out[:B, :num_classes]


# ------------------------------ init & reference ---------------------------- #

def init_params(key, num_classes=10):
    """Parameters stored with PyTorch conventions (OIHW conv, [out,in] linear)."""
    ks = jax.random.split(key, 8)
    s = 0.05
    return {
        "w_conv1": s * jax.random.normal(ks[0], (16, 3, 3, 3), jnp.float32),
        "b_conv1": s * jax.random.normal(ks[1], (16,), jnp.float32),
        "w_conv2": s * jax.random.normal(ks[2], (16, 16, 3, 3), jnp.float32),
        "b_conv2": s * jax.random.normal(ks[3], (16,), jnp.float32),
        "w_fc1": s * jax.random.normal(ks[4], (256, 1024), jnp.float32),
        "b_fc1": s * jax.random.normal(ks[5], (256,), jnp.float32),
        "w_fc2": s * jax.random.normal(ks[6], (num_classes, 256), jnp.float32),
        "b_fc2": s * jax.random.normal(ks[7], (num_classes,), jnp.float32),
    }


def reference_forward(params, x_nchw):
    """Pure-JAX (f32) reference matching the PyTorch module semantics."""
    dn = ("NCHW", "OIHW", "NCHW")
    y = lax.conv_general_dilated(x_nchw, params["w_conv1"], (1, 1), "SAME",
                                 dimension_numbers=dn)
    y = jnp.maximum(y + params["b_conv1"][None, :, None, None], 0.0)
    y = lax.reduce_window(y, -jnp.inf, lax.max, (1, 1, 2, 2), (1, 1, 2, 2), "VALID")
    y = lax.conv_general_dilated(y, params["w_conv2"], (1, 1), "SAME",
                                 dimension_numbers=dn)
    y = jnp.maximum(y + params["b_conv2"][None, :, None, None], 0.0)
    y = lax.reduce_window(y, -jnp.inf, lax.max, (1, 1, 2, 2), (1, 1, 2, 2), "VALID")
    y = y.reshape(y.shape[0], -1)                      # torch.flatten(x, 1) on NCHW
    y = jnp.maximum(y @ params["w_fc1"].T + params["b_fc1"], 0.0)
    return y @ params["w_fc2"].T + params["b_fc2"]


if __name__ == "__main__":
    key = jax.random.PRNGKey(0)
    pkey, xkey = jax.random.split(key)
    params = init_params(pkey, num_classes=10)
    prepped = prepare_params(params, block_batch=8)    # one-time weight prep
    # 32x32 spatial is implied by the module: 16 ch * (32/4)^2 = 1024 = fc1 in.
    # B=12 is not a multiple of the batch block (8): exercises the tail padding
    # and still gives a grid of length 2 (both v7x TensorCores used).
    x = jax.random.normal(xkey, (12, 3, 32, 32), jnp.float32)

    fwd = jax.jit(light_nn_forward)
    out = fwd(prepped, x)
    jax.block_until_ready(out)
    assert out.shape == (12, 10) and out.dtype == jnp.float32

    ref = reference_forward(params, x)
    err = float(jnp.max(jnp.abs(out - ref)))
    assert err < 5e-2, f"max |kernel - reference| = {err}"
    print("KERNEL_OK")
</pallas_src>

<mosaic_0001>
module attributes {stable_mosaic.version = 11 : i64} {
  func.func @_fused_lightnn_kernel(%arg0: i32, %arg1: memref<272x128xbf16, #tpu.memory_space<vmem>>, %arg2: memref<3x128x512xbf16, #tpu.memory_space<vmem>>, %arg3: memref<1x512xf32, #tpu.memory_space<vmem>>, %arg4: memref<152x269xbf16, #tpu.memory_space<vmem>>, %arg5: memref<3x496x256xbf16, #tpu.memory_space<vmem>>, %arg6: memref<1x256xf32, #tpu.memory_space<vmem>>, %arg7: memref<64x143xbf16, #tpu.memory_space<vmem>>, %arg8: memref<240x2048xbf16, #tpu.memory_space<vmem>>, %arg9: memref<1x256xf32, #tpu.memory_space<vmem>>, %arg10: memref<256x128xbf16, #tpu.memory_space<vmem>>, %arg11: memref<1x128xf32, #tpu.memory_space<vmem>>, %arg12: memref<8x128xf32, #tpu.memory_space<vmem>>) attributes {dimension_semantics = [#tpu.dimension_semantics<parallel>], iteration_bounds = array<i64: 2>, scalar_prefetch = 0 : i64, scratch_operands = 0 : i64, tpu.core_type = #tpu.core_type<tc>, window_params = [{transform_indices = @transform_0, window_bounds = array<i64: 272, 128>}, {pipeline_mode = #tpu.pipeline_mode<synchronous>, transform_indices = @transform_1, window_bounds = array<i64: 3, 128, 512>}, {pipeline_mode = #tpu.pipeline_mode<synchronous>, transform_indices = @transform_2, window_bounds = array<i64: 1, 512>}, {pipeline_mode = #tpu.pipeline_mode<synchronous>, transform_indices = @transform_3, window_bounds = array<i64: 152, 269>}, {pipeline_mode = #tpu.pipeline_mode<synchronous>, transform_indices = @transform_4, window_bounds = array<i64: 3, 496, 256>}, {pipeline_mode = #tpu.pipeline_mode<synchronous>, transform_indices = @transform_5, window_bounds = array<i64: 1, 256>}, {pipeline_mode = #tpu.pipeline_mode<synchronous>, transform_indices = @transform_6, window_bounds = array<i64: 64, 143>}, {pipeline_mode = #tpu.pipeline_mode<synchronous>, transform_indices = @transform_7, window_bounds = array<i64: 240, 2048>}, {pipeline_mode = #tpu.pipeline_mode<synchronous>, transform_indices = @transform_8, window_bounds = array<i64: 1, 256>}, {pipeline_mode = #tpu.pipeline_mode<synchronous>, transform_indices = @transform_9, window_bounds = array<i64: 256, 128>}, {pipeline_mode = #tpu.pipeline_mode<synchronous>, transform_indices = @transform_10, window_bounds = array<i64: 1, 128>}, {transform_indices = @transform_11, window_bounds = array<i64: 8, 128>}]} {
    %c0 = arith.constant 0 : index
    %c0_0 = arith.constant 0 : index
    %0 = vector.load %arg1[%c0, %c0_0] : memref<272x128xbf16, #tpu.memory_space<vmem>>, vector<270x128xbf16>
    %c0_1 = arith.constant 0 : index
    %c0_2 = arith.constant 0 : index
    %c0_3 = arith.constant 0 : index
    %1 = vector.load %arg2[%c0_1, %c0_2, %c0_3] : memref<3x128x512xbf16, #tpu.memory_space<vmem>>, vector<1x128x512xbf16>
    %2 = vector.shape_cast %1 : vector<1x128x512xbf16> to vector<128x512xbf16>
    %cst = arith.constant dense<0.000000e+00> : vector<270x512xf32>
    %3 = tpu.matmul %0, %2, %cst {dimension_numbers = #tpu.dot_dimension_numbers<[1], [0], [0], [1], [0, 0, 1, 1], [], []>} : vector<270x128xbf16>, vector<128x512xbf16>, vector<270x512xf32> -> vector<270x512xf32>
    %c1 = arith.constant 1 : index
    %c0_4 = arith.constant 0 : index
    %4 = vector.load %arg1[%c1, %c0_4] : memref<272x128xbf16, #tpu.memory_space<vmem>>, vector<270x128xbf16>
    %c1_5 = arith.constant 1 : index
    %c0_6 = arith.constant 0 : index
    %c0_7 = arith.constant 0 : index
    %5 = vector.load %arg2[%c1_5, %c0_6, %c0_7] : memref<3x128x512xbf16, #tpu.memory_space<vmem>>, vector<1x128x512xbf16>
    %6 = vector.shape_cast %5 : vector<1x128x512xbf16> to vector<128x512xbf16>
    %cst_8 = arith.constant dense<0.000000e+00> : vector<270x512xf32>
    %7 = tpu.matmul %4, %6, %cst_8 {dimension_numbers = #tpu.dot_dimension_numbers<[1], [0], [0], [1], [0, 0, 1, 1], [], []>} : vector<270x128xbf16>, vector<128x512xbf16>, vector<270x512xf32> -> vector<270x512xf32>
    %8 = arith.addf %3, %7 : vector<270x512xf32>
    %c2 = arith.constant 2 : index
    %c0_9 = arith.constant 0 : index
    %9 = vector.load %arg1[%c2, %c0_9] : memref<272x128xbf16, #tpu.memory_space<vmem>>, vector<270x128xbf16>
    %c2_10 = arith.constant 2 : index
    %c0_11 = arith.constant 0 : index
    %c0_12 = arith.constant 0 : index
    %10 = vector.load %arg2[%c2_10, %c0_11, %c0_12] : memref<3x128x512xbf16, #tpu.memory_space<vmem>>, vector<1x128x512xbf16>
    %11 = vector.shape_cast %10 : vector<1x128x512xbf16> to vector<128x512xbf16>
    %cst_13 = arith.constant dense<0.000000e+00> : vector<270x512xf32>
    %12 = tpu.matmul %9, %11, %cst_13 {dimension_numbers = #tpu.dot_dimension_numbers<[1], [0], [0], [1], [0, 0, 1, 1], [], []>} : vector<270x128xbf16>, vector<128x512xbf16>, vector<270x512xf32> -> vector<270x512xf32>
    %13 = arith.addf %8, %12 : vector<270x512xf32>
    %c0_14 = arith.constant 0 : index
    %c0_15 = arith.constant 0 : index
    %14 = vector.load %arg3[%c0_14, %c0_15] : memref<1x512xf32, #tpu.memory_space<vmem>>, vector<1x512xf32>
    %15 = vector.broadcast %14 : vector<1x512xf32> to vector<270x512xf32>
    %16 = arith.addf %13, %15 : vector<270x512xf32>
    %cst_16 = arith.constant 0.000000e+00 : f32
    %17 = vector.broadcast %cst_16 : f32 to vector<270x512xf32>
    %18 = arith.maximumf %16, %17 : vector<270x512xf32>
    %19 = vector.extract_strided_slice %18 {offsets = [0, 0], sizes = [269, 512], strides = [1, 1]} : vector<270x512xf32> to vector<269x512xf32>
    %20 = vector.extract_strided_slice %18 {offsets = [1, 0], sizes = [269, 512], strides = [1, 1]} : vector<270x512xf32> to vector<269x512xf32>
    %21 = arith.maximumf %19, %20 : vector<269x512xf32>
    %22 = arith.truncf %21 : vector<269x512xf32> to vector<269x512xbf16>
    %c0_17 = arith.constant 0 : index
    %c0_18 = arith.constant 0 : index
    %23 = vector.load %arg4[%c0_17, %c0_18] : memref<152x269xbf16, #tpu.memory_space<vmem>>, vector<152x269xbf16>
    %cst_19 = arith.constant dense<0.000000e+00> : vector<152x512xf32>
    %24 = tpu.matmul %23, %22, %cst_19 {dimension_numbers = #tpu.dot_dimension_numbers<[1], [0], [0], [1], [0, 0, 1, 1], [], []>} : vector<152x269xbf16>, vector<269x512xbf16>, vector<152x512xf32> -> vector<152x512xf32>
    %25 = vector.extract_strided_slice %24 {offsets = [0, 0], sizes = [152, 496], strides = [1, 1]} : vector<152x512xf32> to vector<152x496xf32>
    %26 = vector.extract_strided_slice %24 {offsets = [0, 16], sizes = [152, 496], strides = [1, 1]} : vector<152x512xf32> to vector<152x496xf32>
    %27 = arith.maximumf %25, %26 : vector<152x496xf32>
    %28 = arith.truncf %27 : vector<152x496xf32> to vector<152x496xbf16>
    %29 = vector.extract_strided_slice %28 {offsets = [0, 0], sizes = [144, 496], strides = [1, 1]} : vector<152x496xbf16> to vector<144x496xbf16>
    %c0_20 = arith.constant 0 : index
    %c0_21 = arith.constant 0 : index
    %c0_22 = arith.constant 0 : index
    %30 = vector.load %arg5[%c0_20, %c0_21, %c0_22] : memref<3x496x256xbf16, #tpu.memory_space<vmem>>, vector<1x496x256xbf16>
    %31 = vector.shape_cast %30 : vector<1x496x256xbf16> to vector<496x256xbf16>
    %cst_23 = arith.constant dense<0.000000e+00> : vector<144x256xf32>
    %32 = tpu.matmul %29, %31, %cst_23 {dimension_numbers = #tpu.dot_dimension_numbers<[1], [0], [0], [1], [0, 0, 1, 1], [], []>} : vector<144x496xbf16>, vector<496x256xbf16>, vector<144x256xf32> -> vector<144x256xf32>
    %33 = vector.extract_strided_slice %28 {offsets = [1, 0], sizes = [144, 496], strides = [1, 1]} : vector<152x496xbf16> to vector<144x496xbf16>
    %c1_24 = arith.constant 1 : index
    %c0_25 = arith.constant 0 : index
    %c0_26 = arith.constant 0 : index
    %34 = vector.load %arg5[%c1_24, %c0_25, %c0_26] : memref<3x496x256xbf16, #tpu.memory_space<vmem>>, vector<1x496x256xbf16>
    %35 = vector.shape_cast %34 : vector<1x496x256xbf16> to vector<496x256xbf16>
    %cst_27 = arith.constant dense<0.000000e+00> : vector<144x256xf32>
    %36 = tpu.matmul %33, %35, %cst_27 {dimension_numbers = #tpu.dot_dimension_numbers<[1], [0], [0], [1], [0, 0, 1, 1], [], []>} : vector<144x496xbf16>, vector<496x256xbf16>, vector<144x256xf32> -> vector<144x256xf32>
    %37 = arith.addf %32, %36 : vector<144x256xf32>
    %38 = vector.extract_strided_slice %28 {offsets = [2, 0], sizes = [144, 496], strides = [1, 1]} : vector<152x496xbf16> to vector<144x496xbf16>
    %c2_28 = arith.constant 2 : index
    %c0_29 = arith.constant 0 : index
    %c0_30 = arith.constant 0 : index
    %39 = vector.load %arg5[%c2_28, %c0_29, %c0_30] : memref<3x496x256xbf16, #tpu.memory_space<vmem>>, vector<1x496x256xbf16>
    %40 = vector.shape_cast %39 : vector<1x496x256xbf16> to vector<496x256xbf16>
    %cst_31 = arith.constant dense<0.000000e+00> : vector<144x256xf32>
    %41 = tpu.matmul %38, %40, %cst_31 {dimension_numbers = #tpu.dot_dimension_numbers<[1], [0], [0], [1], [0, 0, 1, 1], [], []>} : vector<144x496xbf16>, vector<496x256xbf16>, vector<144x256xf32> -> vector<144x256xf32>
    %42 = arith.addf %37, %41 : vector<144x256xf32>
    %c0_32 = arith.constant 0 : index
    %c0_33 = arith.constant 0 : index
    %43 = vector.load %arg6[%c0_32, %c0_33] : memref<1x256xf32, #tpu.memory_space<vmem>>, vector<1x256xf32>
    %44 = vector.broadcast %43 : vector<1x256xf32> to vector<144x256xf32>
    %45 = arith.addf %42, %44 : vector<144x256xf32>
    %cst_34 = arith.constant 0.000000e+00 : f32
    %46 = vector.broadcast %cst_34 : f32 to vector<144x256xf32>
    %47 = arith.maximumf %45, %46 : vector<144x256xf32>
    %48 = vector.extract_strided_slice %47 {offsets = [0, 0], sizes = [143, 256], strides = [1, 1]} : vector<144x256xf32> to vector<143x256xf32>
    %49 = vector.extract_strided_slice %47 {offsets = [1, 0], sizes = [143, 256], strides = [1, 1]} : vector<144x256xf32> to vector<143x256xf32>
    %50 = arith.maximumf %48, %49 : vector<143x256xf32>
    %51 = arith.truncf %50 : vector<143x256xf32> to vector<143x256xbf16>
    %c0_35 = arith.constant 0 : index
    %c0_36 = arith.constant 0 : index
    %52 = vector.load %arg7[%c0_35, %c0_36] : memref<64x143xbf16, #tpu.memory_space<vmem>>, vector<64x143xbf16>
    %cst_37 = arith.constant dense<0.000000e+00> : vector<64x256xf32>
    %53 = tpu.matmul %52, %51, %cst_37 {dimension_numbers = #tpu.dot_dimension_numbers<[1], [0], [0], [1], [0, 0, 1, 1], [], []>} : vector<64x143xbf16>, vector<143x256xbf16>, vector<64x256xf32> -> vector<64x256xf32>
    %54 = vector.extract_strided_slice %53 {offsets = [0, 0], sizes = [64, 240], strides = [1, 1]} : vector<64x256xf32> to vector<64x240xf32>
    %55 = vector.extract_strided_slice %53 {offsets = [0, 16], sizes = [64, 240], strides = [1, 1]} : vector<64x256xf32> to vector<64x240xf32>
    %56 = arith.maximumf %54, %55 : vector<64x240xf32>
    %57 = arith.truncf %56 : vector<64x240xf32> to vector<64x240xbf16>
    %c0_38 = arith.constant 0 : index
    %c0_39 = arith.constant 0 : index
    %58 = vector.load %arg8[%c0_38, %c0_39] : memref<240x2048xbf16, #tpu.memory_space<vmem>>, vector<240x2048xbf16>
    %cst_40 = arith.constant dense<0.000000e+00> : vector<64x2048xf32>
    %59 = tpu.matmul %57, %58, %cst_40 {dimension_numbers = #tpu.dot_dimension_numbers<[1], [0], [0], [1], [0, 0, 1, 1], [], []>} : vector<64x240xbf16>, vector<240x2048xbf16>, vector<64x2048xf32> -> vector<64x2048xf32>
    %c0_41 = arith.constant 0 : index
    %c0_42 = arith.constant 0 : index
    %60 = vector.load %arg9[%c0_41, %c0_42] : memref<1x256xf32, #tpu.memory_space<vmem>>, vector<1x256xf32>
    %61 = vector.extract_strided_slice %59 {offsets = [0, 0], sizes = [8, 256], strides = [1, 1]} : vector<64x2048xf32> to vector<8x256xf32>
    %62 = vector.broadcast %60 : vector<1x256xf32> to vector<8x256xf32>
    %63 = arith.addf %62, %61 : vector<8x256xf32>
    %64 = vector.extract_strided_slice %59 {offsets = [8, 256], sizes = [8, 256], strides = [1, 1]} : vector<64x2048xf32> to vector<8x256xf32>
    %65 = arith.addf %63, %64 : vector<8x256xf32>
    %66 = vector.extract_strided_slice %59 {offsets = [16, 512], sizes = [8, 256], strides = [1, 1]} : vector<64x2048xf32> to vector<8x256xf32>
    %67 = arith.addf %65, %66 : vector<8x256xf32>
    %68 = vector.extract_strided_slice %59 {offsets = [24, 768], sizes = [8, 256], strides = [1, 1]} : vector<64x2048xf32> to vector<8x256xf32>
    %69 = arith.addf %67, %68 : vector<8x256xf32>
    %70 = vector.extract_strided_slice %59 {offsets = [32, 1024], sizes = [8, 256], strides = [1, 1]} : vector<64x2048xf32> to vector<8x256xf32>
    %71 = arith.addf %69, %70 : vector<8x256xf32>
    %72 = vector.extract_strided_slice %59 {offsets = [40, 1280], sizes = [8, 256], strides = [1, 1]} : vector<64x2048xf32> to vector<8x256xf32>
    %73 = arith.addf %71, %72 : vector<8x256xf32>
    %74 = vector.extract_strided_slice %59 {offsets = [48, 1536], sizes = [8, 256], strides = [1, 1]} : vector<64x2048xf32> to vector<8x256xf32>
    %75 = arith.addf %73, %74 : vector<8x256xf32>
    %76 = vector.extract_strided_slice %59 {offsets = [56, 1792], sizes = [8, 256], strides = [1, 1]} : vector<64x2048xf32> to vector<8x256xf32>
    %77 = arith.addf %75, %76 : vector<8x256xf32>
    %cst_43 = arith.constant 0.000000e+00 : f32
    %78 = vector.broadcast %cst_43 : f32 to vector<8x256xf32>
    %79 = arith.maximumf %77, %78 : vector<8x256xf32>
    %80 = arith.truncf %79 : vector<8x256xf32> to vector<8x256xbf16>
    %c0_44 = arith.constant 0 : index
    %c0_45 = arith.constant 0 : index
    %81 = vector.load %arg10[%c0_44, %c0_45] : memref<256x128xbf16, #tpu.memory_space<vmem>>, vector<256x128xbf16>
    %cst_46 = arith.constant dense<0.000000e+00> : vector<8x128xf32>
    %82 = tpu.matmul %80, %81, %cst_46 {dimension_numbers = #tpu.dot_dimension_numbers<[1], [0], [0], [1], [0, 0, 1, 1], [], []>} : vector<8x256xbf16>, vector<256x128xbf16>, vector<8x128xf32> -> vector<8x128xf32>
    %c0_47 = arith.constant 0 : index
    %c0_48 = arith.constant 0 : index
    %83 = vector.load %arg11[%c0_47, %c0_48] : memref<1x128xf32, #tpu.memory_space<vmem>>, vector<1x128xf32>
    %84 = vector.broadcast %83 : vector<1x128xf32> to vector<8x128xf32>
    %85 = arith.addf %82, %84 : vector<8x128xf32>
    %c0_49 = arith.constant 0 : index
    %c0_50 = arith.constant 0 : index
    %86 = vector.load %arg12[%c0_49, %c0_50] : memref<8x128xf32, #tpu.memory_space<vmem>>, vector<8x128xf32>
    tpu.vector_store %arg12[%c0_49, %c0_50], %85 {strides = array<i32>} : memref<8x128xf32, #tpu.memory_space<vmem>>, vector<8x128xf32>,
    return
  }
  func.func @transform_0(%arg0: i32) -> (i32, i32) {
    %c0_i32 = arith.constant 0 : i32
    %c0_i32_0 = arith.constant 0 : i32
    return %arg0, %c0_i32 : i32, i32
  }
  func.func @transform_1(%arg0: i32) -> (i32, i32, i32) {
    %c0_i32 = arith.constant 0 : i32
    %c0_i32_0 = arith.constant 0 : i32
    %c0_i32_1 = arith.constant 0 : i32
    %c0_i32_2 = arith.constant 0 : i32
    return %c0_i32, %c0_i32_0, %c0_i32_1 : i32, i32, i32
  }
  func.func @transform_2(%arg0: i32) -> (i32, i32) {
    %c0_i32 = arith.constant 0 : i32
    %c0_i32_0 = arith.constant 0 : i32
    %c0_i32_1 = arith.constant 0 : i32
    return %c0_i32, %c0_i32_0 : i32, i32
  }
  func.func @transform_3(%arg0: i32) -> (i32, i32) {
    %c0_i32 = arith.constant 0 : i32
    %c0_i32_0 = arith.constant 0 : i32
    %c0_i32_1 = arith.constant 0 : i32
    return %c0_i32, %c0_i32_0 : i32, i32
  }
  func.func @transform_4(%arg0: i32) -> (i32, i32, i32) {
    %c0_i32 = arith.constant 0 : i32
    %c0_i32_0 = arith.constant 0 : i32
    %c0_i32_1 = arith.constant 0 : i32
    %c0_i32_2 = arith.constant 0 : i32
    return %c0_i32, %c0_i32_0, %c0_i32_1 : i32, i32, i32
  }
  func.func @transform_5(%arg0: i32) -> (i32, i32) {
    %c0_i32 = arith.constant 0 : i32
    %c0_i32_0 = arith.constant 0 : i32
    %c0_i32_1 = arith.constant 0 : i32
    return %c0_i32, %c0_i32_0 : i32, i32
  }
  func.func @transform_6(%arg0: i32) -> (i32, i32) {
    %c0_i32 = arith.constant 0 : i32
    %c0_i32_0 = arith.constant 0 : i32
    %c0_i32_1 = arith.constant 0 : i32
    return %c0_i32, %c0_i32_0 : i32, i32
  }
  func.func @transform_7(%arg0: i32) -> (i32, i32) {
    %c0_i32 = arith.constant 0 : i32
    %c0_i32_0 = arith.constant 0 : i32
    %c0_i32_1 = arith.constant 0 : i32
    return %c0_i32, %c0_i32_0 : i32, i32
  }
  func.func @transform_8(%arg0: i32) -> (i32, i32) {
    %c0_i32 = arith.constant 0 : i32
    %c0_i32_0 = arith.constant 0 : i32
    %c0_i32_1 = arith.constant 0 : i32
    return %c0_i32, %c0_i32_0 : i32, i32
  }
  func.func @transform_9(%arg0: i32) -> (i32, i32) {
    %c0_i32 = arith.constant 0 : i32
    %c0_i32_0 = arith.constant 0 : i32
    %c0_i32_1 = arith.constant 0 : i32
    return %c0_i32, %c0_i32_0 : i32, i32
  }
  func.func @transform_10(%arg0: i32) -> (i32, i32) {
    %c0_i32 = arith.constant 0 : i32
    %c0_i32_0 = arith.constant 0 : i32
    %c0_i32_1 = arith.constant 0 : i32
    return %c0_i32, %c0_i32_0 : i32, i32
  }
  func.func @transform_11(%arg0: i32) -> (i32, i32) {
    %c0_i32 = arith.constant 0 : i32
    %c0_i32_0 = arith.constant 0 : i32
    return %arg0, %c0_i32 : i32, i32
  }
}

</mosaic_0001>

<llo_original>
// kernel: light_nn_forward.1
$region0: #{light_nn_forward.1}
  #allocation0 [shape = 'u32[]', space=smem, size = 0x4, offset = 0x4, fixed_abs, tag = 'smem constant byte address 0x4 - core index']
  #allocation1 [shape = 'u32[144,128]{1,0:T(1,128)}', space=vmem, size = 0x12000, scoped, tag = 'internal scratch']
  %s0 = inlined_call_operand.vmem [shape: bf16[544,128], index: 0, kind: input, shape index: {}]
  %s1 = inlined_call_operand.vmem [shape: bf16[3,128,512], index: 1, kind: input, shape index: {}]
  %s2 = inlined_call_operand.vmem [shape: f32[1,512], index: 2, kind: input, shape index: {}]
  %s3 = inlined_call_operand.vmem [shape: bf16[152,269], index: 3, kind: input, shape index: {}]
  %s4 = inlined_call_operand.vmem [shape: bf16[3,496,256], index: 4, kind: input, shape index: {}]
  %s5 = inlined_call_operand.vmem [shape: f32[1,256], index: 5, kind: input, shape index: {}]
  %s6 = inlined_call_operand.vmem [shape: bf16[64,143], index: 6, kind: input, shape index: {}]
  %s7 = inlined_call_operand.vmem [shape: bf16[240,2048], index: 7, kind: input, shape index: {}]
  %s8 = inlined_call_operand.vmem [shape: f32[1,256], index: 8, kind: input, shape index: {}]
  %s9 = inlined_call_operand.vmem [shape: bf16[256,128], index: 9, kind: input, shape index: {}]
  %s10 = inlined_call_operand.vmem [shape: f32[1,128], index: 10, kind: input, shape index: {}]
  %s11 = inlined_call_operand.hbm [shape: f32[16,128], index: 11, kind: output, shape index: {}]
  %s12 = sld [smem:[#allocation0]]
  $region77: #{light_nn_forward.1} parent=0
    _
  %s14 = ssub.s32 1, %s12
  %s15 = scalar_select 0, %s14, %s12
  $region1: #{light_nn_forward.1} parent=0
    #allocation2 [shape = 'u8[8192]{0}', space=vmem, size = 0x2000, scoped, tag = 'output window, operand 0']
    #allocation3 [shape = 's32[2]{0}', space=sflag, size = 0x8, scoped, tag = 'scoped memory for light_nn_forward.1']
    %16 = vsyncpa [#allocation3], 0
    %s17 = scalar_lea.sflag [#allocation3], 1
    %18 = vsyncpa %s17, 0
    loop: start=0, step=1, limit=4
    $region2: #{light_nn_forward.1} parent=1 // loop_pre_header
      _
    $region3: #{light_nn_forward.1} parent=1 // loop_header
      %s20 = sphi 0, %s24
      %p21 = scmp.ge.s32.totalorder %s20, 4
      %s30 = sphi 0, %s32
      %s33 = sphi 0, %s30
      %s34 = sphi 0, %s33
      %s50 = sphi 0, %s34
      %s54 = sphi 0, %s54
      %s56 = sphi 0, %s54
      %s57 = sphi 0, %s56
      %s71 = sphi 0, %s57
      %s75 = sphi 0, %s75
      %s77 = sphi 0, %s75
      %s78 = sphi 0, %s77
      %s92 = sphi 0, %s78
      %s96 = sphi 0, %s96
      %s98 = sphi 0, %s96
      %s99 = sphi 0, %s98
      %s113 = sphi 0, %s99
      %s117 = sphi 0, %s117
      %s119 = sphi 0, %s117
      %s120 = sphi 0, %s119
      %s134 = sphi 0, %s120
      %s138 = sphi 0, %s138
      %s140 = sphi 0, %s138
      %s141 = sphi 0, %s140
      %s155 = sphi 0, %s141
      %s159 = sphi 0, %s159
      %s161 = sphi 0, %s159
      %s162 = sphi 0, %s161
      %s176 = sphi 0, %s162
      %s180 = sphi 0, %s180
      %s182 = sphi 0, %s180
      %s183 = sphi 0, %s182
      %s197 = sphi 0, %s183
      %s201 = sphi 0, %s201
      %s203 = sphi 0, %s201
      %s204 = sphi 0, %s203
      %s218 = sphi 0, %s204
      %s222 = sphi 0, %s222
      %s224 = sphi 0, %s222
      %s225 = sphi 0, %s224
      %s239 = sphi 0, %s225
      %s243 = sphi 0, %s243
      %s245 = sphi 0, %s243
      %s246 = sphi 0, %s245
      %s260 = sphi 0, %s246
      %s266 = sphi 0, %s268
      %s269 = sphi 0, %s266
      %s270 = sphi 0, %s269
      %s286 = sphi 0, %s270
    $region4: #{light_nn_forward.1} parent=1 // loop_header_branch
      %23 = sbr.rel (%p21) target = $region8
    $region5: #{light_nn_forward.1} parent=1 // loop_body
      %s25 = ssub.s32 %s20, 1
      %s26 = ssub.s32 %s20, 2
      %s27 = sadd.s32 %s20, 1
      %s28 = ssub.s32 %s20, %s27
      %p29 = scmp.eq.s32.totalorder %s28, 0
      %s31 = sadd.s32 %s30, 1
      %s32 = scalar_select %p29, %s30, %s31
      %p35 = pneg %p29
      %p36 = scmp.eq.s32.totalorder %s20, 1
      %p37 = por %p35, %p36
      %p38 = scmp.ne.s32.totalorder %s30, %s33
      %p39 = scmp.eq.s32.totalorder %s20, 0
      %p40 = por %p38, %p39
      %p41 = scmp.ne.s32.totalorder %s30, %s33
      %p42 = scmp.eq.s32.totalorder %s25, 1
      %p43 = por %p41, %p42
      %p44 = scmp.ne.s32.totalorder %s33, %s34
      %p45 = scmp.eq.s32.totalorder %s25, 0
      %p46 = por %p44, %p45
      %p47 = scmp.ne.s32.totalorder %s33, %s34
      %p48 = scmp.eq.s32.totalorder %s26, 1
      %p49 = por %p47, %p48
      %p51 = scmp.ne.s32.totalorder %s34, %s50
      %p52 = scmp.eq.s32.totalorder %s26, 0
      %p53 = por %p51, %p52
      %s55 = sadd.s32 %s54, 1
      %p58 = scmp.eq.s32.totalorder %s20, 1
      %p59 = scmp.ne.s32.totalorder %s54, %s56
      %p60 = scmp.eq.s32.totalorder %s20, 0
      %p61 = por %p59, %p60
      %p62 = scmp.ne.s32.totalorder %s54, %s56
      %p63 = scmp.eq.s32.totalorder %s25, 1
      %p64 = por %p62, %p63
      %p65 = scmp.ne.s32.totalorder %s56, %s57
      %p66 = scmp.eq.s32.totalorder %s25, 0
      %p67 = por %p65, %p66
      %p68 = scmp.ne.s32.totalorder %s56, %s57
      %p69 = scmp.eq.s32.totalorder %s26, 1
      %p70 = por %p68, %p69
      %p72 = scmp.ne.s32.totalorder %s57, %s71
      %p73 = scmp.eq.s32.totalorder %s26, 0
      %p74 = por %p72, %p73
      %s76 = sadd.s32 %s75, 1
      %p79 = scmp.eq.s32.totalorder %s20, 1
      %p80 = scmp.ne.s32.totalorder %s75, %s77
      %p81 = scmp.eq.s32.totalorder %s20, 0
      %p82 = por %p80, %p81
      %p83 = scmp.ne.s32.totalorder %s75, %s77
      %p84 = scmp.eq.s32.totalorder %s25, 1
      %p85 = por %p83, %p84
      %p86 = scmp.ne.s32.totalorder %s77, %s78
      %p87 = scmp.eq.s32.totalorder %s25, 0
      %p88 = por %p86, %p87
      %p89 = scmp.ne.s32.totalorder %s77, %s78
      %p90 = scmp.eq.s32.totalorder %s26, 1
      %p91 = por %p89, %p90
      %p93 = scmp.ne.s32.totalorder %s78, %s92
      %p94 = scmp.eq.s32.totalorder %s26, 0
      %p95 = por %p93, %p94
      %s97 = sadd.s32 %s96, 1
      %p100 = scmp.eq.s32.totalorder %s20, 1
      %p101 = scmp.ne.s32.totalorder %s96, %s98
      %p102 = scmp.eq.s32.totalorder %s20, 0
      %p103 = por %p101, %p102
      %p104 = scmp.ne.s32.totalorder %s96, %s98
      %p105 = scmp.eq.s32.totalorder %s25, 1
      %p106 = por %p104, %p105
      %p107 = scmp.ne.s32.totalorder %s98, %s99
      %p108 = scmp.eq.s32.totalorder %s25, 0
      %p109 = por %p107, %p108
      %p110 = scmp.ne.s32.totalorder %s98, %s99
      %p111 = scmp.eq.s32.totalorder %s26, 1
      %p112 = por %p110, %p111
      %p114 = scmp.ne.s32.totalorder %s99, %s113
      %p115 = scmp.eq.s32.totalorder %s26, 0
      %p116 = por %p114, %p115
      %s118 = sadd.s32 %s117, 1
      %p121 = scmp.eq.s32.totalorder %s20, 1
      %p122 = scmp.ne.s32.totalorder %s117, %s119
      %p123 = scmp.eq.s32.totalorder %s20, 0
      %p124 = por %p122, %p123
      %p125 = scmp.ne.s32.totalorder %s117, %s119
      %p126 = scmp.eq.s32.totalorder %s25, 1
      %p127 = por %p125, %p126
      %p128 = scmp.ne.s32.totalorder %s119, %s120
      %p129 = scmp.eq.s32.totalorder %s25, 0
      %p130 = por %p128, %p129
      %p131 = scmp.ne.s32.totalorder %s119, %s120
      %p132 = scmp.eq.s32.totalorder %s26, 1
      %p133 = por %p131, %p132
      %p135 = scmp.ne.s32.totalorder %s120, %s134
      %p136 = scmp.eq.s32.totalorder %s26, 0
      %p137 = por %p135, %p136
      %s139 = sadd.s32 %s138, 1
      %p142 = scmp.eq.s32.totalorder %s20, 1
      %p143 = scmp.ne.s32.totalorder %s138, %s140
      %p144 = scmp.eq.s32.totalorder %s20, 0
      %p145 = por %p143, %p144
      %p146 = scmp.ne.s32.totalorder %s138, %s140
      %p147 = scmp.eq.s32.totalorder %s25, 1
      %p148 = por %p146, %p147
      %p149 = scmp.ne.s32.totalorder %s140, %s141
      %p150 = scmp.eq.s32.totalorder %s25, 0
      %p151 = por %p149, %p150
      %p152 = scmp.ne.s32.totalorder %s140, %s141
      %p153 = scmp.eq.s32.totalorder %s26, 1
      %p154 = por %p152, %p153
      %p156 = scmp.ne.s32.totalorder %s141, %s155
      %p157 = scmp.eq.s32.totalorder %s26, 0
      %p158 = por %p156, %p157
      %s160 = sadd.s32 %s159, 1
      %p163 = scmp.eq.s32.totalorder %s20, 1
      %p164 = scmp.ne.s32.totalorder %s159, %s161
      %p165 = scmp.eq.s32.totalorder %s20, 0
      %p166 = por %p164, %p165
      %p167 = scmp.ne.s32.totalorder %s159, %s161
      %p168 = scmp.eq.s32.totalorder %s25, 1
      %p169 = por %p167, %p168
      %p170 = scmp.ne.s32.totalorder %s161, %s162
      %p171 = scmp.eq.s32.totalorder %s25, 0
      %p172 = por %p170, %p171
      %p173 = scmp.ne.s32.totalorder %s161, %s162
      %p174 = scmp.eq.s32.totalorder %s26, 1
      %p175 = por %p173, %p174
      %p177 = scmp.ne.s32.totalorder %s162, %s176
      %p178 = scmp.eq.s32.totalorder %s26, 0
      %p179 = por %p177, %p178
      %s181 = sadd.s32 %s180, 1
      %p184 = scmp.eq.s32.totalorder %s20, 1
      %p185 = scmp.ne.s32.totalorder %s180, %s182
      %p186 = scmp.eq.s32.totalorder %s20, 0
      %p187 = por %p185, %p186
      %p188 = scmp.ne.s32.totalorder %s180, %s182
      %p189 = scmp.eq.s32.totalorder %s25, 1
      %p190 = por %p188, %p189
      %p191 = scmp.ne.s32.totalorder %s182, %s183
      %p192 = scmp.eq.s32.totalorder %s25, 0
      %p193 = por %p191, %p192
      %p194 = scmp.ne.s32.totalorder %s182, %s183
      %p195 = scmp.eq.s32.totalorder %s26, 1
      %p196 = por %p194, %p195
      %p198 = scmp.ne.s32.totalorder %s183, %s197
      %p199 = scmp.eq.s32.totalorder %s26, 0
      %p200 = por %p198, %p199
      %s202 = sadd.s32 %s201, 1
      %p205 = scmp.eq.s32.totalorder %s20, 1
      %p206 = scmp.ne.s32.totalorder %s201, %s203
      %p207 = scmp.eq.s32.totalorder %s20, 0
      %p208 = por %p206, %p207
      %p209 = scmp.ne.s32.totalorder %s201, %s203
      %p210 = scmp.eq.s32.totalorder %s25, 1
      %p211 = por %p209, %p210
      %p212 = scmp.ne.s32.totalorder %s203, %s204
      %p213 = scmp.eq.s32.totalorder %s25, 0
      %p214 = por %p212, %p213
      %p215 = scmp.ne.s32.totalorder %s203, %s204
      %p216 = scmp.eq.s32.totalorder %s26, 1
      %p217 = por %p215, %p216
      %p219 = scmp.ne.s32.totalorder %s204, %s218
      %p220 = scmp.eq.s32.totalorder %s26, 0
      %p221 = por %p219, %p220
      %s223 = sadd.s32 %s222, 1
      %p226 = scmp.eq.s32.totalorder %s20, 1
      %p227 = scmp.ne.s32.totalorder %s222, %s224
      %p228 = scmp.eq.s32.totalorder %s20, 0
      %p229 = por %p227, %p228
      %p230 = scmp.ne.s32.totalorder %s222, %s224
      %p231 = scmp.eq.s32.totalorder %s25, 1
      %p232 = por %p230, %p231
      %p233 = scmp.ne.s32.totalorder %s224, %s225
      %p234 = scmp.eq.s32.totalorder %s25, 0
      %p235 = por %p233, %p234
      %p236 = scmp.ne.s32.totalorder %s224, %s225
      %p237 = scmp.eq.s32.totalorder %s26, 1
      %p238 = por %p236, %p237
      %p240 = scmp.ne.s32.totalorder %s225, %s239
      %p241 = scmp.eq.s32.totalorder %s26, 0
      %p242 = por %p240, %p241
      %s244 = sadd.s32 %s243, 1
      %p247 = scmp.eq.s32.totalorder %s20, 1
      %p248 = scmp.ne.s32.totalorder %s243, %s245
      %p249 = scmp.eq.s32.totalorder %s20, 0
      %p250 = por %p248, %p249
      %p251 = scmp.ne.s32.totalorder %s243, %s245
      %p252 = scmp.eq.s32.totalorder %s25, 1
      %p253 = por %p251, %p252
      %p254 = scmp.ne.s32.totalorder %s245, %s246
      %p255 = scmp.eq.s32.totalorder %s25, 0
      %p256 = por %p254, %p255
      %p257 = scmp.ne.s32.totalorder %s245, %s246
      %p258 = scmp.eq.s32.totalorder %s26, 1
      %p259 = por %p257, %p258
      %p261 = scmp.ne.s32.totalorder %s246, %s260
      %p262 = scmp.eq.s32.totalorder %s26, 0
      %p263 = por %p261, %p262
      %s264 = ssub.s32 %s20, %s27
      %p265 = scmp.eq.s32.totalorder %s264, 0
      %s267 = sadd.s32 %s266, 1
      %s268 = scalar_select %p265, %s266, %s267
      %p271 = pneg %p265
      %p272 = scmp.eq.s32.totalorder %s20, 1
      %p273 = por %p271, %p272
      %p274 = scmp.ne.s32.totalorder %s266, %s269
      %p275 = scmp.eq.s32.totalorder %s20, 0
      %p276 = por %p274, %p275
      %p277 = scmp.ne.s32.totalorder %s266, %s269
      %p278 = scmp.eq.s32.totalorder %s25, 1
      %p279 = por %p277, %p278
      %p280 = scmp.ne.s32.totalorder %s269, %s270
      %p281 = scmp.eq.s32.totalorder %s25, 0
      %p282 = por %p280, %p281
      %p283 = scmp.ne.s32.totalorder %s269, %s270
      %p284 = scmp.eq.s32.totalorder %s26, 1
      %p285 = por %p283, %p284
      %p287 = scmp.ne.s32.totalorder %s270, %s286
      %p288 = scmp.eq.s32.totalorder %s26, 0
      %p289 = por %p287, %p288
      %p290 = scmp.le.s32.totalorder 1, %s20
      %p291 = scmp.lt.s32.totalorder %s20, 3
      %p292 = pnand %p290, %p291
      %p293 = pneg %p292
      // Predicated region
      $region9: #{light_nn_forward.1} parent=5 // pred_check
        _
      $region10: #{light_nn_forward.1} parent=5 // pred_check_branch
        %295 = sbr.rel (%p292) target = $region12
      $region11: #{light_nn_forward.1} parent=5 // pred_region
        %s296 = ssub.s32 %s20, 1
        // Predicated region
        $region13: #{light_nn_forward.1} parent=11 // pred_check
          %p297 = pneg %p67
        $region14: #{light_nn_forward.1} parent=11 // pred_check_branch
          %299 = sbr.rel (%p297) target = $region16
        $region15: #{light_nn_forward.1} parent=11 // pred_region
          _
        $region16: #{light_nn_forward.1} parent=11 // pred_fallthru
          _
        // Predicated region
        $region17: #{light_nn_forward.1} parent=11 // pred_check
          %p300 = pneg %p88
        $region18: #{light_nn_forward.1} parent=11 // pred_check_branch
          %302 = sbr.rel (%p300) target = $region20
        $region19: #{light_nn_forward.1} parent=11 // pred_region
          _
        $region20: #{light_nn_forward.1} parent=11 // pred_fallthru
          _
        // Predicated region
        $region21: #{light_nn_forward.1} parent=11 // pred_check
          %p303 = pneg %p109
        $region22: #{light_nn_forward.1} parent=11 // pred_check_branch
          %305 = sbr.rel (%p303) target = $region24
        $region23: #{light_nn_forward.1} parent=11 // pred_region
          _
        $region24: #{light_nn_forward.1} parent=11 // pred_fallthru
          _
        // Predicated region
        $region25: #{light_nn_forward.1} parent=11 // pred_check
          %p306 = pneg %p130
        $region26: #{light_nn_forward.1} parent=11 // pred_check_branch
          %308 = sbr.rel (%p306) target = $region28
        $region27: #{light_nn_forward.1} parent=11 // pred_region
          _
        $region28: #{light_nn_forward.1} parent=11 // pred_fallthru
          _
        // Predicated region
        $region29: #{light_nn_forward.1} parent=11 // pred_check
          %p309 = pneg %p151
        $region30: #{light_nn_forward.1} parent=11 // pred_check_branch
          %311 = sbr.rel (%p309) target = $region32
        $region31: #{light_nn_forward.1} parent=11 // pred_region
          _
        $region32: #{light_nn_forward.1} parent=11 // pred_fallthru
          _
        // Predicated region
        $region33: #{light_nn_forward.1} parent=11 // pred_check
          %p312 = pneg %p172
        $region34: #{light_nn_forward.1} parent=11 // pred_check_branch
          %314 = sbr.rel (%p312) target = $region36
        $region35: #{light_nn_forward.1} parent=11 // pred_region
          _
        $region36: #{light_nn_forward.1} parent=11 // pred_fallthru
          _
        // Predicated region
        $region37: #{light_nn_forward.1} parent=11 // pred_check
          %p315 = pneg %p193
        $region38: #{light_nn_forward.1} parent=11 // pred_check_branch
          %317 = sbr.rel (%p315) target = $region40
        $region39: #{light_nn_forward.1} parent=11 // pred_region
          _
        $region40: #{light_nn_forward.1} parent=11 // pred_fallthru
          _
        // Predicated region
        $region41: #{light_nn_forward.1} parent=11 // pred_check
          %p318 = pneg %p214
        $region42: #{light_nn_forward.1} parent=11 // pred_check_branch
          %320 = sbr.rel (%p318) target = $region44
        $region43: #{light_nn_forward.1} parent=11 // pred_region
          _
        $region44: #{light_nn_forward.1} parent=11 // pred_fallthru
          _
        // Predicated region
        $region45: #{light_nn_forward.1} parent=11 // pred_check
          %p321 = pneg %p235
        $region46: #{light_nn_forward.1} parent=11 // pred_check_branch
          %323 = sbr.rel (%p321) target = $region48
        $region47: #{light_nn_forward.1} parent=11 // pred_region
          _
        $region48: #{light_nn_forward.1} parent=11 // pred_fallthru
          _
        // Predicated region
        $region49: #{light_nn_forward.1} parent=11 // pred_check
          %p324 = pneg %p256
        $region50: #{light_nn_forward.1} parent=11 // pred_check_branch
          %326 = sbr.rel (%p324) target = $region52
        $region51: #{light_nn_forward.1} parent=11 // pred_region
          _
        $region52: #{light_nn_forward.1} parent=11 // pred_fallthru
          _
      $region12: #{light_nn_forward.1} parent=5 // pred_fallthru
        _
      %p327 = scmp.lt.s32.totalorder %s20, 2
      // Predicated region
      $region53: #{light_nn_forward.1} parent=5 // pred_check
        %p328 = pneg %p327
      $region54: #{light_nn_forward.1} parent=5 // pred_check_branch
        %330 = sbr.rel (%p328) target = $region56
      $region55: #{light_nn_forward.1} parent=5 // pred_region
        // Predicated region
        $region57: #{light_nn_forward.1} parent=55 // pred_check
          %p331 = pneg %p40
        $region58: #{light_nn_forward.1} parent=55 // pred_check_branch
          %333 = sbr.rel (%p331) target = $region60
        $region59: #{light_nn_forward.1} parent=55 // pred_region
          %s334 = smul.u32 34, %s20
          %p335 = scmp.lt.s32.totalorder %s334, 67
          %s336 = scalar_select %p335, %s334, 67
          %s337 = smul.addr %s336, 4
          %s338 = scalar_lea.vmem %s0, %s337
          %s339 = smul.u32 34, %s20
        $region60: #{light_nn_forward.1} parent=55 // pred_fallthru
          _
      $region56: #{light_nn_forward.1} parent=5 // pred_fallthru
        _
      %p340 = scmp.le.s32.totalorder 1, %s20
      %p341 = scmp.lt.s32.totalorder %s20, 3
      %p342 = pnand %p340, %p341
      %p343 = pneg %p342
      // Predicated region
      $region61: #{light_nn_forward.1} parent=5 // pred_check
        _
      $region62: #{light_nn_forward.1} parent=5 // pred_check_branch
        %345 = sbr.rel (%p342) target = $region64
      $region63: #{light_nn_forward.1} parent=5 // pred_region
        %s346 = ssub.s32 %s20, 1
        %s347 = smul.u32 34, %s25
        %p348 = scmp.lt.s32.totalorder %s347, 67
        %s349 = scalar_select %p348, %s347, 67
        %s350 = smul.addr %s349, 4
        %s351 = scalar_lea.vmem %s0, %s350
        %p352 = pneg %p46
        %p353 = pneg %p43
        %p354 = pneg %p67
        %p355 = pneg %p64
        %p356 = pneg %p88
        %p357 = pneg %p85
        %p358 = pneg %p109
        %p359 = pneg %p106
        %p360 = pneg %p130
        %p361 = pneg %p127
        %p362 = pneg %p151
        %p363 = pneg %p148
        %p364 = pneg %p172
        %p365 = pneg %p169
        %p366 = pneg %p193
        %p367 = pneg %p190
        %p368 = pneg %p214
        %p369 = pneg %p211
        %p370 = pneg %p235
        %p371 = pneg %p232
        %p372 = pneg %p256
        %p373 = pneg %p253
        %p374 = pneg %p282
        %p375 = pneg %p279
        %s376 = sand.u32 %s269, 1
        %s377 = scalar_lea.sflag [#allocation3], %s376
        %s378 = sand.u32 %s269, 1
        %s379 = smul.addr %s378, 8
        %s380 = scalar_lea.vmem [#allocation2], %s379
        %s381 = smul.u32 34, %s25
        %p382 = scmp.lt.s32.totalorder %s381, 67
        %s383 = scalar_select %p382, %s381, 67
        %s384 = smul.addr %s383, 4
        %s385 = scalar_lea.vmem %s0, %s384
        %s386 = smul.u32 34, %s25
        %v388 = vld [vmem:[%s385] sm:$0xf]
        %v389 = vld [vmem:[%s385 + $0x4] sm:$0xf]
        %v390 = vld [vmem:[%s385 + $0x8] sm:$0xf]
        %v391 = vld [vmem:[%s385 + $0xc] sm:$0xf]
        %v392 = vld [vmem:[%s385 + $0x10] sm:$0xf]
        %v393 = vld [vmem:[%s385 + $0x14] sm:$0xf]
        %v394 = vld [vmem:[%s385 + $0x18] sm:$0xf]
        %v395 = vld [vmem:[%s385 + $0x1c] sm:$0xf]
        %v396 = vld [vmem:[%s385 + $0x20] sm:$0xf]
        %v397 = vld [vmem:[%s385 + $0x24] sm:$0xf]
        %v398 = vld [vmem:[%s385 + $0x28] sm:$0xf]
        %v399 = vld [vmem:[%s385 + $0x2c] sm:$0xf]
        %v400 = vld [vmem:[%s385 + $0x30] sm:$0xf]
        %v401 = vld [vmem:[%s385 + $0x34] sm:$0xf]
        %v402 = vld [vmem:[%s385 + $0x38] sm:$0xf]
        %v403 = vld [vmem:[%s385 + $0x3c] sm:$0xf]
        %v404 = vld [vmem:[%s385 + $0x40] sm:$0xf]
        %v405 = vld [vmem:[%s385 + $0x44] sm:$0xf]
        %v406 = vld [vmem:[%s385 + $0x48] sm:$0xf]
        %v407 = vld [vmem:[%s385 + $0x4c] sm:$0xf]
        %v408 = vld [vmem:[%s385 + $0x50] sm:$0xf]
        %v409 = vld [vmem:[%s385 + $0x54] sm:$0xf]
        %v410 = vld [vmem:[%s385 + $0x58] sm:$0xf]
        %v411 = vld [vmem:[%s385 + $0x5c] sm:$0xf]
        %v412 = vld [vmem:[%s385 + $0x60] sm:$0xf]
        %v413 = vld [vmem:[%s385 + $0x64] sm:$0xf]
        %v414 = vld [vmem:[%s385 + $0x68] sm:$0xf]
        %v415 = vld [vmem:[%s385 + $0x6c] sm:$0xf]
        %v416 = vld [vmem:[%s385 + $0x70] sm:$0xf]
        %v417 = vld [vmem:[%s385 + $0x74] sm:$0xf]
        %v418 = vld [vmem:[%s385 + $0x78] sm:$0xf]
        %v419 = vld [vmem:[%s385 + $0x7c] sm:$0xf]
        %v420 = vld [vmem:[%s385 + $0x80] sm:$0xf]
        %v421 = vld [vmem:[%s385 + $0x84] sm:$0x7]
        %v422 = vld [vmem:[%s1] sm:$0xff]
        %v423 = vld [vmem:[%s1 + $0x8] sm:$0xff]
        %v424 = vld [vmem:[%s1 + $0x10] sm:$0xff]
        %v425 = vld [vmem:[%s1 + $0x18] sm:$0xff]
        %v426 = vld [vmem:[%s1 + $0x20] sm:$0xff]
        %v427 = vld [vmem:[%s1 + $0x28] sm:$0xff]
        %v428 = vld [vmem:[%s1 + $0x30] sm:$0xff]
        %v429 = vld [vmem:[%s1 + $0x38] sm:$0xff]
        %v430 = vld [vmem:[%s1 + $0x40] sm:$0xff]
        %v431 = vld [vmem:[%s1 + $0x48] sm:$0xff]
        %v432 = vld [vmem:[%s1 + $0x50] sm:$0xff]
        %v433 = vld [vmem:[%s1 + $0x58] sm:$0xff]
        %v434 = vld [vmem:[%s1 + $0x60] sm:$0xff]
        %v435 = vld [vmem:[%s1 + $0x68] sm:$0xff]
        %v436 = vld [vmem:[%s1 + $0x70] sm:$0xff]
        %v437 = vld [vmem:[%s1 + $0x78] sm:$0xff]
        %v438 = vld [vmem:[%s1 + $0x80] sm:$0xff]
        %v439 = vld [vmem:[%s1 + $0x88] sm:$0xff]
        %v440 = vld [vmem:[%s1 + $0x90] sm:$0xff]
        %v441 = vld [vmem:[%s1 + $0x98] sm:$0xff]
        %v442 = vld [vmem:[%s1 + $0xa0] sm:$0xff]
        %v443 = vld [vmem:[%s1 + $0xa8] sm:$0xff]
        %v444 = vld [vmem:[%s1 + $0xb0] sm:$0xff]
        %v445 = vld [vmem:[%s1 + $0xb8] sm:$0xff]
        %v446 = vld [vmem:[%s1 + $0xc0] sm:$0xff]
        %v447 = vld [vmem:[%s1 + $0xc8] sm:$0xff]
        %v448 = vld [vmem:[%s1 + $0xd0] sm:$0xff]
        %v449 = vld [vmem:[%s1 + $0xd8] sm:$0xff]
        %v450 = vld [vmem:[%s1 + $0xe0] sm:$0xff]
        %v451 = vld [vmem:[%s1 + $0xe8] sm:$0xff]
        %v452 = vld [vmem:[%s1 + $0xf0] sm:$0xff]
        %v453 = vld [vmem:[%s1 + $0xf8] sm:$0xff]
        %v454 = vld [vmem:[%s385 + $0x84] sm:$0xf]
        %s455 = scalar_lea.vmem %s1, 256
        %v456 = vld [vmem:[%s455] sm:$0xff]
        %v457 = vld [vmem:[%s455 + $0x8] sm:$0xff]
        %v458 = vld [vmem:[%s455 + $0x10] sm:$0xff]
        %v459 = vld [vmem:[%s455 + $0x18] sm:$0xff]
        %v460 = vld [vmem:[%s455 + $0x20] sm:$0xff]
        %v461 = vld [vmem:[%s455 + $0x28] sm:$0xff]
        %v462 = vld [vmem:[%s455 + $0x30] sm:$0xff]
        %v463 = vld [vmem:[%s455 + $0x38] sm:$0xff]
        %v464 = vld [vmem:[%s455 + $0x40] sm:$0xff]
        %v465 = vld [vmem:[%s455 + $0x48] sm:$0xff]
        %v466 = vld [vmem:[%s455 + $0x50] sm:$0xff]
        %v467 = vld [vmem:[%s455 + $0x58] sm:$0xff]
        %v468 = vld [vmem:[%s455 + $0x60] sm:$0xff]
        %v469 = vld [vmem:[%s455 + $0x68] sm:$0xff]
        %v470 = vld [vmem:[%s455 + $0x70] sm:$0xff]
        %v471 = vld [vmem:[%s455 + $0x78] sm:$0xff]
        %v472 = vld [vmem:[%s455 + $0x80] sm:$0xff]
        %v473 = vld [vmem:[%s455 + $0x88] sm:$0xff]
        %v474 = vld [vmem:[%s455 + $0x90] sm:$0xff]
        %v475 = vld [vmem:[%s455 + $0x98] sm:$0xff]
        %v476 = vld [vmem:[%s455 + $0xa0] sm:$0xff]
        %v477 = vld [vmem:[%s455 + $0xa8] sm:$0xff]
        %v478 = vld [vmem:[%s455 + $0xb0] sm:$0xff]
        %v479 = vld [vmem:[%s455 + $0xb8] sm:$0xff]
        %v480 = vld [vmem:[%s455 + $0xc0] sm:$0xff]
        %v481 = vld [vmem:[%s455 + $0xc8] sm:$0xff]
        %v482 = vld [vmem:[%s455 + $0xd0] sm:$0xff]
        %v483 = vld [vmem:[%s455 + $0xd8] sm:$0xff]
        %v484 = vld [vmem:[%s455 + $0xe0] sm:$0xff]
        %v485 = vld [vmem:[%s455 + $0xe8] sm:$0xff]
        %v486 = vld [vmem:[%s455 + $0xf0] sm:$0xff]
        %v487 = vld [vmem:[%s455 + $0xf8] sm:$0xff]
        %v522 = vunpack.c.l.b16 %v388
        %v523 = vunpack.c.l.b16 %v389
        %v524 = vunpack.c.l.b16 %v390
        %v525 = vunpack.c.l.b16 %v391
        %v526 = vunpack.c.l.b16 %v392
        %v527 = vunpack.c.l.b16 %v393
        %v528 = vunpack.c.l.b16 %v394
        %v529 = vunpack.c.l.b16 %v395
        %v530 = vunpack.c.l.b16 %v396
        %v531 = vunpack.c.l.b16 %v397
        %v532 = vunpack.c.l.b16 %v398
        %v533 = vunpack.c.l.b16 %v399
        %v534 = vunpack.c.l.b16 %v400
        %v535 = vunpack.c.l.b16 %v401
        %v536 = vunpack.c.l.b16 %v402
        %v537 = vunpack.c.l.b16 %v403
        %v538 = vunpack.c.l.b16 %v404
        %v539 = vunpack.c.l.b16 %v405
        %v540 = vunpack.c.l.b16 %v406
        %v541 = vunpack.c.l.b16 %v407
        %v542 = vunpack.c.l.b16 %v408
        %v543 = vunpack.c.l.b16 %v409
        %v544 = vunpack.c.l.b16 %v410
        %v545 = vunpack.c.l.b16 %v411
        %v546 = vunpack.c.l.b16 %v412
        %v547 = vunpack.c.l.b16 %v413
        %v548 = vunpack.c.l.b16 %v414
        %v549 = vunpack.c.l.b16 %v415
        %v550 = vunpack.c.l.b16 %v416
        %v551 = vunpack.c.l.b16 %v417
        %v552 = vunpack.c.l.b16 %v418
        %v553 = vunpack.c.l.b16 %v419
        %v554 = vunpack.c.l.b16 %v420
        %v555 = vunpack.c.l.b16 %v454
        %v556 = vpack.c.b16 %v523, %v522
        %v557 = vpack.c.b16 %v525, %v524
        %v558 = vpack.c.b16 %v527, %v526
        %v559 = vpack.c.b16 %v529, %v528
        %v560 = vpack.c.b16 %v531, %v530
        %v561 = vpack.c.b16 %v533, %v532
        %v562 = vpack.c.b16 %v535, %v534
        %v563 = vpack.c.b16 %v537, %v536
        %v564 = vpack.c.b16 %v539, %v538
        %v565 = vpack.c.b16 %v541, %v540
        %v566 = vpack.c.b16 %v543, %v542
        %v567 = vpack.c.b16 %v545, %v544
        %v568 = vpack.c.b16 %v547, %v546
        %v569 = vpack.c.b16 %v549, %v548
        %v570 = vpack.c.b16 %v551, %v550
        %v571 = vpack.c.b16 %v553, %v552
        %v572 = vpack.c.b16 %v555, %v554
        %vm573 = vsmask.f32 7424
        %v575 = vshrl.u32 %v556, 16
        %v577 = vshll.u32 %v556, 16
        %v579 = vrot.slane %v577, 1
        %v580 = vor.u32 %v575, %v579
        %v582 = vshll.u32 %v557, 16
        %v584 = vrot.slane %v582, 1
        %v585 = vsel %vm573, %v580, %v584
        %v586 = vshrl.u32 %v557, 16
        %v588 = vor.u32 %v586, %v584
        %v590 = vshll.u32 %v558, 16
        %v592 = vrot.slane %v590, 1
        %v593 = vsel %vm573, %v588, %v592
        %v594 = vshrl.u32 %v558, 16
        %v596 = vor.u32 %v594, %v592
        %v598 = vshll.u32 %v559, 16
        %v600 = vrot.slane %v598, 1
        %v601 = vsel %vm573, %v596, %v600
        %v602 = vshrl.u32 %v559, 16
        %v604 = vor.u32 %v602, %v600
        %v606 = vshll.u32 %v560, 16
        %v608 = vrot.slane %v606, 1
        %v609 = vsel %vm573, %v604, %v608
        %v610 = vshrl.u32 %v560, 16
        %v612 = vor.u32 %v610, %v608
        %v614 = vshll.u32 %v561, 16
        %v616 = vrot.slane %v614, 1
        %v617 = vsel %vm573, %v612, %v616
        %v618 = vshrl.u32 %v561, 16
        %v620 = vor.u32 %v618, %v616
        %v622 = vshll.u32 %v562, 16
        %v624 = vrot.slane %v622, 1
        %v625 = vsel %vm573, %v620, %v624
        %v626 = vshrl.u32 %v562, 16
        %v628 = vor.u32 %v626, %v624
        %v630 = vshll.u32 %v563, 16
        %v632 = vrot.slane %v630, 1
        %v633 = vsel %vm573, %v628, %v632
        %v634 = vshrl.u32 %v563, 16
        %v636 = vor.u32 %v634, %v632
        %v638 = vshll.u32 %v564, 16
        %v640 = vrot.slane %v638, 1
        %v641 = vsel %vm573, %v636, %v640
        %v642 = vshrl.u32 %v564, 16
        %v644 = vor.u32 %v642, %v640
        %v646 = vshll.u32 %v565, 16
        %v648 = vrot.slane %v646, 1
        %v649 = vsel %vm573, %v644, %v648
        %v650 = vshrl.u32 %v565, 16
        %v652 = vor.u32 %v650, %v648
        %v654 = vshll.u32 %v566, 16
        %v656 = vrot.slane %v654, 1
        %v657 = vsel %vm573, %v652, %v656
        %v658 = vshrl.u32 %v566, 16
        %v660 = vor.u32 %v658, %v656
        %v662 = vshll.u32 %v567, 16
        %v664 = vrot.slane %v662, 1
        %v665 = vsel %vm573, %v660, %v664
        %v666 = vshrl.u32 %v567, 16
        %v668 = vor.u32 %v666, %v664
        %v670 = vshll.u32 %v568, 16
        %v672 = vrot.slane %v670, 1
        %v673 = vsel %vm573, %v668, %v672
        %v674 = vshrl.u32 %v568, 16
        %v676 = vor.u32 %v674, %v672
        %v678 = vshll.u32 %v569, 16
        %v680 = vrot.slane %v678, 1
        %v681 = vsel %vm573, %v676, %v680
        %v682 = vshrl.u32 %v569, 16
        %v684 = vor.u32 %v682, %v680
        %v686 = vshll.u32 %v570, 16
        %v688 = vrot.slane %v686, 1
        %v689 = vsel %vm573, %v684, %v688
        %v690 = vshrl.u32 %v570, 16
        %v692 = vor.u32 %v690, %v688
        %v694 = vshll.u32 %v571, 16
        %v696 = vrot.slane %v694, 1
        %v697 = vsel %vm573, %v692, %v696
        %v698 = vshrl.u32 %v571, 16
        %v700 = vor.u32 %v698, %v696
        %v702 = vshll.u32 %v572, 16
        %v704 = vrot.slane %v702, 1
        %v705 = vsel %vm573, %v700, %v704
        %v706 = vshrl.u32 %v572, 16
        %v708 = vor.u32 %v706, %v704
        %v758 = vunpack.c.l.b16 %v456
        %v759 = vunpack.c.h.b16 %v456
        %v760 = vunpack.c.l.b16 %v457
        %v761 = vunpack.c.h.b16 %v457
        %v762 = vunpack.c.l.b16 %v458
        %v763 = vunpack.c.h.b16 %v458
        %v764 = vunpack.c.l.b16 %v459
        %v765 = vunpack.c.h.b16 %v459
        %v766 = vunpack.c.l.b16 %v460
        %v767 = vunpack.c.h.b16 %v460
        %v768 = vunpack.c.l.b16 %v461
        %v769 = vunpack.c.h.b16 %v461
        %v770 = vunpack.c.l.b16 %v462
        %v771 = vunpack.c.h.b16 %v462
        %v772 = vunpack.c.l.b16 %v463
        %v773 = vunpack.c.h.b16 %v463
        %v774 = vunpack.c.l.b16 %v464
        %v775 = vunpack.c.h.b16 %v464
        %v776 = vunpack.c.l.b16 %v465
        %v777 = vunpack.c.h.b16 %v465
        %v778 = vunpack.c.l.b16 %v466
        %v779 = vunpack.c.h.b16 %v466
        %v780 = vunpack.c.l.b16 %v467
        %v781 = vunpack.c.h.b16 %v467
        %v782 = vunpack.c.l.b16 %v468
        %v783 = vunpack.c.h.b16 %v468
        %v784 = vunpack.c.l.b16 %v469
        %v785 = vunpack.c.h.b16 %v469
        %v786 = vunpack.c.l.b16 %v470
        %v787 = vunpack.c.h.b16 %v470
        %v788 = vunpack.c.l.b16 %v471
        %v789 = vunpack.c.h.b16 %v471
        %v790 = vunpack.c.l.b16 %v472
        %v791 = vunpack.c.h.b16 %v472
        %v792 = vunpack.c.l.b16 %v473
        %v793 = vunpack.c.h.b16 %v473
        %v794 = vunpack.c.l.b16 %v474
        %v795 = vunpack.c.h.b16 %v474
        %v796 = vunpack.c.l.b16 %v475
        %v797 = vunpack.c.h.b16 %v475
        %v798 = vunpack.c.l.b16 %v476
        %v799 = vunpack.c.h.b16 %v476
        %v800 = vunpack.c.l.b16 %v477
        %v801 = vunpack.c.h.b16 %v477
        %v802 = vunpack.c.l.b16 %v478
        %v803 = vunpack.c.h.b16 %v478
        %v804 = vunpack.c.l.b16 %v479
        %v805 = vunpack.c.h.b16 %v479
        %v806 = vunpack.c.l.b16 %v480
        %v807 = vunpack.c.h.b16 %v480
        %v808 = vunpack.c.l.b16 %v481
        %v809 = vunpack.c.h.b16 %v481
        %v810 = vunpack.c.l.b16 %v482
        %v811 = vunpack.c.h.b16 %v482
        %v812 = vunpack.c.l.b16 %v483
        %v813 = vunpack.c.h.b16 %v483
        %v814 = vunpack.c.l.b16 %v484
        %v815 = vunpack.c.h.b16 %v484
        %v816 = vunpack.c.l.b16 %v485
        %v817 = vunpack.c.h.b16 %v485
        %v818 = vunpack.c.l.b16 %v486
        %v819 = vunpack.c.h.b16 %v486
        %v820 = vunpack.c.l.b16 %v487
        %v821 = vunpack.c.h.b16 %v487
        %v822 = vpack.c.b16 %v762, %v758
        %v823 = vpack.c.b16 %v763, %v759
        %v824 = vpack.c.b16 %v764, %v760
        %v825 = vpack.c.b16 %v765, %v761
        %v826 = vpack.c.b16 %v770, %v766
        %v827 = vpack.c.b16 %v771, %v767
        %v828 = vpack.c.b16 %v772, %v768
        %v829 = vpack.c.b16 %v773, %v769
        %v830 = vpack.c.b16 %v778, %v774
        %v831 = vpack.c.b16 %v779, %v775
        %v832 = vpack.c.b16 %v780, %v776
        %v833 = vpack.c.b16 %v781, %v777
        %v834 = vpack.c.b16 %v786, %v782
        %v835 = vpack.c.b16 %v787, %v783
        %v836 = vpack.c.b16 %v788, %v784
        %v837 = vpack.c.b16 %v789, %v785
        %v838 = vpack.c.b16 %v794, %v790
        %v839 = vpack.c.b16 %v795, %v791
        %v840 = vpack.c.b16 %v796, %v792
        %v841 = vpack.c.b16 %v797, %v793
        %v842 = vpack.c.b16 %v802, %v798
        %v843 = vpack.c.b16 %v803, %v799
        %v844 = vpack.c.b16 %v804, %v800
        %v845 = vpack.c.b16 %v805, %v801
        %v846 = vpack.c.b16 %v810, %v806
        %v847 = vpack.c.b16 %v811, %v807
        %v848 = vpack.c.b16 %v812, %v808
        %v849 = vpack.c.b16 %v813, %v809
        %v850 = vpack.c.b16 %v818, %v814
        %v851 = vpack.c.b16 %v819, %v815
        %v852 = vpack.c.b16 %v820, %v816
        %v853 = vpack.c.b16 %v821, %v817
        %886 = vmatprep.subr.bf16.mxu0 %v823
        %887 = vmatpush1.bf16.msra.mxu0 %v822
        %888 = vmatprep.subr.bf16.mxu0 %v827
        %889 = vmatpush1.bf16.msra.mxu0 %v826
        %890 = vmatprep.subr.bf16.mxu0 %v831
        %891 = vmatpush1.bf16.msra.mxu0 %v830
        %892 = vmatprep.subr.bf16.mxu0 %v835
        %893 = vmatpush1.bf16.msra.mxu0 %v834
        %894 = vmatprep.subr.bf16.mxu0 %v839
        %895 = vmatpush1.bf16.msra.mxu0 %v838
        %896 = vmatprep.subr.bf16.mxu0 %v843
        %897 = vmatpush1.bf16.msra.mxu0 %v842
        %898 = vmatprep.subr.bf16.mxu0 %v847
        %899 = vmatpush1.bf16.msra.mxu0 %v846
        %900 = vmatprep.subr.bf16.mxu0 %v851
        %901 = vmatpush1.bf16.msra.mxu0 %v850
        %902 = vmatprep.subr.bf16.mxu0 0
        %903 = vmatpush1.bf16.msra.mxu0 0
        %904 = vmatprep.subr.bf16.mxu0 0
        %905 = vmatpush1.bf16.msra.mxu0 0
        %906 = vmatprep.subr.bf16.mxu0 0
        %907 = vmatpush1.bf16.msra.mxu0 0
        %908 = vmatprep.subr.bf16.mxu0 0
        %909 = vmatpush1.bf16.msra.mxu0 0
        %910 = vmatprep.subr.bf16.mxu0 0
        %911 = vmatpush1.bf16.msra.mxu0 0
        %912 = vmatprep.subr.bf16.mxu0 0
        %913 = vmatpush1.bf16.msra.mxu0 0
        %914 = vmatprep.subr.bf16.mxu0 0
        %915 = vmatpush1.bf16.msra.mxu0 0
        %916 = vmatprep.subr.bf16.mxu0 0
        %917 = vmatpush1.bf16.msra.mxu0 0
        %918 = vmatprep.mubr.bf16.mxu0 0
        %919 = vmatmul.mubr.bf16.gmra.mrb[0].mxu0 %v585
        %v920 = vpop.f32.mrb[0].mxu0
        %v921 = vadd.f32 0.0, %v920
        %v922 = vpop.f32.mrb[0].mxu0
        %v923 = vadd.f32 0.0, %v922
        %v924 = vpop.f32.mrb[0].mxu0
        %v925 = vadd.f32 0.0, %v924
        %v926 = vpop.f32.mrb[0].mxu0
        %v927 = vadd.f32 0.0, %v926
        %928 = vmatprep.mubr.bf16.mxu0 0
        %929 = vmatmul.mubr.bf16.gmra.mrb[0].mxu0 %v593
        %v930 = vpop.f32.mrb[0].mxu0
        %v931 = vadd.f32 0.0, %v930
        %v932 = vpop.f32.mrb[0].mxu0
        %v933 = vadd.f32 0.0, %v932
        %v934 = vpop.f32.mrb[0].mxu0
        %v935 = vadd.f32 0.0, %v934
        %v936 = vpop.f32.mrb[0].mxu0
        %v937 = vadd.f32 0.0, %v936
        %938 = vmatprep.mubr.bf16.mxu0 0
        %939 = vmatmul.mubr.bf16.gmra.mrb[0].mxu0 %v601
        %v940 = vpop.f32.mrb[0].mxu0
        %v941 = vadd.f32 0.0, %v940
        %v942 = vpop.f32.mrb[0].mxu0
        %v943 = vadd.f32 0.0, %v942
        %v944 = vpop.f32.mrb[0].mxu0
        %v945 = vadd.f32 0.0, %v944
        %v946 = vpop.f32.mrb[0].mxu0
        %v947 = vadd.f32 0.0, %v946
        %948 = vmatprep.mubr.bf16.mxu0 0
        %949 = vmatmul.mubr.bf16.gmra.mrb[0].mxu0 %v609
        %v950 = vpop.f32.mrb[0].mxu0
        %v951 = vadd.f32 0.0, %v950
        %v952 = vpop.f32.mrb[0].mxu0
        %v953 = vadd.f32 0.0, %v952
        %v954 = vpop.f32.mrb[0].mxu0
        %v955 = vadd.f32 0.0, %v954
        %v956 = vpop.f32.mrb[0].mxu0
        %v957 = vadd.f32 0.0, %v956
        %958 = vmatprep.mubr.bf16.mxu0 0
        %959 = vmatmul.mubr.bf16.gmra.mrb[0].mxu0 %v617
        %v960 = vpop.f32.mrb[0].mxu0
        %v961 = vadd.f32 0.0, %v960
        %v962 = vpop.f32.mrb[0].mxu0
        %v963 = vadd.f32 0.0, %v962
        %v964 = vpop.f32.mrb[0].mxu0
        %v965 = vadd.f32 0.0, %v964
        %v966 = vpop.f32.mrb[0].mxu0
        %v967 = vadd.f32 0.0, %v966
        %968 = vmatprep.mubr.bf16.mxu0 0
        %969 = vmatmul.mubr.bf16.gmra.mrb[0].mxu0 %v625
        %v970 = vpop.f32.mrb[0].mxu0
        %v971 = vadd.f32 0.0, %v970
        %v972 = vpop.f32.mrb[0].mxu0
        %v973 = vadd.f32 0.0, %v972
        %v974 = vpop.f32.mrb[0].mxu0
        %v975 = vadd.f32 0.0, %v974
        %v976 = vpop.f32.mrb[0].mxu0
        %v977 = vadd.f32 0.0, %v976
        %978 = vmatprep.mubr.bf16.mxu0 0
        %979 = vmatmul.mubr.bf16.gmra.mrb[0].mxu0 %v633
        %v980 = vpop.f32.mrb[0].mxu0
        %v981 = vadd.f32 0.0, %v980
        %v982 = vpop.f32.mrb[0].mxu0
        %v983 = vadd.f32 0.0, %v982
        %v984 = vpop.f32.mrb[0].mxu0
        %v985 = vadd.f32 0.0, %v984
        %v986 = vpop.f32.mrb[0].mxu0
        %v987 = vadd.f32 0.0, %v986
        %988 = vmatprep.mubr.bf16.mxu0 0
        %989 = vmatmul.mubr.bf16.gmra.mrb[0].mxu0 %v641
        %v990 = vpop.f32.mrb[0].mxu0
        %v991 = vadd.f32 0.0, %v990
        %v992 = vpop.f32.mrb[0].mxu0
        %v993 = vadd.f32 0.0, %v992
        %v994 = vpop.f32.mrb[0].mxu0
        %v995 = vadd.f32 0.0, %v994
        %v996 = vpop.f32.mrb[0].mxu0
        %v997 = vadd.f32 0.0, %v996
        %998 = vmatprep.mubr.bf16.mxu0 0
        %999 = vmatmul.mubr.bf16.gmra.mrb[0].mxu0 %v649
        %v1000 = vpop.f32.mrb[0].mxu0
        %v1001 = vadd.f32 0.0, %v1000
        %v1002 = vpop.f32.mrb[0].mxu0
        %v1003 = vadd.f32 0.0, %v1002
        %v1004 = vpop.f32.mrb[0].mxu0
        %v1005 = vadd.f32 0.0, %v1004
        %v1006 = vpop.f32.mrb[0].mxu0
        %v1007 = vadd.f32 0.0, %v1006
        %1008 = vmatprep.mubr.bf16.mxu0 0
        %1009 = vmatmul.mubr.bf16.gmra.mrb[0].mxu0 %v657
        %v1010 = vpop.f32.mrb[0].mxu0
        %v1011 = vadd.f32 0.0, %v1010
        %v1012 = vpop.f32.mrb[0].mxu0
        %v1013 = vadd.f32 0.0, %v1012
        %v1014 = vpop.f32.mrb[0].mxu0
        %v1015 = vadd.f32 0.0, %v1014
        %v1016 = vpop.f32.mrb[0].mxu0
        %v1017 = vadd.f32 0.0, %v1016
        %1018 = vmatprep.mubr.bf16.mxu0 0
        %1019 = vmatmul.mubr.bf16.gmra.mrb[0].mxu0 %v665
        %v1020 = vpop.f32.mrb[0].mxu0
        %v1021 = vadd.f32 0.0, %v1020
        %v1022 = vpop.f32.mrb[0].mxu0
        %v1023 = vadd.f32 0.0, %v1022
        %v1024 = vpop.f32.mrb[0].mxu0
        %v1025 = vadd.f32 0.0, %v1024
        %v1026 = vpop.f32.mrb[0].mxu0
        %v1027 = vadd.f32 0.0, %v1026
        %1028 = vmatprep.mubr.bf16.mxu0 0
        %1029 = vmatmul.mubr.bf16.gmra.mrb[0].mxu0 %v673
        %v1030 = vpop.f32.mrb[0].mxu0
        %v1031 = vadd.f32 0.0, %v1030
        %v1032 = vpop.f32.mrb[0].mxu0
        %v1033 = vadd.f32 0.0, %v1032
        %v1034 = vpop.f32.mrb[0].mxu0
        %v1035 = vadd.f32 0.0, %v1034
        %v1036 = vpop.f32.mrb[0].mxu0
        %v1037 = vadd.f32 0.0, %v1036
        %1038 = vmatprep.mubr.bf16.mxu0 0
        %1039 = vmatmul.mubr.bf16.gmra.mrb[0].mxu0 %v681
        %v1040 = vpop.f32.mrb[0].mxu0
        %v1041 = vadd.f32 0.0, %v1040
        %v1042 = vpop.f32.mrb[0].mxu0
        %v1043 = vadd.f32 0.0, %v1042
        %v1044 = vpop.f32.mrb[0].mxu0
        %v1045 = vadd.f32 0.0, %v1044
        %v1046 = vpop.f32.mrb[0].mxu0
        %v1047 = vadd.f32 0.0, %v1046
        %1048 = vmatprep.mubr.bf16.mxu0 0
        %1049 = vmatmul.mubr.bf16.gmra.mrb[0].mxu0 %v689
        %v1050 = vpop.f32.mrb[0].mxu0
        %v1051 = vadd.f32 0.0, %v1050
        %v1052 = vpop.f32.mrb[0].mxu0
        %v1053 = vadd.f32 0.0, %v1052
        %v1054 = vpop.f32.mrb[0].mxu0
        %v1055 = vadd.f32 0.0, %v1054
        %v1056 = vpop.f32.mrb[0].mxu0
        %v1057 = vadd.f32 0.0, %v1056
        %1058 = vmatprep.mubr.bf16.mxu0 0
        %1059 = vmatmul.mubr.bf16.gmra.mrb[0].mxu0 %v697
        %v1060 = vpop.f32.mrb[0].mxu0
        %v1061 = vadd.f32 0.0, %v1060
        %v1062 = vpop.f32.mrb[0].mxu0
        %v1063 = vadd.f32 0.0, %v1062
        %v1064 = vpop.f32.mrb[0].mxu0
        %v1065 = vadd.f32 0.0, %v1064
        %v1066 = vpop.f32.mrb[0].mxu0
        %v1067 = vadd.f32 0.0, %v1066
        %1068 = vmatprep.mubr.bf16.mxu0 0
        %1069 = vmatmul.mubr.bf16.gmra.mrb[0].mxu0 %v705
        %v1070 = vpop.f32.mrb[0].mxu0
        %v1071 = vadd.f32 0.0, %v1070
        %v1072 = vpop.f32.mrb[0].mxu0
        %v1073 = vadd.f32 0.0, %v1072
        %v1074 = vpop.f32.mrb[0].mxu0
        %v1075 = vadd.f32 0.0, %v1074
        %v1076 = vpop.f32.mrb[0].mxu0
        %v1077 = vadd.f32 0.0, %v1076
        %1078 = vmatprep.mubr.bf16.mxu0 0
        %1079 = vmatmul.mubr.bf16.gmra.mrb[0].mxu0 %v708
        %v1080 = vpop.f32.mrb[0].mxu0
        %v1081 = vadd.f32 0.0, %v1080
        %v1082 = vpop.f32.mrb[0].mxu0
        %v1083 = vadd.f32 0.0, %v1082
        %v1084 = vpop.f32.mrb[0].mxu0
        %v1085 = vadd.f32 0.0, %v1084
        %v1086 = vpop.f32.mrb[0].mxu0
        %v1087 = vadd.f32 0.0, %v1086
        %1088 = vdwg.mxu0
        %1089 = vmatprep.subr.bf16.mxu0 %v825
        %1090 = vmatpush1.bf16.msra.mxu0 %v824
        %1091 = vmatprep.subr.bf16.mxu0 %v829
        %1092 = vmatpush1.bf16.msra.mxu0 %v828
        %1093 = vmatprep.subr.bf16.mxu0 %v833
        %1094 = vmatpush1.bf16.msra.mxu0 %v832
        %1095 = vmatprep.subr.bf16.mxu0 %v837
        %1096 = vmatpush1.bf16.msra.mxu0 %v836
        %1097 = vmatprep.subr.bf16.mxu0 %v841
        %1098 = vmatpush1.bf16.msra.mxu0 %v840
        %1099 = vmatprep.subr.bf16.mxu0 %v845
        %1100 = vmatpush1.bf16.msra.mxu0 %v844
        %1101 = vmatprep.subr.bf16.mxu0 %v849
        %1102 = vmatpush1.bf16.msra.mxu0 %v848
        %1103 = vmatprep.subr.bf16.mxu0 %v853
        %1104 = vmatpush1.bf16.msra.mxu0 %v852
        %1105 = vmatprep.subr.bf16.mxu0 0
        %1106 = vmatpush1.bf16.msra.mxu0 0
        %1107 = vmatprep.subr.bf16.mxu0 0
        %1108 = vmatpush1.bf16.msra.mxu0 0
        %1109 = vmatprep.subr.bf16.mxu0 0
        %1110 = vmatpush1.bf16.msra.mxu0 0
        %1111 = vmatprep.subr.bf16.mxu0 0
        %1112 = vmatpush1.bf16.msra.mxu0 0
        %1113 = vmatprep.subr.bf16.mxu0 0
        %1114 = vmatpush1.bf16.msra.mxu0 0
        %1115 = vmatprep.subr.bf16.mxu0 0
        %1116 = vmatpush1.bf16.msra.mxu0 0
        %1117 = vmatprep.subr.bf16.mxu0 0
        %1118 = vmatpush1.bf16.msra.mxu0 0
        %1119 = vmatprep.subr.bf16.mxu0 0
        %1120 = vmatpush1.bf16.msra.mxu0 0
        %1121 = vmatprep.mubr.bf16.mxu0 0
        %1122 = vmatmul.mubr.bf16.gmra.mrb[0].mxu0 %v585
        %v1123 = vpop.f32.mrb[0].mxu0
        %v1124 = vadd.f32 0.0, %v1123
        %v1125 = vpop.f32.mrb[0].mxu0
        %v1126 = vadd.f32 0.0, %v1125
        %v1127 = vpop.f32.mrb[0].mxu0
        %v1128 = vadd.f32 0.0, %v1127
        %v1129 = vpop.f32.mrb[0].mxu0
        %v1130 = vadd.f32 0.0, %v1129
        %1131 = vmatprep.mubr.bf16.mxu0 0
        %1132 = vmatmul.mubr.bf16.gmra.mrb[0].mxu0 %v593
        %v1133 = vpop.f32.mrb[0].mxu0
        %v1134 = vadd.f32 0.0, %v1133
        %v1135 = vpop.f32.mrb[0].mxu0
        %v1136 = vadd.f32 0.0, %v1135
        %v1137 = vpop.f32.mrb[0].mxu0
        %v1138 = vadd.f32 0.0, %v1137
        %v1139 = vpop.f32.mrb[0].mxu0
        %v1140 = vadd.f32 0.0, %v1139
        %1141 = vmatprep.mubr.bf16.mxu0 0
        %1142 = vmatmul.mubr.bf16.gmra.mrb[0].mxu0 %v601
        %v1143 = vpop.f32.mrb[0].mxu0
        %v1144 = vadd.f32 0.0, %v1143
        %v1145 = vpop.f32.mrb[0].mxu0
        %v1146 = vadd.f32 0.0, %v1145
        %v1147 = vpop.f32.mrb[0].mxu0
        %v1148 = vadd.f32 0.0, %v1147
        %v1149 = vpop.f32.mrb[0].mxu0
        %v1150 = vadd.f32 0.0, %v1149
        %1151 = vmatprep.mubr.bf16.mxu0 0
        %1152 = vmatmul.mubr.bf16.gmra.mrb[0].mxu0 %v609
        %v1153 = vpop.f32.mrb[0].mxu0
        %v1154 = vadd.f32 0.0, %v1153
        %v1155 = vpop.f32.mrb[0].mxu0
        %v1156 = vadd.f32 0.0, %v1155
        %v1157 = vpop.f32.mrb[0].mxu0
        %v1158 = vadd.f32 0.0, %v1157
        %v1159 = vpop.f32.mrb[0].mxu0
        %v1160 = vadd.f32 0.0, %v1159
        %1161 = vmatprep.mubr.bf16.mxu0 0
        %1162 = vmatmul.mubr.bf16.gmra.mrb[0].mxu0 %v617
        %v1163 = vpop.f32.mrb[0].mxu0
        %v1164 = vadd.f32 0.0, %v1163
        %v1165 = vpop.f32.mrb[0].mxu0
        %v1166 = vadd.f32 0.0, %v1165
        %v1167 = vpop.f32.mrb[0].mxu0
        %v1168 = vadd.f32 0.0, %v1167
        %v1169 = vpop.f32.mrb[0].mxu0
        %v1170 = vadd.f32 0.0, %v1169
        %1171 = vmatprep.mubr.bf16.mxu0 0
        %1172 = vmatmul.mubr.bf16.gmra.mrb[0].mxu0 %v625
        %v1173 = vpop.f32.mrb[0].mxu0
        %v1174 = vadd.f32 0.0, %v1173
        %v1175 = vpop.f32.mrb[0].mxu0
        %v1176 = vadd.f32 0.0, %v1175
        %v1177 = vpop.f32.mrb[0].mxu0
        %v1178 = vadd.f32 0.0, %v1177
        %v1179 = vpop.f32.mrb[0].mxu0
        %v1180 = vadd.f32 0.0, %v1179
        %1181 = vmatprep.mubr.bf16.mxu0 0
        %1182 = vmatmul.mubr.bf16.gmra.mrb[0].mxu0 %v633
        %v1183 = vpop.f32.mrb[0].mxu0
        %v1184 = vadd.f32 0.0, %v1183
        %v1185 = vpop.f32.mrb[0].mxu0
        %v1186 = vadd.f32 0.0, %v1185
        %v1187 = vpop.f32.mrb[0].mxu0
        %v1188 = vadd.f32 0.0, %v1187
        %v1189 = vpop.f32.mrb[0].mxu0
        %v1190 = vadd.f32 0.0, %v1189
        %1191 = vmatprep.mubr.bf16.mxu0 0
        %1192 = vmatmul.mubr.bf16.gmra.mrb[0].mxu0 %v641
        %v1193 = vpop.f32.mrb[0].mxu0
        %v1194 = vadd.f32 0.0, %v1193
        %v1195 = vpop.f32.mrb[0].mxu0
        %v1196 = vadd.f32 0.0, %v1195
        %v1197 = vpop.f32.mrb[0].mxu0
        %v1198 = vadd.f32 0.0, %v1197
        %v1199 = vpop.f32.mrb[0].mxu0
        %v1200 = vadd.f32 0.0, %v1199
        %1201 = vmatprep.mubr.bf16.mxu0 0
        %1202 = vmatmul.mubr.bf16.gmra.mrb[0].mxu0 %v649
        %v1203 = vpop.f32.mrb[0].mxu0
        %v1204 = vadd.f32 0.0, %v1203
        %v1205 = vpop.f32.mrb[0].mxu0
        %v1206 = vadd.f32 0.0, %v1205
        %v1207 = vpop.f32.mrb[0].mxu0
        %v1208 = vadd.f32 0.0, %v1207
        %v1209 = vpop.f32.mrb[0].mxu0
        %v1210 = vadd.f32 0.0, %v1209
        %1211 = vmatprep.mubr.bf16.mxu0 0
        %1212 = vmatmul.mubr.bf16.gmra.mrb[0].mxu0 %v657
        %v1213 = vpop.f32.mrb[0].mxu0
        %v1214 = vadd.f32 0.0, %v1213
        %v1215 = vpop.f32.mrb[0].mxu0
        %v1216 = vadd.f32 0.0, %v1215
        %v1217 = vpop.f32.mrb[0].mxu0
        %v1218 = vadd.f32 0.0, %v1217
        %v1219 = vpop.f32.mrb[0].mxu0
        %v1220 = vadd.f32 0.0, %v1219
        %1221 = vmatprep.mubr.bf16.mxu0 0
        %1222 = vmatmul.mubr.bf16.gmra.mrb[0].mxu0 %v665
        %v1223 = vpop.f32.mrb[0].mxu0
        %v1224 = vadd.f32 0.0, %v1223
        %v1225 = vpop.f32.mrb[0].mxu0
        %v1226 = vadd.f32 0.0, %v1225
        %v1227 = vpop.f32.mrb[0].mxu0
        %v1228 = vadd.f32 0.0, %v1227
        %v1229 = vpop.f32.mrb[0].mxu0
        %v1230 = vadd.f32 0.0, %v1229
        %1231 = vmatprep.mubr.bf16.mxu0 0
        %1232 = vmatmul.mubr.bf16.gmra.mrb[0].mxu0 %v673
        %v1233 = vpop.f32.mrb[0].mxu0
        %v1234 = vadd.f32 0.0, %v1233
        %v1235 = vpop.f32.mrb[0].mxu0
        %v1236 = vadd.f32 0.0, %v1235
        %v1237 = vpop.f32.mrb[0].mxu0
        %v1238 = vadd.f32 0.0, %v1237
        %v1239 = vpop.f32.mrb[0].mxu0
        %v1240 = vadd.f32 0.0, %v1239
        %1241 = vmatprep.mubr.bf16.mxu0 0
        %1242 = vmatmul.mubr.bf16.gmra.mrb[0].mxu0 %v681
        %v1243 = vpop.f32.mrb[0].mxu0
        %v1244 = vadd.f32 0.0, %v1243
        %v1245 = vpop.f32.mrb[0].mxu0
        %v1246 = vadd.f32 0.0, %v1245
        %v1247 = vpop.f32.mrb[0].mxu0
        %v1248 = vadd.f32 0.0, %v1247
        %v1249 = vpop.f32.mrb[0].mxu0
        %v1250 = vadd.f32 0.0, %v1249
        %1251 = vmatprep.mubr.bf16.mxu0 0
        %1252 = vmatmul.mubr.bf16.gmra.mrb[0].mxu0 %v689
        %v1253 = vpop.f32.mrb[0].mxu0
        %v1254 = vadd.f32 0.0, %v1253
        %v1255 = vpop.f32.mrb[0].mxu0
        %v1256 = vadd.f32 0.0, %v1255
        %v1257 = vpop.f32.mrb[0].mxu0
        %v1258 = vadd.f32 0.0, %v1257
        %v1259 = vpop.f32.mrb[0].mxu0
        %v1260 = vadd.f32 0.0, %v1259
        %1261 = vmatprep.mubr.bf16.mxu0 0
        %1262 = vmatmul.mubr.bf16.gmra.mrb[0].mxu0 %v697
        %v1263 = vpop.f32.mrb[0].mxu0
        %v1264 = vadd.f32 0.0, %v1263
        %v1265 = vpop.f32.mrb[0].mxu0
        %v1266 = vadd.f32 0.0, %v1265
        %v1267 = vpop.f32.mrb[0].mxu0
        %v1268 = vadd.f32 0.0, %v1267
        %v1269 = vpop.f32.mrb[0].mxu0
        %v1270 = vadd.f32 0.0, %v1269
        %1271 = vmatprep.mubr.bf16.mxu0 0
        %1272 = vmatmul.mubr.bf16.gmra.mrb[0].mxu0 %v705
        %v1273 = vpop.f32.mrb[0].mxu0
        %v1274 = vadd.f32 0.0, %v1273
        %v1275 = vpop.f32.mrb[0].mxu0
        %v1276 = vadd.f32 0.0, %v1275
        %v1277 = vpop.f32.mrb[0].mxu0
        %v1278 = vadd.f32 0.0, %v1277
        %v1279 = vpop.f32.mrb[0].mxu0
        %v1280 = vadd.f32 0.0, %v1279
        %1281 = vmatprep.mubr.bf16.mxu0 0
        %1282 = vmatmul.mubr.bf16.gmra.mrb[0].mxu0 %v708
        %v1283 = vpop.f32.mrb[0].mxu0
        %v1284 = vadd.f32 0.0, %v1283
        %v1285 = vpop.f32.mrb[0].mxu0
        %v1286 = vadd.f32 0.0, %v1285
        %v1287 = vpop.f32.mrb[0].mxu0
        %v1288 = vadd.f32 0.0, %v1287
        %v1289 = vpop.f32.mrb[0].mxu0
        %v1290 = vadd.f32 0.0, %v1289
        %1291 = vdwg.mxu0
        %v1293 = vunpack.c.l.b16 %v421
        %v1294 = vpack.c.b16 %v1293, %v554
        %v1344 = vunpack.c.l.b16 %v422
        %v1345 = vunpack.c.h.b16 %v422
        %v1346 = vunpack.c.l.b16 %v423
        %v1347 = vunpack.c.h.b16 %v423
        %v1348 = vunpack.c.l.b16 %v424
        %v1349 = vunpack.c.h.b16 %v424
        %v1350 = vunpack.c.l.b16 %v425
        %v1351 = vunpack.c.h.b16 %v425
        %v1352 = vunpack.c.l.b16 %v426
        %v1353 = vunpack.c.h.b16 %v426
        %v1354 = vunpack.c.l.b16 %v427
        %v1355 = vunpack.c.h.b16 %v427
        %v1356 = vunpack.c.l.b16 %v428
        %v1357 = vunpack.c.h.b16 %v428
        %v1358 = vunpack.c.l.b16 %v429
        %v1359 = vunpack.c.h.b16 %v429
        %v1360 = vunpack.c.l.b16 %v430
        %v1361 = vunpack.c.h.b16 %v430
        %v1362 = vunpack.c.l.b16 %v431
        %v1363 = vunpack.c.h.b16 %v431
        %v1364 = vunpack.c.l.b16 %v432
        %v1365 = vunpack.c.h.b16 %v432
        %v1366 = vunpack.c.l.b16 %v433
        %v1367 = vunpack.c.h.b16 %v433
        %v1368 = vunpack.c.l.b16 %v434
        %v1369 = vunpack.c.h.b16 %v434
        %v1370 = vunpack.c.l.b16 %v435
        %v1371 = vunpack.c.h.b16 %v435
        %v1372 = vunpack.c.l.b16 %v436
        %v1373 = vunpack.c.h.b16 %v436
        %v1374 = vunpack.c.l.b16 %v437
        %v1375 = vunpack.c.h.b16 %v437
        %v1376 = vunpack.c.l.b16 %v438
        %v1377 = vunpack.c.h.b16 %v438
        %v1378 = vunpack.c.l.b16 %v439
        %v1379 = vunpack.c.h.b16 %v439
        %v1380 = vunpack.c.l.b16 %v440
        %v1381 = vunpack.c.h.b16 %v440
        %v1382 = vunpack.c.l.b16 %v441
        %v1383 = vunpack.c.h.b16 %v441
        %v1384 = vunpack.c.l.b16 %v442
        %v1385 = vunpack.c.h.b16 %v442
        %v1386 = vunpack.c.l.b16 %v443
        %v1387 = vunpack.c.h.b16 %v443
        %v1388 = vunpack.c.l.b16 %v444
        %v1389 = vunpack.c.h.b16 %v444
        %v1390 = vunpack.c.l.b16 %v445
        %v1391 = vunpack.c.h.b16 %v445
        %v1392 = vunpack.c.l.b16 %v446
        %v1393 = vunpack.c.h.b16 %v446
        %v1394 = vunpack.c.l.b16 %v447
        %v1395 = vunpack.c.h.b16 %v447
        %v1396 = vunpack.c.l.b16 %v448
        %v1397 = vunpack.c.h.b16 %v448
        %v1398 = vunpack.c.l.b16 %v449
        %v1399 = vunpack.c.h.b16 %v449
        %v1400 = vunpack.c.l.b16 %v450
        %v1401 = vunpack.c.h.b16 %v450
        %v1402 = vunpack.c.l.b16 %v451
        %v1403 = vunpack.c.h.b16 %v451
        %v1404 = vunpack.c.l.b16 %v452
        %v1405 = vunpack.c.h.b16 %v452
        %v1406 = vunpack.c.l.b16 %v453
        %v1407 = vunpack.c.h.b16 %v453
        %v1408 = vpack.c.b16 %v1348, %v1344
        %v1409 = vpack.c.b16 %v1349, %v1345
        %v1410 = vpack.c.b16 %v1350, %v1346
        %v1411 = vpack.c.b16 %v1351, %v1347
        %v1412 = vpack.c.b16 %v1356, %v1352
        %v1413 = vpack.c.b16 %v1357, %v1353
        %v1414 = vpack.c.b16 %v1358, %v1354
        %v1415 = vpack.c.b16 %v1359, %v1355
        %v1416 = vpack.c.b16 %v1364, %v1360
        %v1417 = vpack.c.b16 %v1365, %v1361
        %v1418 = vpack.c.b16 %v1366, %v1362
        %v1419 = vpack.c.b16 %v1367, %v1363
        %v1420 = vpack.c.b16 %v1372, %v1368
        %v1421 = vpack.c.b16 %v1373, %v1369
        %v1422 = vpack.c.b16 %v1374, %v1370
        %v1423 = vpack.c.b16 %v1375, %v1371
        %v1424 = vpack.c.b16 %v1380, %v1376
        %v1425 = vpack.c.b16 %v1381, %v1377
        %v1426 = vpack.c.b16 %v1382, %v1378
        %v1427 = vpack.c.b16 %v1383, %v1379
        %v1428 = vpack.c.b16 %v1388, %v1384
        %v1429 = vpack.c.b16 %v1389, %v1385
        %v1430 = vpack.c.b16 %v1390, %v1386
        %v1431 = vpack.c.b16 %v1391, %v1387
        %v1432 = vpack.c.b16 %v1396, %v1392
        %v1433 = vpack.c.b16 %v1397, %v1393
        %v1434 = vpack.c.b16 %v1398, %v1394
        %v1435 = vpack.c.b16 %v1399, %v1395
        %v1436 = vpack.c.b16 %v1404, %v1400
        %v1437 = vpack.c.b16 %v1405, %v1401
        %v1438 = vpack.c.b16 %v1406, %v1402
        %v1439 = vpack.c.b16 %v1407, %v1403
        %1472 = vmatprep.subr.bf16.mxu0 %v1409
        %1473 = vmatpush1.bf16.msra.mxu0 %v1408
        %1474 = vmatprep.subr.bf16.mxu0 %v1413
        %1475 = vmatpush1.bf16.msra.mxu0 %v1412
        %1476 = vmatprep.subr.bf16.mxu0 %v1417
        %1477 = vmatpush1.bf16.msra.mxu0 %v1416
        %1478 = vmatprep.subr.bf16.mxu0 %v1421
        %1479 = vmatpush1.bf16.msra.mxu0 %v1420
        %1480 = vmatprep.subr.bf16.mxu0 %v1425
        %1481 = vmatpush1.bf16.msra.mxu0 %v1424
        %1482 = vmatprep.subr.bf16.mxu0 %v1429
        %1483 = vmatpush1.bf16.msra.mxu0 %v1428
        %1484 = vmatprep.subr.bf16.mxu0 %v1433
        %1485 = vmatpush1.bf16.msra.mxu0 %v1432
        %1486 = vmatprep.subr.bf16.mxu0 %v1437
        %1487 = vmatpush1.bf16.msra.mxu0 %v1436
        %1488 = vmatprep.subr.bf16.mxu0 0
        %1489 = vmatpush1.bf16.msra.mxu0 0
        %1490 = vmatprep.subr.bf16.mxu0 0
        %1491 = vmatpush1.bf16.msra.mxu0 0
        %1492 = vmatprep.subr.bf16.mxu0 0
        %1493 = vmatpush1.bf16.msra.mxu0 0
        %1494 = vmatprep.subr.bf16.mxu0 0
        %1495 = vmatpush1.bf16.msra.mxu0 0
        %1496 = vmatprep.subr.bf16.mxu0 0
        %1497 = vmatpush1.bf16.msra.mxu0 0
        %1498 = vmatprep.subr.bf16.mxu0 0
        %1499 = vmatpush1.bf16.msra.mxu0 0
        %1500 = vmatprep.subr.bf16.mxu0 0
        %1501 = vmatpush1.bf16.msra.mxu0 0
        %1502 = vmatprep.subr.bf16.mxu0 0
        %1503 = vmatpush1.bf16.msra.mxu0 0
        %1504 = vmatprep.mubr.bf16.mxu0 0
        %1505 = vmatmul.mubr.bf16.gmra.mrb[0].mxu0 %v556
        %v1506 = vpop.f32.mrb[0].mxu0
        %v1507 = vadd.f32 %v921, %v1506
        %v1508 = vpop.f32.mrb[0].mxu0
        %v1509 = vadd.f32 %v923, %v1508
        %v1510 = vpop.f32.mrb[0].mxu0
        %v1511 = vadd.f32 %v925, %v1510
        %v1512 = vpop.f32.mrb[0].mxu0
        %v1513 = vadd.f32 %v927, %v1512
        %1514 = vmatprep.mubr.bf16.mxu0 0
        %1515 = vmatmul.mubr.bf16.gmra.mrb[0].mxu0 %v557
        %v1516 = vpop.f32.mrb[0].mxu0
        %v1517 = vadd.f32 %v931, %v1516
        %v1518 = vpop.f32.mrb[0].mxu0
        %v1519 = vadd.f32 %v933, %v1518
        %v1520 = vpop.f32.mrb[0].mxu0
        %v1521 = vadd.f32 %v935, %v1520
        %v1522 = vpop.f32.mrb[0].mxu0
        %v1523 = vadd.f32 %v937, %v1522
        %1524 = vmatprep.mubr.bf16.mxu0 0
        %1525 = vmatmul.mubr.bf16.gmra.mrb[0].mxu0 %v558
        %v1526 = vpop.f32.mrb[0].mxu0
        %v1527 = vadd.f32 %v941, %v1526
        %v1528 = vpop.f32.mrb[0].mxu0
        %v1529 = vadd.f32 %v943, %v1528
        %v1530 = vpop.f32.mrb[0].mxu0
        %v1531 = vadd.f32 %v945, %v1530
        %v1532 = vpop.f32.mrb[0].mxu0
        %v1533 = vadd.f32 %v947, %v1532
        %1534 = vmatprep.mubr.bf16.mxu0 0
        %1535 = vmatmul.mubr.bf16.gmra.mrb[0].mxu0 %v559
        %v1536 = vpop.f32.mrb[0].mxu0
        %v1537 = vadd.f32 %v951, %v1536
        %v1538 = vpop.f32.mrb[0].mxu0
        %v1539 = vadd.f32 %v953, %v1538
        %v1540 = vpop.f32.mrb[0].mxu0
        %v1541 = vadd.f32 %v955, %v1540
        %v1542 = vpop.f32.mrb[0].mxu0
        %v1543 = vadd.f32 %v957, %v1542
        %1544 = vmatprep.mubr.bf16.mxu0 0
        %1545 = vmatmul.mubr.bf16.gmra.mrb[0].mxu0 %v560
        %v1546 = vpop.f32.mrb[0].mxu0
        %v1547 = vadd.f32 %v961, %v1546
        %v1548 = vpop.f32.mrb[0].mxu0
        %v1549 = vadd.f32 %v963, %v1548
        %v1550 = vpop.f32.mrb[0].mxu0
        %v1551 = vadd.f32 %v965, %v1550
        %v1552 = vpop.f32.mrb[0].mxu0
        %v1553 = vadd.f32 %v967, %v1552
        %1554 = vmatprep.mubr.bf16.mxu0 0
        %1555 = vmatmul.mubr.bf16.gmra.mrb[0].mxu0 %v561
        %v1556 = vpop.f32.mrb[0].mxu0
        %v1557 = vadd.f32 %v971, %v1556
        %v1558 = vpop.f32.mrb[0].mxu0
        %v1559 = vadd.f32 %v973, %v1558
        %v1560 = vpop.f32.mrb[0].mxu0
        %v1561 = vadd.f32 %v975, %v1560
        %v1562 = vpop.f32.mrb[0].mxu0
        %v1563 = vadd.f32 %v977, %v1562
        %1564 = vmatprep.mubr.bf16.mxu0 0
        %1565 = vmatmul.mubr.bf16.gmra.mrb[0].mxu0 %v562
        %v1566 = vpop.f32.mrb[0].mxu0
        %v1567 = vadd.f32 %v981, %v1566
        %v1568 = vpop.f32.mrb[0].mxu0
        %v1569 = vadd.f32 %v983, %v1568
        %v1570 = vpop.f32.mrb[0].mxu0
        %v1571 = vadd.f32 %v985, %v1570
        %v1572 = vpop.f32.mrb[0].mxu0
        %v1573 = vadd.f32 %v987, %v1572
        %1574 = vmatprep.mubr.bf16.mxu0 0
        %1575 = vmatmul.mubr.bf16.gmra.mrb[0].mxu0 %v563
        %v1576 = vpop.f32.mrb[0].mxu0
        %v1577 = vadd.f32 %v991, %v1576
        %v1578 = vpop.f32.mrb[0].mxu0
        %v1579 = vadd.f32 %v993, %v1578
        %v1580 = vpop.f32.mrb[0].mxu0
        %v1581 = vadd.f32 %v995, %v1580
        %v1582 = vpop.f32.mrb[0].mxu0
        %v1583 = vadd.f32 %v997, %v1582
        %1584 = vmatprep.mubr.bf16.mxu0 0
        %1585 = vmatmul.mubr.bf16.gmra.mrb[0].mxu0 %v564
        %v1586 = vpop.f32.mrb[0].mxu0
        %v1587 = vadd.f32 %v1001, %v1586
        %v1588 = vpop.f32.mrb[0].mxu0
        %v1589 = vadd.f32 %v1003, %v1588
        %v1590 = vpop.f32.mrb[0].mxu0
        %v1591 = vadd.f32 %v1005, %v1590
        %v1592 = vpop.f32.mrb[0].mxu0
        %v1593 = vadd.f32 %v1007, %v1592
        %1594 = vmatprep.mubr.bf16.mxu0 0
        %1595 = vmatmul.mubr.bf16.gmra.mrb[0].mxu0 %v565
        %v1596 = vpop.f32.mrb[0].mxu0
        %v1597 = vadd.f32 %v1011, %v1596
        %v1598 = vpop.f32.mrb[0].mxu0
        %v1599 = vadd.f32 %v1013, %v1598
        %v1600 = vpop.f32.mrb[0].mxu0
        %v1601 = vadd.f32 %v1015, %v1600
        %v1602 = vpop.f32.mrb[0].mxu0
        %v1603 = vadd.f32 %v1017, %v1602
        %1604 = vmatprep.mubr.bf16.mxu0 0
        %1605 = vmatmul.mubr.bf16.gmra.mrb[0].mxu0 %v566
        %v1606 = vpop.f32.mrb[0].mxu0
        %v1607 = vadd.f32 %v1021, %v1606
        %v1608 = vpop.f32.mrb[0].mxu0
        %v1609 = vadd.f32 %v1023, %v1608
        %v1610 = vpop.f32.mrb[0].mxu0
        %v1611 = vadd.f32 %v1025, %v1610
        %v1612 = vpop.f32.mrb[0].mxu0
        %v1613 = vadd.f32 %v1027, %v1612
        %1614 = vmatprep.mubr.bf16.mxu0 0
        %1615 = vmatmul.mubr.bf16.gmra.mrb[0].mxu0 %v567
        %v1616 = vpop.f32.mrb[0].mxu0
        %v1617 = vadd.f32 %v1031, %v1616
        %v1618 = vpop.f32.mrb[0].mxu0
        %v1619 = vadd.f32 %v1033, %v1618
        %v1620 = vpop.f32.mrb[0].mxu0
        %v1621 = vadd.f32 %v1035, %v1620
        %v1622 = vpop.f32.mrb[0].mxu0
        %v1623 = vadd.f32 %v1037, %v1622
        %1624 = vmatprep.mubr.bf16.mxu0 0
        %1625 = vmatmul.mubr.bf16.gmra.mrb[0].mxu0 %v568
        %v1626 = vpop.f32.mrb[0].mxu0
        %v1627 = vadd.f32 %v1041, %v1626
        %v1628 = vpop.f32.mrb[0].mxu0
        %v1629 = vadd.f32 %v1043, %v1628
        %v1630 = vpop.f32.mrb[0].mxu0
        %v1631 = vadd.f32 %v1045, %v1630
        %v1632 = vpop.f32.mrb[0].mxu0
        %v1633 = vadd.f32 %v1047, %v1632
        %1634 = vmatprep.mubr.bf16.mxu0 0
        %1635 = vmatmul.mubr.bf16.gmra.mrb[0].mxu0 %v569
        %v1636 = vpop.f32.mrb[0].mxu0
        %v1637 = vadd.f32 %v1051, %v1636
        %v1638 = vpop.f32.mrb[0].mxu0
        %v1639 = vadd.f32 %v1053, %v1638
        %v1640 = vpop.f32.mrb[0].mxu0
        %v1641 = vadd.f32 %v1055, %v1640
        %v1642 = vpop.f32.mrb[0].mxu0
        %v1643 = vadd.f32 %v1057, %v1642
        %1644 = vmatprep.mubr.bf16.mxu0 0
        %1645 = vmatmul.mubr.bf16.gmra.mrb[0].mxu0 %v570
        %v1646 = vpop.f32.mrb[0].mxu0
        %v1647 = vadd.f32 %v1061, %v1646
        %v1648 = vpop.f32.mrb[0].mxu0
        %v1649 = vadd.f32 %v1063, %v1648
        %v1650 = vpop.f32.mrb[0].mxu0
        %v1651 = vadd.f32 %v1065, %v1650
        %v1652 = vpop.f32.mrb[0].mxu0
        %v1653 = vadd.f32 %v1067, %v1652
        %1654 = vmatprep.mubr.bf16.mxu0 0
        %1655 = vmatmul.mubr.bf16.gmra.mrb[0].mxu0 %v571
        %v1656 = vpop.f32.mrb[0].mxu0
        %v1657 = vadd.f32 %v1071, %v1656
        %v1658 = vpop.f32.mrb[0].mxu0
        %v1659 = vadd.f32 %v1073, %v1658
        %v1660 = vpop.f32.mrb[0].mxu0
        %v1661 = vadd.f32 %v1075, %v1660
        %v1662 = vpop.f32.mrb[0].mxu0
        %v1663 = vadd.f32 %v1077, %v1662
        %1664 = vmatprep.mubr.bf16.mxu0 0
        %1665 = vmatmul.mubr.bf16.gmra.mrb[0].mxu0 %v1294
        %v1666 = vpop.f32.mrb[0].mxu0
        %v1667 = vadd.f32 %v1081, %v1666
        %v1668 = vpop.f32.mrb[0].mxu0
        %v1669 = vadd.f32 %v1083, %v1668
        %v1670 = vpop.f32.mrb[0].mxu0
        %v1671 = vadd.f32 %v1085, %v1670
        %v1672 = vpop.f32.mrb[0].mxu0
        %v1673 = vadd.f32 %v1087, %v1672
        %1674 = vdwg.mxu0
        %1675 = vmatprep.subr.bf16.mxu0 %v1411
        %1676 = vmatpush1.bf16.msra.mxu0 %v1410
        %1677 = vmatprep.subr.bf16.mxu0 %v1415
        %1678 = vmatpush1.bf16.msra.mxu0 %v1414
        %1679 = vmatprep.subr.bf16.mxu0 %v1419
        %1680 = vmatpush1.bf16.msra.mxu0 %v1418
        %1681 = vmatprep.subr.bf16.mxu0 %v1423
        %1682 = vmatpush1.bf16.msra.mxu0 %v1422
        %1683 = vmatprep.subr.bf16.mxu0 %v1427
        %1684 = vmatpush1.bf16.msra.mxu0 %v1426
        %1685 = vmatprep.subr.bf16.mxu0 %v1431
        %1686 = vmatpush1.bf16.msra.mxu0 %v1430
        %1687 = vmatprep.subr.bf16.mxu0 %v1435
        %1688 = vmatpush1.bf16.msra.mxu0 %v1434
        %1689 = vmatprep.subr.bf16.mxu0 %v1439
        %1690 = vmatpush1.bf16.msra.mxu0 %v1438
        %1691 = vmatprep.subr.bf16.mxu0 0
        %1692 = vmatpush1.bf16.msra.mxu0 0
        %1693 = vmatprep.subr.bf16.mxu0 0
        %1694 = vmatpush1.bf16.msra.mxu0 0
        %1695 = vmatprep.subr.bf16.mxu0 0
        %1696 = vmatpush1.bf16.msra.mxu0 0
        %1697 = vmatprep.subr.bf16.mxu0 0
        %1698 = vmatpush1.bf16.msra.mxu0 0
        %1699 = vmatprep.subr.bf16.mxu0 0
        %1700 = vmatpush1.bf16.msra.mxu0 0
        %1701 = vmatprep.subr.bf16.mxu0 0
        %1702 = vmatpush1.bf16.msra.mxu0 0
        %1703 = vmatprep.subr.bf16.mxu0 0
        %1704 = vmatpush1.bf16.msra.mxu0 0
        %1705 = vmatprep.subr.bf16.mxu0 0
        %1706 = vmatpush1.bf16.msra.mxu0 0
        %1707 = vmatprep.mubr.bf16.mxu0 0
        %1708 = vmatmul.mubr.bf16.gmra.mrb[0].mxu0 %v556
        %v1709 = vpop.f32.mrb[0].mxu0
        %v1710 = vadd.f32 %v1124, %v1709
        %v1711 = vpop.f32.mrb[0].mxu0
        %v1712 = vadd.f32 %v1126, %v1711
        %v1713 = vpop.f32.mrb[0].mxu0
        %v1714 = vadd.f32 %v1128, %v1713
        %v1715 = vpop.f32.mrb[0].mxu0
        %v1716 = vadd.f32 %v1130, %v1715
        %1717 = vmatprep.mubr.bf16.mxu0 0
        %1718 = vmatmul.mubr.bf16.gmra.mrb[0].mxu0 %v557
        %v1719 = vpop.f32.mrb[0].mxu0
        %v1720 = vadd.f32 %v1134, %v1719
        %v1721 = vpop.f32.mrb[0].mxu0
        %v1722 = vadd.f32 %v1136, %v1721
        %v1723 = vpop.f32.mrb[0].mxu0
        %v1724 = vadd.f32 %v1138, %v1723
        %v1725 = vpop.f32.mrb[0].mxu0
        %v1726 = vadd.f32 %v1140, %v1725
        %1727 = vmatprep.mubr.bf16.mxu0 0
        %1728 = vmatmul.mubr.bf16.gmra.mrb[0].mxu0 %v558
        %v1729 = vpop.f32.mrb[0].mxu0
        %v1730 = vadd.f32 %v1144, %v1729
        %v1731 = vpop.f32.mrb[0].mxu0
        %v1732 = vadd.f32 %v1146, %v1731
        %v1733 = vpop.f32.mrb[0].mxu0
        %v1734 = vadd.f32 %v1148, %v1733
        %v1735 = vpop.f32.mrb[0].mxu0
        %v1736 = vadd.f32 %v1150, %v1735
        %1737 = vmatprep.mubr.bf16.mxu0 0
        %1738 = vmatmul.mubr.bf16.gmra.mrb[0].mxu0 %v559
        %v1739 = vpop.f32.mrb[0].mxu0
        %v1740 = vadd.f32 %v1154, %v1739
        %v1741 = vpop.f32.mrb[0].mxu0
        %v1742 = vadd.f32 %v1156, %v1741
        %v1743 = vpop.f32.mrb[0].mxu0
        %v1744 = vadd.f32 %v1158, %v1743
        %v1745 = vpop.f32.mrb[0].mxu0
        %v1746 = vadd.f32 %v1160, %v1745
        %1747 = vmatprep.mubr.bf16.mxu0 0
        %1748 = vmatmul.mubr.bf16.gmra.mrb[0].mxu0 %v560
        %v1749 = vpop.f32.mrb[0].mxu0
        %v1750 = vadd.f32 %v1164, %v1749
        %v1751 = vpop.f32.mrb[0].mxu0
        %v1752 = vadd.f32 %v1166, %v1751
        %v1753 = vpop.f32.mrb[0].mxu0
        %v1754 = vadd.f32 %v1168, %v1753
        %v1755 = vpop.f32.mrb[0].mxu0
        %v1756 = vadd.f32 %v1170, %v1755
        %1757 = vmatprep.mubr.bf16.mxu0 0
        %1758 = vmatmul.mubr.bf16.gmra.mrb[0].mxu0 %v561
        %v1759 = vpop.f32.mrb[0].mxu0
        %v1760 = vadd.f32 %v1174, %v1759
        %v1761 = vpop.f32.mrb[0].mxu0
        %v1762 = vadd.f32 %v1176, %v1761
        %v1763 = vpop.f32.mrb[0].mxu0
        %v1764 = vadd.f32 %v1178, %v1763
        %v1765 = vpop.f32.mrb[0].mxu0
        %v1766 = vadd.f32 %v1180, %v1765
        %1767 = vmatprep.mubr.bf16.mxu0 0
        %1768 = vmatmul.mubr.bf16.gmra.mrb[0].mxu0 %v562
        %v1769 = vpop.f32.mrb[0].mxu0
        %v1770 = vadd.f32 %v1184, %v1769
        %v1771 = vpop.f32.mrb[0].mxu0
        %v1772 = vadd.f32 %v1186, %v1771
        %v1773 = vpop.f32.mrb[0].mxu0
        %v1774 = vadd.f32 %v1188, %v1773
        %v1775 = vpop.f32.mrb[0].mxu0
        %v1776 = vadd.f32 %v1190, %v1775
        %1777 = vmatprep.mubr.bf16.mxu0 0
        %1778 = vmatmul.mubr.bf16.gmra.mrb[0].mxu0 %v563
        %v1779 = vpop.f32.mrb[0].mxu0
        %v1780 = vadd.f32 %v1194, %v1779
        %v1781 = vpop.f32.mrb[0].mxu0
        %v1782 = vadd.f32 %v1196, %v1781
        %v1783 = vpop.f32.mrb[0].mxu0
        %v1784 = vadd.f32 %v1198, %v1783
        %v1785 = vpop.f32.mrb[0].mxu0
        %v1786 = vadd.f32 %v1200, %v1785
        %1787 = vmatprep.mubr.bf16.mxu0 0
        %1788 = vmatmul.mubr.bf16.gmra.mrb[0].mxu0 %v564
        %v1789 = vpop.f32.mrb[0].mxu0
        %v1790 = vadd.f32 %v1204, %v1789
        %v1791 = vpop.f32.mrb[0].mxu0
        %v1792 = vadd.f32 %v1206, %v1791
        %v1793 = vpop.f32.mrb[0].mxu0
        %v1794 = vadd.f32 %v1208, %v1793
        %v1795 = vpop.f32.mrb[0].mxu0
        %v1796 = vadd.f32 %v1210, %v1795
        %1797 = vmatprep.mubr.bf16.mxu0 0
        %1798 = vmatmul.mubr.bf16.gmra.mrb[0].mxu0 %v565
        %v1799 = vpop.f32.mrb[0].mxu0
        %v1800 = vadd.f32 %v1214, %v1799
        %v1801 = vpop.f32.mrb[0].mxu0
        %v1802 = vadd.f32 %v1216, %v1801
        %v1803 = vpop.f32.mrb[0].mxu0
        %v1804 = vadd.f32 %v1218, %v1803
        %v1805 = vpop.f32.mrb[0].mxu0
        %v1806 = vadd.f32 %v1220, %v1805
        %1807 = vmatprep.mubr.bf16.mxu0 0
        %1808 = vmatmul.mubr.bf16.gmra.mrb[0].mxu0 %v566
        %v1809 = vpop.f32.mrb[0].mxu0
        %v1810 = vadd.f32 %v1224, %v1809
        %v1811 = vpop.f32.mrb[0].mxu0
        %v1812 = vadd.f32 %v1226, %v1811
        %v1813 = vpop.f32.mrb[0].mxu0
        %v1814 = vadd.f32 %v1228, %v1813
        %v1815 = vpop.f32.mrb[0].mxu0
        %v1816 = vadd.f32 %v1230, %v1815
        %1817 = vmatprep.mubr.bf16.mxu0 0
        %1818 = vmatmul.mubr.bf16.gmra.mrb[0].mxu0 %v567
        %v1819 = vpop.f32.mrb[0].mxu0
        %v1820 = vadd.f32 %v1234, %v1819
        %v1821 = vpop.f32.mrb[0].mxu0
        %v1822 = vadd.f32 %v1236, %v1821
        %v1823 = vpop.f32.mrb[0].mxu0
        %v1824 = vadd.f32 %v1238, %v1823
        %v1825 = vpop.f32.mrb[0].mxu0
        %v1826 = vadd.f32 %v1240, %v1825
        %1827 = vmatprep.mubr.bf16.mxu0 0
        %1828 = vmatmul.mubr.bf16.gmra.mrb[0].mxu0 %v568
        %v1829 = vpop.f32.mrb[0].mxu0
        %v1830 = vadd.f32 %v1244, %v1829
        %v1831 = vpop.f32.mrb[0].mxu0
        %v1832 = vadd.f32 %v1246, %v1831
        %v1833 = vpop.f32.mrb[0].mxu0
        %v1834 = vadd.f32 %v1248, %v1833
        %v1835 = vpop.f32.mrb[0].mxu0
        %v1836 = vadd.f32 %v1250, %v1835
        %1837 = vmatprep.mubr.bf16.mxu0 0
        %1838 = vmatmul.mubr.bf16.gmra.mrb[0].mxu0 %v569
        %v1839 = vpop.f32.mrb[0].mxu0
        %v1840 = vadd.f32 %v1254, %v1839
        %v1841 = vpop.f32.mrb[0].mxu0
        %v1842 = vadd.f32 %v1256, %v1841
        %v1843 = vpop.f32.mrb[0].mxu0
        %v1844 = vadd.f32 %v1258, %v1843
        %v1845 = vpop.f32.mrb[0].mxu0
        %v1846 = vadd.f32 %v1260, %v1845
        %1847 = vmatprep.mubr.bf16.mxu0 0
        %1848 = vmatmul.mubr.bf16.gmra.mrb[0].mxu0 %v570
        %v1849 = vpop.f32.mrb[0].mxu0
        %v1850 = vadd.f32 %v1264, %v1849
        %v1851 = vpop.f32.mrb[0].mxu0
        %v1852 = vadd.f32 %v1266, %v1851
        %v1853 = vpop.f32.mrb[0].mxu0
        %v1854 = vadd.f32 %v1268, %v1853
        %v1855 = vpop.f32.mrb[0].mxu0
        %v1856 = vadd.f32 %v1270, %v1855
        %1857 = vmatprep.mubr.bf16.mxu0 0
        %1858 = vmatmul.mubr.bf16.gmra.mrb[0].mxu0 %v571
        %v1859 = vpop.f32.mrb[0].mxu0
        %v1860 = vadd.f32 %v1274, %v1859
        %v1861 = vpop.f32.mrb[0].mxu0
        %v1862 = vadd.f32 %v1276, %v1861
        %v1863 = vpop.f32.mrb[0].mxu0
        %v1864 = vadd.f32 %v1278, %v1863
        %v1865 = vpop.f32.mrb[0].mxu0
        %v1866 = vadd.f32 %v1280, %v1865
        %1867 = vmatprep.mubr.bf16.mxu0 0
        %1868 = vmatmul.mubr.bf16.gmra.mrb[0].mxu0 %v1294
        %v1869 = vpop.f32.mrb[0].mxu0
        %v1870 = vadd.f32 %v1284, %v1869
        %v1871 = vpop.f32.mrb[0].mxu0
        %v1872 = vadd.f32 %v1286, %v1871
        %v1873 = vpop.f32.mrb[0].mxu0
        %v1874 = vadd.f32 %v1288, %v1873
        %v1875 = vpop.f32.mrb[0].mxu0
        %v1876 = vadd.f32 %v1290, %v1875
        %1877 = vdwg.mxu0
        %v1878 = vld [vmem:[%s385] sm:$0xe]
        %s1879 = scalar_lea.vmem %s1, 512
        %v1880 = vld [vmem:[%s1879] sm:$0xff]
        %v1881 = vld [vmem:[%s1879 + $0x8] sm:$0xff]
        %v1882 = vld [vmem:[%s1879 + $0x10] sm:$0xff]
        %v1883 = vld [vmem:[%s1879 + $0x18] sm:$0xff]
        %v1884 = vld [vmem:[%s1879 + $0x20] sm:$0xff]
        %v1885 = vld [vmem:[%s1879 + $0x28] sm:$0xff]
        %v1886 = vld [vmem:[%s1879 + $0x30] sm:$0xff]
        %v1887 = vld [vmem:[%s1879 + $0x38] sm:$0xff]
        %v1888 = vld [vmem:[%s1879 + $0x40] sm:$0xff]
        %v1889 = vld [vmem:[%s1879 + $0x48] sm:$0xff]
        %v1890 = vld [vmem:[%s1879 + $0x50] sm:$0xff]
        %v1891 = vld [vmem:[%s1879 + $0x58] sm:$0xff]
        %v1892 = vld [vmem:[%s1879 + $0x60] sm:$0xff]
        %v1893 = vld [vmem:[%s1879 + $0x68] sm:$0xff]
        %v1894 = vld [vmem:[%s1879 + $0x70] sm:$0xff]
        %v1895 = vld [vmem:[%s1879 + $0x78] sm:$0xff]
        %v1896 = vld [vmem:[%s1879 + $0x80] sm:$0xff]
        %v1897 = vld [vmem:[%s1879 + $0x88] sm:$0xff]
        %v1898 = vld [vmem:[%s1879 + $0x90] sm:$0xff]
        %v1899 = vld [vmem:[%s1879 + $0x98] sm:$0xff]
        %v1900 = vld [vmem:[%s1879 + $0xa0] sm:$0xff]
        %v1901 = vld [vmem:[%s1879 + $0xa8] sm:$0xff]
        %v1902 = vld [vmem:[%s1879 + $0xb0] sm:$0xff]
        %v1903 = vld [vmem:[%s1879 + $0xb8] sm:$0xff]
        %v1904 = vld [vmem:[%s1879 + $0xc0] sm:$0xff]
        %v1905 = vld [vmem:[%s1879 + $0xc8] sm:$0xff]
        %v1906 = vld [vmem:[%s1879 + $0xd0] sm:$0xff]
        %v1907 = vld [vmem:[%s1879 + $0xd8] sm:$0xff]
        %v1908 = vld [vmem:[%s1879 + $0xe0] sm:$0xff]
        %v1909 = vld [vmem:[%s1879 + $0xe8] sm:$0xff]
        %v1910 = vld [vmem:[%s1879 + $0xf0] sm:$0xff]
        %v1911 = vld [vmem:[%s1879 + $0xf8] sm:$0xff]
        %v1913 = vunpack.c.l.b16 %v1878
        %v1914 = vpack.c.b16 %v523, %v1913
        %vm1915 = vcmask 1046528
        %v1916 = vrot.slane %v1914, 1
        %v1917 = vrot.slane %v557, 1
        %v1918 = vsel %vm1915, %v1916, %v1917
        %v1919 = vrot.slane %v558, 1
        %v1920 = vsel %vm1915, %v1917, %v1919
        %v1921 = vrot.slane %v559, 1
        %v1922 = vsel %vm1915, %v1919, %v1921
        %v1923 = vrot.slane %v560, 1
        %v1924 = vsel %vm1915, %v1921, %v1923
        %v1925 = vrot.slane %v561, 1
        %v1926 = vsel %vm1915, %v1923, %v1925
        %v1927 = vrot.slane %v562, 1
        %v1928 = vsel %vm1915, %v1925, %v1927
        %v1929 = vrot.slane %v563, 1
        %v1930 = vsel %vm1915, %v1927, %v1929
        %v1931 = vrot.slane %v564, 1
        %v1932 = vsel %vm1915, %v1929, %v1931
        %v1933 = vrot.slane %v565, 1
        %v1934 = vsel %vm1915, %v1931, %v1933
        %v1935 = vrot.slane %v566, 1
        %v1936 = vsel %vm1915, %v1933, %v1935
        %v1937 = vrot.slane %v567, 1
        %v1938 = vsel %vm1915, %v1935, %v1937
        %v1939 = vrot.slane %v568, 1
        %v1940 = vsel %vm1915, %v1937, %v1939
        %v1941 = vrot.slane %v569, 1
        %v1942 = vsel %vm1915, %v1939, %v1941
        %v1943 = vrot.slane %v570, 1
        %v1944 = vsel %vm1915, %v1941, %v1943
        %v1945 = vrot.slane %v571, 1
        %v1946 = vsel %vm1915, %v1943, %v1945
        %v1947 = vrot.slane %v572, 1
        %v1948 = vsel %vm1915, %v1945, %v1947
        %v1998 = vunpack.c.l.b16 %v1880
        %v1999 = vunpack.c.h.b16 %v1880
        %v2000 = vunpack.c.l.b16 %v1881
        %v2001 = vunpack.c.h.b16 %v1881
        %v2002 = vunpack.c.l.b16 %v1882
        %v2003 = vunpack.c.h.b16 %v1882
        %v2004 = vunpack.c.l.b16 %v1883
        %v2005 = vunpack.c.h.b16 %v1883
        %v2006 = vunpack.c.l.b16 %v1884
        %v2007 = vunpack.c.h.b16 %v1884
        %v2008 = vunpack.c.l.b16 %v1885
        %v2009 = vunpack.c.h.b16 %v1885
        %v2010 = vunpack.c.l.b16 %v1886
        %v2011 = vunpack.c.h.b16 %v1886
        %v2012 = vunpack.c.l.b16 %v1887
        %v2013 = vunpack.c.h.b16 %v1887
        %v2014 = vunpack.c.l.b16 %v1888
        %v2015 = vunpack.c.h.b16 %v1888
        %v2016 = vunpack.c.l.b16 %v1889
        %v2017 = vunpack.c.h.b16 %v1889
        %v2018 = vunpack.c.l.b16 %v1890
        %v2019 = vunpack.c.h.b16 %v1890
        %v2020 = vunpack.c.l.b16 %v1891
        %v2021 = vunpack.c.h.b16 %v1891
        %v2022 = vunpack.c.l.b16 %v1892
        %v2023 = vunpack.c.h.b16 %v1892
        %v2024 = vunpack.c.l.b16 %v1893
        %v2025 = vunpack.c.h.b16 %v1893
        %v2026 = vunpack.c.l.b16 %v1894
        %v2027 = vunpack.c.h.b16 %v1894
        %v2028 = vunpack.c.l.b16 %v1895
        %v2029 = vunpack.c.h.b16 %v1895
        %v2030 = vunpack.c.l.b16 %v1896
        %v2031 = vunpack.c.h.b16 %v1896
        %v2032 = vunpack.c.l.b16 %v1897
        %v2033 = vunpack.c.h.b16 %v1897
        %v2034 = vunpack.c.l.b16 %v1898
        %v2035 = vunpack.c.h.b16 %v1898
        %v2036 = vunpack.c.l.b16 %v1899
        %v2037 = vunpack.c.h.b16 %v1899
        %v2038 = vunpack.c.l.b16 %v1900
        %v2039 = vunpack.c.h.b16 %v1900
        %v2040 = vunpack.c.l.b16 %v1901
        %v2041 = vunpack.c.h.b16 %v1901
        %v2042 = vunpack.c.l.b16 %v1902
        %v2043 = vunpack.c.h.b16 %v1902
        %v2044 = vunpack.c.l.b16 %v1903
        %v2045 = vunpack.c.h.b16 %v1903
        %v2046 = vunpack.c.l.b16 %v1904
        %v2047 = vunpack.c.h.b16 %v1904
        %v2048 = vunpack.c.l.b16 %v1905
        %v2049 = vunpack.c.h.b16 %v1905
        %v2050 = vunpack.c.l.b16 %v1906
        %v2051 = vunpack.c.h.b16 %v1906
        %v2052 = vunpack.c.l.b16 %v1907
        %v2053 = vunpack.c.h.b16 %v1907
        %v2054 = vunpack.c.l.b16 %v1908
        %v2055 = vunpack.c.h.b16 %v1908
        %v2056 = vunpack.c.l.b16 %v1909
        %v2057 = vunpack.c.h.b16 %v1909
        %v2058 = vunpack.c.l.b16 %v1910
        %v2059 = vunpack.c.h.b16 %v1910
        %v2060 = vunpack.c.l.b16 %v1911
        %v2061 = vunpack.c.h.b16 %v1911
        %v2062 = vpack.c.b16 %v2002, %v1998
        %v2063 = vpack.c.b16 %v2003, %v1999
        %v2064 = vpack.c.b16 %v2004, %v2000
        %v2065 = vpack.c.b16 %v2005, %v2001
        %v2066 = vpack.c.b16 %v2010, %v2006
        %v2067 = vpack.c.b16 %v2011, %v2007
        %v2068 = vpack.c.b16 %v2012, %v2008
        %v2069 = vpack.c.b16 %v2013, %v2009
        %v2070 = vpack.c.b16 %v2018, %v2014
        %v2071 = vpack.c.b16 %v2019, %v2015
        %v2072 = vpack.c.b16 %v2020, %v2016
        %v2073 = vpack.c.b16 %v2021, %v2017
        %v2074 = vpack.c.b16 %v2026, %v2022
        %v2075 = vpack.c.b16 %v2027, %v2023
        %v2076 = vpack.c.b16 %v2028, %v2024
        %v2077 = vpack.c.b16 %v2029, %v2025
        %v2078 = vpack.c.b16 %v2034, %v2030
        %v2079 = vpack.c.b16 %v2035, %v2031
        %v2080 = vpack.c.b16 %v2036, %v2032
        %v2081 = vpack.c.b16 %v2037, %v2033
        %v2082 = vpack.c.b16 %v2042, %v2038
        %v2083 = vpack.c.b16 %v2043, %v2039
        %v2084 = vpack.c.b16 %v2044, %v2040
        %v2085 = vpack.c.b16 %v2045, %v2041
        %v2086 = vpack.c.b16 %v2050, %v2046
        %v2087 = vpack.c.b16 %v2051, %v2047
        %v2088 = vpack.c.b16 %v2052, %v2048
        %v2089 = vpack.c.b16 %v2053, %v2049
        %v2090 = vpack.c.b16 %v2058, %v2054
        %v2091 = vpack.c.b16 %v2059, %v2055
        %v2092 = vpack.c.b16 %v2060, %v2056
        %v2093 = vpack.c.b16 %v2061, %v2057
        %2126 = vmatprep.subr.bf16.mxu0 %v2063
        %2127 = vmatpush1.bf16.msra.mxu0 %v2062
        %2128 = vmatprep.subr.bf16.mxu0 %v2067
        %2129 = vmatpush1.bf16.msra.mxu0 %v2066
        %2130 = vmatprep.subr.bf16.mxu0 %v2071
        %2131 = vmatpush1.bf16.msra.mxu0 %v2070
        %2132 = vmatprep.subr.bf16.mxu0 %v2075
        %2133 = vmatpush1.bf16.msra.mxu0 %v2074
        %2134 = vmatprep.subr.bf16.mxu0 %v2079
        %2135 = vmatpush1.bf16.msra.mxu0 %v2078
        %2136 = vmatprep.subr.bf16.mxu0 %v2083
        %2137 = vmatpush1.bf16.msra.mxu0 %v2082
        %2138 = vmatprep.subr.bf16.mxu0 %v2087
        %2139 = vmatpush1.bf16.msra.mxu0 %v2086
        %2140 = vmatprep.subr.bf16.mxu0 %v2091
        %2141 = vmatpush1.bf16.msra.mxu0 %v2090
        %2142 = vmatprep.subr.bf16.mxu0 0
        %2143 = vmatpush1.bf16.msra.mxu0 0
        %2144 = vmatprep.subr.bf16.mxu0 0
        %2145 = vmatpush1.bf16.msra.mxu0 0
        %2146 = vmatprep.subr.bf16.mxu0 0
        %2147 = vmatpush1.bf16.msra.mxu0 0
        %2148 = vmatprep.subr.bf16.mxu0 0
        %2149 = vmatpush1.bf16.msra.mxu0 0
        %2150 = vmatprep.subr.bf16.mxu0 0
        %2151 = vmatpush1.bf16.msra.mxu0 0
        %2152 = vmatprep.subr.bf16.mxu0 0
        %2153 = vmatpush1.bf16.msra.mxu0 0
        %2154 = vmatprep.subr.bf16.mxu0 0
        %2155 = vmatpush1.bf16.msra.mxu0 0
        %2156 = vmatprep.subr.bf16.mxu0 0
        %2157 = vmatpush1.bf16.msra.mxu0 0
        %2158 = vmatprep.mubr.bf16.mxu0 0
        %2159 = vmatmul.mubr.bf16.gmra.mrb[0].mxu0 %v1918
        %v2160 = vpop.f32.mrb[0].mxu0
        %v2161 = vadd.f32 0.0, %v2160
        %v2162 = vpop.f32.mrb[0].mxu0
        %v2163 = vadd.f32 0.0, %v2162
        %v2164 = vpop.f32.mrb[0].mxu0
        %v2165 = vadd.f32 0.0, %v2164
        %v2166 = vpop.f32.mrb[0].mxu0
        %v2167 = vadd.f32 0.0, %v2166
        %2168 = vmatprep.mubr.bf16.mxu0 0
        %2169 = vmatmul.mubr.bf16.gmra.mrb[0].mxu0 %v1920
        %v2170 = vpop.f32.mrb[0].mxu0
        %v2171 = vadd.f32 0.0, %v2170
        %v2172 = vpop.f32.mrb[0].mxu0
        %v2173 = vadd.f32 0.0, %v2172
        %v2174 = vpop.f32.mrb[0].mxu0
        %v2175 = vadd.f32 0.0, %v2174
        %v2176 = vpop.f32.mrb[0].mxu0
        %v2177 = vadd.f32 0.0, %v2176
        %2178 = vmatprep.mubr.bf16.mxu0 0
        %2179 = vmatmul.mubr.bf16.gmra.mrb[0].mxu0 %v1922
        %v2180 = vpop.f32.mrb[0].mxu0
        %v2181 = vadd.f32 0.0, %v2180
        %v2182 = vpop.f32.mrb[0].mxu0
        %v2183 = vadd.f32 0.0, %v2182
        %v2184 = vpop.f32.mrb[0].mxu0
        %v2185 = vadd.f32 0.0, %v2184
        %v2186 = vpop.f32.mrb[0].mxu0
        %v2187 = vadd.f32 0.0, %v2186
        %2188 = vmatprep.mubr.bf16.mxu0 0
        %2189 = vmatmul.mubr.bf16.gmra.mrb[0].mxu0 %v1924
        %v2190 = vpop.f32.mrb[0].mxu0
        %v2191 = vadd.f32 0.0, %v2190
        %v2192 = vpop.f32.mrb[0].mxu0
        %v2193 = vadd.f32 0.0, %v2192
        %v2194 = vpop.f32.mrb[0].mxu0
        %v2195 = vadd.f32 0.0, %v2194
        %v2196 = vpop.f32.mrb[0].mxu0
        %v2197 = vadd.f32 0.0, %v2196
        %2198 = vmatprep.mubr.bf16.mxu0 0
        %2199 = vmatmul.mubr.bf16.gmra.mrb[0].mxu0 %v1926
        %v2200 = vpop.f32.mrb[0].mxu0
        %v2201 = vadd.f32 0.0, %v2200
        %v2202 = vpop.f32.mrb[0].mxu0
        %v2203 = vadd.f32 0.0, %v2202
        %v2204 = vpop.f32.mrb[0].mxu0
        %v2205 = vadd.f32 0.0, %v2204
        %v2206 = vpop.f32.mrb[0].mxu0
        %v2207 = vadd.f32 0.0, %v2206
        %2208 = vmatprep.mubr.bf16.mxu0 0
        %2209 = vmatmul.mubr.bf16.gmra.mrb[0].mxu0 %v1928
        %v2210 = vpop.f32.mrb[0].mxu0
        %v2211 = vadd.f32 0.0, %v2210
        %v2212 = vpop.f32.mrb[0].mxu0
        %v2213 = vadd.f32 0.0, %v2212
        %v2214 = vpop.f32.mrb[0].mxu0
        %v2215 = vadd.f32 0.0, %v2214
        %v2216 = vpop.f32.mrb[0].mxu0
        %v2217 = vadd.f32 0.0, %v2216
        %2218 = vmatprep.mubr.bf16.mxu0 0
        %2219 = vmatmul.mubr.bf16.gmra.mrb[0].mxu0 %v1930
        %v2220 = vpop.f32.mrb[0].mxu0
        %v2221 = vadd.f32 0.0, %v2220
        %v2222 = vpop.f32.mrb[0].mxu0
        %v2223 = vadd.f32 0.0, %v2222
        %v2224 = vpop.f32.mrb[0].mxu0
        %v2225 = vadd.f32 0.0, %v2224
        %v2226 = vpop.f32.mrb[0].mxu0
        %v2227 = vadd.f32 0.0, %v2226
        %2228 = vmatprep.mubr.bf16.mxu0 0
        %2229 = vmatmul.mubr.bf16.gmra.mrb[0].mxu0 %v1932
        %v2230 = vpop.f32.mrb[0].mxu0
        %v2231 = vadd.f32 0.0, %v2230
        %v2232 = vpop.f32.mrb[0].mxu0
        %v2233 = vadd.f32 0.0, %v2232
        %v2234 = vpop.f32.mrb[0].mxu0
        %v2235 = vadd.f32 0.0, %v2234
        %v2236 = vpop.f32.mrb[0].mxu0
        %v2237 = vadd.f32 0.0, %v2236
        %2238 = vmatprep.mubr.bf16.mxu0 0
        %2239 = vmatmul.mubr.bf16.gmra.mrb[0].mxu0 %v1934
        %v2240 = vpop.f32.mrb[0].mxu0
        %v2241 = vadd.f32 0.0, %v2240
        %v2242 = vpop.f32.mrb[0].mxu0
        %v2243 = vadd.f32 0.0, %v2242
        %v2244 = vpop.f32.mrb[0].mxu0
        %v2245 = vadd.f32 0.0, %v2244
        %v2246 = vpop.f32.mrb[0].mxu0
        %v2247 = vadd.f32 0.0, %v2246
        %2248 = vmatprep.mubr.bf16.mxu0 0
        %2249 = vmatmul.mubr.bf16.gmra.mrb[0].mxu0 %v1936
        %v2250 = vpop.f32.mrb[0].mxu0
        %v2251 = vadd.f32 0.0, %v2250
        %v2252 = vpop.f32.mrb[0].mxu0
        %v2253 = vadd.f32 0.0, %v2252
        %v2254 = vpop.f32.mrb[0].mxu0
        %v2255 = vadd.f32 0.0, %v2254
        %v2256 = vpop.f32.mrb[0].mxu0
        %v2257 = vadd.f32 0.0, %v2256
        %2258 = vmatprep.mubr.bf16.mxu0 0
        %2259 = vmatmul.mubr.bf16.gmra.mrb[0].mxu0 %v1938
        %v2260 = vpop.f32.mrb[0].mxu0
        %v2261 = vadd.f32 0.0, %v2260
        %v2262 = vpop.f32.mrb[0].mxu0
        %v2263 = vadd.f32 0.0, %v2262
        %v2264 = vpop.f32.mrb[0].mxu0
        %v2265 = vadd.f32 0.0, %v2264
        %v2266 = vpop.f32.mrb[0].mxu0
        %v2267 = vadd.f32 0.0, %v2266
        %2268 = vmatprep.mubr.bf16.mxu0 0
        %2269 = vmatmul.mubr.bf16.gmra.mrb[0].mxu0 %v1940
        %v2270 = vpop.f32.mrb[0].mxu0
        %v2271 = vadd.f32 0.0, %v2270
        %v2272 = vpop.f32.mrb[0].mxu0
        %v2273 = vadd.f32 0.0, %v2272
        %v2274 = vpop.f32.mrb[0].mxu0
        %v2275 = vadd.f32 0.0, %v2274
        %v2276 = vpop.f32.mrb[0].mxu0
        %v2277 = vadd.f32 0.0, %v2276
        %2278 = vmatprep.mubr.bf16.mxu0 0
        %2279 = vmatmul.mubr.bf16.gmra.mrb[0].mxu0 %v1942
        %v2280 = vpop.f32.mrb[0].mxu0
        %v2281 = vadd.f32 0.0, %v2280
        %v2282 = vpop.f32.mrb[0].mxu0
        %v2283 = vadd.f32 0.0, %v2282
        %v2284 = vpop.f32.mrb[0].mxu0
        %v2285 = vadd.f32 0.0, %v2284
        %v2286 = vpop.f32.mrb[0].mxu0
        %v2287 = vadd.f32 0.0, %v2286
        %2288 = vmatprep.mubr.bf16.mxu0 0
        %2289 = vmatmul.mubr.bf16.gmra.mrb[0].mxu0 %v1944
        %v2290 = vpop.f32.mrb[0].mxu0
        %v2291 = vadd.f32 0.0, %v2290
        %v2292 = vpop.f32.mrb[0].mxu0
        %v2293 = vadd.f32 0.0, %v2292
        %v2294 = vpop.f32.mrb[0].mxu0
        %v2295 = vadd.f32 0.0, %v2294
        %v2296 = vpop.f32.mrb[0].mxu0
        %v2297 = vadd.f32 0.0, %v2296
        %2298 = vmatprep.mubr.bf16.mxu0 0
        %2299 = vmatmul.mubr.bf16.gmra.mrb[0].mxu0 %v1946
        %v2300 = vpop.f32.mrb[0].mxu0
        %v2301 = vadd.f32 0.0, %v2300
        %v2302 = vpop.f32.mrb[0].mxu0
        %v2303 = vadd.f32 0.0, %v2302
        %v2304 = vpop.f32.mrb[0].mxu0
        %v2305 = vadd.f32 0.0, %v2304
        %v2306 = vpop.f32.mrb[0].mxu0
        %v2307 = vadd.f32 0.0, %v2306
        %2308 = vmatprep.mubr.bf16.mxu0 0
        %2309 = vmatmul.mubr.bf16.gmra.mrb[0].mxu0 %v1948
        %v2310 = vpop.f32.mrb[0].mxu0
        %v2311 = vadd.f32 0.0, %v2310
        %v2312 = vpop.f32.mrb[0].mxu0
        %v2313 = vadd.f32 0.0, %v2312
        %v2314 = vpop.f32.mrb[0].mxu0
        %v2315 = vadd.f32 0.0, %v2314
        %v2316 = vpop.f32.mrb[0].mxu0
        %v2317 = vadd.f32 0.0, %v2316
        %2318 = vmatprep.mubr.bf16.mxu0 0
        %2319 = vmatmul.mubr.bf16.gmra.mrb[0].mxu0 %v1947
        %v2320 = vpop.f32.mrb[0].mxu0
        %v2321 = vadd.f32 0.0, %v2320
        %v2322 = vpop.f32.mrb[0].mxu0
        %v2323 = vadd.f32 0.0, %v2322
        %v2324 = vpop.f32.mrb[0].mxu0
        %v2325 = vadd.f32 0.0, %v2324
        %v2326 = vpop.f32.mrb[0].mxu0
        %v2327 = vadd.f32 0.0, %v2326
        %2328 = vdwg.mxu0
        %2329 = vmatprep.subr.bf16.mxu0 %v2065
        %2330 = vmatpush1.bf16.msra.mxu0 %v2064
        %2331 = vmatprep.subr.bf16.mxu0 %v2069
        %2332 = vmatpush1.bf16.msra.mxu0 %v2068
        %2333 = vmatprep.subr.bf16.mxu0 %v2073
        %2334 = vmatpush1.bf16.msra.mxu0 %v2072
        %2335 = vmatprep.subr.bf16.mxu0 %v2077
        %2336 = vmatpush1.bf16.msra.mxu0 %v2076
        %2337 = vmatprep.subr.bf16.mxu0 %v2081
        %2338 = vmatpush1.bf16.msra.mxu0 %v2080
        %2339 = vmatprep.subr.bf16.mxu0 %v2085
        %2340 = vmatpush1.bf16.msra.mxu0 %v2084
        %2341 = vmatprep.subr.bf16.mxu0 %v2089
        %2342 = vmatpush1.bf16.msra.mxu0 %v2088
        %2343 = vmatprep.subr.bf16.mxu0 %v2093
        %2344 = vmatpush1.bf16.msra.mxu0 %v2092
        %2345 = vmatprep.subr.bf16.mxu0 0
        %2346 = vmatpush1.bf16.msra.mxu0 0
        %2347 = vmatprep.subr.bf16.mxu0 0
        %2348 = vmatpush1.bf16.msra.mxu0 0
        %2349 = vmatprep.subr.bf16.mxu0 0
        %2350 = vmatpush1.bf16.msra.mxu0 0
        %2351 = vmatprep.subr.bf16.mxu0 0
        %2352 = vmatpush1.bf16.msra.mxu0 0
        %2353 = vmatprep.subr.bf16.mxu0 0
        %2354 = vmatpush1.bf16.msra.mxu0 0
        %2355 = vmatprep.subr.bf16.mxu0 0
        %2356 = vmatpush1.bf16.msra.mxu0 0
        %2357 = vmatprep.subr.bf16.mxu0 0
        %2358 = vmatpush1.bf16.msra.mxu0 0
        %2359 = vmatprep.subr.bf16.mxu0 0
        %2360 = vmatpush1.bf16.msra.mxu0 0
        %2361 = vmatprep.mubr.bf16.mxu0 0
        %2362 = vmatmul.mubr.bf16.gmra.mrb[0].mxu0 %v1918
        %v2363 = vpop.f32.mrb[0].mxu0
        %v2364 = vadd.f32 0.0, %v2363
        %v2365 = vpop.f32.mrb[0].mxu0
        %v2366 = vadd.f32 0.0, %v2365
        %v2367 = vpop.f32.mrb[0].mxu0
        %v2368 = vadd.f32 0.0, %v2367
        %v2369 = vpop.f32.mrb[0].mxu0
        %v2370 = vadd.f32 0.0, %v2369
        %2371 = vmatprep.mubr.bf16.mxu0 0
        %2372 = vmatmul.mubr.bf16.gmra.mrb[0].mxu0 %v1920
        %v2373 = vpop.f32.mrb[0].mxu0
        %v2374 = vadd.f32 0.0, %v2373
        %v2375 = vpop.f32.mrb[0].mxu0
        %v2376 = vadd.f32 0.0, %v2375
        %v2377 = vpop.f32.mrb[0].mxu0
        %v2378 = vadd.f32 0.0, %v2377
        %v2379 = vpop.f32.mrb[0].mxu0
        %v2380 = vadd.f32 0.0, %v2379
        %2381 = vmatprep.mubr.bf16.mxu0 0
        %2382 = vmatmul.mubr.bf16.gmra.mrb[0].mxu0 %v1922
        %v2383 = vpop.f32.mrb[0].mxu0
        %v2384 = vadd.f32 0.0, %v2383
        %v2385 = vpop.f32.mrb[0].mxu0
        %v2386 = vadd.f32 0.0, %v2385
        %v2387 = vpop.f32.mrb[0].mxu0
        %v2388 = vadd.f32 0.0, %v2387
        %v2389 = vpop.f32.mrb[0].mxu0
        %v2390 = vadd.f32 0.0, %v2389
        %2391 = vmatprep.mubr.bf16.mxu0 0
        %2392 = vmatmul.mubr.bf16.gmra.mrb[0].mxu0 %v1924
        %v2393 = vpop.f32.mrb[0].mxu0
        %v2394 = vadd.f32 0.0, %v2393
        %v2395 = vpop.f32.mrb[0].mxu0
        %v2396 = vadd.f32 0.0, %v2395
        %v2397 = vpop.f32.mrb[0].mxu0
        %v2398 = vadd.f32 0.0, %v2397
        %v2399 = vpop.f32.mrb[0].mxu0
        %v2400 = vadd.f32 0.0, %v2399
        %2401 = vmatprep.mubr.bf16.mxu0 0
        %2402 = vmatmul.mubr.bf16.gmra.mrb[0].mxu0 %v1926
        %v2403 = vpop.f32.mrb[0].mxu0
        %v2404 = vadd.f32 0.0, %v2403
        %v2405 = vpop.f32.mrb[0].mxu0
        %v2406 = vadd.f32 0.0, %v2405
        %v2407 = vpop.f32.mrb[0].mxu0
        %v2408 = vadd.f32 0.0, %v2407
        %v2409 = vpop.f32.mrb[0].mxu0
        %v2410 = vadd.f32 0.0, %v2409
        %2411 = vmatprep.mubr.bf16.mxu0 0
        %2412 = vmatmul.mubr.bf16.gmra.mrb[0].mxu0 %v1928
        %v2413 = vpop.f32.mrb[0].mxu0
        %v2414 = vadd.f32 0.0, %v2413
        %v2415 = vpop.f32.mrb[0].mxu0
        %v2416 = vadd.f32 0.0, %v2415
        %v2417 = vpop.f32.mrb[0].mxu0
        %v2418 = vadd.f32 0.0, %v2417
        %v2419 = vpop.f32.mrb[0].mxu0
        %v2420 = vadd.f32 0.0, %v2419
        %2421 = vmatprep.mubr.bf16.mxu0 0
        %2422 = vmatmul.mubr.bf16.gmra.mrb[0].mxu0 %v1930
        %v2423 = vpop.f32.mrb[0].mxu0
        %v2424 = vadd.f32 0.0, %v2423
        %v2425 = vpop.f32.mrb[0].mxu0
        %v2426 = vadd.f32 0.0, %v2425
        %v2427 = vpop.f32.mrb[0].mxu0
        %v2428 = vadd.f32 0.0, %v2427
        %v2429 = vpop.f32.mrb[0].mxu0
        %v2430 = vadd.f32 0.0, %v2429
        %2431 = vmatprep.mubr.bf16.mxu0 0
        %2432 = vmatmul.mubr.bf16.gmra.mrb[0].mxu0 %v1932
        %v2433 = vpop.f32.mrb[0].mxu0
        %v2434 = vadd.f32 0.0, %v2433
        %v2435 = vpop.f32.mrb[0].mxu0
        %v2436 = vadd.f32 0.0, %v2435
        %v2437 = vpop.f32.mrb[0].mxu0
        %v2438 = vadd.f32 0.0, %v2437
        %v2439 = vpop.f32.mrb[0].mxu0
        %v2440 = vadd.f32 0.0, %v2439
        %2441 = vmatprep.mubr.bf16.mxu0 0
        %2442 = vmatmul.mubr.bf16.gmra.mrb[0].mxu0 %v1934
        %v2443 = vpop.f32.mrb[0].mxu0
        %v2444 = vadd.f32 0.0, %v2443
        %v2445 = vpop.f32.mrb[0].mxu0
        %v2446 = vadd.f32 0.0, %v2445
        %v2447 = vpop.f32.mrb[0].mxu0
        %v2448 = vadd.f32 0.0, %v2447
        %v2449 = vpop.f32.mrb[0].mxu0
        %v2450 = vadd.f32 0.0, %v2449
        %2451 = vmatprep.mubr.bf16.mxu0 0
        %2452 = vmatmul.mubr.bf16.gmra.mrb[0].mxu0 %v1936
        %v2453 = vpop.f32.mrb[0].mxu0
        %v2454 = vadd.f32 0.0, %v2453
        %v2455 = vpop.f32.mrb[0].mxu0
        %v2456 = vadd.f32 0.0, %v2455
        %v2457 = vpop.f32.mrb[0].mxu0
        %v2458 = vadd.f32 0.0, %v2457
        %v2459 = vpop.f32.mrb[0].mxu0
        %v2460 = vadd.f32 0.0, %v2459
        %2461 = vmatprep.mubr.bf16.mxu0 0
        %2462 = vmatmul.mubr.bf16.gmra.mrb[0].mxu0 %v1938
        %v2463 = vpop.f32.mrb[0].mxu0
        %v2464 = vadd.f32 0.0, %v2463
        %v2465 = vpop.f32.mrb[0].mxu0
        %v2466 = vadd.f32 0.0, %v2465
        %v2467 = vpop.f32.mrb[0].mxu0
        %v2468 = vadd.f32 0.0, %v2467
        %v2469 = vpop.f32.mrb[0].mxu0
        %v2470 = vadd.f32 0.0, %v2469
        %2471 = vmatprep.mubr.bf16.mxu0 0
        %2472 = vmatmul.mubr.bf16.gmra.mrb[0].mxu0 %v1940
        %v2473 = vpop.f32.mrb[0].mxu0
        %v2474 = vadd.f32 0.0, %v2473
        %v2475 = vpop.f32.mrb[0].mxu0
        %v2476 = vadd.f32 0.0, %v2475
        %v2477 = vpop.f32.mrb[0].mxu0
        %v2478 = vadd.f32 0.0, %v2477
        %v2479 = vpop.f32.mrb[0].mxu0
        %v2480 = vadd.f32 0.0, %v2479
        %2481 = vmatprep.mubr.bf16.mxu0 0
        %2482 = vmatmul.mubr.bf16.gmra.mrb[0].mxu0 %v1942
        %v2483 = vpop.f32.mrb[0].mxu0
        %v2484 = vadd.f32 0.0, %v2483
        %v2485 = vpop.f32.mrb[0].mxu0
        %v2486 = vadd.f32 0.0, %v2485
        %v2487 = vpop.f32.mrb[0].mxu0
        %v2488 = vadd.f32 0.0, %v2487
        %v2489 = vpop.f32.mrb[0].mxu0
        %v2490 = vadd.f32 0.0, %v2489
        %2491 = vmatprep.mubr.bf16.mxu0 0
        %2492 = vmatmul.mubr.bf16.gmra.mrb[0].mxu0 %v1944
        %v2493 = vpop.f32.mrb[0].mxu0
        %v2494 = vadd.f32 0.0, %v2493
        %v2495 = vpop.f32.mrb[0].mxu0
        %v2496 = vadd.f32 0.0, %v2495
        %v2497 = vpop.f32.mrb[0].mxu0
        %v2498 = vadd.f32 0.0, %v2497
        %v2499 = vpop.f32.mrb[0].mxu0
        %v2500 = vadd.f32 0.0, %v2499
        %2501 = vmatprep.mubr.bf16.mxu0 0
        %2502 = vmatmul.mubr.bf16.gmra.mrb[0].mxu0 %v1946
        %v2503 = vpop.f32.mrb[0].mxu0
        %v2504 = vadd.f32 0.0, %v2503
        %v2505 = vpop.f32.mrb[0].mxu0
        %v2506 = vadd.f32 0.0, %v2505
        %v2507 = vpop.f32.mrb[0].mxu0
        %v2508 = vadd.f32 0.0, %v2507
        %v2509 = vpop.f32.mrb[0].mxu0
        %v2510 = vadd.f32 0.0, %v2509
        %2511 = vmatprep.mubr.bf16.mxu0 0
        %2512 = vmatmul.mubr.bf16.gmra.mrb[0].mxu0 %v1948
        %v2513 = vpop.f32.mrb[0].mxu0
        %v2514 = vadd.f32 0.0, %v2513
        %v2515 = vpop.f32.mrb[0].mxu0
        %v2516 = vadd.f32 0.0, %v2515
        %v2517 = vpop.f32.mrb[0].mxu0
        %v2518 = vadd.f32 0.0, %v2517
        %v2519 = vpop.f32.mrb[0].mxu0
        %v2520 = vadd.f32 0.0, %v2519
        %2521 = vmatprep.mubr.bf16.mxu0 0
        %2522 = vmatmul.mubr.bf16.gmra.mrb[0].mxu0 %v1947
        %v2523 = vpop.f32.mrb[0].mxu0
        %v2524 = vadd.f32 0.0, %v2523
        %v2525 = vpop.f32.mrb[0].mxu0
        %v2526 = vadd.f32 0.0, %v2525
        %v2527 = vpop.f32.mrb[0].mxu0
        %v2528 = vadd.f32 0.0, %v2527
        %v2529 = vpop.f32.mrb[0].mxu0
        %v2530 = vadd.f32 0.0, %v2529
        %2531 = vdwg.mxu0
        %v2532 = vadd.f32 %v1507, %v2161
        %v2533 = vadd.f32 %v1509, %v2163
        %v2534 = vadd.f32 %v1710, %v2364
        %v2535 = vadd.f32 %v1712, %v2366
        %v2536 = vadd.f32 %v1511, %v2165
        %v2537 = vadd.f32 %v1513, %v2167
        %v2538 = vadd.f32 %v1714, %v2368
        %v2539 = vadd.f32 %v1716, %v2370
        %v2540 = vadd.f32 %v1517, %v2171
        %v2541 = vadd.f32 %v1519, %v2173
        %v2542 = vadd.f32 %v1720, %v2374
        %v2543 = vadd.f32 %v1722, %v2376
        %v2544 = vadd.f32 %v1521, %v2175
        %v2545 = vadd.f32 %v1523, %v2177
        %v2546 = vadd.f32 %v1724, %v2378
        %v2547 = vadd.f32 %v1726, %v2380
        %v2548 = vadd.f32 %v1527, %v2181
        %v2549 = vadd.f32 %v1529, %v2183
        %v2550 = vadd.f32 %v1730, %v2384
        %v2551 = vadd.f32 %v1732, %v2386
        %v2552 = vadd.f32 %v1531, %v2185
        %v2553 = vadd.f32 %v1533, %v2187
        %v2554 = vadd.f32 %v1734, %v2388
        %v2555 = vadd.f32 %v1736, %v2390
        %v2556 = vadd.f32 %v1537, %v2191
        %v2557 = vadd.f32 %v1539, %v2193
        %v2558 = vadd.f32 %v1740, %v2394
        %v2559 = vadd.f32 %v1742, %v2396
        %v2560 = vadd.f32 %v1541, %v2195
        %v2561 = vadd.f32 %v1543, %v2197
        %v2562 = vadd.f32 %v1744, %v2398
        %v2563 = vadd.f32 %v1746, %v2400
        %v2564 = vadd.f32 %v1547, %v2201
        %v2565 = vadd.f32 %v1549, %v2203
        %v2566 = vadd.f32 %v1750, %v2404
        %v2567 = vadd.f32 %v1752, %v2406
        %v2568 = vadd.f32 %v1551, %v2205
        %v2569 = vadd.f32 %v1553, %v2207
        %v2570 = vadd.f32 %v1754, %v2408
        %v2571 = vadd.f32 %v1756, %v2410
        %v2572 = vadd.f32 %v1557, %v2211
        %v2573 = vadd.f32 %v1559, %v2213
        %v2574 = vadd.f32 %v1760, %v2414
        %v2575 = vadd.f32 %v1762, %v2416
        %v2576 = vadd.f32 %v1561, %v2215
        %v2577 = vadd.f32 %v1563, %v2217
        %v2578 = vadd.f32 %v1764, %v2418
        %v2579 = vadd.f32 %v1766, %v2420
        %v2580 = vadd.f32 %v1567, %v2221
        %v2581 = vadd.f32 %v1569, %v2223
        %v2582 = vadd.f32 %v1770, %v2424
        %v2583 = vadd.f32 %v1772, %v2426
        %v2584 = vadd.f32 %v1571, %v2225
        %v2585 = vadd.f32 %v1573, %v2227
        %v2586 = vadd.f32 %v1774, %v2428
        %v2587 = vadd.f32 %v1776, %v2430
        %v2588 = vadd.f32 %v1577, %v2231
        %v2589 = vadd.f32 %v1579, %v2233
        %v2590 = vadd.f32 %v1780, %v2434
        %v2591 = vadd.f32 %v1782, %v2436
        %v2592 = vadd.f32 %v1581, %v2235
        %v2593 = vadd.f32 %v1583, %v2237
        %v2594 = vadd.f32 %v1784, %v2438
        %v2595 = vadd.f32 %v1786, %v2440
        %v2596 = vadd.f32 %v1587, %v2241
        %v2597 = vadd.f32 %v1589, %v2243
        %v2598 = vadd.f32 %v1790, %v2444
        %v2599 = vadd.f32 %v1792, %v2446
        %v2600 = vadd.f32 %v1591, %v2245
        %v2601 = vadd.f32 %v1593, %v2247
        %v2602 = vadd.f32 %v1794, %v2448
        %v2603 = vadd.f32 %v1796, %v2450
        %v2604 = vadd.f32 %v1597, %v2251
        %v2605 = vadd.f32 %v1599, %v2253
        %v2606 = vadd.f32 %v1800, %v2454
        %v2607 = vadd.f32 %v1802, %v2456
        %v2608 = vadd.f32 %v1601, %v2255
        %v2609 = vadd.f32 %v1603, %v2257
        %v2610 = vadd.f32 %v1804, %v2458
        %v2611 = vadd.f32 %v1806, %v2460
        %v2612 = vadd.f32 %v1607, %v2261
        %v2613 = vadd.f32 %v1609, %v2263
        %v2614 = vadd.f32 %v1810, %v2464
        %v2615 = vadd.f32 %v1812, %v2466
        %v2616 = vadd.f32 %v1611, %v2265
        %v2617 = vadd.f32 %v1613, %v2267
        %v2618 = vadd.f32 %v1814, %v2468
        %v2619 = vadd.f32 %v1816, %v2470
        %v2620 = vadd.f32 %v1617, %v2271
        %v2621 = vadd.f32 %v1619, %v2273
        %v2622 = vadd.f32 %v1820, %v2474
        %v2623 = vadd.f32 %v1822, %v2476
        %v2624 = vadd.f32 %v1621, %v2275
        %v2625 = vadd.f32 %v1623, %v2277
        %v2626 = vadd.f32 %v1824, %v2478
        %v2627 = vadd.f32 %v1826, %v2480
        %v2628 = vadd.f32 %v1627, %v2281
        %v2629 = vadd.f32 %v1629, %v2283
        %v2630 = vadd.f32 %v1830, %v2484
        %v2631 = vadd.f32 %v1832, %v2486
        %v2632 = vadd.f32 %v1631, %v2285
        %v2633 = vadd.f32 %v1633, %v2287
        %v2634 = vadd.f32 %v1834, %v2488
        %v2635 = vadd.f32 %v1836, %v2490
        %v2636 = vadd.f32 %v1637, %v2291
        %v2637 = vadd.f32 %v1639, %v2293
        %v2638 = vadd.f32 %v1840, %v2494
        %v2639 = vadd.f32 %v1842, %v2496
        %v2640 = vadd.f32 %v1641, %v2295
        %v2641 = vadd.f32 %v1643, %v2297
        %v2642 = vadd.f32 %v1844, %v2498
        %v2643 = vadd.f32 %v1846, %v2500
        %v2644 = vadd.f32 %v1647, %v2301
        %v2645 = vadd.f32 %v1649, %v2303
        %v2646 = vadd.f32 %v1850, %v2504
        %v2647 = vadd.f32 %v1852, %v2506
        %v2648 = vadd.f32 %v1651, %v2305
        %v2649 = vadd.f32 %v1653, %v2307
        %v2650 = vadd.f32 %v1854, %v2508
        %v2651 = vadd.f32 %v1856, %v2510
        %v2652 = vadd.f32 %v1657, %v2311
        %v2653 = vadd.f32 %v1659, %v2313
        %v2654 = vadd.f32 %v1860, %v2514
        %v2655 = vadd.f32 %v1862, %v2516
        %v2656 = vadd.f32 %v1661, %v2315
        %v2657 = vadd.f32 %v1663, %v2317
        %v2658 = vadd.f32 %v1864, %v2518
        %v2659 = vadd.f32 %v1866, %v2520
        %v2660 = vadd.f32 %v1667, %v2321
        %v2661 = vadd.f32 %v1669, %v2323
        %v2662 = vadd.f32 %v1870, %v2524
        %v2663 = vadd.f32 %v1872, %v2526
        %v2664 = vadd.f32 %v1671, %v2325
        %v2665 = vadd.f32 %v1673, %v2327
        %v2666 = vadd.f32 %v1874, %v2528
        %v2667 = vadd.f32 %v1876, %v2530
        %v2668 = vld [vmem:[%s2] sm:$0xf]
        %v2670 = vlaneseq
        %v2671 = vshrl.u32 %v2670, 7
        %v2672 = vsub.s32 0, %v2671
        %v2673 = vrot.slane %v2668, %v2672
        %v2674 = vlaneseq
        %v2675 = vshrl.u32 %v2674, 7
        %v2676 = vsub.s32 1, %v2675
        %v2677 = vrot.slane %v2668, %v2676
        %v2678 = vlaneseq
        %v2679 = vshrl.u32 %v2678, 7
        %v2680 = vsub.s32 2, %v2679
        %v2681 = vrot.slane %v2668, %v2680
        %v2682 = vlaneseq
        %v2683 = vshrl.u32 %v2682, 7
        %v2684 = vsub.s32 3, %v2683
        %v2685 = vrot.slane %v2668, %v2684
        %v2690 = vadd.f32 %v2532, %v2673
        %v2691 = vadd.f32 %v2533, %v2677
        %v2692 = vadd.f32 %v2534, %v2681
        %v2693 = vadd.f32 %v2535, %v2685
        %v2694 = vadd.f32 %v2536, %v2673
        %v2695 = vadd.f32 %v2537, %v2677
        %v2696 = vadd.f32 %v2538, %v2681
        %v2697 = vadd.f32 %v2539, %v2685
        %v2698 = vadd.f32 %v2540, %v2673
        %v2699 = vadd.f32 %v2541, %v2677
        %v2700 = vadd.f32 %v2542, %v2681
        %v2701 = vadd.f32 %v2543, %v2685
        %v2702 = vadd.f32 %v2544, %v2673
        %v2703 = vadd.f32 %v2545, %v2677
        %v2704 = vadd.f32 %v2546, %v2681
        %v2705 = vadd.f32 %v2547, %v2685
        %v2706 = vadd.f32 %v2548, %v2673
        %v2707 = vadd.f32 %v2549, %v2677
        %v2708 = vadd.f32 %v2550, %v2681
        %v2709 = vadd.f32 %v2551, %v2685
        %v2710 = vadd.f32 %v2552, %v2673
        %v2711 = vadd.f32 %v2553, %v2677
        %v2712 = vadd.f32 %v2554, %v2681
        %v2713 = vadd.f32 %v2555, %v2685
        %v2714 = vadd.f32 %v2556, %v2673
        %v2715 = vadd.f32 %v2557, %v2677
        %v2716 = vadd.f32 %v2558, %v2681
        %v2717 = vadd.f32 %v2559, %v2685
        %v2718 = vadd.f32 %v2560, %v2673
        %v2719 = vadd.f32 %v2561, %v2677
        %v2720 = vadd.f32 %v2562, %v2681
        %v2721 = vadd.f32 %v2563, %v2685
        %v2722 = vadd.f32 %v2564, %v2673
        %v2723 = vadd.f32 %v2565, %v2677
        %v2724 = vadd.f32 %v2566, %v2681
        %v2725 = vadd.f32 %v2567, %v2685
        %v2726 = vadd.f32 %v2568, %v2673
        %v2727 = vadd.f32 %v2569, %v2677
        %v2728 = vadd.f32 %v2570, %v2681
        %v2729 = vadd.f32 %v2571, %v2685
        %v2730 = vadd.f32 %v2572, %v2673
        %v2731 = vadd.f32 %v2573, %v2677
        %v2732 = vadd.f32 %v2574, %v2681
        %v2733 = vadd.f32 %v2575, %v2685
        %v2734 = vadd.f32 %v2576, %v2673
        %v2735 = vadd.f32 %v2577, %v2677
        %v2736 = vadd.f32 %v2578, %v2681
        %v2737 = vadd.f32 %v2579, %v2685
        %v2738 = vadd.f32 %v2580, %v2673
        %v2739 = vadd.f32 %v2581, %v2677
        %v2740 = vadd.f32 %v2582, %v2681
        %v2741 = vadd.f32 %v2583, %v2685
        %v2742 = vadd.f32 %v2584, %v2673
        %v2743 = vadd.f32 %v2585, %v2677
        %v2744 = vadd.f32 %v2586, %v2681
        %v2745 = vadd.f32 %v2587, %v2685
        %v2746 = vadd.f32 %v2588, %v2673
        %v2747 = vadd.f32 %v2589, %v2677
        %v2748 = vadd.f32 %v2590, %v2681
        %v2749 = vadd.f32 %v2591, %v2685
        %v2750 = vadd.f32 %v2592, %v2673
        %v2751 = vadd.f32 %v2593, %v2677
        %v2752 = vadd.f32 %v2594, %v2681
        %v2753 = vadd.f32 %v2595, %v2685
        %v2754 = vadd.f32 %v2596, %v2673
        %v2755 = vadd.f32 %v2597, %v2677
        %v2756 = vadd.f32 %v2598, %v2681
        %v2757 = vadd.f32 %v2599, %v2685
        %v2758 = vadd.f32 %v2600, %v2673
        %v2759 = vadd.f32 %v2601, %v2677
        %v2760 = vadd.f32 %v2602, %v2681
        %v2761 = vadd.f32 %v2603, %v2685
        %v2762 = vadd.f32 %v2604, %v2673
        %v2763 = vadd.f32 %v2605, %v2677
        %v2764 = vadd.f32 %v2606, %v2681
        %v2765 = vadd.f32 %v2607, %v2685
        %v2766 = vadd.f32 %v2608, %v2673
        %v2767 = vadd.f32 %v2609, %v2677
        %v2768 = vadd.f32 %v2610, %v2681
        %v2769 = vadd.f32 %v2611, %v2685
        %v2770 = vadd.f32 %v2612, %v2673
        %v2771 = vadd.f32 %v2613, %v2677
        %v2772 = vadd.f32 %v2614, %v2681
        %v2773 = vadd.f32 %v2615, %v2685
        %v2774 = vadd.f32 %v2616, %v2673
        %v2775 = vadd.f32 %v2617, %v2677
        %v2776 = vadd.f32 %v2618, %v2681
        %v2777 = vadd.f32 %v2619, %v2685
        %v2778 = vadd.f32 %v2620, %v2673
        %v2779 = vadd.f32 %v2621, %v2677
        %v2780 = vadd.f32 %v2622, %v2681
        %v2781 = vadd.f32 %v2623, %v2685
        %v2782 = vadd.f32 %v2624, %v2673
        %v2783 = vadd.f32 %v2625, %v2677
        %v2784 = vadd.f32 %v2626, %v2681
        %v2785 = vadd.f32 %v2627, %v2685
        %v2786 = vadd.f32 %v2628, %v2673
        %v2787 = vadd.f32 %v2629, %v2677
        %v2788 = vadd.f32 %v2630, %v2681
        %v2789 = vadd.f32 %v2631, %v2685
        %v2790 = vadd.f32 %v2632, %v2673
        %v2791 = vadd.f32 %v2633, %v2677
        %v2792 = vadd.f32 %v2634, %v2681
        %v2793 = vadd.f32 %v2635, %v2685
        %v2794 = vadd.f32 %v2636, %v2673
        %v2795 = vadd.f32 %v2637, %v2677
        %v2796 = vadd.f32 %v2638, %v2681
        %v2797 = vadd.f32 %v2639, %v2685
        %v2798 = vadd.f32 %v2640, %v2673
        %v2799 = vadd.f32 %v2641, %v2677
        %v2800 = vadd.f32 %v2642, %v2681
        %v2801 = vadd.f32 %v2643, %v2685
        %v2802 = vadd.f32 %v2644, %v2673
        %v2803 = vadd.f32 %v2645, %v2677
        %v2804 = vadd.f32 %v2646, %v2681
        %v2805 = vadd.f32 %v2647, %v2685
        %v2806 = vadd.f32 %v2648, %v2673
        %v2807 = vadd.f32 %v2649, %v2677
        %v2808 = vadd.f32 %v2650, %v2681
        %v2809 = vadd.f32 %v2651, %v2685
        %v2810 = vadd.f32 %v2652, %v2673
        %v2811 = vadd.f32 %v2653, %v2677
        %v2812 = vadd.f32 %v2654, %v2681
        %v2813 = vadd.f32 %v2655, %v2685
        %v2814 = vadd.f32 %v2656, %v2673
        %v2815 = vadd.f32 %v2657, %v2677
        %v2816 = vadd.f32 %v2658, %v2681
        %v2817 = vadd.f32 %v2659, %v2685
        %v2818 = vadd.f32 %v2660, %v2673
        %v2819 = vadd.f32 %v2661, %v2677
        %v2820 = vadd.f32 %v2662, %v2681
        %v2821 = vadd.f32 %v2663, %v2685
        %v2822 = vadd.f32 %v2664, %v2673
        %v2823 = vadd.f32 %v2665, %v2677
        %v2824 = vadd.f32 %v2666, %v2681
        %v2825 = vadd.f32 %v2667, %v2685
        %v2826 = vmax.f32 %v2690, 0.0
        %v2827 = vmax.f32 %v2691, 0.0
        %v2828 = vmax.f32 %v2692, 0.0
        %v2829 = vmax.f32 %v2693, 0.0
        %v2830 = vmax.f32 %v2694, 0.0
        %v2831 = vmax.f32 %v2695, 0.0
        %v2832 = vmax.f32 %v2696, 0.0
        %v2833 = vmax.f32 %v2697, 0.0
        %v2834 = vmax.f32 %v2698, 0.0
        %v2835 = vmax.f32 %v2699, 0.0
        %v2836 = vmax.f32 %v2700, 0.0
        %v2837 = vmax.f32 %v2701, 0.0
        %v2838 = vmax.f32 %v2702, 0.0
        %v2839 = vmax.f32 %v2703, 0.0
        %v2840 = vmax.f32 %v2704, 0.0
        %v2841 = vmax.f32 %v2705, 0.0
        %v2842 = vmax.f32 %v2706, 0.0
        %v2843 = vmax.f32 %v2707, 0.0
        %v2844 = vmax.f32 %v2708, 0.0
        %v2845 = vmax.f32 %v2709, 0.0
        %v2846 = vmax.f32 %v2710, 0.0
        %v2847 = vmax.f32 %v2711, 0.0
        %v2848 = vmax.f32 %v2712, 0.0
        %v2849 = vmax.f32 %v2713, 0.0
        %v2850 = vmax.f32 %v2714, 0.0
        %v2851 = vmax.f32 %v2715, 0.0
        %v2852 = vmax.f32 %v2716, 0.0
        %v2853 = vmax.f32 %v2717, 0.0
        %v2854 = vmax.f32 %v2718, 0.0
        %v2855 = vmax.f32 %v2719, 0.0
        %v2856 = vmax.f32 %v2720, 0.0
        %v2857 = vmax.f32 %v2721, 0.0
        %v2858 = vmax.f32 %v2722, 0.0
        %v2859 = vmax.f32 %v2723, 0.0
        %v2860 = vmax.f32 %v2724, 0.0
        %v2861 = vmax.f32 %v2725, 0.0
        %v2862 = vmax.f32 %v2726, 0.0
        %v2863 = vmax.f32 %v2727, 0.0
        %v2864 = vmax.f32 %v2728, 0.0
        %v2865 = vmax.f32 %v2729, 0.0
        %v2866 = vmax.f32 %v2730, 0.0
        %v2867 = vmax.f32 %v2731, 0.0
        %v2868 = vmax.f32 %v2732, 0.0
        %v2869 = vmax.f32 %v2733, 0.0
        %v2870 = vmax.f32 %v2734, 0.0
        %v2871 = vmax.f32 %v2735, 0.0
        %v2872 = vmax.f32 %v2736, 0.0
        %v2873 = vmax.f32 %v2737, 0.0
        %v2874 = vmax.f32 %v2738, 0.0
        %v2875 = vmax.f32 %v2739, 0.0
        %v2876 = vmax.f32 %v2740, 0.0
        %v2877 = vmax.f32 %v2741, 0.0
        %v2878 = vmax.f32 %v2742, 0.0
        %v2879 = vmax.f32 %v2743, 0.0
        %v2880 = vmax.f32 %v2744, 0.0
        %v2881 = vmax.f32 %v2745, 0.0
        %v2882 = vmax.f32 %v2746, 0.0
        %v2883 = vmax.f32 %v2747, 0.0
        %v2884 = vmax.f32 %v2748, 0.0
        %v2885 = vmax.f32 %v2749, 0.0
        %v2886 = vmax.f32 %v2750, 0.0
        %v2887 = vmax.f32 %v2751, 0.0
        %v2888 = vmax.f32 %v2752, 0.0
        %v2889 = vmax.f32 %v2753, 0.0
        %v2890 = vmax.f32 %v2754, 0.0
        %v2891 = vmax.f32 %v2755, 0.0
        %v2892 = vmax.f32 %v2756, 0.0
        %v2893 = vmax.f32 %v2757, 0.0
        %v2894 = vmax.f32 %v2758, 0.0
        %v2895 = vmax.f32 %v2759, 0.0
        %v2896 = vmax.f32 %v2760, 0.0
        %v2897 = vmax.f32 %v2761, 0.0
        %v2898 = vmax.f32 %v2762, 0.0
        %v2899 = vmax.f32 %v2763, 0.0
        %v2900 = vmax.f32 %v2764, 0.0
        %v2901 = vmax.f32 %v2765, 0.0
        %v2902 = vmax.f32 %v2766, 0.0
        %v2903 = vmax.f32 %v2767, 0.0
        %v2904 = vmax.f32 %v2768, 0.0
        %v2905 = vmax.f32 %v2769, 0.0
        %v2906 = vmax.f32 %v2770, 0.0
        %v2907 = vmax.f32 %v2771, 0.0
        %v2908 = vmax.f32 %v2772, 0.0
        %v2909 = vmax.f32 %v2773, 0.0
        %v2910 = vmax.f32 %v2774, 0.0
        %v2911 = vmax.f32 %v2775, 0.0
        %v2912 = vmax.f32 %v2776, 0.0
        %v2913 = vmax.f32 %v2777, 0.0
        %v2914 = vmax.f32 %v2778, 0.0
        %v2915 = vmax.f32 %v2779, 0.0
        %v2916 = vmax.f32 %v2780, 0.0
        %v2917 = vmax.f32 %v2781, 0.0
        %v2918 = vmax.f32 %v2782, 0.0
        %v2919 = vmax.f32 %v2783, 0.0
        %v2920 = vmax.f32 %v2784, 0.0
        %v2921 = vmax.f32 %v2785, 0.0
        %v2922 = vmax.f32 %v2786, 0.0
        %v2923 = vmax.f32 %v2787, 0.0
        %v2924 = vmax.f32 %v2788, 0.0
        %v2925 = vmax.f32 %v2789, 0.0
        %v2926 = vmax.f32 %v2790, 0.0
        %v2927 = vmax.f32 %v2791, 0.0
        %v2928 = vmax.f32 %v2792, 0.0
        %v2929 = vmax.f32 %v2793, 0.0
        %v2930 = vmax.f32 %v2794, 0.0
        %v2931 = vmax.f32 %v2795, 0.0
        %v2932 = vmax.f32 %v2796, 0.0
        %v2933 = vmax.f32 %v2797, 0.0
        %v2934 = vmax.f32 %v2798, 0.0
        %v2935 = vmax.f32 %v2799, 0.0
        %v2936 = vmax.f32 %v2800, 0.0
        %v2937 = vmax.f32 %v2801, 0.0
        %v2938 = vmax.f32 %v2802, 0.0
        %v2939 = vmax.f32 %v2803, 0.0
        %v2940 = vmax.f32 %v2804, 0.0
        %v2941 = vmax.f32 %v2805, 0.0
        %v2942 = vmax.f32 %v2806, 0.0
        %v2943 = vmax.f32 %v2807, 0.0
        %v2944 = vmax.f32 %v2808, 0.0
        %v2945 = vmax.f32 %v2809, 0.0
        %v2946 = vmax.f32 %v2810, 0.0
        %v2947 = vmax.f32 %v2811, 0.0
        %v2948 = vmax.f32 %v2812, 0.0
        %v2949 = vmax.f32 %v2813, 0.0
        %v2950 = vmax.f32 %v2814, 0.0
        %v2951 = vmax.f32 %v2815, 0.0
        %v2952 = vmax.f32 %v2816, 0.0
        %v2953 = vmax.f32 %v2817, 0.0
        %v2954 = vmax.f32 %v2818, 0.0
        %v2955 = vmax.f32 %v2819, 0.0
        %v2956 = vmax.f32 %v2820, 0.0
        %v2957 = vmax.f32 %v2821, 0.0
        %v2958 = vmax.f32 %v2822, 0.0
        %v2959 = vmax.f32 %v2823, 0.0
        %v2960 = vmax.f32 %v2824, 0.0
        %v2961 = vmax.f32 %v2825, 0.0
        %vm3098 = vcmask 1046528
        %v3099 = vrot.slane %v2826, 1
        %v3100 = vrot.slane %v2830, 1
        %v3101 = vsel %vm3098, %v3099, %v3100
        %v3102 = vrot.slane %v2827, 1
        %v3103 = vrot.slane %v2831, 1
        %v3104 = vsel %vm3098, %v3102, %v3103
        %v3105 = vrot.slane %v2828, 1
        %v3106 = vrot.slane %v2832, 1
        %v3107 = vsel %vm3098, %v3105, %v3106
        %v3108 = vrot.slane %v2829, 1
        %v3109 = vrot.slane %v2833, 1
        %v3110 = vsel %vm3098, %v3108, %v3109
        %v3111 = vrot.slane %v2834, 1
        %v3112 = vsel %vm3098, %v3100, %v3111
        %v3113 = vrot.slane %v2835, 1
        %v3114 = vsel %vm3098, %v3103, %v3113
        %v3115 = vrot.slane %v2836, 1
        %v3116 = vsel %vm3098, %v3106, %v3115
        %v3117 = vrot.slane %v2837, 1
        %v3118 = vsel %vm3098, %v3109, %v3117
        %v3119 = vrot.slane %v2838, 1
        %v3120 = vsel %vm3098, %v3111, %v3119
        %v3121 = vrot.slane %v2839, 1
        %v3122 = vsel %vm3098, %v3113, %v3121
        %v3123 = vrot.slane %v2840, 1
        %v3124 = vsel %vm3098, %v3115, %v3123
        %v3125 = vrot.slane %v2841, 1
        %v3126 = vsel %vm3098, %v3117, %v3125
        %v3127 = vrot.slane %v2842, 1
        %v3128 = vsel %vm3098, %v3119, %v3127
        %v3129 = vrot.slane %v2843, 1
        %v3130 = vsel %vm3098, %v3121, %v3129
        %v3131 = vrot.slane %v2844, 1
        %v3132 = vsel %vm3098, %v3123, %v3131
        %v3133 = vrot.slane %v2845, 1
        %v3134 = vsel %vm3098, %v3125, %v3133
        %v3135 = vrot.slane %v2846, 1
        %v3136 = vsel %vm3098, %v3127, %v3135
        %v3137 = vrot.slane %v2847, 1
        %v3138 = vsel %vm3098, %v3129, %v3137
        %v3139 = vrot.slane %v2848, 1
        %v3140 = vsel %vm3098, %v3131, %v3139
        %v3141 = vrot.slane %v2849, 1
        %v3142 = vsel %vm3098, %v3133, %v3141
        %v3143 = vrot.slane %v2850, 1
        %v3144 = vsel %vm3098, %v3135, %v3143
        %v3145 = vrot.slane %v2851, 1
        %v3146 = vsel %vm3098, %v3137, %v3145
        %v3147 = vrot.slane %v2852, 1
        %v3148 = vsel %vm3098, %v3139, %v3147
        %v3149 = vrot.slane %v2853, 1
        %v3150 = vsel %vm3098, %v3141, %v3149
        %v3151 = vrot.slane %v2854, 1
        %v3152 = vsel %vm3098, %v3143, %v3151
        %v3153 = vrot.slane %v2855, 1
        %v3154 = vsel %vm3098, %v3145, %v3153
        %v3155 = vrot.slane %v2856, 1
        %v3156 = vsel %vm3098, %v3147, %v3155
        %v3157 = vrot.slane %v2857, 1
        %v3158 = vsel %vm3098, %v3149, %v3157
        %v3159 = vrot.slane %v2858, 1
        %v3160 = vsel %vm3098, %v3151, %v3159
        %v3161 = vrot.slane %v2859, 1
        %v3162 = vsel %vm3098, %v3153, %v3161
        %v3163 = vrot.slane %v2860, 1
        %v3164 = vsel %vm3098, %v3155, %v3163
        %v3165 = vrot.slane %v2861, 1
        %v3166 = vsel %vm3098, %v3157, %v3165
        %v3167 = vrot.slane %v2862, 1
        %v3168 = vsel %vm3098, %v3159, %v3167
        %v3169 = vrot.slane %v2863, 1
        %v3170 = vsel %vm3098, %v3161, %v3169
        %v3171 = vrot.slane %v2864, 1
        %v3172 = vsel %vm3098, %v3163, %v3171
        %v3173 = vrot.slane %v2865, 1
        %v3174 = vsel %vm3098, %v3165, %v3173
        %v3175 = vrot.slane %v2866, 1
        %v3176 = vsel %vm3098, %v3167, %v3175
        %v3177 = vrot.slane %v2867, 1
        %v3178 = vsel %vm3098, %v3169, %v3177
        %v3179 = vrot.slane %v2868, 1
        %v3180 = vsel %vm3098, %v3171, %v3179
        %v3181 = vrot.slane %v2869, 1
        %v3182 = vsel %vm3098, %v3173, %v3181
        %v3183 = vrot.slane %v2870, 1
        %v3184 = vsel %vm3098, %v3175, %v3183
        %v3185 = vrot.slane %v2871, 1
        %v3186 = vsel %vm3098, %v3177, %v3185
        %v3187 = vrot.slane %v2872, 1
        %v3188 = vsel %vm3098, %v3179, %v3187
        %v3189 = vrot.slane %v2873, 1
        %v3190 = vsel %vm3098, %v3181, %v3189
        %v3191 = vrot.slane %v2874, 1
        %v3192 = vsel %vm3098, %v3183, %v3191
        %v3193 = vrot.slane %v2875, 1
        %v3194 = vsel %vm3098, %v3185, %v3193
        %v3195 = vrot.slane %v2876, 1
        %v3196 = vsel %vm3098, %v3187, %v3195
        %v3197 = vrot.slane %v2877, 1
        %v3198 = vsel %vm3098, %v3189, %v3197
        %v3199 = vrot.slane %v2878, 1
        %v3200 = vsel %vm3098, %v3191, %v3199
        %v3201 = vrot.slane %v2879, 1
        %v3202 = vsel %vm3098, %v3193, %v3201
        %v3203 = vrot.slane %v2880, 1
        %v3204 = vsel %vm3098, %v3195, %v3203
        %v3205 = vrot.slane %v2881, 1
        %v3206 = vsel %vm3098, %v3197, %v3205
        %v3207 = vrot.slane %v2882, 1
        %v3208 = vsel %vm3098, %v3199, %v3207
        %v3209 = vrot.slane %v2883, 1
        %v3210 = vsel %vm3098, %v3201, %v3209
        %v3211 = vrot.slane %v2884, 1
        %v3212 = vsel %vm3098, %v3203, %v3211
        %v3213 = vrot.slane %v2885, 1
        %v3214 = vsel %vm3098, %v3205, %v3213
        %v3215 = vrot.slane %v2886, 1
        %v3216 = vsel %vm3098, %v3207, %v3215
        %v3217 = vrot.slane %v2887, 1
        %v3218 = vsel %vm3098, %v3209, %v3217
        %v3219 = vrot.slane %v2888, 1
        %v3220 = vsel %vm3098, %v3211, %v3219
        %v3221 = vrot.slane %v2889, 1
        %v3222 = vsel %vm3098, %v3213, %v3221
        %v3223 = vrot.slane %v2890, 1
        %v3224 = vsel %vm3098, %v3215, %v3223
        %v3225 = vrot.slane %v2891, 1
        %v3226 = vsel %vm3098, %v3217, %v3225
        %v3227 = vrot.slane %v2892, 1
        %v3228 = vsel %vm3098, %v3219, %v3227
        %v3229 = vrot.slane %v2893, 1
        %v3230 = vsel %vm3098, %v3221, %v3229
        %v3231 = vrot.slane %v2894, 1
        %v3232 = vsel %vm3098, %v3223, %v3231
        %v3233 = vrot.slane %v2895, 1
        %v3234 = vsel %vm3098, %v3225, %v3233
        %v3235 = vrot.slane %v2896, 1
        %v3236 = vsel %vm3098, %v3227, %v3235
        %v3237 = vrot.slane %v2897, 1
        %v3238 = vsel %vm3098, %v3229, %v3237
        %v3239 = vrot.slane %v2898, 1
        %v3240 = vsel %vm3098, %v3231, %v3239
        %v3241 = vrot.slane %v2899, 1
        %v3242 = vsel %vm3098, %v3233, %v3241
        %v3243 = vrot.slane %v2900, 1
        %v3244 = vsel %vm3098, %v3235, %v3243
        %v3245 = vrot.slane %v2901, 1
        %v3246 = vsel %vm3098, %v3237, %v3245
        %v3247 = vrot.slane %v2902, 1
        %v3248 = vsel %vm3098, %v3239, %v3247
        %v3249 = vrot.slane %v2903, 1
        %v3250 = vsel %vm3098, %v3241, %v3249
        %v3251 = vrot.slane %v2904, 1
        %v3252 = vsel %vm3098, %v3243, %v3251
        %v3253 = vrot.slane %v2905, 1
        %v3254 = vsel %vm3098, %v3245, %v3253
        %v3255 = vrot.slane %v2906, 1
        %v3256 = vsel %vm3098, %v3247, %v3255
        %v3257 = vrot.slane %v2907, 1
        %v3258 = vsel %vm3098, %v3249, %v3257
        %v3259 = vrot.slane %v2908, 1
        %v3260 = vsel %vm3098, %v3251, %v3259
        %v3261 = vrot.slane %v2909, 1
        %v3262 = vsel %vm3098, %v3253, %v3261
        %v3263 = vrot.slane %v2910, 1
        %v3264 = vsel %vm3098, %v3255, %v3263
        %v3265 = vrot.slane %v2911, 1
        %v3266 = vsel %vm3098, %v3257, %v3265
        %v3267 = vrot.slane %v2912, 1
        %v3268 = vsel %vm3098, %v3259, %v3267
        %v3269 = vrot.slane %v2913, 1
        %v3270 = vsel %vm3098, %v3261, %v3269
        %v3271 = vrot.slane %v2914, 1
        %v3272 = vsel %vm3098, %v3263, %v3271
        %v3273 = vrot.slane %v2915, 1
        %v3274 = vsel %vm3098, %v3265, %v3273
        %v3275 = vrot.slane %v2916, 1
        %v3276 = vsel %vm3098, %v3267, %v3275
        %v3277 = vrot.slane %v2917, 1
        %v3278 = vsel %vm3098, %v3269, %v3277
        %v3279 = vrot.slane %v2918, 1
        %v3280 = vsel %vm3098, %v3271, %v3279
        %v3281 = vrot.slane %v2919, 1
        %v3282 = vsel %vm3098, %v3273, %v3281
        %v3283 = vrot.slane %v2920, 1
        %v3284 = vsel %vm3098, %v3275, %v3283
        %v3285 = vrot.slane %v2921, 1
        %v3286 = vsel %vm3098, %v3277, %v3285
        %v3287 = vrot.slane %v2922, 1
        %v3288 = vsel %vm3098, %v3279, %v3287
        %v3289 = vrot.slane %v2923, 1
        %v3290 = vsel %vm3098, %v3281, %v3289
        %v3291 = vrot.slane %v2924, 1
        %v3292 = vsel %vm3098, %v3283, %v3291
        %v3293 = vrot.slane %v2925, 1
        %v3294 = vsel %vm3098, %v3285, %v3293
        %v3295 = vrot.slane %v2926, 1
        %v3296 = vsel %vm3098, %v3287, %v3295
        %v3297 = vrot.slane %v2927, 1
        %v3298 = vsel %vm3098, %v3289, %v3297
        %v3299 = vrot.slane %v2928, 1
        %v3300 = vsel %vm3098, %v3291, %v3299
        %v3301 = vrot.slane %v2929, 1
        %v3302 = vsel %vm3098, %v3293, %v3301
        %v3303 = vrot.slane %v2930, 1
        %v3304 = vsel %vm3098, %v3295, %v3303
        %v3305 = vrot.slane %v2931, 1
        %v3306 = vsel %vm3098, %v3297, %v3305
        %v3307 = vrot.slane %v2932, 1
        %v3308 = vsel %vm3098, %v3299, %v3307
        %v3309 = vrot.slane %v2933, 1
        %v3310 = vsel %vm3098, %v3301, %v3309
        %v3311 = vrot.slane %v2934, 1
        %v3312 = vsel %vm3098, %v3303, %v3311
        %v3313 = vrot.slane %v2935, 1
        %v3314 = vsel %vm3098, %v3305, %v3313
        %v3315 = vrot.slane %v2936, 1
        %v3316 = vsel %vm3098, %v3307, %v3315
        %v3317 = vrot.slane %v2937, 1
        %v3318 = vsel %vm3098, %v3309, %v3317
        %v3319 = vrot.slane %v2938, 1
        %v3320 = vsel %vm3098, %v3311, %v3319
        %v3321 = vrot.slane %v2939, 1
        %v3322 = vsel %vm3098, %v3313, %v3321
        %v3323 = vrot.slane %v2940, 1
        %v3324 = vsel %vm3098, %v3315, %v3323
        %v3325 = vrot.slane %v2941, 1
        %v3326 = vsel %vm3098, %v3317, %v3325
        %v3327 = vrot.slane %v2942, 1
        %v3328 = vsel %vm3098, %v3319, %v3327
        %v3329 = vrot.slane %v2943, 1
        %v3330 = vsel %vm3098, %v3321, %v3329
        %v3331 = vrot.slane %v2944, 1
        %v3332 = vsel %vm3098, %v3323, %v3331
        %v3333 = vrot.slane %v2945, 1
        %v3334 = vsel %vm3098, %v3325, %v3333
        %v3335 = vrot.slane %v2946, 1
        %v3336 = vsel %vm3098, %v3327, %v3335
        %v3337 = vrot.slane %v2947, 1
        %v3338 = vsel %vm3098, %v3329, %v3337
        %v3339 = vrot.slane %v2948, 1
        %v3340 = vsel %vm3098, %v3331, %v3339
        %v3341 = vrot.slane %v2949, 1
        %v3342 = vsel %vm3098, %v3333, %v3341
        %v3343 = vrot.slane %v2950, 1
        %v3344 = vsel %vm3098, %v3335, %v3343
        %v3345 = vrot.slane %v2951, 1
        %v3346 = vsel %vm3098, %v3337, %v3345
        %v3347 = vrot.slane %v2952, 1
        %v3348 = vsel %vm3098, %v3339, %v3347
        %v3349 = vrot.slane %v2953, 1
        %v3350 = vsel %vm3098, %v3341, %v3349
        %v3351 = vrot.slane %v2954, 1
        %v3352 = vsel %vm3098, %v3343, %v3351
        %v3353 = vrot.slane %v2955, 1
        %v3354 = vsel %vm3098, %v3345, %v3353
        %v3355 = vrot.slane %v2956, 1
        %v3356 = vsel %vm3098, %v3347, %v3355
        %v3357 = vrot.slane %v2957, 1
        %v3358 = vsel %vm3098, %v3349, %v3357
        %v3359 = vrot.slane %v2958, 1
        %v3360 = vsel %vm3098, %v3351, %v3359
        %v3361 = vrot.slane %v2959, 1
        %v3362 = vsel %vm3098, %v3353, %v3361
        %v3363 = vrot.slane %v2960, 1
        %v3364 = vsel %vm3098, %v3355, %v3363
        %v3365 = vrot.slane %v2961, 1
        %v3366 = vsel %vm3098, %v3357, %v3365
        %v3503 = vmax.f32 %v2826, %v3101
        %v3504 = vmax.f32 %v2827, %v3104
        %v3505 = vmax.f32 %v2828, %v3107
        %v3506 = vmax.f32 %v2829, %v3110
        %v3507 = vmax.f32 %v2830, %v3112
        %v3508 = vmax.f32 %v2831, %v3114
        %v3509 = vmax.f32 %v2832, %v3116
        %v3510 = vmax.f32 %v2833, %v3118
        %v3511 = vmax.f32 %v2834, %v3120
        %v3512 = vmax.f32 %v2835, %v3122
        %v3513 = vmax.f32 %v2836, %v3124
        %v3514 = vmax.f32 %v2837, %v3126
        %v3515 = vmax.f32 %v2838, %v3128
        %v3516 = vmax.f32 %v2839, %v3130
        %v3517 = vmax.f32 %v2840, %v3132
        %v3518 = vmax.f32 %v2841, %v3134
        %v3519 = vmax.f32 %v2842, %v3136
        %v3520 = vmax.f32 %v2843, %v3138
        %v3521 = vmax.f32 %v2844, %v3140
        %v3522 = vmax.f32 %v2845, %v3142
        %v3523 = vmax.f32 %v2846, %v3144
        %v3524 = vmax.f32 %v2847, %v3146
        %v3525 = vmax.f32 %v2848, %v3148
        %v3526 = vmax.f32 %v2849, %v3150
        %v3527 = vmax.f32 %v2850, %v3152
        %v3528 = vmax.f32 %v2851, %v3154
        %v3529 = vmax.f32 %v2852, %v3156
        %v3530 = vmax.f32 %v2853, %v3158
        %v3531 = vmax.f32 %v2854, %v3160
        %v3532 = vmax.f32 %v2855, %v3162
        %v3533 = vmax.f32 %v2856, %v3164
        %v3534 = vmax.f32 %v2857, %v3166
        %v3535 = vmax.f32 %v2858, %v3168
        %v3536 = vmax.f32 %v2859, %v3170
        %v3537 = vmax.f32 %v2860, %v3172
        %v3538 = vmax.f32 %v2861, %v3174
        %v3539 = vmax.f32 %v2862, %v3176
        %v3540 = vmax.f32 %v2863, %v3178
        %v3541 = vmax.f32 %v2864, %v3180
        %v3542 = vmax.f32 %v2865, %v3182
        %v3543 = vmax.f32 %v2866, %v3184
        %v3544 = vmax.f32 %v2867, %v3186
        %v3545 = vmax.f32 %v2868, %v3188
        %v3546 = vmax.f32 %v2869, %v3190
        %v3547 = vmax.f32 %v2870, %v3192
        %v3548 = vmax.f32 %v2871, %v3194
        %v3549 = vmax.f32 %v2872, %v3196
        %v3550 = vmax.f32 %v2873, %v3198
        %v3551 = vmax.f32 %v2874, %v3200
        %v3552 = vmax.f32 %v2875, %v3202
        %v3553 = vmax.f32 %v2876, %v3204
        %v3554 = vmax.f32 %v2877, %v3206
        %v3555 = vmax.f32 %v2878, %v3208
        %v3556 = vmax.f32 %v2879, %v3210
        %v3557 = vmax.f32 %v2880, %v3212
        %v3558 = vmax.f32 %v2881, %v3214
        %v3559 = vmax.f32 %v2882, %v3216
        %v3560 = vmax.f32 %v2883, %v3218
        %v3561 = vmax.f32 %v2884, %v3220
        %v3562 = vmax.f32 %v2885, %v3222
        %v3563 = vmax.f32 %v2886, %v3224
        %v3564 = vmax.f32 %v2887, %v3226
        %v3565 = vmax.f32 %v2888, %v3228
        %v3566 = vmax.f32 %v2889, %v3230
        %v3567 = vmax.f32 %v2890, %v3232
        %v3568 = vmax.f32 %v2891, %v3234
        %v3569 = vmax.f32 %v2892, %v3236
        %v3570 = vmax.f32 %v2893, %v3238
        %v3571 = vmax.f32 %v2894, %v3240
        %v3572 = vmax.f32 %v2895, %v3242
        %v3573 = vmax.f32 %v2896, %v3244
        %v3574 = vmax.f32 %v2897, %v3246
        %v3575 = vmax.f32 %v2898, %v3248
        %v3576 = vmax.f32 %v2899, %v3250
        %v3577 = vmax.f32 %v2900, %v3252
        %v3578 = vmax.f32 %v2901, %v3254
        %v3579 = vmax.f32 %v2902, %v3256
        %v3580 = vmax.f32 %v2903, %v3258
        %v3581 = vmax.f32 %v2904, %v3260
        %v3582 = vmax.f32 %v2905, %v3262
        %v3583 = vmax.f32 %v2906, %v3264
        %v3584 = vmax.f32 %v2907, %v3266
        %v3585 = vmax.f32 %v2908, %v3268
        %v3586 = vmax.f32 %v2909, %v3270
        %v3587 = vmax.f32 %v2910, %v3272
        %v3588 = vmax.f32 %v2911, %v3274
        %v3589 = vmax.f32 %v2912, %v3276
        %v3590 = vmax.f32 %v2913, %v3278
        %v3591 = vmax.f32 %v2914, %v3280
        %v3592 = vmax.f32 %v2915, %v3282
        %v3593 = vmax.f32 %v2916, %v3284
        %v3594 = vmax.f32 %v2917, %v3286
        %v3595 = vmax.f32 %v2918, %v3288
        %v3596 = vmax.f32 %v2919, %v3290
        %v3597 = vmax.f32 %v2920, %v3292
        %v3598 = vmax.f32 %v2921, %v3294
        %v3599 = vmax.f32 %v2922, %v3296
        %v3600 = vmax.f32 %v2923, %v3298
        %v3601 = vmax.f32 %v2924, %v3300
        %v3602 = vmax.f32 %v2925, %v3302
        %v3603 = vmax.f32 %v2926, %v3304
        %v3604 = vmax.f32 %v2927, %v3306
        %v3605 = vmax.f32 %v2928, %v3308
        %v3606 = vmax.f32 %v2929, %v3310
        %v3607 = vmax.f32 %v2930, %v3312
        %v3608 = vmax.f32 %v2931, %v3314
        %v3609 = vmax.f32 %v2932, %v3316
        %v3610 = vmax.f32 %v2933, %v3318
        %v3611 = vmax.f32 %v2934, %v3320
        %v3612 = vmax.f32 %v2935, %v3322
        %v3613 = vmax.f32 %v2936, %v3324
        %v3614 = vmax.f32 %v2937, %v3326
        %v3615 = vmax.f32 %v2938, %v3328
        %v3616 = vmax.f32 %v2939, %v3330
        %v3617 = vmax.f32 %v2940, %v3332
        %v3618 = vmax.f32 %v2941, %v3334
        %v3619 = vmax.f32 %v2942, %v3336
        %v3620 = vmax.f32 %v2943, %v3338
        %v3621 = vmax.f32 %v2944, %v3340
        %v3622 = vmax.f32 %v2945, %v3342
        %v3623 = vmax.f32 %v2946, %v3344
        %v3624 = vmax.f32 %v2947, %v3346
        %v3625 = vmax.f32 %v2948, %v3348
        %v3626 = vmax.f32 %v2949, %v3350
        %v3627 = vmax.f32 %v2950, %v3352
        %v3628 = vmax.f32 %v2951, %v3354
        %v3629 = vmax.f32 %v2952, %v3356
        %v3630 = vmax.f32 %v2953, %v3358
        %v3631 = vmax.f32 %v2954, %v3360
        %v3632 = vmax.f32 %v2955, %v3362
        %v3633 = vmax.f32 %v2956, %v3364
        %v3634 = vmax.f32 %v2957, %v3366
        %v3635 = vmax.f32 %v2958, %v3359
        %v3636 = vmax.f32 %v2959, %v3361
        %v3637 = vmax.f32 %v2960, %v3363
        %v3638 = vmax.f32 %v2961, %v3365
        %v3639 = vpack.c.bf16 %v3507, %v3503
        %v3640 = vpack.c.bf16 %v3508, %v3504
        %v3641 = vpack.c.bf16 %v3509, %v3505
        %v3642 = vpack.c.bf16 %v3510, %v3506
        %v3643 = vpack.c.bf16 %v3515, %v3511
        %v3644 = vpack.c.bf16 %v3516, %v3512
        %v3645 = vpack.c.bf16 %v3517, %v3513
        %v3646 = vpack.c.bf16 %v3518, %v3514
        %v3647 = vpack.c.bf16 %v3523, %v3519
        %v3648 = vpack.c.bf16 %v3524, %v3520
        %v3649 = vpack.c.bf16 %v3525, %v3521
        %v3650 = vpack.c.bf16 %v3526, %v3522
        %v3651 = vpack.c.bf16 %v3531, %v3527
        %v3652 = vpack.c.bf16 %v3532, %v3528
        %v3653 = vpack.c.bf16 %v3533, %v3529
        %v3654 = vpack.c.bf16 %v3534, %v3530
        %v3655 = vpack.c.bf16 %v3539, %v3535
        %v3656 = vpack.c.bf16 %v3540, %v3536
        %v3657 = vpack.c.bf16 %v3541, %v3537
        %v3658 = vpack.c.bf16 %v3542, %v3538
        %v3659 = vpack.c.bf16 %v3547, %v3543
        %v3660 = vpack.c.bf16 %v3548, %v3544
        %v3661 = vpack.c.bf16 %v3549, %v3545
        %v3662 = vpack.c.bf16 %v3550, %v3546
        %v3663 = vpack.c.bf16 %v3555, %v3551
        %v3664 = vpack.c.bf16 %v3556, %v3552
        %v3665 = vpack.c.bf16 %v3557, %v3553
        %v3666 = vpack.c.bf16 %v3558, %v3554
        %v3667 = vpack.c.bf16 %v3563, %v3559
        %v3668 = vpack.c.bf16 %v3564, %v3560
        %v3669 = vpack.c.bf16 %v3565, %v3561
        %v3670 = vpack.c.bf16 %v3566, %v3562
        %v3671 = vpack.c.bf16 %v3571, %v3567
        %v3672 = vpack.c.bf16 %v3572, %v3568
        %v3673 = vpack.c.bf16 %v3573, %v3569
        %v3674 = vpack.c.bf16 %v3574, %v3570
        %v3675 = vpack.c.bf16 %v3579, %v3575
        %v3676 = vpack.c.bf16 %v3580, %v3576
        %v3677 = vpack.c.bf16 %v3581, %v3577
        %v3678 = vpack.c.bf16 %v3582, %v3578
        %v3679 = vpack.c.bf16 %v3587, %v3583
        %v3680 = vpack.c.bf16 %v3588, %v3584
        %v3681 = vpack.c.bf16 %v3589, %v3585
        %v3682 = vpack.c.bf16 %v3590, %v3586
        %v3683 = vpack.c.bf16 %v3595, %v3591
        %v3684 = vpack.c.bf16 %v3596, %v3592
        %v3685 = vpack.c.bf16 %v3597, %v3593
        %v3686 = vpack.c.bf16 %v3598, %v3594
        %v3687 = vpack.c.bf16 %v3603, %v3599
        %v3688 = vpack.c.bf16 %v3604, %v3600
        %v3689 = vpack.c.bf16 %v3605, %v3601
        %v3690 = vpack.c.bf16 %v3606, %v3602
        %v3691 = vpack.c.bf16 %v3611, %v3607
        %v3692 = vpack.c.bf16 %v3612, %v3608
        %v3693 = vpack.c.bf16 %v3613, %v3609
        %v3694 = vpack.c.bf16 %v3614, %v3610
        %v3695 = vpack.c.bf16 %v3619, %v3615
        %v3696 = vpack.c.bf16 %v3620, %v3616
        %v3697 = vpack.c.bf16 %v3621, %v3617
        %v3698 = vpack.c.bf16 %v3622, %v3618
        %v3699 = vpack.c.bf16 %v3627, %v3623
        %v3700 = vpack.c.bf16 %v3628, %v3624
        %v3701 = vpack.c.bf16 %v3629, %v3625
        %v3702 = vpack.c.bf16 %v3630, %v3626
        %v3703 = vpack.c.bf16 %v3635, %v3631
        %v3704 = vpack.c.bf16 %v3636, %v3632
        %v3705 = vpack.c.bf16 %v3637, %v3633
        %v3706 = vpack.c.bf16 %v3638, %v3634
        %v3707 = vld [vmem:[%s3] sm:$0xff]
        %v3708 = vld [vmem:[%s3 + $0x8] sm:$0xf]
        %v3709 = vld [vmem:[%s3 + $0xc] sm:$0xff]
        %v3710 = vld [vmem:[%s3 + $0x14] sm:$0xf]
        %v3711 = vld [vmem:[%s3 + $0x18] sm:$0xff]
        %v3712 = vld [vmem:[%s3 + $0x20] sm:$0xf]
        %v3713 = vld [vmem:[%s3 + $0x24] sm:$0xff]
        %v3714 = vld [vmem:[%s3 + $0x2c] sm:$0xf]
        %v3715 = vld [vmem:[%s3 + $0x30] sm:$0xff]
        %v3716 = vld [vmem:[%s3 + $0x38] sm:$0xf]
        %v3717 = vld [vmem:[%s3 + $0x3c] sm:$0xff]
        %v3718 = vld [vmem:[%s3 + $0x44] sm:$0xf]
        %v3719 = vld [vmem:[%s3 + $0x48] sm:$0xff]
        %v3720 = vld [vmem:[%s3 + $0x50] sm:$0xf]
        %v3721 = vld [vmem:[%s3 + $0x54] sm:$0xff]
        %v3722 = vld [vmem:[%s3 + $0x5c] sm:$0xf]
        %v3723 = vld [vmem:[%s3 + $0x60] sm:$0xff]
        %v3724 = vld [vmem:[%s3 + $0x68] sm:$0xf]
        %v3725 = vld [vmem:[%s3 + $0x6c] sm:$0xff]
        %v3726 = vld [vmem:[%s3 + $0x74] sm:$0xf]
        %v3727 = vld [vmem:[%s3 + $0x78] sm:$0xff]
        %v3728 = vld [vmem:[%s3 + $0x80] sm:$0xf]
        %v3729 = vld [vmem:[%s3 + $0x84] sm:$0xff]
        %v3730 = vld [vmem:[%s3 + $0x8c] sm:$0xf]
        %v3731 = vld [vmem:[%s3 + $0x90] sm:$0xff]
        %v3732 = vld [vmem:[%s3 + $0x98] sm:$0xf]
        %v3733 = vld [vmem:[%s3 + $0x9c] sm:$0xff]
        %v3734 = vld [vmem:[%s3 + $0xa4] sm:$0xf]
        %v3735 = vld [vmem:[%s3 + $0xa8] sm:$0xff]
        %v3736 = vld [vmem:[%s3 + $0xb0] sm:$0xf]
        %v3737 = vld [vmem:[%s3 + $0xb4] sm:$0xff]
        %v3738 = vld [vmem:[%s3 + $0xbc] sm:$0xf]
        %v3739 = vld [vmem:[%s3 + $0xc0] sm:$0xff]
        %v3740 = vld [vmem:[%s3 + $0xc8] sm:$0xf]
        %v3741 = vld [vmem:[%s3 + $0xcc] sm:$0xff]
        %v3742 = vld [vmem:[%s3 + $0xd4] sm:$0xf]
        %v3743 = vld [vmem:[%s3 + $0xd8] sm:$0xff]
        %v3744 = vld [vmem:[%s3 + $0xe0] sm:$0xf]
        %v3783 = vunpack.c.l.b16 %v3707
        %v3784 = vunpack.c.h.b16 %v3707
        %v3785 = vunpack.c.l.b16 %v3708
        %v3786 = vunpack.c.l.b16 %v3709
        %v3787 = vunpack.c.h.b16 %v3709
        %v3788 = vunpack.c.l.b16 %v3710
        %v3789 = vunpack.c.l.b16 %v3711
        %v3790 = vunpack.c.h.b16 %v3711
        %v3791 = vunpack.c.l.b16 %v3712
        %v3792 = vunpack.c.l.b16 %v3713
        %v3793 = vunpack.c.h.b16 %v3713
        %v3794 = vunpack.c.l.b16 %v3714
        %v3795 = vunpack.c.l.b16 %v3715
        %v3796 = vunpack.c.h.b16 %v3715
        %v3797 = vunpack.c.l.b16 %v3716
        %v3798 = vunpack.c.l.b16 %v3717
        %v3799 = vunpack.c.h.b16 %v3717
        %v3800 = vunpack.c.l.b16 %v3718
        %v3801 = vunpack.c.l.b16 %v3719
        %v3802 = vunpack.c.h.b16 %v3719
        %v3803 = vunpack.c.l.b16 %v3720
        %v3804 = vunpack.c.l.b16 %v3721
        %v3805 = vunpack.c.h.b16 %v3721
        %v3806 = vunpack.c.l.b16 %v3722
        %v3807 = vunpack.c.l.b16 %v3723
        %v3808 = vunpack.c.h.b16 %v3723
        %v3809 = vunpack.c.l.b16 %v3724
        %v3810 = vunpack.c.l.b16 %v3725
        %v3811 = vunpack.c.h.b16 %v3725
        %v3812 = vunpack.c.l.b16 %v3726
        %v3813 = vunpack.c.l.b16 %v3727
        %v3814 = vunpack.c.h.b16 %v3727
        %v3815 = vunpack.c.l.b16 %v3728
        %v3816 = vunpack.c.l.b16 %v3729
        %v3817 = vunpack.c.h.b16 %v3729
        %v3818 = vunpack.c.l.b16 %v3730
        %v3819 = vunpack.c.l.b16 %v3731
        %v3820 = vunpack.c.h.b16 %v3731
        %v3821 = vunpack.c.l.b16 %v3732
        %v3822 = vunpack.c.l.b16 %v3733
        %v3823 = vunpack.c.h.b16 %v3733
        %v3824 = vunpack.c.l.b16 %v3734
        %v3825 = vunpack.c.l.b16 %v3735
        %v3826 = vunpack.c.h.b16 %v3735
        %v3827 = vunpack.c.l.b16 %v3736
        %v3828 = vunpack.c.l.b16 %v3737
        %v3829 = vunpack.c.h.b16 %v3737
        %v3830 = vunpack.c.l.b16 %v3738
        %v3831 = vunpack.c.l.b16 %v3739
        %v3832 = vunpack.c.h.b16 %v3739
        %v3833 = vunpack.c.l.b16 %v3740
        %v3834 = vunpack.c.l.b16 %v3741
        %v3835 = vunpack.c.h.b16 %v3741
        %v3836 = vunpack.c.l.b16 %v3742
        %v3837 = vunpack.c.l.b16 %v3743
        %v3838 = vunpack.c.h.b16 %v3743
        %v3839 = vunpack.c.l.b16 %v3744
        %v3840 = vpack.c.b16 %v3786, %v3783
        %v3841 = vpack.c.b16 %v3787, %v3784
        %v3842 = vpack.c.b16 %v3788, %v3785
        %v3843 = vpack.c.b16 %v3792, %v3789
        %v3844 = vpack.c.b16 %v3793, %v3790
        %v3845 = vpack.c.b16 %v3794, %v3791
        %v3846 = vpack.c.b16 %v3798, %v3795
        %v3847 = vpack.c.b16 %v3799, %v3796
        %v3848 = vpack.c.b16 %v3800, %v3797
        %v3849 = vpack.c.b16 %v3804, %v3801
        %v3850 = vpack.c.b16 %v3805, %v3802
        %v3851 = vpack.c.b16 %v3806, %v3803
        %v3852 = vpack.c.b16 %v3810, %v3807
        %v3853 = vpack.c.b16 %v3811, %v3808
        %v3854 = vpack.c.b16 %v3812, %v3809
        %v3855 = vpack.c.b16 %v3816, %v3813
        %v3856 = vpack.c.b16 %v3817, %v3814
        %v3857 = vpack.c.b16 %v3818, %v3815
        %v3858 = vpack.c.b16 %v3822, %v3819
        %v3859 = vpack.c.b16 %v3823, %v3820
        %v3860 = vpack.c.b16 %v3824, %v3821
        %v3861 = vpack.c.b16 %v3828, %v3825
        %v3862 = vpack.c.b16 %v3829, %v3826
        %v3863 = vpack.c.b16 %v3830, %v3827
        %v3864 = vpack.c.b16 %v3834, %v3831
        %v3865 = vpack.c.b16 %v3835, %v3832
        %v3866 = vpack.c.b16 %v3836, %v3833
        %v3867 = vpack.c.b16 %v3837, %v3837
        %v3868 = vpack.c.b16 %v3838, %v3838
        %v3869 = vpack.c.b16 %v3839, %v3839
        %vm3890 = vcmask 105472
        %v3892 = vsel %vm3890, %v3842, 0
        %v3895 = vsel %vm3890, %v3845, 0
        %v3898 = vsel %vm3890, %v3848, 0
        %v3901 = vsel %vm3890, %v3851, 0
        %v3904 = vsel %vm3890, %v3854, 0
        %v3907 = vsel %vm3890, %v3857, 0
        %v3910 = vsel %vm3890, %v3860, 0
        %v3913 = vsel %vm3890, %v3863, 0
        %v3916 = vsel %vm3890, %v3866, 0
        %v3919 = vsel %vm3890, %v3869, 0
        %vm3921 = vcmask 1045504
        %v3922 = vsel %vm3921, 4294967295, 65535
        %v3923 = vsel %vm3098, %v3922, 0
        %v3925 = vand.u32 %v3703, %v3923
        %v3928 = vand.u32 %v3704, %v3923
        %v3931 = vand.u32 %v3705, %v3923
        %v3934 = vand.u32 %v3706, %v3923
        %3936 = vmatprep.subr.bf16.mxu0 %v3640
        %3937 = vmatpush1.bf16.msra.mxu0 %v3639
        %3938 = vmatprep.subr.bf16.mxu0 %v3644
        %3939 = vmatpush1.bf16.msra.mxu0 %v3643
        %3940 = vmatprep.subr.bf16.mxu0 %v3648
        %3941 = vmatpush1.bf16.msra.mxu0 %v3647
        %3942 = vmatprep.subr.bf16.mxu0 %v3652
        %3943 = vmatpush1.bf16.msra.mxu0 %v3651
        %3944 = vmatprep.subr.bf16.mxu0 %v3656
        %3945 = vmatpush1.bf16.msra.mxu0 %v3655
        %3946 = vmatprep.subr.bf16.mxu0 %v3660
        %3947 = vmatpush1.bf16.msra.mxu0 %v3659
        %3948 = vmatprep.subr.bf16.mxu0 %v3664
        %3949 = vmatpush1.bf16.msra.mxu0 %v3663
        %3950 = vmatprep.subr.bf16.mxu0 %v3668
        %3951 = vmatpush1.bf16.msra.mxu0 %v3667
        %3952 = vmatprep.subr.bf16.mxu0 %v3672
        %3953 = vmatpush1.bf16.msra.mxu0 %v3671
        %3954 = vmatprep.subr.bf16.mxu0 %v3676
        %3955 = vmatpush1.bf16.msra.mxu0 %v3675
        %3956 = vmatprep.subr.bf16.mxu0 %v3680
        %3957 = vmatpush1.bf16.msra.mxu0 %v3679
        %3958 = vmatprep.subr.bf16.mxu0 %v3684
        %3959 = vmatpush1.bf16.msra.mxu0 %v3683
        %3960 = vmatprep.subr.bf16.mxu0 %v3688
        %3961 = vmatpush1.bf16.msra.mxu0 %v3687
        %3962 = vmatprep.subr.bf16.mxu0 %v3692
        %3963 = vmatpush1.bf16.msra.mxu0 %v3691
        %3964 = vmatprep.subr.bf16.mxu0 %v3696
        %3965 = vmatpush1.bf16.msra.mxu0 %v3695
        %3966 = vmatprep.subr.bf16.mxu0 %v3700
        %3967 = vmatpush1.bf16.msra.mxu0 %v3699
        %3968 = vmatprep.mubr.bf16.mxu0 %v3841
        %3969 = vmatmul.mubr.bf16.gmra.mrb[0].mxu0 %v3840
        %v3970 = vpop.f32.mrb[0].mxu0
        %v3971 = vadd.f32 0.0, %v3970
        %v3972 = vpop.f32.mrb[0].mxu0
        %v3973 = vadd.f32 0.0, %v3972
        %v3974 = vpop.f32.mrb[0].mxu0
        %v3975 = vadd.f32 0.0, %v3974
        %v3976 = vpop.f32.mrb[0].mxu0
        %v3977 = vadd.f32 0.0, %v3976
        %3978 = vmatprep.mubr.bf16.mxu0 %v3844
        %3979 = vmatmul.mubr.bf16.gmra.mrb[0].mxu0 %v3843
        %v3980 = vpop.f32.mrb[0].mxu0
        %v3981 = vadd.f32 0.0, %v3980
        %v3982 = vpop.f32.mrb[0].mxu0
        %v3983 = vadd.f32 0.0, %v3982
        %v3984 = vpop.f32.mrb[0].mxu0
        %v3985 = vadd.f32 0.0, %v3984
        %v3986 = vpop.f32.mrb[0].mxu0
        %v3987 = vadd.f32 0.0, %v3986
        %3988 = vmatprep.mubr.bf16.mxu0 %v3847
        %3989 = vmatmul.mubr.bf16.gmra.mrb[0].mxu0 %v3846
        %v3990 = vpop.f32.mrb[0].mxu0
        %v3991 = vadd.f32 0.0, %v3990
        %v3992 = vpop.f32.mrb[0].mxu0
        %v3993 = vadd.f32 0.0, %v3992
        %v3994 = vpop.f32.mrb[0].mxu0
        %v3995 = vadd.f32 0.0, %v3994
        %v3996 = vpop.f32.mrb[0].mxu0
        %v3997 = vadd.f32 0.0, %v3996
        %3998 = vmatprep.mubr.bf16.mxu0 %v3850
        %3999 = vmatmul.mubr.bf16.gmra.mrb[0].mxu0 %v3849
        %v4000 = vpop.f32.mrb[0].mxu0
        %v4001 = vadd.f32 0.0, %v4000
        %v4002 = vpop.f32.mrb[0].mxu0
        %v4003 = vadd.f32 0.0, %v4002
        %v4004 = vpop.f32.mrb[0].mxu0
        %v4005 = vadd.f32 0.0, %v4004
        %v4006 = vpop.f32.mrb[0].mxu0
        %v4007 = vadd.f32 0.0, %v4006
        %4008 = vmatprep.mubr.bf16.mxu0 %v3853
        %4009 = vmatmul.mubr.bf16.gmra.mrb[0].mxu0 %v3852
        %v4010 = vpop.f32.mrb[0].mxu0
        %v4011 = vadd.f32 0.0, %v4010
        %v4012 = vpop.f32.mrb[0].mxu0
        %v4013 = vadd.f32 0.0, %v4012
        %v4014 = vpop.f32.mrb[0].mxu0
        %v4015 = vadd.f32 0.0, %v4014
        %v4016 = vpop.f32.mrb[0].mxu0
        %v4017 = vadd.f32 0.0, %v4016
        %4018 = vmatprep.mubr.bf16.mxu0 %v3856
        %4019 = vmatmul.mubr.bf16.gmra.mrb[0].mxu0 %v3855
        %v4020 = vpop.f32.mrb[0].mxu0
        %v4021 = vadd.f32 0.0, %v4020
        %v4022 = vpop.f32.mrb[0].mxu0
        %v4023 = vadd.f32 0.0, %v4022
        %v4024 = vpop.f32.mrb[0].mxu0
        %v4025 = vadd.f32 0.0, %v4024
        %v4026 = vpop.f32.mrb[0].mxu0
        %v4027 = vadd.f32 0.0, %v4026
        %4028 = vmatprep.mubr.bf16.mxu0 %v3859
        %4029 = vmatmul.mubr.bf16.gmra.mrb[0].mxu0 %v3858
        %v4030 = vpop.f32.mrb[0].mxu0
        %v4031 = vadd.f32 0.0, %v4030
        %v4032 = vpop.f32.mrb[0].mxu0
        %v4033 = vadd.f32 0.0, %v4032
        %v4034 = vpop.f32.mrb[0].mxu0
        %v4035 = vadd.f32 0.0, %v4034
        %v4036 = vpop.f32.mrb[0].mxu0
        %v4037 = vadd.f32 0.0, %v4036
        %4038 = vmatprep.mubr.bf16.mxu0 %v3862
        %4039 = vmatmul.mubr.bf16.gmra.mrb[0].mxu0 %v3861
        %v4040 = vpop.f32.mrb[0].mxu0
        %v4041 = vadd.f32 0.0, %v4040
        %v4042 = vpop.f32.mrb[0].mxu0
        %v4043 = vadd.f32 0.0, %v4042
        %v4044 = vpop.f32.mrb[0].mxu0
        %v4045 = vadd.f32 0.0, %v4044
        %v4046 = vpop.f32.mrb[0].mxu0
        %v4047 = vadd.f32 0.0, %v4046
        %4048 = vmatprep.mubr.bf16.mxu0 %v3865
        %4049 = vmatmul.mubr.bf16.gmra.mrb[0].mxu0 %v3864
        %v4050 = vpop.f32.mrb[0].mxu0
        %v4051 = vadd.f32 0.0, %v4050
        %v4052 = vpop.f32.mrb[0].mxu0
        %v4053 = vadd.f32 0.0, %v4052
        %v4054 = vpop.f32.mrb[0].mxu0
        %v4055 = vadd.f32 0.0, %v4054
        %v4056 = vpop.f32.mrb[0].mxu0
        %v4057 = vadd.f32 0.0, %v4056
        %4058 = vmatprep.mubr.bf16.mxu0 %v3868
        %4059 = vmatmul.mubr.bf16.gmra.mrb[0].mxu0 %v3867
        %v4060 = vpop.f32.mrb[0].mxu0
        %v4061 = vadd.f32 0.0, %v4060
        %v4062 = vpop.f32.mrb[0].mxu0
        %v4063 = vadd.f32 0.0, %v4062
        %v4064 = vpop.f32.mrb[0].mxu0
        %v4065 = vpop.f32.mrb[0].mxu0
        %4066 = vdwg.mxu0
        %4067 = vmatprep.subr.bf16.mxu0 %v3928
        %4068 = vmatpush1.bf16.msra.mxu0 %v3925
        %4069 = vmatprep.subr.bf16.mxu0 0
        %4070 = vmatpush1.bf16.msra.mxu0 0
        %4071 = vmatprep.subr.bf16.mxu0 0
        %4072 = vmatpush1.bf16.msra.mxu0 0
        %4073 = vmatprep.subr.bf16.mxu0 0
        %4074 = vmatpush1.bf16.msra.mxu0 0
        %4075 = vmatprep.subr.bf16.mxu0 0
        %4076 = vmatpush1.bf16.msra.mxu0 0
        %4077 = vmatprep.subr.bf16.mxu0 0
        %4078 = vmatpush1.bf16.msra.mxu0 0
        %4079 = vmatprep.subr.bf16.mxu0 0
        %4080 = vmatpush1.bf16.msra.mxu0 0
        %4081 = vmatprep.subr.bf16.mxu0 0
        %4082 = vmatpush1.bf16.msra.mxu0 0
        %4083 = vmatprep.subr.bf16.mxu0 0
        %4084 = vmatpush1.bf16.msra.mxu0 0
        %4085 = vmatprep.subr.bf16.mxu0 0
        %4086 = vmatpush1.bf16.msra.mxu0 0
        %4087 = vmatprep.subr.bf16.mxu0 0
        %4088 = vmatpush1.bf16.msra.mxu0 0
        %4089 = vmatprep.subr.bf16.mxu0 0
        %4090 = vmatpush1.bf16.msra.mxu0 0
        %4091 = vmatprep.subr.bf16.mxu0 0
        %4092 = vmatpush1.bf16.msra.mxu0 0
        %4093 = vmatprep.subr.bf16.mxu0 0
        %4094 = vmatpush1.bf16.msra.mxu0 0
        %4095 = vmatprep.subr.bf16.mxu0 0
        %4096 = vmatpush1.bf16.msra.mxu0 0
        %4097 = vmatprep.subr.bf16.mxu0 0
        %4098 = vmatpush1.bf16.msra.mxu0 0
        %4099 = vmatprep.mubr.bf16.mxu0 0
        %4100 = vmatmul.mubr.bf16.gmra.mrb[0].mxu0 %v3892
        %v4101 = vpop.f32.mrb[0].mxu0
        %v4102 = vadd.f32 %v3971, %v4101
        %v4103 = vpop.f32.mrb[0].mxu0
        %v4104 = vadd.f32 %v3973, %v4103
        %v4105 = vpop.f32.mrb[0].mxu0
        %v4106 = vadd.f32 %v3975, %v4105
        %v4107 = vpop.f32.mrb[0].mxu0
        %v4108 = vadd.f32 %v3977, %v4107
        %4109 = vmatprep.mubr.bf16.mxu0 0
        %4110 = vmatmul.mubr.bf16.gmra.mrb[0].mxu0 %v3895
        %v4111 = vpop.f32.mrb[0].mxu0
        %v4112 = vadd.f32 %v3981, %v4111
        %v4113 = vpop.f32.mrb[0].mxu0
        %v4114 = vadd.f32 %v3983, %v4113
        %v4115 = vpop.f32.mrb[0].mxu0
        %v4116 = vadd.f32 %v3985, %v4115
        %v4117 = vpop.f32.mrb[0].mxu0
        %v4118 = vadd.f32 %v3987, %v4117
        %4119 = vmatprep.mubr.bf16.mxu0 0
        %4120 = vmatmul.mubr.bf16.gmra.mrb[0].mxu0 %v3898
        %v4121 = vpop.f32.mrb[0].mxu0
        %v4122 = vadd.f32 %v3991, %v4121
        %v4123 = vpop.f32.mrb[0].mxu0
        %v4124 = vadd.f32 %v3993, %v4123
        %v4125 = vpop.f32.mrb[0].mxu0
        %v4126 = vadd.f32 %v3995, %v4125
        %v4127 = vpop.f32.mrb[0].mxu0
        %v4128 = vadd.f32 %v3997, %v4127
        %4129 = vmatprep.mubr.bf16.mxu0 0
        %4130 = vmatmul.mubr.bf16.gmra.mrb[0].mxu0 %v3901
        %v4131 = vpop.f32.mrb[0].mxu0
        %v4132 = vadd.f32 %v4001, %v4131
        %v4133 = vpop.f32.mrb[0].mxu0
        %v4134 = vadd.f32 %v4003, %v4133
        %v4135 = vpop.f32.mrb[0].mxu0
        %v4136 = vadd.f32 %v4005, %v4135
        %v4137 = vpop.f32.mrb[0].mxu0
        %v4138 = vadd.f32 %v4007, %v4137
        %4139 = vmatprep.mubr.bf16.mxu0 0
        %4140 = vmatmul.mubr.bf16.gmra.mrb[0].mxu0 %v3904
        %v4141 = vpop.f32.mrb[0].mxu0
        %v4142 = vadd.f32 %v4011, %v4141
        %v4143 = vpop.f32.mrb[0].mxu0
        %v4144 = vadd.f32 %v4013, %v4143
        %v4145 = vpop.f32.mrb[0].mxu0
        %v4146 = vadd.f32 %v4015, %v4145
        %v4147 = vpop.f32.mrb[0].mxu0
        %v4148 = vadd.f32 %v4017, %v4147
        %4149 = vmatprep.mubr.bf16.mxu0 0
        %4150 = vmatmul.mubr.bf16.gmra.mrb[0].mxu0 %v3907
        %v4151 = vpop.f32.mrb[0].mxu0
        %v4152 = vadd.f32 %v4021, %v4151
        %v4153 = vpop.f32.mrb[0].mxu0
        %v4154 = vadd.f32 %v4023, %v4153
        %v4155 = vpop.f32.mrb[0].mxu0
        %v4156 = vadd.f32 %v4025, %v4155
        %v4157 = vpop.f32.mrb[0].mxu0
        %v4158 = vadd.f32 %v4027, %v4157
        %4159 = vmatprep.mubr.bf16.mxu0 0
        %4160 = vmatmul.mubr.bf16.gmra.mrb[0].mxu0 %v3910
        %v4161 = vpop.f32.mrb[0].mxu0
        %v4162 = vadd.f32 %v4031, %v4161
        %v4163 = vpop.f32.mrb[0].mxu0
        %v4164 = vadd.f32 %v4033, %v4163
        %v4165 = vpop.f32.mrb[0].mxu0
        %v4166 = vadd.f32 %v4035, %v4165
        %v4167 = vpop.f32.mrb[0].mxu0
        %v4168 = vadd.f32 %v4037, %v4167
        %4169 = vmatprep.mubr.bf16.mxu0 0
        %4170 = vmatmul.mubr.bf16.gmra.mrb[0].mxu0 %v3913
        %v4171 = vpop.f32.mrb[0].mxu0
        %v4172 = vadd.f32 %v4041, %v4171
        %v4173 = vpop.f32.mrb[0].mxu0
        %v4174 = vadd.f32 %v4043, %v4173
        %v4175 = vpop.f32.mrb[0].mxu0
        %v4176 = vadd.f32 %v4045, %v4175
        %v4177 = vpop.f32.mrb[0].mxu0
        %v4178 = vadd.f32 %v4047, %v4177
        %4179 = vmatprep.mubr.bf16.mxu0 0
        %4180 = vmatmul.mubr.bf16.gmra.mrb[0].mxu0 %v3916
        %v4181 = vpop.f32.mrb[0].mxu0
        %v4182 = vadd.f32 %v4051, %v4181
        %v4183 = vpop.f32.mrb[0].mxu0
        %v4184 = vadd.f32 %v4053, %v4183
        %v4185 = vpop.f32.mrb[0].mxu0
        %v4186 = vadd.f32 %v4055, %v4185
        %v4187 = vpop.f32.mrb[0].mxu0
        %v4188 = vadd.f32 %v4057, %v4187
        %4189 = vmatprep.mubr.bf16.mxu0 0
        %4190 = vmatmul.mubr.bf16.gmra.mrb[0].mxu0 %v3919
        %v4191 = vpop.f32.mrb[0].mxu0
        %v4192 = vadd.f32 %v4061, %v4191
        %v4193 = vpop.f32.mrb[0].mxu0
        %v4194 = vadd.f32 %v4063, %v4193
        %v4195 = vpop.f32.mrb[0].mxu0
        %v4196 = vpop.f32.mrb[0].mxu0
        %4197 = vdwg.mxu0
        %4198 = vmatprep.subr.bf16.mxu0 %v3642
        %4199 = vmatpush1.bf16.msra.mxu0 %v3641
        %4200 = vmatprep.subr.bf16.mxu0 %v3646
        %4201 = vmatpush1.bf16.msra.mxu0 %v3645
        %4202 = vmatprep.subr.bf16.mxu0 %v3650
        %4203 = vmatpush1.bf16.msra.mxu0 %v3649
        %4204 = vmatprep.subr.bf16.mxu0 %v3654
        %4205 = vmatpush1.bf16.msra.mxu0 %v3653
        %4206 = vmatprep.subr.bf16.mxu0 %v3658
        %4207 = vmatpush1.bf16.msra.mxu0 %v3657
        %4208 = vmatprep.subr.bf16.mxu0 %v3662
        %4209 = vmatpush1.bf16.msra.mxu0 %v3661
        %4210 = vmatprep.subr.bf16.mxu0 %v3666
        %4211 = vmatpush1.bf16.msra.mxu0 %v3665
        %4212 = vmatprep.subr.bf16.mxu0 %v3670
        %4213 = vmatpush1.bf16.msra.mxu0 %v3669
        %4214 = vmatprep.subr.bf16.mxu0 %v3674
        %4215 = vmatpush1.bf16.msra.mxu0 %v3673
        %4216 = vmatprep.subr.bf16.mxu0 %v3678
        %4217 = vmatpush1.bf16.msra.mxu0 %v3677
        %4218 = vmatprep.subr.bf16.mxu0 %v3682
        %4219 = vmatpush1.bf16.msra.mxu0 %v3681
        %4220 = vmatprep.subr.bf16.mxu0 %v3686
        %4221 = vmatpush1.bf16.msra.mxu0 %v3685
        %4222 = vmatprep.subr.bf16.mxu0 %v3690
        %4223 = vmatpush1.bf16.msra.mxu0 %v3689
        %4224 = vmatprep.subr.bf16.mxu0 %v3694
        %4225 = vmatpush1.bf16.msra.mxu0 %v3693
        %4226 = vmatprep.subr.bf16.mxu0 %v3698
        %4227 = vmatpush1.bf16.msra.mxu0 %v3697
        %4228 = vmatprep.subr.bf16.mxu0 %v3702
        %4229 = vmatpush1.bf16.msra.mxu0 %v3701
        %4230 = vmatprep.mubr.bf16.mxu0 %v3841
        %4231 = vmatmul.mubr.bf16.gmra.mrb[0].mxu0 %v3840
        %v4232 = vpop.f32.mrb[0].mxu0
        %v4233 = vadd.f32 0.0, %v4232
        %v4234 = vpop.f32.mrb[0].mxu0
        %v4235 = vadd.f32 0.0, %v4234
        %v4236 = vpop.f32.mrb[0].mxu0
        %v4237 = vadd.f32 0.0, %v4236
        %v4238 = vpop.f32.mrb[0].mxu0
        %v4239 = vadd.f32 0.0, %v4238
        %4240 = vmatprep.mubr.bf16.mxu0 %v3844
        %4241 = vmatmul.mubr.bf16.gmra.mrb[0].mxu0 %v3843
        %v4242 = vpop.f32.mrb[0].mxu0
        %v4243 = vadd.f32 0.0, %v4242
        %v4244 = vpop.f32.mrb[0].mxu0
        %v4245 = vadd.f32 0.0, %v4244
        %v4246 = vpop.f32.mrb[0].mxu0
        %v4247 = vadd.f32 0.0, %v4246
        %v4248 = vpop.f32.mrb[0].mxu0
        %v4249 = vadd.f32 0.0, %v4248
        %4250 = vmatprep.mubr.bf16.mxu0 %v3847
        %4251 = vmatmul.mubr.bf16.gmra.mrb[0].mxu0 %v3846
        %v4252 = vpop.f32.mrb[0].mxu0
        %v4253 = vadd.f32 0.0, %v4252
        %v4254 = vpop.f32.mrb[0].mxu0
        %v4255 = vadd.f32 0.0, %v4254
        %v4256 = vpop.f32.mrb[0].mxu0
        %v4257 = vadd.f32 0.0, %v4256
        %v4258 = vpop.f32.mrb[0].mxu0
        %v4259 = vadd.f32 0.0, %v4258
        %4260 = vmatprep.mubr.bf16.mxu0 %v3850
        %4261 = vmatmul.mubr.bf16.gmra.mrb[0].mxu0 %v3849
        %v4262 = vpop.f32.mrb[0].mxu0
        %v4263 = vadd.f32 0.0, %v4262
        %v4264 = vpop.f32.mrb[0].mxu0
        %v4265 = vadd.f32 0.0, %v4264
        %v4266 = vpop.f32.mrb[0].mxu0
        %v4267 = vadd.f32 0.0, %v4266
        %v4268 = vpop.f32.mrb[0].mxu0
        %v4269 = vadd.f32 0.0, %v4268
        %4270 = vmatprep.mubr.bf16.mxu0 %v3853
        %4271 = vmatmul.mubr.bf16.gmra.mrb[0].mxu0 %v3852
        %v4272 = vpop.f32.mrb[0].mxu0
        %v4273 = vadd.f32 0.0, %v4272
        %v4274 = vpop.f32.mrb[0].mxu0
        %v4275 = vadd.f32 0.0, %v4274
        %v4276 = vpop.f32.mrb[0].mxu0
        %v4277 = vadd.f32 0.0, %v4276
        %v4278 = vpop.f32.mrb[0].mxu0
        %v4279 = vadd.f32 0.0, %v4278
        %4280 = vmatprep.mubr.bf16.mxu0 %v3856
        %4281 = vmatmul.mubr.bf16.gmra.mrb[0].mxu0 %v3855
        %v4282 = vpop.f32.mrb[0].mxu0
        %v4283 = vadd.f32 0.0, %v4282
        %v4284 = vpop.f32.mrb[0].mxu0
        %v4285 = vadd.f32 0.0, %v4284
        %v4286 = vpop.f32.mrb[0].mxu0
        %v4287 = vadd.f32 0.0, %v4286
        %v4288 = vpop.f32.mrb[0].mxu0
        %v4289 = vadd.f32 0.0, %v4288
        %4290 = vmatprep.mubr.bf16.mxu0 %v3859
        %4291 = vmatmul.mubr.bf16.gmra.mrb[0].mxu0 %v3858
        %v4292 = vpop.f32.mrb[0].mxu0
        %v4293 = vadd.f32 0.0, %v4292
        %v4294 = vpop.f32.mrb[0].mxu0
        %v4295 = vadd.f32 0.0, %v4294
        %v4296 = vpop.f32.mrb[0].mxu0
        %v4297 = vadd.f32 0.0, %v4296
        %v4298 = vpop.f32.mrb[0].mxu0
        %v4299 = vadd.f32 0.0, %v4298
        %4300 = vmatprep.mubr.bf16.mxu0 %v3862
        %4301 = vmatmul.mubr.bf16.gmra.mrb[0].mxu0 %v3861
        %v4302 = vpop.f32.mrb[0].mxu0
        %v4303 = vadd.f32 0.0, %v4302
        %v4304 = vpop.f32.mrb[0].mxu0
        %v4305 = vadd.f32 0.0, %v4304
        %v4306 = vpop.f32.mrb[0].mxu0
        %v4307 = vadd.f32 0.0, %v4306
        %v4308 = vpop.f32.mrb[0].mxu0
        %v4309 = vadd.f32 0.0, %v4308
        %4310 = vmatprep.mubr.bf16.mxu0 %v3865
        %4311 = vmatmul.mubr.bf16.gmra.mrb[0].mxu0 %v3864
        %v4312 = vpop.f32.mrb[0].mxu0
        %v4313 = vadd.f32 0.0, %v4312
        %v4314 = vpop.f32.mrb[0].mxu0
        %v4315 = vadd.f32 0.0, %v4314
        %v4316 = vpop.f32.mrb[0].mxu0
        %v4317 = vadd.f32 0.0, %v4316
        %v4318 = vpop.f32.mrb[0].mxu0
        %v4319 = vadd.f32 0.0, %v4318
        %4320 = vmatprep.mubr.bf16.mxu0 %v3868
        %4321 = vmatmul.mubr.bf16.gmra.mrb[0].mxu0 %v3867
        %v4322 = vpop.f32.mrb[0].mxu0
        %v4323 = vadd.f32 0.0, %v4322
        %v4324 = vpop.f32.mrb[0].mxu0
        %v4325 = vadd.f32 0.0, %v4324
        %v4326 = vpop.f32.mrb[0].mxu0
        %v4327 = vpop.f32.mrb[0].mxu0
        %4328 = vdwg.mxu0
        %4329 = vmatprep.subr.bf16.mxu0 %v3934
        %4330 = vmatpush1.bf16.msra.mxu0 %v3931
        %4331 = vmatprep.subr.bf16.mxu0 0
        %4332 = vmatpush1.bf16.msra.mxu0 0
        %4333 = vmatprep.subr.bf16.mxu0 0
        %4334 = vmatpush1.bf16.msra.mxu0 0
        %4335 = vmatprep.subr.bf16.mxu0 0
        %4336 = vmatpush1.bf16.msra.mxu0 0
        %4337 = vmatprep.subr.bf16.mxu0 0
        %4338 = vmatpush1.bf16.msra.mxu0 0
        %4339 = vmatprep.subr.bf16.mxu0 0
        %4340 = vmatpush1.bf16.msra.mxu0 0
        %4341 = vmatprep.subr.bf16.mxu0 0
        %4342 = vmatpush1.bf16.msra.mxu0 0
        %4343 = vmatprep.subr.bf16.mxu0 0
        %4344 = vmatpush1.bf16.msra.mxu0 0
        %4345 = vmatprep.subr.bf16.mxu0 0
        %4346 = vmatpush1.bf16.msra.mxu0 0
        %4347 = vmatprep.subr.bf16.mxu0 0
        %4348 = vmatpush1.bf16.msra.mxu0 0
        %4349 = vmatprep.subr.bf16.mxu0 0
        %4350 = vmatpush1.bf16.msra.mxu0 0
        %4351 = vmatprep.subr.bf16.mxu0 0
        %4352 = vmatpush1.bf16.msra.mxu0 0
        %4353 = vmatprep.subr.bf16.mxu0 0
        %4354 = vmatpush1.bf16.msra.mxu0 0
        %4355 = vmatprep.subr.bf16.mxu0 0
        %4356 = vmatpush1.bf16.msra.mxu0 0
        %4357 = vmatprep.subr.bf16.mxu0 0
        %4358 = vmatpush1.bf16.msra.mxu0 0
        %4359 = vmatprep.subr.bf16.mxu0 0
        %4360 = vmatpush1.bf16.msra.mxu0 0
        %4361 = vmatprep.mubr.bf16.mxu0 0
        %4362 = vmatmul.mubr.bf16.gmra.mrb[0].mxu0 %v3892
        %v4363 = vpop.f32.mrb[0].mxu0
        %v4364 = vadd.f32 %v4233, %v4363
        %v4365 = vpop.f32.mrb[0].mxu0
        %v4366 = vadd.f32 %v4235, %v4365
        %v4367 = vpop.f32.mrb[0].mxu0
        %v4368 = vadd.f32 %v4237, %v4367
        %v4369 = vpop.f32.mrb[0].mxu0
        %v4370 = vadd.f32 %v4239, %v4369
        %4371 = vmatprep.mubr.bf16.mxu0 0
        %4372 = vmatmul.mubr.bf16.gmra.mrb[0].mxu0 %v3895
        %v4373 = vpop.f32.mrb[0].mxu0
        %v4374 = vadd.f32 %v4243, %v4373
        %v4375 = vpop.f32.mrb[0].mxu0
        %v4376 = vadd.f32 %v4245, %v4375
        %v4377 = vpop.f32.mrb[0].mxu0
        %v4378 = vadd.f32 %v4247, %v4377
        %v4379 = vpop.f32.mrb[0].mxu0
        %v4380 = vadd.f32 %v4249, %v4379
        %4381 = vmatprep.mubr.bf16.mxu0 0
        %4382 = vmatmul.mubr.bf16.gmra.mrb[0].mxu0 %v3898
        %v4383 = vpop.f32.mrb[0].mxu0
        %v4384 = vadd.f32 %v4253, %v4383
        %v4385 = vpop.f32.mrb[0].mxu0
        %v4386 = vadd.f32 %v4255, %v4385
        %v4387 = vpop.f32.mrb[0].mxu0
        %v4388 = vadd.f32 %v4257, %v4387
        %v4389 = vpop.f32.mrb[0].mxu0
        %v4390 = vadd.f32 %v4259, %v4389
        %4391 = vmatprep.mubr.bf16.mxu0 0
        %4392 = vmatmul.mubr.bf16.gmra.mrb[0].mxu0 %v3901
        %v4393 = vpop.f32.mrb[0].mxu0
        %v4394 = vadd.f32 %v4263, %v4393
        %v4395 = vpop.f32.mrb[0].mxu0
        %v4396 = vadd.f32 %v4265, %v4395
        %v4397 = vpop.f32.mrb[0].mxu0
        %v4398 = vadd.f32 %v4267, %v4397
        %v4399 = vpop.f32.mrb[0].mxu0
        %v4400 = vadd.f32 %v4269, %v4399
        %4401 = vmatprep.mubr.bf16.mxu0 0
        %4402 = vmatmul.mubr.bf16.gmra.mrb[0].mxu0 %v3904
        %v4403 = vpop.f32.mrb[0].mxu0
        %v4404 = vadd.f32 %v4273, %v4403
        %v4405 = vpop.f32.mrb[0].mxu0
        %v4406 = vadd.f32 %v4275, %v4405
        %v4407 = vpop.f32.mrb[0].mxu0
        %v4408 = vadd.f32 %v4277, %v4407
        %v4409 = vpop.f32.mrb[0].mxu0
        %v4410 = vadd.f32 %v4279, %v4409
        %4411 = vmatprep.mubr.bf16.mxu0 0
        %4412 = vmatmul.mubr.bf16.gmra.mrb[0].mxu0 %v3907
        %v4413 = vpop.f32.mrb[0].mxu0
        %v4414 = vadd.f32 %v4283, %v4413
        %v4415 = vpop.f32.mrb[0].mxu0
        %v4416 = vadd.f32 %v4285, %v4415
        %v4417 = vpop.f32.mrb[0].mxu0
        %v4418 = vadd.f32 %v4287, %v4417
        %v4419 = vpop.f32.mrb[0].mxu0
        %v4420 = vadd.f32 %v4289, %v4419
        %4421 = vmatprep.mubr.bf16.mxu0 0
        %4422 = vmatmul.mubr.bf16.gmra.mrb[0].mxu0 %v3910
        %v4423 = vpop.f32.mrb[0].mxu0
        %v4424 = vadd.f32 %v4293, %v4423
        %v4425 = vpop.f32.mrb[0].mxu0
        %v4426 = vadd.f32 %v4295, %v4425
        %v4427 = vpop.f32.mrb[0].mxu0
        %v4428 = vadd.f32 %v4297, %v4427
        %v4429 = vpop.f32.mrb[0].mxu0
        %v4430 = vadd.f32 %v4299, %v4429
        %4431 = vmatprep.mubr.bf16.mxu0 0
        %4432 = vmatmul.mubr.bf16.gmra.mrb[0].mxu0 %v3913
        %v4433 = vpop.f32.mrb[0].mxu0
        %v4434 = vadd.f32 %v4303, %v4433
        %v4435 = vpop.f32.mrb[0].mxu0
        %v4436 = vadd.f32 %v4305, %v4435
        %v4437 = vpop.f32.mrb[0].mxu0
        %v4438 = vadd.f32 %v4307, %v4437
        %v4439 = vpop.f32.mrb[0].mxu0
        %v4440 = vadd.f32 %v4309, %v4439
        %4441 = vmatprep.mubr.bf16.mxu0 0
        %4442 = vmatmul.mubr.bf16.gmra.mrb[0].mxu0 %v3916
        %v4443 = vpop.f32.mrb[0].mxu0
        %v4444 = vadd.f32 %v4313, %v4443
        %v4445 = vpop.f32.mrb[0].mxu0
        %v4446 = vadd.f32 %v4315, %v4445
        %v4447 = vpop.f32.mrb[0].mxu0
        %v4448 = vadd.f32 %v4317, %v4447
        %v4449 = vpop.f32.mrb[0].mxu0
        %v4450 = vadd.f32 %v4319, %v4449
        %4451 = vmatprep.mubr.bf16.mxu0 0
        %4452 = vmatmul.mubr.bf16.gmra.mrb[0].mxu0 %v3919
        %v4453 = vpop.f32.mrb[0].mxu0
        %v4454 = vadd.f32 %v4323, %v4453
        %v4455 = vpop.f32.mrb[0].mxu0
        %v4456 = vadd.f32 %v4325, %v4455
        %v4457 = vpop.f32.mrb[0].mxu0
        %v4458 = vpop.f32.mrb[0].mxu0
        %4459 = vdwg.mxu0
        %4536 = vrot.lane.b32.xlu0 %v4102, 112
        %v4537 = vpop.permute.xlu0 %4536
        %4538 = vrot.lane.b32.xlu0 %v4104, 112
        %v4539 = vpop.permute.xlu0 %4538
        %4540 = vrot.lane.b32.xlu0 %v4364, 112
        %v4541 = vpop.permute.xlu0 %4540
        %4542 = vrot.lane.b32.xlu0 %v4366, 112
        %v4543 = vpop.permute.xlu0 %4542
        %4544 = vrot.lane.b32.xlu0 %v4106, 112
        %v4545 = vpop.permute.xlu0 %4544
        %4546 = vrot.lane.b32.xlu0 %v4108, 112
        %v4547 = vpop.permute.xlu0 %4546
        %4548 = vrot.lane.b32.xlu0 %v4368, 112
        %v4549 = vpop.permute.xlu0 %4548
        %4550 = vrot.lane.b32.xlu0 %v4370, 112
        %v4551 = vpop.permute.xlu0 %4550
        %4552 = vrot.lane.b32.xlu0 %v4112, 112
        %v4553 = vpop.permute.xlu0 %4552
        %4554 = vrot.lane.b32.xlu0 %v4114, 112
        %v4555 = vpop.permute.xlu0 %4554
        %4556 = vrot.lane.b32.xlu0 %v4374, 112
        %v4557 = vpop.permute.xlu0 %4556
        %4558 = vrot.lane.b32.xlu0 %v4376, 112
        %v4559 = vpop.permute.xlu0 %4558
        %4560 = vrot.lane.b32.xlu0 %v4116, 112
        %v4561 = vpop.permute.xlu0 %4560
        %4562 = vrot.lane.b32.xlu0 %v4118, 112
        %v4563 = vpop.permute.xlu0 %4562
        %4564 = vrot.lane.b32.xlu0 %v4378, 112
        %v4565 = vpop.permute.xlu0 %4564
        %4566 = vrot.lane.b32.xlu0 %v4380, 112
        %v4567 = vpop.permute.xlu0 %4566
        %4568 = vrot.lane.b32.xlu0 %v4122, 112
        %v4569 = vpop.permute.xlu0 %4568
        %4570 = vrot.lane.b32.xlu0 %v4124, 112
        %v4571 = vpop.permute.xlu0 %4570
        %4572 = vrot.lane.b32.xlu0 %v4384, 112
        %v4573 = vpop.permute.xlu0 %4572
        %4574 = vrot.lane.b32.xlu0 %v4386, 112
        %v4575 = vpop.permute.xlu0 %4574
        %4576 = vrot.lane.b32.xlu0 %v4126, 112
        %v4577 = vpop.permute.xlu0 %4576
        %4578 = vrot.lane.b32.xlu0 %v4128, 112
        %v4579 = vpop.permute.xlu0 %4578
        %4580 = vrot.lane.b32.xlu0 %v4388, 112
        %v4581 = vpop.permute.xlu0 %4580
        %4582 = vrot.lane.b32.xlu0 %v4390, 112
        %v4583 = vpop.permute.xlu0 %4582
        %4584 = vrot.lane.b32.xlu0 %v4132, 112
        %v4585 = vpop.permute.xlu0 %4584
        %4586 = vrot.lane.b32.xlu0 %v4134, 112
        %v4587 = vpop.permute.xlu0 %4586
        %4588 = vrot.lane.b32.xlu0 %v4394, 112
        %v4589 = vpop.permute.xlu0 %4588
        %4590 = vrot.lane.b32.xlu0 %v4396, 112
        %v4591 = vpop.permute.xlu0 %4590
        %4592 = vrot.lane.b32.xlu0 %v4136, 112
        %v4593 = vpop.permute.xlu0 %4592
        %4594 = vrot.lane.b32.xlu0 %v4138, 112
        %v4595 = vpop.permute.xlu0 %4594
        %4596 = vrot.lane.b32.xlu0 %v4398, 112
        %v4597 = vpop.permute.xlu0 %4596
        %4598 = vrot.lane.b32.xlu0 %v4400, 112
        %v4599 = vpop.permute.xlu0 %4598
        %4600 = vrot.lane.b32.xlu0 %v4142, 112
        %v4601 = vpop.permute.xlu0 %4600
        %4602 = vrot.lane.b32.xlu0 %v4144, 112
        %v4603 = vpop.permute.xlu0 %4602
        %4604 = vrot.lane.b32.xlu0 %v4404, 112
        %v4605 = vpop.permute.xlu0 %4604
        %4606 = vrot.lane.b32.xlu0 %v4406, 112
        %v4607 = vpop.permute.xlu0 %4606
        %4608 = vrot.lane.b32.xlu0 %v4146, 112
        %v4609 = vpop.permute.xlu0 %4608
        %4610 = vrot.lane.b32.xlu0 %v4148, 112
        %v4611 = vpop.permute.xlu0 %4610
        %4612 = vrot.lane.b32.xlu0 %v4408, 112
        %v4613 = vpop.permute.xlu0 %4612
        %4614 = vrot.lane.b32.xlu0 %v4410, 112
        %v4615 = vpop.permute.xlu0 %4614
        %4616 = vrot.lane.b32.xlu0 %v4152, 112
        %v4617 = vpop.permute.xlu0 %4616
        %4618 = vrot.lane.b32.xlu0 %v4154, 112
        %v4619 = vpop.permute.xlu0 %4618
        %4620 = vrot.lane.b32.xlu0 %v4414, 112
        %v4621 = vpop.permute.xlu0 %4620
        %4622 = vrot.lane.b32.xlu0 %v4416, 112
        %v4623 = vpop.permute.xlu0 %4622
        %4624 = vrot.lane.b32.xlu0 %v4156, 112
        %v4625 = vpop.permute.xlu0 %4624
        %4626 = vrot.lane.b32.xlu0 %v4158, 112
        %v4627 = vpop.permute.xlu0 %4626
        %4628 = vrot.lane.b32.xlu0 %v4418, 112
        %v4629 = vpop.permute.xlu0 %4628
        %4630 = vrot.lane.b32.xlu0 %v4420, 112
        %v4631 = vpop.permute.xlu0 %4630
        %4632 = vrot.lane.b32.xlu0 %v4162, 112
        %v4633 = vpop.permute.xlu0 %4632
        %4634 = vrot.lane.b32.xlu0 %v4164, 112
        %v4635 = vpop.permute.xlu0 %4634
        %4636 = vrot.lane.b32.xlu0 %v4424, 112
        %v4637 = vpop.permute.xlu0 %4636
        %4638 = vrot.lane.b32.xlu0 %v4426, 112
        %v4639 = vpop.permute.xlu0 %4638
        %4640 = vrot.lane.b32.xlu0 %v4166, 112
        %v4641 = vpop.permute.xlu0 %4640
        %4642 = vrot.lane.b32.xlu0 %v4168, 112
        %v4643 = vpop.permute.xlu0 %4642
        %4644 = vrot.lane.b32.xlu0 %v4428, 112
        %v4645 = vpop.permute.xlu0 %4644
        %4646 = vrot.lane.b32.xlu0 %v4430, 112
        %v4647 = vpop.permute.xlu0 %4646
        %4648 = vrot.lane.b32.xlu0 %v4172, 112
        %v4649 = vpop.permute.xlu0 %4648
        %4650 = vrot.lane.b32.xlu0 %v4174, 112
        %v4651 = vpop.permute.xlu0 %4650
        %4652 = vrot.lane.b32.xlu0 %v4434, 112
        %v4653 = vpop.permute.xlu0 %4652
        %4654 = vrot.lane.b32.xlu0 %v4436, 112
        %v4655 = vpop.permute.xlu0 %4654
        %4656 = vrot.lane.b32.xlu0 %v4176, 112
        %v4657 = vpop.permute.xlu0 %4656
        %4658 = vrot.lane.b32.xlu0 %v4178, 112
        %v4659 = vpop.permute.xlu0 %4658
        %4660 = vrot.lane.b32.xlu0 %v4438, 112
        %v4661 = vpop.permute.xlu0 %4660
        %4662 = vrot.lane.b32.xlu0 %v4440, 112
        %v4663 = vpop.permute.xlu0 %4662
        %4664 = vrot.lane.b32.xlu0 %v4182, 112
        %v4665 = vpop.permute.xlu0 %4664
        %4666 = vrot.lane.b32.xlu0 %v4184, 112
        %v4667 = vpop.permute.xlu0 %4666
        %4668 = vrot.lane.b32.xlu0 %v4444, 112
        %v4669 = vpop.permute.xlu0 %4668
        %4670 = vrot.lane.b32.xlu0 %v4446, 112
        %v4671 = vpop.permute.xlu0 %4670
        %4672 = vrot.lane.b32.xlu0 %v4186, 112
        %v4673 = vpop.permute.xlu0 %4672
        %4674 = vrot.lane.b32.xlu0 %v4188, 112
        %v4675 = vpop.permute.xlu0 %4674
        %4676 = vrot.lane.b32.xlu0 %v4448, 112
        %v4677 = vpop.permute.xlu0 %4676
        %4678 = vrot.lane.b32.xlu0 %v4450, 112
        %v4679 = vpop.permute.xlu0 %4678
        %4680 = vrot.lane.b32.xlu0 %v4192, 112
        %v4681 = vpop.permute.xlu0 %4680
        %4682 = vrot.lane.b32.xlu0 %v4194, 112
        %v4683 = vpop.permute.xlu0 %4682
        %4684 = vrot.lane.b32.xlu0 %v4454, 112
        %v4685 = vpop.permute.xlu0 %4684
        %4686 = vrot.lane.b32.xlu0 %v4456, 112
        %v4687 = vpop.permute.xlu0 %4686
        %vm4688 = vcmask 916480
        %v4689 = vsel %vm4688, %v4537, %v4539
        %v4690 = vsel %vm4688, %v4539, %v4541
        %v4691 = vsel %vm4688, %v4541, %v4543
        %v4692 = vsel %vm4688, %v4545, %v4547
        %v4693 = vsel %vm4688, %v4547, %v4549
        %v4694 = vsel %vm4688, %v4549, %v4551
        %v4695 = vsel %vm4688, %v4553, %v4555
        %v4696 = vsel %vm4688, %v4555, %v4557
        %v4697 = vsel %vm4688, %v4557, %v4559
        %v4698 = vsel %vm4688, %v4561, %v4563
        %v4699 = vsel %vm4688, %v4563, %v4565
        %v4700 = vsel %vm4688, %v4565, %v4567
        %v4701 = vsel %vm4688, %v4569, %v4571
        %v4702 = vsel %vm4688, %v4571, %v4573
        %v4703 = vsel %vm4688, %v4573, %v4575
        %v4704 = vsel %vm4688, %v4577, %v4579
        %v4705 = vsel %vm4688, %v4579, %v4581
        %v4706 = vsel %vm4688, %v4581, %v4583
        %v4707 = vsel %vm4688, %v4585, %v4587
        %v4708 = vsel %vm4688, %v4587, %v4589
        %v4709 = vsel %vm4688, %v4589, %v4591
        %v4710 = vsel %vm4688, %v4593, %v4595
        %v4711 = vsel %vm4688, %v4595, %v4597
        %v4712 = vsel %vm4688, %v4597, %v4599
        %v4713 = vsel %vm4688, %v4601, %v4603
        %v4714 = vsel %vm4688, %v4603, %v4605
        %v4715 = vsel %vm4688, %v4605, %v4607
        %v4716 = vsel %vm4688, %v4609, %v4611
        %v4717 = vsel %vm4688, %v4611, %v4613
        %v4718 = vsel %vm4688, %v4613, %v4615
        %v4719 = vsel %vm4688, %v4617, %v4619
        %v4720 = vsel %vm4688, %v4619, %v4621
        %v4721 = vsel %vm4688, %v4621, %v4623
        %v4722 = vsel %vm4688, %v4625, %v4627
        %v4723 = vsel %vm4688, %v4627, %v4629
        %v4724 = vsel %vm4688, %v4629, %v4631
        %v4725 = vsel %vm4688, %v4633, %v4635
        %v4726 = vsel %vm4688, %v4635, %v4637
        %v4727 = vsel %vm4688, %v4637, %v4639
        %v4728 = vsel %vm4688, %v4641, %v4643
        %v4729 = vsel %vm4688, %v4643, %v4645
        %v4730 = vsel %vm4688, %v4645, %v4647
        %v4731 = vsel %vm4688, %v4649, %v4651
        %v4732 = vsel %vm4688, %v4651, %v4653
        %v4733 = vsel %vm4688, %v4653, %v4655
        %v4734 = vsel %vm4688, %v4657, %v4659
        %v4735 = vsel %vm4688, %v4659, %v4661
        %v4736 = vsel %vm4688, %v4661, %v4663
        %v4737 = vsel %vm4688, %v4665, %v4667
        %v4738 = vsel %vm4688, %v4667, %v4669
        %v4739 = vsel %vm4688, %v4669, %v4671
        %v4740 = vsel %vm4688, %v4673, %v4675
        %v4741 = vsel %vm4688, %v4675, %v4677
        %v4742 = vsel %vm4688, %v4677, %v4679
        %v4743 = vsel %vm4688, %v4681, %v4683
        %v4744 = vsel %vm4688, %v4683, %v4685
        %v4745 = vsel %vm4688, %v4685, %v4687
        %v4822 = vmax.f32 %v4102, %v4689
        %v4823 = vmax.f32 %v4104, %v4690
        %v4824 = vmax.f32 %v4364, %v4691
        %v4825 = vmax.f32 %v4366, %v4543
        %v4826 = vmax.f32 %v4106, %v4692
        %v4827 = vmax.f32 %v4108, %v4693
        %v4828 = vmax.f32 %v4368, %v4694
        %v4829 = vmax.f32 %v4370, %v4551
        %v4830 = vmax.f32 %v4112, %v4695
        %v4831 = vmax.f32 %v4114, %v4696
        %v4832 = vmax.f32 %v4374, %v4697
        %v4833 = vmax.f32 %v4376, %v4559
        %v4834 = vmax.f32 %v4116, %v4698
        %v4835 = vmax.f32 %v4118, %v4699
        %v4836 = vmax.f32 %v4378, %v4700
        %v4837 = vmax.f32 %v4380, %v4567
        %v4838 = vmax.f32 %v4122, %v4701
        %v4839 = vmax.f32 %v4124, %v4702
        %v4840 = vmax.f32 %v4384, %v4703
        %v4841 = vmax.f32 %v4386, %v4575
        %v4842 = vmax.f32 %v4126, %v4704
        %v4843 = vmax.f32 %v4128, %v4705
        %v4844 = vmax.f32 %v4388, %v4706
        %v4845 = vmax.f32 %v4390, %v4583
        %v4846 = vmax.f32 %v4132, %v4707
        %v4847 = vmax.f32 %v4134, %v4708
        %v4848 = vmax.f32 %v4394, %v4709
        %v4849 = vmax.f32 %v4396, %v4591
        %v4850 = vmax.f32 %v4136, %v4710
        %v4851 = vmax.f32 %v4138, %v4711
        %v4852 = vmax.f32 %v4398, %v4712
        %v4853 = vmax.f32 %v4400, %v4599
        %v4854 = vmax.f32 %v4142, %v4713
        %v4855 = vmax.f32 %v4144, %v4714
        %v4856 = vmax.f32 %v4404, %v4715
        %v4857 = vmax.f32 %v4406, %v4607
        %v4858 = vmax.f32 %v4146, %v4716
        %v4859 = vmax.f32 %v4148, %v4717
        %v4860 = vmax.f32 %v4408, %v4718
        %v4861 = vmax.f32 %v4410, %v4615
        %v4862 = vmax.f32 %v4152, %v4719
        %v4863 = vmax.f32 %v4154, %v4720
        %v4864 = vmax.f32 %v4414, %v4721
        %v4865 = vmax.f32 %v4416, %v4623
        %v4866 = vmax.f32 %v4156, %v4722
        %v4867 = vmax.f32 %v4158, %v4723
        %v4868 = vmax.f32 %v4418, %v4724
        %v4869 = vmax.f32 %v4420, %v4631
        %v4870 = vmax.f32 %v4162, %v4725
        %v4871 = vmax.f32 %v4164, %v4726
        %v4872 = vmax.f32 %v4424, %v4727
        %v4873 = vmax.f32 %v4426, %v4639
        %v4874 = vmax.f32 %v4166, %v4728
        %v4875 = vmax.f32 %v4168, %v4729
        %v4876 = vmax.f32 %v4428, %v4730
        %v4877 = vmax.f32 %v4430, %v4647
        %v4878 = vmax.f32 %v4172, %v4731
        %v4879 = vmax.f32 %v4174, %v4732
        %v4880 = vmax.f32 %v4434, %v4733
        %v4881 = vmax.f32 %v4436, %v4655
        %v4882 = vmax.f32 %v4176, %v4734
        %v4883 = vmax.f32 %v4178, %v4735
        %v4884 = vmax.f32 %v4438, %v4736
        %v4885 = vmax.f32 %v4440, %v4663
        %v4886 = vmax.f32 %v4182, %v4737
        %v4887 = vmax.f32 %v4184, %v4738
        %v4888 = vmax.f32 %v4444, %v4739
        %v4889 = vmax.f32 %v4446, %v4671
        %v4890 = vmax.f32 %v4186, %v4740
        %v4891 = vmax.f32 %v4188, %v4741
        %v4892 = vmax.f32 %v4448, %v4742
        %v4893 = vmax.f32 %v4450, %v4679
        %v4894 = vmax.f32 %v4192, %v4743
        %v4895 = vmax.f32 %v4194, %v4744
        %v4896 = vmax.f32 %v4454, %v4745
        %v4897 = vmax.f32 %v4456, %v4687
        %v4898 = vpack.c.bf16 %v4826, %v4822
        %v4899 = vpack.c.bf16 %v4827, %v4823
        %v4900 = vpack.c.bf16 %v4828, %v4824
        %v4901 = vpack.c.bf16 %v4829, %v4825
        %v4902 = vpack.c.bf16 %v4834, %v4830
        %v4903 = vpack.c.bf16 %v4835, %v4831
        %v4904 = vpack.c.bf16 %v4836, %v4832
        %v4905 = vpack.c.bf16 %v4837, %v4833
        %v4906 = vpack.c.bf16 %v4842, %v4838
        %v4907 = vpack.c.bf16 %v4843, %v4839
        %v4908 = vpack.c.bf16 %v4844, %v4840
        %v4909 = vpack.c.bf16 %v4845, %v4841
        %v4910 = vpack.c.bf16 %v4850, %v4846
        %v4911 = vpack.c.bf16 %v4851, %v4847
        %v4912 = vpack.c.bf16 %v4852, %v4848
        %v4913 = vpack.c.bf16 %v4853, %v4849
        %v4914 = vpack.c.bf16 %v4858, %v4854
        %v4915 = vpack.c.bf16 %v4859, %v4855
        %v4916 = vpack.c.bf16 %v4860, %v4856
        %v4917 = vpack.c.bf16 %v4861, %v4857
        %v4918 = vpack.c.bf16 %v4866, %v4862
        %v4919 = vpack.c.bf16 %v4867, %v4863
        %v4920 = vpack.c.bf16 %v4868, %v4864
        %v4921 = vpack.c.bf16 %v4869, %v4865
        %v4922 = vpack.c.bf16 %v4874, %v4870
        %v4923 = vpack.c.bf16 %v4875, %v4871
        %v4924 = vpack.c.bf16 %v4876, %v4872
        %v4925 = vpack.c.bf16 %v4877, %v4873
        %v4926 = vpack.c.bf16 %v4882, %v4878
        %v4927 = vpack.c.bf16 %v4883, %v4879
        %v4928 = vpack.c.bf16 %v4884, %v4880
        %v4929 = vpack.c.bf16 %v4885, %v4881
        %v4930 = vpack.c.bf16 %v4890, %v4886
        %v4931 = vpack.c.bf16 %v4891, %v4887
        %v4932 = vpack.c.bf16 %v4892, %v4888
        %v4933 = vpack.c.bf16 %v4893, %v4889
        %v4934 = vpack.c.bf16 %v4894, %v4894
        %v4935 = vpack.c.bf16 %v4895, %v4895
        %v4936 = vpack.c.bf16 %v4896, %v4896
        %v4937 = vpack.c.bf16 %v4897, %v4897
        %v4938 = vld [vmem:[%s4] sm:$0xff]
        %v4939 = vld [vmem:[%s4 + $0x8] sm:$0xff]
        %v4940 = vld [vmem:[%s4 + $0x10] sm:$0xff]
        %v4941 = vld [vmem:[%s4 + $0x18] sm:$0xff]
        %v4942 = vld [vmem:[%s4 + $0x20] sm:$0xff]
        %v4943 = vld [vmem:[%s4 + $0x28] sm:$0xff]
        %v4944 = vld [vmem:[%s4 + $0x30] sm:$0xff]
        %v4945 = vld [vmem:[%s4 + $0x38] sm:$0xff]
        %v4946 = vld [vmem:[%s4 + $0x40] sm:$0xff]
        %v4947 = vld [vmem:[%s4 + $0x48] sm:$0xff]
        %v4948 = vld [vmem:[%s4 + $0x50] sm:$0xff]
        %v4949 = vld [vmem:[%s4 + $0x58] sm:$0xff]
        %v4950 = vld [vmem:[%s4 + $0x60] sm:$0xff]
        %v4951 = vld [vmem:[%s4 + $0x68] sm:$0xff]
        %v4952 = vld [vmem:[%s4 + $0x70] sm:$0xff]
        %v4953 = vld [vmem:[%s4 + $0x78] sm:$0xff]
        %v4954 = vld [vmem:[%s4 + $0x80] sm:$0xff]
        %v4955 = vld [vmem:[%s4 + $0x88] sm:$0xff]
        %v4956 = vld [vmem:[%s4 + $0x90] sm:$0xff]
        %v4957 = vld [vmem:[%s4 + $0x98] sm:$0xff]
        %v4958 = vld [vmem:[%s4 + $0xa0] sm:$0xff]
        %v4959 = vld [vmem:[%s4 + $0xa8] sm:$0xff]
        %v4960 = vld [vmem:[%s4 + $0xb0] sm:$0xff]
        %v4961 = vld [vmem:[%s4 + $0xb8] sm:$0xff]
        %v4962 = vld [vmem:[%s4 + $0xc0] sm:$0xff]
        %v4963 = vld [vmem:[%s4 + $0xc8] sm:$0xff]
        %v4964 = vld [vmem:[%s4 + $0xd0] sm:$0xff]
        %v4965 = vld [vmem:[%s4 + $0xd8] sm:$0xff]
        %v4966 = vld [vmem:[%s4 + $0xe0] sm:$0xff]
        %v4967 = vld [vmem:[%s4 + $0xe8] sm:$0xff]
        %v4968 = vld [vmem:[%s4 + $0xf0] sm:$0xff]
        %v4969 = vld [vmem:[%s4 + $0xf8] sm:$0xff]
        %v4970 = vld [vmem:[%s4 + $0x100] sm:$0xff]
        %v4971 = vld [vmem:[%s4 + $0x108] sm:$0xff]
        %v4972 = vld [vmem:[%s4 + $0x110] sm:$0xff]
        %v4973 = vld [vmem:[%s4 + $0x118] sm:$0xff]
        %v4974 = vld [vmem:[%s4 + $0x120] sm:$0xff]
        %v4975 = vld [vmem:[%s4 + $0x128] sm:$0xff]
        %v4976 = vld [vmem:[%s4 + $0x130] sm:$0xff]
        %v4977 = vld [vmem:[%s4 + $0x138] sm:$0xff]
        %v4978 = vld [vmem:[%s4 + $0x140] sm:$0xff]
        %v4979 = vld [vmem:[%s4 + $0x148] sm:$0xff]
        %v4980 = vld [vmem:[%s4 + $0x150] sm:$0xff]
        %v4981 = vld [vmem:[%s4 + $0x158] sm:$0xff]
        %v4982 = vld [vmem:[%s4 + $0x160] sm:$0xff]
        %v4983 = vld [vmem:[%s4 + $0x168] sm:$0xff]
        %v4984 = vld [vmem:[%s4 + $0x170] sm:$0xff]
        %v4985 = vld [vmem:[%s4 + $0x178] sm:$0xff]
        %v4986 = vld [vmem:[%s4 + $0x180] sm:$0xff]
        %v4987 = vld [vmem:[%s4 + $0x188] sm:$0xff]
        %v4988 = vld [vmem:[%s4 + $0x190] sm:$0xff]
        %v4989 = vld [vmem:[%s4 + $0x198] sm:$0xff]
        %v4990 = vld [vmem:[%s4 + $0x1a0] sm:$0xff]
        %v4991 = vld [vmem:[%s4 + $0x1a8] sm:$0xff]
        %v4992 = vld [vmem:[%s4 + $0x1b0] sm:$0xff]
        %v4993 = vld [vmem:[%s4 + $0x1b8] sm:$0xff]
        %v4994 = vld [vmem:[%s4 + $0x1c0] sm:$0xff]
        %v4995 = vld [vmem:[%s4 + $0x1c8] sm:$0xff]
        %v4996 = vld [vmem:[%s4 + $0x1d0] sm:$0xff]
        %v4997 = vld [vmem:[%s4 + $0x1d8] sm:$0xff]
        %v4998 = vld [vmem:[%s4 + $0x1e0] sm:$0xff]
        %v4999 = vld [vmem:[%s4 + $0x1e8] sm:$0xff]
        %s5000 = scalar_lea.vmem %s4, 496
        %v5001 = vld [vmem:[%s5000] sm:$0xff]
        %v5002 = vld [vmem:[%s5000 + $0x8] sm:$0xff]
        %v5003 = vld [vmem:[%s5000 + $0x10] sm:$0xff]
        %v5004 = vld [vmem:[%s5000 + $0x18] sm:$0xff]
        %v5005 = vld [vmem:[%s5000 + $0x20] sm:$0xff]
        %v5006 = vld [vmem:[%s5000 + $0x28] sm:$0xff]
        %v5007 = vld [vmem:[%s5000 + $0x30] sm:$0xff]
        %v5008 = vld [vmem:[%s5000 + $0x38] sm:$0xff]
        %v5009 = vld [vmem:[%s5000 + $0x40] sm:$0xff]
        %v5010 = vld [vmem:[%s5000 + $0x48] sm:$0xff]
        %v5011 = vld [vmem:[%s5000 + $0x50] sm:$0xff]
        %v5012 = vld [vmem:[%s5000 + $0x58] sm:$0xff]
        %v5013 = vld [vmem:[%s5000 + $0x60] sm:$0xff]
        %v5014 = vld [vmem:[%s5000 + $0x68] sm:$0xff]
        %v5015 = vld [vmem:[%s5000 + $0x70] sm:$0xff]
        %v5016 = vld [vmem:[%s5000 + $0x78] sm:$0xff]
        %v5017 = vld [vmem:[%s5000 + $0x80] sm:$0xff]
        %v5018 = vld [vmem:[%s5000 + $0x88] sm:$0xff]
        %v5019 = vld [vmem:[%s5000 + $0x90] sm:$0xff]
        %v5020 = vld [vmem:[%s5000 + $0x98] sm:$0xff]
        %v5021 = vld [vmem:[%s5000 + $0xa0] sm:$0xff]
        %v5022 = vld [vmem:[%s5000 + $0xa8] sm:$0xff]
        %v5023 = vld [vmem:[%s5000 + $0xb0] sm:$0xff]
        %v5024 = vld [vmem:[%s5000 + $0xb8] sm:$0xff]
        %v5025 = vld [vmem:[%s5000 + $0xc0] sm:$0xff]
        %v5026 = vld [vmem:[%s5000 + $0xc8] sm:$0xff]
        %v5027 = vld [vmem:[%s5000 + $0xd0] sm:$0xff]
        %v5028 = vld [vmem:[%s5000 + $0xd8] sm:$0xff]
        %v5029 = vld [vmem:[%s5000 + $0xe0] sm:$0xff]
        %v5030 = vld [vmem:[%s5000 + $0xe8] sm:$0xff]
        %v5031 = vld [vmem:[%s5000 + $0xf0] sm:$0xff]
        %v5032 = vld [vmem:[%s5000 + $0xf8] sm:$0xff]
        %v5033 = vld [vmem:[%s5000 + $0x100] sm:$0xff]
        %v5034 = vld [vmem:[%s5000 + $0x108] sm:$0xff]
        %v5035 = vld [vmem:[%s5000 + $0x110] sm:$0xff]
        %v5036 = vld [vmem:[%s5000 + $0x118] sm:$0xff]
        %v5037 = vld [vmem:[%s5000 + $0x120] sm:$0xff]
        %v5038 = vld [vmem:[%s5000 + $0x128] sm:$0xff]
        %v5039 = vld [vmem:[%s5000 + $0x130] sm:$0xff]
        %v5040 = vld [vmem:[%s5000 + $0x138] sm:$0xff]
        %v5041 = vld [vmem:[%s5000 + $0x140] sm:$0xff]
        %v5042 = vld [vmem:[%s5000 + $0x148] sm:$0xff]
        %v5043 = vld [vmem:[%s5000 + $0x150] sm:$0xff]
        %v5044 = vld [vmem:[%s5000 + $0x158] sm:$0xff]
        %v5045 = vld [vmem:[%s5000 + $0x160] sm:$0xff]
        %v5046 = vld [vmem:[%s5000 + $0x168] sm:$0xff]
        %v5047 = vld [vmem:[%s5000 + $0x170] sm:$0xff]
        %v5048 = vld [vmem:[%s5000 + $0x178] sm:$0xff]
        %v5049 = vld [vmem:[%s5000 + $0x180] sm:$0xff]
        %v5050 = vld [vmem:[%s5000 + $0x188] sm:$0xff]
        %v5051 = vld [vmem:[%s5000 + $0x190] sm:$0xff]
        %v5052 = vld [vmem:[%s5000 + $0x198] sm:$0xff]
        %v5053 = vld [vmem:[%s5000 + $0x1a0] sm:$0xff]
        %v5054 = vld [vmem:[%s5000 + $0x1a8] sm:$0xff]
        %v5055 = vld [vmem:[%s5000 + $0x1b0] sm:$0xff]
        %v5056 = vld [vmem:[%s5000 + $0x1b8] sm:$0xff]
        %v5057 = vld [vmem:[%s5000 + $0x1c0] sm:$0xff]
        %v5058 = vld [vmem:[%s5000 + $0x1c8] sm:$0xff]
        %v5059 = vld [vmem:[%s5000 + $0x1d0] sm:$0xff]
        %v5060 = vld [vmem:[%s5000 + $0x1d8] sm:$0xff]
        %v5061 = vld [vmem:[%s5000 + $0x1e0] sm:$0xff]
        %v5062 = vld [vmem:[%s5000 + $0x1e8] sm:$0xff]
        %v5064 = vshrl.u32 %v4898, 16
        %v5066 = vshll.u32 %v4898, 16
        %v5068 = vrot.slane %v5066, 1
        %v5069 = vor.u32 %v5064, %v5068
        %v5071 = vshll.u32 %v4902, 16
        %v5073 = vrot.slane %v5071, 1
        %v5074 = vsel %vm573, %v5069, %v5073
        %v5076 = vshrl.u32 %v4899, 16
        %v5078 = vshll.u32 %v4899, 16
        %v5080 = vrot.slane %v5078, 1
        %v5081 = vor.u32 %v5076, %v5080
        %v5083 = vshll.u32 %v4903, 16
        %v5085 = vrot.slane %v5083, 1
        %v5086 = vsel %vm573, %v5081, %v5085
        %v5088 = vshrl.u32 %v4900, 16
        %v5090 = vshll.u32 %v4900, 16
        %v5092 = vrot.slane %v5090, 1
        %v5093 = vor.u32 %v5088, %v5092
        %v5095 = vshll.u32 %v4904, 16
        %v5097 = vrot.slane %v5095, 1
        %v5098 = vsel %vm573, %v5093, %v5097
        %v5100 = vshrl.u32 %v4901, 16
        %v5102 = vshll.u32 %v4901, 16
        %v5104 = vrot.slane %v5102, 1
        %v5105 = vor.u32 %v5100, %v5104
        %v5107 = vshll.u32 %v4905, 16
        %v5109 = vrot.slane %v5107, 1
        %v5110 = vsel %vm573, %v5105, %v5109
        %v5111 = vshrl.u32 %v4902, 16
        %v5113 = vor.u32 %v5111, %v5073
        %v5115 = vshll.u32 %v4906, 16
        %v5117 = vrot.slane %v5115, 1
        %v5118 = vsel %vm573, %v5113, %v5117
        %v5119 = vshrl.u32 %v4903, 16
        %v5121 = vor.u32 %v5119, %v5085
        %v5123 = vshll.u32 %v4907, 16
        %v5125 = vrot.slane %v5123, 1
        %v5126 = vsel %vm573, %v5121, %v5125
        %v5127 = vshrl.u32 %v4904, 16
        %v5129 = vor.u32 %v5127, %v5097
        %v5131 = vshll.u32 %v4908, 16
        %v5133 = vrot.slane %v5131, 1
        %v5134 = vsel %vm573, %v5129, %v5133
        %v5135 = vshrl.u32 %v4905, 16
        %v5137 = vor.u32 %v5135, %v5109
        %v5139 = vshll.u32 %v4909, 16
        %v5141 = vrot.slane %v5139, 1
        %v5142 = vsel %vm573, %v5137, %v5141
        %v5143 = vshrl.u32 %v4906, 16
        %v5145 = vor.u32 %v5143, %v5117
        %v5147 = vshll.u32 %v4910, 16
        %v5149 = vrot.slane %v5147, 1
        %v5150 = vsel %vm573, %v5145, %v5149
        %v5151 = vshrl.u32 %v4907, 16
        %v5153 = vor.u32 %v5151, %v5125
        %v5155 = vshll.u32 %v4911, 16
        %v5157 = vrot.slane %v5155, 1
        %v5158 = vsel %vm573, %v5153, %v5157
        %v5159 = vshrl.u32 %v4908, 16
        %v5161 = vor.u32 %v5159, %v5133
        %v5163 = vshll.u32 %v4912, 16
        %v5165 = vrot.slane %v5163, 1
        %v5166 = vsel %vm573, %v5161, %v5165
        %v5167 = vshrl.u32 %v4909, 16
        %v5169 = vor.u32 %v5167, %v5141
        %v5171 = vshll.u32 %v4913, 16
        %v5173 = vrot.slane %v5171, 1
        %v5174 = vsel %vm573, %v5169, %v5173
        %v5175 = vshrl.u32 %v4910, 16
        %v5177 = vor.u32 %v5175, %v5149
        %v5179 = vshll.u32 %v4914, 16
        %v5181 = vrot.slane %v5179, 1
        %v5182 = vsel %vm573, %v5177, %v5181
        %v5183 = vshrl.u32 %v4911, 16
        %v5185 = vor.u32 %v5183, %v5157
        %v5187 = vshll.u32 %v4915, 16
        %v5189 = vrot.slane %v5187, 1
        %v5190 = vsel %vm573, %v5185, %v5189
        %v5191 = vshrl.u32 %v4912, 16
        %v5193 = vor.u32 %v5191, %v5165
        %v5195 = vshll.u32 %v4916, 16
        %v5197 = vrot.slane %v5195, 1
        %v5198 = vsel %vm573, %v5193, %v5197
        %v5199 = vshrl.u32 %v4913, 16
        %v5201 = vor.u32 %v5199, %v5173
        %v5203 = vshll.u32 %v4917, 16
        %v5205 = vrot.slane %v5203, 1
        %v5206 = vsel %vm573, %v5201, %v5205
        %v5207 = vshrl.u32 %v4914, 16
        %v5209 = vor.u32 %v5207, %v5181
        %v5211 = vshll.u32 %v4918, 16
        %v5213 = vrot.slane %v5211, 1
        %v5214 = vsel %vm573, %v5209, %v5213
        %v5215 = vshrl.u32 %v4915, 16
        %v5217 = vor.u32 %v5215, %v5189
        %v5219 = vshll.u32 %v4919, 16
        %v5221 = vrot.slane %v5219, 1
        %v5222 = vsel %vm573, %v5217, %v5221
        %v5223 = vshrl.u32 %v4916, 16
        %v5225 = vor.u32 %v5223, %v5197
        %v5227 = vshll.u32 %v4920, 16
        %v5229 = vrot.slane %v5227, 1
        %v5230 = vsel %vm573, %v5225, %v5229
        %v5231 = vshrl.u32 %v4917, 16
        %v5233 = vor.u32 %v5231, %v5205
        %v5235 = vshll.u32 %v4921, 16
        %v5237 = vrot.slane %v5235, 1
        %v5238 = vsel %vm573, %v5233, %v5237
        %v5239 = vshrl.u32 %v4918, 16
        %v5241 = vor.u32 %v5239, %v5213
        %v5243 = vshll.u32 %v4922, 16
        %v5245 = vrot.slane %v5243, 1
        %v5246 = vsel %vm573, %v5241, %v5245
        %v5247 = vshrl.u32 %v4919, 16
        %v5249 = vor.u32 %v5247, %v5221
        %v5251 = vshll.u32 %v4923, 16
        %v5253 = vrot.slane %v5251, 1
        %v5254 = vsel %vm573, %v5249, %v5253
        %v5255 = vshrl.u32 %v4920, 16
        %v5257 = vor.u32 %v5255, %v5229
        %v5259 = vshll.u32 %v4924, 16
        %v5261 = vrot.slane %v5259, 1
        %v5262 = vsel %vm573, %v5257, %v5261
        %v5263 = vshrl.u32 %v4921, 16
        %v5265 = vor.u32 %v5263, %v5237
        %v5267 = vshll.u32 %v4925, 16
        %v5269 = vrot.slane %v5267, 1
        %v5270 = vsel %vm573, %v5265, %v5269
        %v5271 = vshrl.u32 %v4922, 16
        %v5273 = vor.u32 %v5271, %v5245
        %v5275 = vshll.u32 %v4926, 16
        %v5277 = vrot.slane %v5275, 1
        %v5278 = vsel %vm573, %v5273, %v5277
        %v5279 = vshrl.u32 %v4923, 16
        %v5281 = vor.u32 %v5279, %v5253
        %v5283 = vshll.u32 %v4927, 16
        %v5285 = vrot.slane %v5283, 1
        %v5286 = vsel %vm573, %v5281, %v5285
        %v5287 = vshrl.u32 %v4924, 16
        %v5289 = vor.u32 %v5287, %v5261
        %v5291 = vshll.u32 %v4928, 16
        %v5293 = vrot.slane %v5291, 1
        %v5294 = vsel %vm573, %v5289, %v5293
        %v5295 = vshrl.u32 %v4925, 16
        %v5297 = vor.u32 %v5295, %v5269
        %v5299 = vshll.u32 %v4929, 16
        %v5301 = vrot.slane %v5299, 1
        %v5302 = vsel %vm573, %v5297, %v5301
        %v5303 = vshrl.u32 %v4926, 16
        %v5305 = vor.u32 %v5303, %v5277
        %v5307 = vshll.u32 %v4930, 16
        %v5309 = vrot.slane %v5307, 1
        %v5310 = vsel %vm573, %v5305, %v5309
        %v5311 = vshrl.u32 %v4927, 16
        %v5313 = vor.u32 %v5311, %v5285
        %v5315 = vshll.u32 %v4931, 16
        %v5317 = vrot.slane %v5315, 1
        %v5318 = vsel %vm573, %v5313, %v5317
        %v5319 = vshrl.u32 %v4928, 16
        %v5321 = vor.u32 %v5319, %v5293
        %v5323 = vshll.u32 %v4932, 16
        %v5325 = vrot.slane %v5323, 1
        %v5326 = vsel %vm573, %v5321, %v5325
        %v5327 = vshrl.u32 %v4929, 16
        %v5329 = vor.u32 %v5327, %v5301
        %v5331 = vshll.u32 %v4933, 16
        %v5333 = vrot.slane %v5331, 1
        %v5334 = vsel %vm573, %v5329, %v5333
        %v5335 = vshrl.u32 %v4930, 16
        %v5337 = vor.u32 %v5335, %v5309
        %v5339 = vshll.u32 %v4934, 16
        %v5341 = vrot.slane %v5339, 1
        %v5342 = vsel %vm573, %v5337, %v5341
        %v5343 = vshrl.u32 %v4931, 16
        %v5345 = vor.u32 %v5343, %v5317
        %v5347 = vshll.u32 %v4935, 16
        %v5349 = vrot.slane %v5347, 1
        %v5350 = vsel %vm573, %v5345, %v5349
        %v5351 = vshrl.u32 %v4932, 16
        %v5353 = vor.u32 %v5351, %v5325
        %v5355 = vshll.u32 %v4936, 16
        %v5357 = vrot.slane %v5355, 1
        %v5358 = vsel %vm573, %v5353, %v5357
        %v5359 = vshrl.u32 %v4933, 16
        %v5361 = vor.u32 %v5359, %v5333
        %v5363 = vshll.u32 %v4937, 16
        %v5365 = vrot.slane %v5363, 1
        %v5366 = vsel %vm573, %v5361, %v5365
        %v5456 = vunpack.c.l.b16 %v5001
        %v5457 = vunpack.c.h.b16 %v5001
        %v5458 = vunpack.c.l.b16 %v5002
        %v5459 = vunpack.c.h.b16 %v5002
        %v5460 = vunpack.c.l.b16 %v5003
        %v5461 = vunpack.c.h.b16 %v5003
        %v5462 = vunpack.c.l.b16 %v5004
        %v5463 = vunpack.c.h.b16 %v5004
        %v5464 = vunpack.c.l.b16 %v5005
        %v5465 = vunpack.c.h.b16 %v5005
        %v5466 = vunpack.c.l.b16 %v5006
        %v5467 = vunpack.c.h.b16 %v5006
        %v5468 = vunpack.c.l.b16 %v5007
        %v5469 = vunpack.c.h.b16 %v5007
        %v5470 = vunpack.c.l.b16 %v5008
        %v5471 = vunpack.c.h.b16 %v5008
        %v5472 = vunpack.c.l.b16 %v5009
        %v5473 = vunpack.c.h.b16 %v5009
        %v5474 = vunpack.c.l.b16 %v5010
        %v5475 = vunpack.c.h.b16 %v5010
        %v5476 = vunpack.c.l.b16 %v5011
        %v5477 = vunpack.c.h.b16 %v5011
        %v5478 = vunpack.c.l.b16 %v5012
        %v5479 = vunpack.c.h.b16 %v5012
        %v5480 = vunpack.c.l.b16 %v5013
        %v5481 = vunpack.c.h.b16 %v5013
        %v5482 = vunpack.c.l.b16 %v5014
        %v5483 = vunpack.c.h.b16 %v5014
        %v5484 = vunpack.c.l.b16 %v5015
        %v5485 = vunpack.c.h.b16 %v5015
        %v5486 = vunpack.c.l.b16 %v5016
        %v5487 = vunpack.c.h.b16 %v5016
        %v5488 = vunpack.c.l.b16 %v5017
        %v5489 = vunpack.c.h.b16 %v5017
        %v5490 = vunpack.c.l.b16 %v5018
        %v5491 = vunpack.c.h.b16 %v5018
        %v5492 = vunpack.c.l.b16 %v5019
        %v5493 = vunpack.c.h.b16 %v5019
        %v5494 = vunpack.c.l.b16 %v5020
        %v5495 = vunpack.c.h.b16 %v5020
        %v5496 = vunpack.c.l.b16 %v5021
        %v5497 = vunpack.c.h.b16 %v5021
        %v5498 = vunpack.c.l.b16 %v5022
        %v5499 = vunpack.c.h.b16 %v5022
        %v5500 = vunpack.c.l.b16 %v5023
        %v5501 = vunpack.c.h.b16 %v5023
        %v5502 = vunpack.c.l.b16 %v5024
        %v5503 = vunpack.c.h.b16 %v5024
        %v5504 = vunpack.c.l.b16 %v5025
        %v5505 = vunpack.c.h.b16 %v5025
        %v5506 = vunpack.c.l.b16 %v5026
        %v5507 = vunpack.c.h.b16 %v5026
        %v5508 = vunpack.c.l.b16 %v5027
        %v5509 = vunpack.c.h.b16 %v5027
        %v5510 = vunpack.c.l.b16 %v5028
        %v5511 = vunpack.c.h.b16 %v5028
        %v5512 = vunpack.c.l.b16 %v5029
        %v5513 = vunpack.c.h.b16 %v5029
        %v5514 = vunpack.c.l.b16 %v5030
        %v5515 = vunpack.c.h.b16 %v5030
        %v5516 = vunpack.c.l.b16 %v5031
        %v5517 = vunpack.c.h.b16 %v5031
        %v5518 = vunpack.c.l.b16 %v5032
        %v5519 = vunpack.c.h.b16 %v5032
        %v5520 = vunpack.c.l.b16 %v5033
        %v5521 = vunpack.c.h.b16 %v5033
        %v5522 = vunpack.c.l.b16 %v5034
        %v5523 = vunpack.c.h.b16 %v5034
        %v5524 = vunpack.c.l.b16 %v5035
        %v5525 = vunpack.c.h.b16 %v5035
        %v5526 = vunpack.c.l.b16 %v5036
        %v5527 = vunpack.c.h.b16 %v5036
        %v5528 = vunpack.c.l.b16 %v5037
        %v5529 = vunpack.c.h.b16 %v5037
        %v5530 = vunpack.c.l.b16 %v5038
        %v5531 = vunpack.c.h.b16 %v5038
        %v5532 = vunpack.c.l.b16 %v5039
        %v5533 = vunpack.c.h.b16 %v5039
        %v5534 = vunpack.c.l.b16 %v5040
        %v5535 = vunpack.c.h.b16 %v5040
        %v5536 = vunpack.c.l.b16 %v5041
        %v5537 = vunpack.c.h.b16 %v5041
        %v5538 = vunpack.c.l.b16 %v5042
        %v5539 = vunpack.c.h.b16 %v5042
        %v5540 = vunpack.c.l.b16 %v5043
        %v5541 = vunpack.c.h.b16 %v5043
        %v5542 = vunpack.c.l.b16 %v5044
        %v5543 = vunpack.c.h.b16 %v5044
        %v5544 = vunpack.c.l.b16 %v5045
        %v5545 = vunpack.c.h.b16 %v5045
        %v5546 = vunpack.c.l.b16 %v5046
        %v5547 = vunpack.c.h.b16 %v5046
        %v5548 = vunpack.c.l.b16 %v5047
        %v5549 = vunpack.c.h.b16 %v5047
        %v5550 = vunpack.c.l.b16 %v5048
        %v5551 = vunpack.c.h.b16 %v5048
        %v5552 = vunpack.c.l.b16 %v5049
        %v5553 = vunpack.c.h.b16 %v5049
        %v5554 = vunpack.c.l.b16 %v5050
        %v5555 = vunpack.c.h.b16 %v5050
        %v5556 = vunpack.c.l.b16 %v5051
        %v5557 = vunpack.c.h.b16 %v5051
        %v5558 = vunpack.c.l.b16 %v5052
        %v5559 = vunpack.c.h.b16 %v5052
        %v5560 = vunpack.c.l.b16 %v5053
        %v5561 = vunpack.c.h.b16 %v5053
        %v5562 = vunpack.c.l.b16 %v5054
        %v5563 = vunpack.c.h.b16 %v5054
        %v5564 = vunpack.c.l.b16 %v5055
        %v5565 = vunpack.c.h.b16 %v5055
        %v5566 = vunpack.c.l.b16 %v5056
        %v5567 = vunpack.c.h.b16 %v5056
        %v5568 = vunpack.c.l.b16 %v5057
        %v5569 = vunpack.c.h.b16 %v5057
        %v5570 = vunpack.c.l.b16 %v5058
        %v5571 = vunpack.c.h.b16 %v5058
        %v5572 = vunpack.c.l.b16 %v5059
        %v5573 = vunpack.c.h.b16 %v5059
        %v5574 = vunpack.c.l.b16 %v5060
        %v5575 = vunpack.c.h.b16 %v5060
        %v5576 = vunpack.c.l.b16 %v5061
        %v5577 = vunpack.c.h.b16 %v5061
        %v5578 = vunpack.c.l.b16 %v5062
        %v5579 = vunpack.c.h.b16 %v5062
        %v5580 = vpack.c.b16 %v5458, %v5456
        %v5581 = vpack.c.b16 %v5459, %v5457
        %v5582 = vpack.c.b16 %v5462, %v5460
        %v5583 = vpack.c.b16 %v5463, %v5461
        %v5584 = vpack.c.b16 %v5466, %v5464
        %v5585 = vpack.c.b16 %v5467, %v5465
        %v5586 = vpack.c.b16 %v5470, %v5468
        %v5587 = vpack.c.b16 %v5471, %v5469
        %v5588 = vpack.c.b16 %v5474, %v5472
        %v5589 = vpack.c.b16 %v5475, %v5473
        %v5590 = vpack.c.b16 %v5478, %v5476
        %v5591 = vpack.c.b16 %v5479, %v5477
        %v5592 = vpack.c.b16 %v5482, %v5480
        %v5593 = vpack.c.b16 %v5483, %v5481
        %v5594 = vpack.c.b16 %v5486, %v5484
        %v5595 = vpack.c.b16 %v5487, %v5485
        %v5596 = vpack.c.b16 %v5490, %v5488
        %v5597 = vpack.c.b16 %v5491, %v5489
        %v5598 = vpack.c.b16 %v5494, %v5492
        %v5599 = vpack.c.b16 %v5495, %v5493
        %v5600 = vpack.c.b16 %v5498, %v5496
        %v5601 = vpack.c.b16 %v5499, %v5497
        %v5602 = vpack.c.b16 %v5502, %v5500
        %v5603 = vpack.c.b16 %v5503, %v5501
        %v5604 = vpack.c.b16 %v5506, %v5504
        %v5605 = vpack.c.b16 %v5507, %v5505
        %v5606 = vpack.c.b16 %v5510, %v5508
        %v5607 = vpack.c.b16 %v5511, %v5509
        %v5608 = vpack.c.b16 %v5514, %v5512
        %v5609 = vpack.c.b16 %v5515, %v5513
        %v5610 = vpack.c.b16 %v5518, %v5516
        %v5611 = vpack.c.b16 %v5519, %v5517
        %v5612 = vpack.c.b16 %v5522, %v5520
        %v5613 = vpack.c.b16 %v5523, %v5521
        %v5614 = vpack.c.b16 %v5526, %v5524
        %v5615 = vpack.c.b16 %v5527, %v5525
        %v5616 = vpack.c.b16 %v5530, %v5528
        %v5617 = vpack.c.b16 %v5531, %v5529
        %v5618 = vpack.c.b16 %v5534, %v5532
        %v5619 = vpack.c.b16 %v5535, %v5533
        %v5620 = vpack.c.b16 %v5538, %v5536
        %v5621 = vpack.c.b16 %v5539, %v5537
        %v5622 = vpack.c.b16 %v5542, %v5540
        %v5623 = vpack.c.b16 %v5543, %v5541
        %v5624 = vpack.c.b16 %v5546, %v5544
        %v5625 = vpack.c.b16 %v5547, %v5545
        %v5626 = vpack.c.b16 %v5550, %v5548
        %v5627 = vpack.c.b16 %v5551, %v5549
        %v5628 = vpack.c.b16 %v5554, %v5552
        %v5629 = vpack.c.b16 %v5555, %v5553
        %v5630 = vpack.c.b16 %v5558, %v5556
        %v5631 = vpack.c.b16 %v5559, %v5557
        %v5632 = vpack.c.b16 %v5562, %v5560
        %v5633 = vpack.c.b16 %v5563, %v5561
        %v5634 = vpack.c.b16 %v5566, %v5564
        %v5635 = vpack.c.b16 %v5567, %v5565
        %v5636 = vpack.c.b16 %v5570, %v5568
        %v5637 = vpack.c.b16 %v5571, %v5569
        %v5638 = vpack.c.b16 %v5574, %v5572
        %v5639 = vpack.c.b16 %v5575, %v5573
        %v5640 = vpack.c.b16 %v5578, %v5576
        %v5641 = vpack.c.b16 %v5579, %v5577
        %v5705 = vsel %vm4688, %v5110, 0
        %v5708 = vsel %vm4688, %v5142, 0
        %v5711 = vsel %vm4688, %v5174, 0
        %v5714 = vsel %vm4688, %v5206, 0
        %v5717 = vsel %vm4688, %v5238, 0
        %v5720 = vsel %vm4688, %v5270, 0
        %v5723 = vsel %vm4688, %v5302, 0
        %v5726 = vsel %vm4688, %v5334, 0
        %v5729 = vsel %vm4688, %v5366, 0
        %5731 = vmatprep.subr.bf16.mxu0 %v5581
        %5732 = vmatpush1.bf16.msra.mxu0 %v5580
        %5733 = vmatprep.subr.bf16.mxu0 %v5583
        %5734 = vmatpush1.bf16.msra.mxu0 %v5582
        %5735 = vmatprep.subr.bf16.mxu0 %v5585
        %5736 = vmatpush1.bf16.msra.mxu0 %v5584
        %5737 = vmatprep.subr.bf16.mxu0 %v5587
        %5738 = vmatpush1.bf16.msra.mxu0 %v5586
        %5739 = vmatprep.subr.bf16.mxu0 %v5589
        %5740 = vmatpush1.bf16.msra.mxu0 %v5588
        %5741 = vmatprep.subr.bf16.mxu0 %v5591
        %5742 = vmatpush1.bf16.msra.mxu0 %v5590
        %5743 = vmatprep.subr.bf16.mxu0 %v5593
        %5744 = vmatpush1.bf16.msra.mxu0 %v5592
        %5745 = vmatprep.subr.bf16.mxu0 %v5595
        %5746 = vmatpush1.bf16.msra.mxu0 %v5594
        %5747 = vmatprep.subr.bf16.mxu0 %v5597
        %5748 = vmatpush1.bf16.msra.mxu0 %v5596
        %5749 = vmatprep.subr.bf16.mxu0 %v5599
        %5750 = vmatpush1.bf16.msra.mxu0 %v5598
        %5751 = vmatprep.subr.bf16.mxu0 %v5601
        %5752 = vmatpush1.bf16.msra.mxu0 %v5600
        %5753 = vmatprep.subr.bf16.mxu0 %v5603
        %5754 = vmatpush1.bf16.msra.mxu0 %v5602
        %5755 = vmatprep.subr.bf16.mxu0 %v5605
        %5756 = vmatpush1.bf16.msra.mxu0 %v5604
        %5757 = vmatprep.subr.bf16.mxu0 %v5607
        %5758 = vmatpush1.bf16.msra.mxu0 %v5606
        %5759 = vmatprep.subr.bf16.mxu0 %v5609
        %5760 = vmatpush1.bf16.msra.mxu0 %v5608
        %5761 = vmatprep.subr.bf16.mxu0 %v5611
        %5762 = vmatpush1.bf16.msra.mxu0 %v5610
        %5763 = vmatprep.mubr.bf16.mxu0 %v5086
        %5764 = vmatmul.mubr.bf16.gmra.mrb[0].mxu0 %v5074
        %v5765 = vpop.f32.mrb[0].mxu0
        %v5766 = vadd.f32 0.0, %v5765
        %v5767 = vpop.f32.mrb[0].mxu0
        %v5768 = vadd.f32 0.0, %v5767
        %v5769 = vpop.f32.mrb[0].mxu0
        %v5770 = vadd.f32 0.0, %v5769
        %v5771 = vpop.f32.mrb[0].mxu0
        %v5772 = vadd.f32 0.0, %v5771
        %5773 = vmatprep.mubr.bf16.mxu0 %v5126
        %5774 = vmatmul.mubr.bf16.gmra.mrb[0].mxu0 %v5118
        %v5775 = vpop.f32.mrb[0].mxu0
        %v5776 = vadd.f32 0.0, %v5775
        %v5777 = vpop.f32.mrb[0].mxu0
        %v5778 = vadd.f32 0.0, %v5777
        %v5779 = vpop.f32.mrb[0].mxu0
        %v5780 = vadd.f32 0.0, %v5779
        %v5781 = vpop.f32.mrb[0].mxu0
        %v5782 = vadd.f32 0.0, %v5781
        %5783 = vmatprep.mubr.bf16.mxu0 %v5158
        %5784 = vmatmul.mubr.bf16.gmra.mrb[0].mxu0 %v5150
        %v5785 = vpop.f32.mrb[0].mxu0
        %v5786 = vadd.f32 0.0, %v5785
        %v5787 = vpop.f32.mrb[0].mxu0
        %v5788 = vadd.f32 0.0, %v5787
        %v5789 = vpop.f32.mrb[0].mxu0
        %v5790 = vadd.f32 0.0, %v5789
        %v5791 = vpop.f32.mrb[0].mxu0
        %v5792 = vadd.f32 0.0, %v5791
        %5793 = vmatprep.mubr.bf16.mxu0 %v5190
        %5794 = vmatmul.mubr.bf16.gmra.mrb[0].mxu0 %v5182
        %v5795 = vpop.f32.mrb[0].mxu0
        %v5796 = vadd.f32 0.0, %v5795
        %v5797 = vpop.f32.mrb[0].mxu0
        %v5798 = vadd.f32 0.0, %v5797
        %v5799 = vpop.f32.mrb[0].mxu0
        %v5800 = vadd.f32 0.0, %v5799
        %v5801 = vpop.f32.mrb[0].mxu0
        %v5802 = vadd.f32 0.0, %v5801
        %5803 = vmatprep.mubr.bf16.mxu0 %v5222
        %5804 = vmatmul.mubr.bf16.gmra.mrb[0].mxu0 %v5214
        %v5805 = vpop.f32.mrb[0].mxu0
        %v5806 = vadd.f32 0.0, %v5805
        %v5807 = vpop.f32.mrb[0].mxu0
        %v5808 = vadd.f32 0.0, %v5807
        %v5809 = vpop.f32.mrb[0].mxu0
        %v5810 = vadd.f32 0.0, %v5809
        %v5811 = vpop.f32.mrb[0].mxu0
        %v5812 = vadd.f32 0.0, %v5811
        %5813 = vmatprep.mubr.bf16.mxu0 %v5254
        %5814 = vmatmul.mubr.bf16.gmra.mrb[0].mxu0 %v5246
        %v5815 = vpop.f32.mrb[0].mxu0
        %v5816 = vadd.f32 0.0, %v5815
        %v5817 = vpop.f32.mrb[0].mxu0
        %v5818 = vadd.f32 0.0, %v5817
        %v5819 = vpop.f32.mrb[0].mxu0
        %v5820 = vadd.f32 0.0, %v5819
        %v5821 = vpop.f32.mrb[0].mxu0
        %v5822 = vadd.f32 0.0, %v5821
        %5823 = vmatprep.mubr.bf16.mxu0 %v5286
        %5824 = vmatmul.mubr.bf16.gmra.mrb[0].mxu0 %v5278
        %v5825 = vpop.f32.mrb[0].mxu0
        %v5826 = vadd.f32 0.0, %v5825
        %v5827 = vpop.f32.mrb[0].mxu0
        %v5828 = vadd.f32 0.0, %v5827
        %v5829 = vpop.f32.mrb[0].mxu0
        %v5830 = vadd.f32 0.0, %v5829
        %v5831 = vpop.f32.mrb[0].mxu0
        %v5832 = vadd.f32 0.0, %v5831
        %5833 = vmatprep.mubr.bf16.mxu0 %v5318
        %5834 = vmatmul.mubr.bf16.gmra.mrb[0].mxu0 %v5310
        %v5835 = vpop.f32.mrb[0].mxu0
        %v5836 = vadd.f32 0.0, %v5835
        %v5837 = vpop.f32.mrb[0].mxu0
        %v5838 = vadd.f32 0.0, %v5837
        %v5839 = vpop.f32.mrb[0].mxu0
        %v5840 = vadd.f32 0.0, %v5839
        %v5841 = vpop.f32.mrb[0].mxu0
        %v5842 = vadd.f32 0.0, %v5841
        %5843 = vmatprep.mubr.bf16.mxu0 %v5350
        %5844 = vmatmul.mubr.bf16.gmra.mrb[0].mxu0 %v5342
        %v5845 = vpop.f32.mrb[0].mxu0
        %v5846 = vadd.f32 0.0, %v5845
        %v5847 = vpop.f32.mrb[0].mxu0
        %v5848 = vadd.f32 0.0, %v5847
        %v5849 = vpop.f32.mrb[0].mxu0
        %v5850 = vadd.f32 0.0, %v5849
        %v5851 = vpop.f32.mrb[0].mxu0
        %v5852 = vadd.f32 0.0, %v5851
        %5853 = vdwg.mxu0
        %5854 = vmatprep.subr.bf16.mxu0 %v5613
        %5855 = vmatpush1.bf16.msra.mxu0 %v5612
        %5856 = vmatprep.subr.bf16.mxu0 %v5615
        %5857 = vmatpush1.bf16.msra.mxu0 %v5614
        %5858 = vmatprep.subr.bf16.mxu0 %v5617
        %5859 = vmatpush1.bf16.msra.mxu0 %v5616
        %5860 = vmatprep.subr.bf16.mxu0 %v5619
        %5861 = vmatpush1.bf16.msra.mxu0 %v5618
        %5862 = vmatprep.subr.bf16.mxu0 %v5621
        %5863 = vmatpush1.bf16.msra.mxu0 %v5620
        %5864 = vmatprep.subr.bf16.mxu0 %v5623
        %5865 = vmatpush1.bf16.msra.mxu0 %v5622
        %5866 = vmatprep.subr.bf16.mxu0 %v5625
        %5867 = vmatpush1.bf16.msra.mxu0 %v5624
        %5868 = vmatprep.subr.bf16.mxu0 %v5627
        %5869 = vmatpush1.bf16.msra.mxu0 %v5626
        %5870 = vmatprep.subr.bf16.mxu0 %v5629
        %5871 = vmatpush1.bf16.msra.mxu0 %v5628
        %5872 = vmatprep.subr.bf16.mxu0 %v5631
        %5873 = vmatpush1.bf16.msra.mxu0 %v5630
        %5874 = vmatprep.subr.bf16.mxu0 %v5633
        %5875 = vmatpush1.bf16.msra.mxu0 %v5632
        %5876 = vmatprep.subr.bf16.mxu0 %v5635
        %5877 = vmatpush1.bf16.msra.mxu0 %v5634
        %5878 = vmatprep.subr.bf16.mxu0 %v5637
        %5879 = vmatpush1.bf16.msra.mxu0 %v5636
        %5880 = vmatprep.subr.bf16.mxu0 %v5639
        %5881 = vmatpush1.bf16.msra.mxu0 %v5638
        %5882 = vmatprep.subr.bf16.mxu0 %v5641
        %5883 = vmatpush1.bf16.msra.mxu0 %v5640
        %5884 = vmatprep.subr.bf16.mxu0 0
        %5885 = vmatpush1.bf16.msra.mxu0 0
        %5886 = vmatprep.mubr.bf16.mxu0 %v5705
        %5887 = vmatmul.mubr.bf16.gmra.mrb[0].mxu0 %v5098
        %v5888 = vpop.f32.mrb[0].mxu0
        %v5889 = vadd.f32 %v5766, %v5888
        %v5890 = vpop.f32.mrb[0].mxu0
        %v5891 = vadd.f32 %v5768, %v5890
        %v5892 = vpop.f32.mrb[0].mxu0
        %v5893 = vadd.f32 %v5770, %v5892
        %v5894 = vpop.f32.mrb[0].mxu0
        %v5895 = vadd.f32 %v5772, %v5894
        %5896 = vmatprep.mubr.bf16.mxu0 %v5708
        %5897 = vmatmul.mubr.bf16.gmra.mrb[0].mxu0 %v5134
        %v5898 = vpop.f32.mrb[0].mxu0
        %v5899 = vadd.f32 %v5776, %v5898
        %v5900 = vpop.f32.mrb[0].mxu0
        %v5901 = vadd.f32 %v5778, %v5900
        %v5902 = vpop.f32.mrb[0].mxu0
        %v5903 = vadd.f32 %v5780, %v5902
        %v5904 = vpop.f32.mrb[0].mxu0
        %v5905 = vadd.f32 %v5782, %v5904
        %5906 = vmatprep.mubr.bf16.mxu0 %v5711
        %5907 = vmatmul.mubr.bf16.gmra.mrb[0].mxu0 %v5166
        %v5908 = vpop.f32.mrb[0].mxu0
        %v5909 = vadd.f32 %v5786, %v5908
        %v5910 = vpop.f32.mrb[0].mxu0
        %v5911 = vadd.f32 %v5788, %v5910
        %v5912 = vpop.f32.mrb[0].mxu0
        %v5913 = vadd.f32 %v5790, %v5912
        %v5914 = vpop.f32.mrb[0].mxu0
        %v5915 = vadd.f32 %v5792, %v5914
        %5916 = vmatprep.mubr.bf16.mxu0 %v5714
        %5917 = vmatmul.mubr.bf16.gmra.mrb[0].mxu0 %v5198
        %v5918 = vpop.f32.mrb[0].mxu0
        %v5919 = vadd.f32 %v5796, %v5918
        %v5920 = vpop.f32.mrb[0].mxu0
        %v5921 = vadd.f32 %v5798, %v5920
        %v5922 = vpop.f32.mrb[0].mxu0
        %v5923 = vadd.f32 %v5800, %v5922
        %v5924 = vpop.f32.mrb[0].mxu0
        %v5925 = vadd.f32 %v5802, %v5924
        %5926 = vmatprep.mubr.bf16.mxu0 %v5717
        %5927 = vmatmul.mubr.bf16.gmra.mrb[0].mxu0 %v5230
        %v5928 = vpop.f32.mrb[0].mxu0
        %v5929 = vadd.f32 %v5806, %v5928
        %v5930 = vpop.f32.mrb[0].mxu0
        %v5931 = vadd.f32 %v5808, %v5930
        %v5932 = vpop.f32.mrb[0].mxu0
        %v5933 = vadd.f32 %v5810, %v5932
        %v5934 = vpop.f32.mrb[0].mxu0
        %v5935 = vadd.f32 %v5812, %v5934
        %5936 = vmatprep.mubr.bf16.mxu0 %v5720
        %5937 = vmatmul.mubr.bf16.gmra.mrb[0].mxu0 %v5262
        %v5938 = vpop.f32.mrb[0].mxu0
        %v5939 = vadd.f32 %v5816, %v5938
        %v5940 = vpop.f32.mrb[0].mxu0
        %v5941 = vadd.f32 %v5818, %v5940
        %v5942 = vpop.f32.mrb[0].mxu0
        %v5943 = vadd.f32 %v5820, %v5942
        %v5944 = vpop.f32.mrb[0].mxu0
        %v5945 = vadd.f32 %v5822, %v5944
        %5946 = vmatprep.mubr.bf16.mxu0 %v5723
        %5947 = vmatmul.mubr.bf16.gmra.mrb[0].mxu0 %v5294
        %v5948 = vpop.f32.mrb[0].mxu0
        %v5949 = vadd.f32 %v5826, %v5948
        %v5950 = vpop.f32.mrb[0].mxu0
        %v5951 = vadd.f32 %v5828, %v5950
        %v5952 = vpop.f32.mrb[0].mxu0
        %v5953 = vadd.f32 %v5830, %v5952
        %v5954 = vpop.f32.mrb[0].mxu0
        %v5955 = vadd.f32 %v5832, %v5954
        %5956 = vmatprep.mubr.bf16.mxu0 %v5726
        %5957 = vmatmul.mubr.bf16.gmra.mrb[0].mxu0 %v5326
        %v5958 = vpop.f32.mrb[0].mxu0
        %v5959 = vadd.f32 %v5836, %v5958
        %v5960 = vpop.f32.mrb[0].mxu0
        %v5961 = vadd.f32 %v5838, %v5960
        %v5962 = vpop.f32.mrb[0].mxu0
        %v5963 = vadd.f32 %v5840, %v5962
        %v5964 = vpop.f32.mrb[0].mxu0
        %v5965 = vadd.f32 %v5842, %v5964
        %5966 = vmatprep.mubr.bf16.mxu0 %v5729
        %5967 = vmatmul.mubr.bf16.gmra.mrb[0].mxu0 %v5358
        %v5968 = vpop.f32.mrb[0].mxu0
        %v5969 = vadd.f32 %v5846, %v5968
        %v5970 = vpop.f32.mrb[0].mxu0
        %v5971 = vadd.f32 %v5848, %v5970
        %v5972 = vpop.f32.mrb[0].mxu0
        %v5973 = vadd.f32 %v5850, %v5972
        %v5974 = vpop.f32.mrb[0].mxu0
        %v5975 = vadd.f32 %v5852, %v5974
        %5976 = vdwg.mxu0
        %v6039 = vunpack.c.l.b16 %v4938
        %v6040 = vunpack.c.h.b16 %v4938
        %v6041 = vunpack.c.l.b16 %v4939
        %v6042 = vunpack.c.h.b16 %v4939
        %v6043 = vunpack.c.l.b16 %v4940
        %v6044 = vunpack.c.h.b16 %v4940
        %v6045 = vunpack.c.l.b16 %v4941
        %v6046 = vunpack.c.h.b16 %v4941
        %v6047 = vunpack.c.l.b16 %v4942
        %v6048 = vunpack.c.h.b16 %v4942
        %v6049 = vunpack.c.l.b16 %v4943
        %v6050 = vunpack.c.h.b16 %v4943
        %v6051 = vunpack.c.l.b16 %v4944
        %v6052 = vunpack.c.h.b16 %v4944
        %v6053 = vunpack.c.l.b16 %v4945
        %v6054 = vunpack.c.h.b16 %v4945
        %v6055 = vunpack.c.l.b16 %v4946
        %v6056 = vunpack.c.h.b16 %v4946
        %v6057 = vunpack.c.l.b16 %v4947
        %v6058 = vunpack.c.h.b16 %v4947
        %v6059 = vunpack.c.l.b16 %v4948
        %v6060 = vunpack.c.h.b16 %v4948
        %v6061 = vunpack.c.l.b16 %v4949
        %v6062 = vunpack.c.h.b16 %v4949
        %v6063 = vunpack.c.l.b16 %v4950
        %v6064 = vunpack.c.h.b16 %v4950
        %v6065 = vunpack.c.l.b16 %v4951
        %v6066 = vunpack.c.h.b16 %v4951
        %v6067 = vunpack.c.l.b16 %v4952
        %v6068 = vunpack.c.h.b16 %v4952
        %v6069 = vunpack.c.l.b16 %v4953
        %v6070 = vunpack.c.h.b16 %v4953
        %v6071 = vunpack.c.l.b16 %v4954
        %v6072 = vunpack.c.h.b16 %v4954
        %v6073 = vunpack.c.l.b16 %v4955
        %v6074 = vunpack.c.h.b16 %v4955
        %v6075 = vunpack.c.l.b16 %v4956
        %v6076 = vunpack.c.h.b16 %v4956
        %v6077 = vunpack.c.l.b16 %v4957
        %v6078 = vunpack.c.h.b16 %v4957
        %v6079 = vunpack.c.l.b16 %v4958
        %v6080 = vunpack.c.h.b16 %v4958
        %v6081 = vunpack.c.l.b16 %v4959
        %v6082 = vunpack.c.h.b16 %v4959
        %v6083 = vunpack.c.l.b16 %v4960
        %v6084 = vunpack.c.h.b16 %v4960
        %v6085 = vunpack.c.l.b16 %v4961
        %v6086 = vunpack.c.h.b16 %v4961
        %v6087 = vunpack.c.l.b16 %v4962
        %v6088 = vunpack.c.h.b16 %v4962
        %v6089 = vunpack.c.l.b16 %v4963
        %v6090 = vunpack.c.h.b16 %v4963
        %v6091 = vunpack.c.l.b16 %v4964
        %v6092 = vunpack.c.h.b16 %v4964
        %v6093 = vunpack.c.l.b16 %v4965
        %v6094 = vunpack.c.h.b16 %v4965
        %v6095 = vunpack.c.l.b16 %v4966
        %v6096 = vunpack.c.h.b16 %v4966
        %v6097 = vunpack.c.l.b16 %v4967
        %v6098 = vunpack.c.h.b16 %v4967
        %v6099 = vunpack.c.l.b16 %v4968
        %v6100 = vunpack.c.h.b16 %v4968
        %v6101 = vunpack.c.l.b16 %v4969
        %v6102 = vunpack.c.h.b16 %v4969
        %v6103 = vunpack.c.l.b16 %v4970
        %v6104 = vunpack.c.h.b16 %v4970
        %v6105 = vunpack.c.l.b16 %v4971
        %v6106 = vunpack.c.h.b16 %v4971
        %v6107 = vunpack.c.l.b16 %v4972
        %v6108 = vunpack.c.h.b16 %v4972
        %v6109 = vunpack.c.l.b16 %v4973
        %v6110 = vunpack.c.h.b16 %v4973
        %v6111 = vunpack.c.l.b16 %v4974
        %v6112 = vunpack.c.h.b16 %v4974
        %v6113 = vunpack.c.l.b16 %v4975
        %v6114 = vunpack.c.h.b16 %v4975
        %v6115 = vunpack.c.l.b16 %v4976
        %v6116 = vunpack.c.h.b16 %v4976
        %v6117 = vunpack.c.l.b16 %v4977
        %v6118 = vunpack.c.h.b16 %v4977
        %v6119 = vunpack.c.l.b16 %v4978
        %v6120 = vunpack.c.h.b16 %v4978
        %v6121 = vunpack.c.l.b16 %v4979
        %v6122 = vunpack.c.h.b16 %v4979
        %v6123 = vunpack.c.l.b16 %v4980
        %v6124 = vunpack.c.h.b16 %v4980
        %v6125 = vunpack.c.l.b16 %v4981
        %v6126 = vunpack.c.h.b16 %v4981
        %v6127 = vunpack.c.l.b16 %v4982
        %v6128 = vunpack.c.h.b16 %v4982
        %v6129 = vunpack.c.l.b16 %v4983
        %v6130 = vunpack.c.h.b16 %v4983
        %v6131 = vunpack.c.l.b16 %v4984
        %v6132 = vunpack.c.h.b16 %v4984
        %v6133 = vunpack.c.l.b16 %v4985
        %v6134 = vunpack.c.h.b16 %v4985
        %v6135 = vunpack.c.l.b16 %v4986
        %v6136 = vunpack.c.h.b16 %v4986
        %v6137 = vunpack.c.l.b16 %v4987
        %v6138 = vunpack.c.h.b16 %v4987
        %v6139 = vunpack.c.l.b16 %v4988
        %v6140 = vunpack.c.h.b16 %v4988
        %v6141 = vunpack.c.l.b16 %v4989
        %v6142 = vunpack.c.h.b16 %v4989
        %v6143 = vunpack.c.l.b16 %v4990
        %v6144 = vunpack.c.h.b16 %v4990
        %v6145 = vunpack.c.l.b16 %v4991
        %v6146 = vunpack.c.h.b16 %v4991
        %v6147 = vunpack.c.l.b16 %v4992
        %v6148 = vunpack.c.h.b16 %v4992
        %v6149 = vunpack.c.l.b16 %v4993
        %v6150 = vunpack.c.h.b16 %v4993
        %v6151 = vunpack.c.l.b16 %v4994
        %v6152 = vunpack.c.h.b16 %v4994
        %v6153 = vunpack.c.l.b16 %v4995
        %v6154 = vunpack.c.h.b16 %v4995
        %v6155 = vunpack.c.l.b16 %v4996
        %v6156 = vunpack.c.h.b16 %v4996
        %v6157 = vunpack.c.l.b16 %v4997
        %v6158 = vunpack.c.h.b16 %v4997
        %v6159 = vunpack.c.l.b16 %v4998
        %v6160 = vunpack.c.h.b16 %v4998
        %v6161 = vunpack.c.l.b16 %v4999
        %v6162 = vunpack.c.h.b16 %v4999
        %v6163 = vpack.c.b16 %v6041, %v6039
        %v6164 = vpack.c.b16 %v6042, %v6040
        %v6165 = vpack.c.b16 %v6045, %v6043
        %v6166 = vpack.c.b16 %v6046, %v6044
        %v6167 = vpack.c.b16 %v6049, %v6047
        %v6168 = vpack.c.b16 %v6050, %v6048
        %v6169 = vpack.c.b16 %v6053, %v6051
        %v6170 = vpack.c.b16 %v6054, %v6052
        %v6171 = vpack.c.b16 %v6057, %v6055
        %v6172 = vpack.c.b16 %v6058, %v6056
        %v6173 = vpack.c.b16 %v6061, %v6059
        %v6174 = vpack.c.b16 %v6062, %v6060
        %v6175 = vpack.c.b16 %v6065, %v6063
        %v6176 = vpack.c.b16 %v6066, %v6064
        %v6177 = vpack.c.b16 %v6069, %v6067
        %v6178 = vpack.c.b16 %v6070, %v6068
        %v6179 = vpack.c.b16 %v6073, %v6071
        %v6180 = vpack.c.b16 %v6074, %v6072
        %v6181 = vpack.c.b16 %v6077, %v6075
        %v6182 = vpack.c.b16 %v6078, %v6076
        %v6183 = vpack.c.b16 %v6081, %v6079
        %v6184 = vpack.c.b16 %v6082, %v6080
        %v6185 = vpack.c.b16 %v6085, %v6083
        %v6186 = vpack.c.b16 %v6086, %v6084
        %v6187 = vpack.c.b16 %v6089, %v6087
        %v6188 = vpack.c.b16 %v6090, %v6088
        %v6189 = vpack.c.b16 %v6093, %v6091
        %v6190 = vpack.c.b16 %v6094, %v6092
        %v6191 = vpack.c.b16 %v6097, %v6095
        %v6192 = vpack.c.b16 %v6098, %v6096
        %v6193 = vpack.c.b16 %v6101, %v6099
        %v6194 = vpack.c.b16 %v6102, %v6100
        %v6195 = vpack.c.b16 %v6105, %v6103
        %v6196 = vpack.c.b16 %v6106, %v6104
        %v6197 = vpack.c.b16 %v6109, %v6107
        %v6198 = vpack.c.b16 %v6110, %v6108
        %v6199 = vpack.c.b16 %v6113, %v6111
        %v6200 = vpack.c.b16 %v6114, %v6112
        %v6201 = vpack.c.b16 %v6117, %v6115
        %v6202 = vpack.c.b16 %v6118, %v6116
        %v6203 = vpack.c.b16 %v6121, %v6119
        %v6204 = vpack.c.b16 %v6122, %v6120
        %v6205 = vpack.c.b16 %v6125, %v6123
        %v6206 = vpack.c.b16 %v6126, %v6124
        %v6207 = vpack.c.b16 %v6129, %v6127
        %v6208 = vpack.c.b16 %v6130, %v6128
        %v6209 = vpack.c.b16 %v6133, %v6131
        %v6210 = vpack.c.b16 %v6134, %v6132
        %v6211 = vpack.c.b16 %v6137, %v6135
        %v6212 = vpack.c.b16 %v6138, %v6136
        %v6213 = vpack.c.b16 %v6141, %v6139
        %v6214 = vpack.c.b16 %v6142, %v6140
        %v6215 = vpack.c.b16 %v6145, %v6143
        %v6216 = vpack.c.b16 %v6146, %v6144
        %v6217 = vpack.c.b16 %v6149, %v6147
        %v6218 = vpack.c.b16 %v6150, %v6148
        %v6219 = vpack.c.b16 %v6153, %v6151
        %v6220 = vpack.c.b16 %v6154, %v6152
        %v6221 = vpack.c.b16 %v6157, %v6155
        %v6222 = vpack.c.b16 %v6158, %v6156
        %v6223 = vpack.c.b16 %v6161, %v6159
        %v6224 = vpack.c.b16 %v6162, %v6160
        %v6287 = vsel %vm4688, %v4901, 0
        %v6289 = vsel %vm4688, %v4905, 0
        %v6291 = vsel %vm4688, %v4909, 0
        %v6293 = vsel %vm4688, %v4913, 0
        %v6295 = vsel %vm4688, %v4917, 0
        %v6297 = vsel %vm4688, %v4921, 0
        %v6299 = vsel %vm4688, %v4925, 0
        %v6301 = vsel %vm4688, %v4929, 0
        %v6303 = vsel %vm4688, %v4933, 0
        %6305 = vmatprep.subr.bf16.mxu0 %v6164
        %6306 = vmatpush1.bf16.msra.mxu0 %v6163
        %6307 = vmatprep.subr.bf16.mxu0 %v6166
        %6308 = vmatpush1.bf16.msra.mxu0 %v6165
        %6309 = vmatprep.subr.bf16.mxu0 %v6168
        %6310 = vmatpush1.bf16.msra.mxu0 %v6167
        %6311 = vmatprep.subr.bf16.mxu0 %v6170
        %6312 = vmatpush1.bf16.msra.mxu0 %v6169
        %6313 = vmatprep.subr.bf16.mxu0 %v6172
        %6314 = vmatpush1.bf16.msra.mxu0 %v6171
        %6315 = vmatprep.subr.bf16.mxu0 %v6174
        %6316 = vmatpush1.bf16.msra.mxu0 %v6173
        %6317 = vmatprep.subr.bf16.mxu0 %v6176
        %6318 = vmatpush1.bf16.msra.mxu0 %v6175
        %6319 = vmatprep.subr.bf16.mxu0 %v6178
        %6320 = vmatpush1.bf16.msra.mxu0 %v6177
        %6321 = vmatprep.subr.bf16.mxu0 %v6180
        %6322 = vmatpush1.bf16.msra.mxu0 %v6179
        %6323 = vmatprep.subr.bf16.mxu0 %v6182
        %6324 = vmatpush1.bf16.msra.mxu0 %v6181
        %6325 = vmatprep.subr.bf16.mxu0 %v6184
        %6326 = vmatpush1.bf16.msra.mxu0 %v6183
        %6327 = vmatprep.subr.bf16.mxu0 %v6186
        %6328 = vmatpush1.bf16.msra.mxu0 %v6185
        %6329 = vmatprep.subr.bf16.mxu0 %v6188
        %6330 = vmatpush1.bf16.msra.mxu0 %v6187
        %6331 = vmatprep.subr.bf16.mxu0 %v6190
        %6332 = vmatpush1.bf16.msra.mxu0 %v6189
        %6333 = vmatprep.subr.bf16.mxu0 %v6192
        %6334 = vmatpush1.bf16.msra.mxu0 %v6191
        %6335 = vmatprep.subr.bf16.mxu0 %v6194
        %6336 = vmatpush1.bf16.msra.mxu0 %v6193
        %6337 = vmatprep.mubr.bf16.mxu0 %v4899
        %6338 = vmatmul.mubr.bf16.gmra.mrb[0].mxu0 %v4898
        %v6339 = vpop.f32.mrb[0].mxu0
        %v6340 = vadd.f32 %v5889, %v6339
        %v6341 = vpop.f32.mrb[0].mxu0
        %v6342 = vadd.f32 %v5891, %v6341
        %v6343 = vpop.f32.mrb[0].mxu0
        %v6344 = vadd.f32 %v5893, %v6343
        %v6345 = vpop.f32.mrb[0].mxu0
        %v6346 = vadd.f32 %v5895, %v6345
        %6347 = vmatprep.mubr.bf16.mxu0 %v4903
        %6348 = vmatmul.mubr.bf16.gmra.mrb[0].mxu0 %v4902
        %v6349 = vpop.f32.mrb[0].mxu0
        %v6350 = vadd.f32 %v5899, %v6349
        %v6351 = vpop.f32.mrb[0].mxu0
        %v6352 = vadd.f32 %v5901, %v6351
        %v6353 = vpop.f32.mrb[0].mxu0
        %v6354 = vadd.f32 %v5903, %v6353
        %v6355 = vpop.f32.mrb[0].mxu0
        %v6356 = vadd.f32 %v5905, %v6355
        %6357 = vmatprep.mubr.bf16.mxu0 %v4907
        %6358 = vmatmul.mubr.bf16.gmra.mrb[0].mxu0 %v4906
        %v6359 = vpop.f32.mrb[0].mxu0
        %v6360 = vadd.f32 %v5909, %v6359
        %v6361 = vpop.f32.mrb[0].mxu0
        %v6362 = vadd.f32 %v5911, %v6361
        %v6363 = vpop.f32.mrb[0].mxu0
        %v6364 = vadd.f32 %v5913, %v6363
        %v6365 = vpop.f32.mrb[0].mxu0
        %v6366 = vadd.f32 %v5915, %v6365
        %6367 = vmatprep.mubr.bf16.mxu0 %v4911
        %6368 = vmatmul.mubr.bf16.gmra.mrb[0].mxu0 %v4910
        %v6369 = vpop.f32.mrb[0].mxu0
        %v6370 = vadd.f32 %v5919, %v6369
        %v6371 = vpop.f32.mrb[0].mxu0
        %v6372 = vadd.f32 %v5921, %v6371
        %v6373 = vpop.f32.mrb[0].mxu0
        %v6374 = vadd.f32 %v5923, %v6373
        %v6375 = vpop.f32.mrb[0].mxu0
        %v6376 = vadd.f32 %v5925, %v6375
        %6377 = vmatprep.mubr.bf16.mxu0 %v4915
        %6378 = vmatmul.mubr.bf16.gmra.mrb[0].mxu0 %v4914
        %v6379 = vpop.f32.mrb[0].mxu0
        %v6380 = vadd.f32 %v5929, %v6379
        %v6381 = vpop.f32.mrb[0].mxu0
        %v6382 = vadd.f32 %v5931, %v6381
        %v6383 = vpop.f32.mrb[0].mxu0
        %v6384 = vadd.f32 %v5933, %v6383
        %v6385 = vpop.f32.mrb[0].mxu0
        %v6386 = vadd.f32 %v5935, %v6385
        %6387 = vmatprep.mubr.bf16.mxu0 %v4919
        %6388 = vmatmul.mubr.bf16.gmra.mrb[0].mxu0 %v4918
        %v6389 = vpop.f32.mrb[0].mxu0
        %v6390 = vadd.f32 %v5939, %v6389
        %v6391 = vpop.f32.mrb[0].mxu0
        %v6392 = vadd.f32 %v5941, %v6391
        %v6393 = vpop.f32.mrb[0].mxu0
        %v6394 = vadd.f32 %v5943, %v6393
        %v6395 = vpop.f32.mrb[0].mxu0
        %v6396 = vadd.f32 %v5945, %v6395
        %6397 = vmatprep.mubr.bf16.mxu0 %v4923
        %6398 = vmatmul.mubr.bf16.gmra.mrb[0].mxu0 %v4922
        %v6399 = vpop.f32.mrb[0].mxu0
        %v6400 = vadd.f32 %v5949, %v6399
        %v6401 = vpop.f32.mrb[0].mxu0
        %v6402 = vadd.f32 %v5951, %v6401
        %v6403 = vpop.f32.mrb[0].mxu0
        %v6404 = vadd.f32 %v5953, %v6403
        %v6405 = vpop.f32.mrb[0].mxu0
        %v6406 = vadd.f32 %v5955, %v6405
        %6407 = vmatprep.mubr.bf16.mxu0 %v4927
        %6408 = vmatmul.mubr.bf16.gmra.mrb[0].mxu0 %v4926
        %v6409 = vpop.f32.mrb[0].mxu0
        %v6410 = vadd.f32 %v5959, %v6409
        %v6411 = vpop.f32.mrb[0].mxu0
        %v6412 = vadd.f32 %v5961, %v6411
        %v6413 = vpop.f32.mrb[0].mxu0
        %v6414 = vadd.f32 %v5963, %v6413
        %v6415 = vpop.f32.mrb[0].mxu0
        %v6416 = vadd.f32 %v5965, %v6415
        %6417 = vmatprep.mubr.bf16.mxu0 %v4931
        %6418 = vmatmul.mubr.bf16.gmra.mrb[0].mxu0 %v4930
        %v6419 = vpop.f32.mrb[0].mxu0
        %v6420 = vadd.f32 %v5969, %v6419
        %v6421 = vpop.f32.mrb[0].mxu0
        %v6422 = vadd.f32 %v5971, %v6421
        %v6423 = vpop.f32.mrb[0].mxu0
        %v6424 = vadd.f32 %v5973, %v6423
        %v6425 = vpop.f32.mrb[0].mxu0
        %v6426 = vadd.f32 %v5975, %v6425
        %6427 = vdwg.mxu0
        %6428 = vmatprep.subr.bf16.mxu0 %v6196
        %6429 = vmatpush1.bf16.msra.mxu0 %v6195
        %6430 = vmatprep.subr.bf16.mxu0 %v6198
        %6431 = vmatpush1.bf16.msra.mxu0 %v6197
        %6432 = vmatprep.subr.bf16.mxu0 %v6200
        %6433 = vmatpush1.bf16.msra.mxu0 %v6199
        %6434 = vmatprep.subr.bf16.mxu0 %v6202
        %6435 = vmatpush1.bf16.msra.mxu0 %v6201
        %6436 = vmatprep.subr.bf16.mxu0 %v6204
        %6437 = vmatpush1.bf16.msra.mxu0 %v6203
        %6438 = vmatprep.subr.bf16.mxu0 %v6206
        %6439 = vmatpush1.bf16.msra.mxu0 %v6205
        %6440 = vmatprep.subr.bf16.mxu0 %v6208
        %6441 = vmatpush1.bf16.msra.mxu0 %v6207
        %6442 = vmatprep.subr.bf16.mxu0 %v6210
        %6443 = vmatpush1.bf16.msra.mxu0 %v6209
        %6444 = vmatprep.subr.bf16.mxu0 %v6212
        %6445 = vmatpush1.bf16.msra.mxu0 %v6211
        %6446 = vmatprep.subr.bf16.mxu0 %v6214
        %6447 = vmatpush1.bf16.msra.mxu0 %v6213
        %6448 = vmatprep.subr.bf16.mxu0 %v6216
        %6449 = vmatpush1.bf16.msra.mxu0 %v6215
        %6450 = vmatprep.subr.bf16.mxu0 %v6218
        %6451 = vmatpush1.bf16.msra.mxu0 %v6217
        %6452 = vmatprep.subr.bf16.mxu0 %v6220
        %6453 = vmatpush1.bf16.msra.mxu0 %v6219
        %6454 = vmatprep.subr.bf16.mxu0 %v6222
        %6455 = vmatpush1.bf16.msra.mxu0 %v6221
        %6456 = vmatprep.subr.bf16.mxu0 %v6224
        %6457 = vmatpush1.bf16.msra.mxu0 %v6223
        %6458 = vmatprep.subr.bf16.mxu0 0
        %6459 = vmatpush1.bf16.msra.mxu0 0
        %6460 = vmatprep.mubr.bf16.mxu0 %v6287
        %6461 = vmatmul.mubr.bf16.gmra.mrb[0].mxu0 %v4900
        %v6462 = vpop.f32.mrb[0].mxu0
        %v6463 = vadd.f32 %v6340, %v6462
        %v6464 = vpop.f32.mrb[0].mxu0
        %v6465 = vadd.f32 %v6342, %v6464
        %v6466 = vpop.f32.mrb[0].mxu0
        %v6467 = vadd.f32 %v6344, %v6466
        %v6468 = vpop.f32.mrb[0].mxu0
        %v6469 = vadd.f32 %v6346, %v6468
        %6470 = vmatprep.mubr.bf16.mxu0 %v6289
        %6471 = vmatmul.mubr.bf16.gmra.mrb[0].mxu0 %v4904
        %v6472 = vpop.f32.mrb[0].mxu0
        %v6473 = vadd.f32 %v6350, %v6472
        %v6474 = vpop.f32.mrb[0].mxu0
        %v6475 = vadd.f32 %v6352, %v6474
        %v6476 = vpop.f32.mrb[0].mxu0
        %v6477 = vadd.f32 %v6354, %v6476
        %v6478 = vpop.f32.mrb[0].mxu0
        %v6479 = vadd.f32 %v6356, %v6478
        %6480 = vmatprep.mubr.bf16.mxu0 %v6291
        %6481 = vmatmul.mubr.bf16.gmra.mrb[0].mxu0 %v4908
        %v6482 = vpop.f32.mrb[0].mxu0
        %v6483 = vadd.f32 %v6360, %v6482
        %v6484 = vpop.f32.mrb[0].mxu0
        %v6485 = vadd.f32 %v6362, %v6484
        %v6486 = vpop.f32.mrb[0].mxu0
        %v6487 = vadd.f32 %v6364, %v6486
        %v6488 = vpop.f32.mrb[0].mxu0
        %v6489 = vadd.f32 %v6366, %v6488
        %6490 = vmatprep.mubr.bf16.mxu0 %v6293
        %6491 = vmatmul.mubr.bf16.gmra.mrb[0].mxu0 %v4912
        %v6492 = vpop.f32.mrb[0].mxu0
        %v6493 = vadd.f32 %v6370, %v6492
        %v6494 = vpop.f32.mrb[0].mxu0
        %v6495 = vadd.f32 %v6372, %v6494
        %v6496 = vpop.f32.mrb[0].mxu0
        %v6497 = vadd.f32 %v6374, %v6496
        %v6498 = vpop.f32.mrb[0].mxu0
        %v6499 = vadd.f32 %v6376, %v6498
        %6500 = vmatprep.mubr.bf16.mxu0 %v6295
        %6501 = vmatmul.mubr.bf16.gmra.mrb[0].mxu0 %v4916
        %v6502 = vpop.f32.mrb[0].mxu0
        %v6503 = vadd.f32 %v6380, %v6502
        %v6504 = vpop.f32.mrb[0].mxu0
        %v6505 = vadd.f32 %v6382, %v6504
        %v6506 = vpop.f32.mrb[0].mxu0
        %v6507 = vadd.f32 %v6384, %v6506
        %v6508 = vpop.f32.mrb[0].mxu0
        %v6509 = vadd.f32 %v6386, %v6508
        %6510 = vmatprep.mubr.bf16.mxu0 %v6297
        %6511 = vmatmul.mubr.bf16.gmra.mrb[0].mxu0 %v4920
        %v6512 = vpop.f32.mrb[0].mxu0
        %v6513 = vadd.f32 %v6390, %v6512
        %v6514 = vpop.f32.mrb[0].mxu0
        %v6515 = vadd.f32 %v6392, %v6514
        %v6516 = vpop.f32.mrb[0].mxu0
        %v6517 = vadd.f32 %v6394, %v6516
        %v6518 = vpop.f32.mrb[0].mxu0
        %v6519 = vadd.f32 %v6396, %v6518
        %6520 = vmatprep.mubr.bf16.mxu0 %v6299
        %6521 = vmatmul.mubr.bf16.gmra.mrb[0].mxu0 %v4924
        %v6522 = vpop.f32.mrb[0].mxu0
        %v6523 = vadd.f32 %v6400, %v6522
        %v6524 = vpop.f32.mrb[0].mxu0
        %v6525 = vadd.f32 %v6402, %v6524
        %v6526 = vpop.f32.mrb[0].mxu0
        %v6527 = vadd.f32 %v6404, %v6526
        %v6528 = vpop.f32.mrb[0].mxu0
        %v6529 = vadd.f32 %v6406, %v6528
        %6530 = vmatprep.mubr.bf16.mxu0 %v6301
        %6531 = vmatmul.mubr.bf16.gmra.mrb[0].mxu0 %v4928
        %v6532 = vpop.f32.mrb[0].mxu0
        %v6533 = vadd.f32 %v6410, %v6532
        %v6534 = vpop.f32.mrb[0].mxu0
        %v6535 = vadd.f32 %v6412, %v6534
        %v6536 = vpop.f32.mrb[0].mxu0
        %v6537 = vadd.f32 %v6414, %v6536
        %v6538 = vpop.f32.mrb[0].mxu0
        %v6539 = vadd.f32 %v6416, %v6538
        %6540 = vmatprep.mubr.bf16.mxu0 %v6303
        %6541 = vmatmul.mubr.bf16.gmra.mrb[0].mxu0 %v4932
        %v6542 = vpop.f32.mrb[0].mxu0
        %v6543 = vadd.f32 %v6420, %v6542
        %v6544 = vpop.f32.mrb[0].mxu0
        %v6545 = vadd.f32 %v6422, %v6544
        %v6546 = vpop.f32.mrb[0].mxu0
        %v6547 = vadd.f32 %v6424, %v6546
        %v6548 = vpop.f32.mrb[0].mxu0
        %v6549 = vadd.f32 %v6426, %v6548
        %6550 = vdwg.mxu0
        %s6551 = scalar_lea.vmem %s4, 992
        %v6552 = vld [vmem:[%s6551] sm:$0xff]
        %v6553 = vld [vmem:[%s6551 + $0x8] sm:$0xff]
        %v6554 = vld [vmem:[%s6551 + $0x10] sm:$0xff]
        %v6555 = vld [vmem:[%s6551 + $0x18] sm:$0xff]
        %v6556 = vld [vmem:[%s6551 + $0x20] sm:$0xff]
        %v6557 = vld [vmem:[%s6551 + $0x28] sm:$0xff]
        %v6558 = vld [vmem:[%s6551 + $0x30] sm:$0xff]
        %v6559 = vld [vmem:[%s6551 + $0x38] sm:$0xff]
        %v6560 = vld [vmem:[%s6551 + $0x40] sm:$0xff]
        %v6561 = vld [vmem:[%s6551 + $0x48] sm:$0xff]
        %v6562 = vld [vmem:[%s6551 + $0x50] sm:$0xff]
        %v6563 = vld [vmem:[%s6551 + $0x58] sm:$0xff]
        %v6564 = vld [vmem:[%s6551 + $0x60] sm:$0xff]
        %v6565 = vld [vmem:[%s6551 + $0x68] sm:$0xff]
        %v6566 = vld [vmem:[%s6551 + $0x70] sm:$0xff]
        %v6567 = vld [vmem:[%s6551 + $0x78] sm:$0xff]
        %v6568 = vld [vmem:[%s6551 + $0x80] sm:$0xff]
        %v6569 = vld [vmem:[%s6551 + $0x88] sm:$0xff]
        %v6570 = vld [vmem:[%s6551 + $0x90] sm:$0xff]
        %v6571 = vld [vmem:[%s6551 + $0x98] sm:$0xff]
        %v6572 = vld [vmem:[%s6551 + $0xa0] sm:$0xff]
        %v6573 = vld [vmem:[%s6551 + $0xa8] sm:$0xff]
        %v6574 = vld [vmem:[%s6551 + $0xb0] sm:$0xff]
        %v6575 = vld [vmem:[%s6551 + $0xb8] sm:$0xff]
        %v6576 = vld [vmem:[%s6551 + $0xc0] sm:$0xff]
        %v6577 = vld [vmem:[%s6551 + $0xc8] sm:$0xff]
        %v6578 = vld [vmem:[%s6551 + $0xd0] sm:$0xff]
        %v6579 = vld [vmem:[%s6551 + $0xd8] sm:$0xff]
        %v6580 = vld [vmem:[%s6551 + $0xe0] sm:$0xff]
        %v6581 = vld [vmem:[%s6551 + $0xe8] sm:$0xff]
        %v6582 = vld [vmem:[%s6551 + $0xf0] sm:$0xff]
        %v6583 = vld [vmem:[%s6551 + $0xf8] sm:$0xff]
        %v6584 = vld [vmem:[%s6551 + $0x100] sm:$0xff]
        %v6585 = vld [vmem:[%s6551 + $0x108] sm:$0xff]
        %v6586 = vld [vmem:[%s6551 + $0x110] sm:$0xff]
        %v6587 = vld [vmem:[%s6551 + $0x118] sm:$0xff]
        %v6588 = vld [vmem:[%s6551 + $0x120] sm:$0xff]
        %v6589 = vld [vmem:[%s6551 + $0x128] sm:$0xff]
        %v6590 = vld [vmem:[%s6551 + $0x130] sm:$0xff]
        %v6591 = vld [vmem:[%s6551 + $0x138] sm:$0xff]
        %v6592 = vld [vmem:[%s6551 + $0x140] sm:$0xff]
        %v6593 = vld [vmem:[%s6551 + $0x148] sm:$0xff]
        %v6594 = vld [vmem:[%s6551 + $0x150] sm:$0xff]
        %v6595 = vld [vmem:[%s6551 + $0x158] sm:$0xff]
        %v6596 = vld [vmem:[%s6551 + $0x160] sm:$0xff]
        %v6597 = vld [vmem:[%s6551 + $0x168] sm:$0xff]
        %v6598 = vld [vmem:[%s6551 + $0x170] sm:$0xff]
        %v6599 = vld [vmem:[%s6551 + $0x178] sm:$0xff]
        %v6600 = vld [vmem:[%s6551 + $0x180] sm:$0xff]
        %v6601 = vld [vmem:[%s6551 + $0x188] sm:$0xff]
        %v6602 = vld [vmem:[%s6551 + $0x190] sm:$0xff]
        %v6603 = vld [vmem:[%s6551 + $0x198] sm:$0xff]
        %v6604 = vld [vmem:[%s6551 + $0x1a0] sm:$0xff]
        %v6605 = vld [vmem:[%s6551 + $0x1a8] sm:$0xff]
        %v6606 = vld [vmem:[%s6551 + $0x1b0] sm:$0xff]
        %v6607 = vld [vmem:[%s6551 + $0x1b8] sm:$0xff]
        %v6608 = vld [vmem:[%s6551 + $0x1c0] sm:$0xff]
        %v6609 = vld [vmem:[%s6551 + $0x1c8] sm:$0xff]
        %v6610 = vld [vmem:[%s6551 + $0x1d0] sm:$0xff]
        %v6611 = vld [vmem:[%s6551 + $0x1d8] sm:$0xff]
        %v6612 = vld [vmem:[%s6551 + $0x1e0] sm:$0xff]
        %v6613 = vld [vmem:[%s6551 + $0x1e8] sm:$0xff]
        %v6654 = vrot.slane %v4898, 1
        %v6655 = vrot.slane %v4902, 1
        %v6656 = vsel %vm1915, %v6654, %v6655
        %v6657 = vrot.slane %v4899, 1
        %v6658 = vrot.slane %v4903, 1
        %v6659 = vsel %vm1915, %v6657, %v6658
        %v6660 = vrot.slane %v4900, 1
        %v6661 = vrot.slane %v4904, 1
        %v6662 = vsel %vm1915, %v6660, %v6661
        %v6663 = vrot.slane %v4901, 1
        %v6664 = vrot.slane %v4905, 1
        %v6665 = vsel %vm1915, %v6663, %v6664
        %v6666 = vrot.slane %v4906, 1
        %v6667 = vsel %vm1915, %v6655, %v6666
        %v6668 = vrot.slane %v4907, 1
        %v6669 = vsel %vm1915, %v6658, %v6668
        %v6670 = vrot.slane %v4908, 1
        %v6671 = vsel %vm1915, %v6661, %v6670
        %v6672 = vrot.slane %v4909, 1
        %v6673 = vsel %vm1915, %v6664, %v6672
        %v6674 = vrot.slane %v4910, 1
        %v6675 = vsel %vm1915, %v6666, %v6674
        %v6676 = vrot.slane %v4911, 1
        %v6677 = vsel %vm1915, %v6668, %v6676
        %v6678 = vrot.slane %v4912, 1
        %v6679 = vsel %vm1915, %v6670, %v6678
        %v6680 = vrot.slane %v4913, 1
        %v6681 = vsel %vm1915, %v6672, %v6680
        %v6682 = vrot.slane %v4914, 1
        %v6683 = vsel %vm1915, %v6674, %v6682
        %v6684 = vrot.slane %v4915, 1
        %v6685 = vsel %vm1915, %v6676, %v6684
        %v6686 = vrot.slane %v4916, 1
        %v6687 = vsel %vm1915, %v6678, %v6686
        %v6688 = vrot.slane %v4917, 1
        %v6689 = vsel %vm1915, %v6680, %v6688
        %v6690 = vrot.slane %v4918, 1
        %v6691 = vsel %vm1915, %v6682, %v6690
        %v6692 = vrot.slane %v4919, 1
        %v6693 = vsel %vm1915, %v6684, %v6692
        %v6694 = vrot.slane %v4920, 1
        %v6695 = vsel %vm1915, %v6686, %v6694
        %v6696 = vrot.slane %v4921, 1
        %v6697 = vsel %vm1915, %v6688, %v6696
        %v6698 = vrot.slane %v4922, 1
        %v6699 = vsel %vm1915, %v6690, %v6698
        %v6700 = vrot.slane %v4923, 1
        %v6701 = vsel %vm1915, %v6692, %v6700
        %v6702 = vrot.slane %v4924, 1
        %v6703 = vsel %vm1915, %v6694, %v6702
        %v6704 = vrot.slane %v4925, 1
        %v6705 = vsel %vm1915, %v6696, %v6704
        %v6706 = vrot.slane %v4926, 1
        %v6707 = vsel %vm1915, %v6698, %v6706
        %v6708 = vrot.slane %v4927, 1
        %v6709 = vsel %vm1915, %v6700, %v6708
        %v6710 = vrot.slane %v4928, 1
        %v6711 = vsel %vm1915, %v6702, %v6710
        %v6712 = vrot.slane %v4929, 1
        %v6713 = vsel %vm1915, %v6704, %v6712
        %v6714 = vrot.slane %v4930, 1
        %v6715 = vsel %vm1915, %v6706, %v6714
        %v6716 = vrot.slane %v4931, 1
        %v6717 = vsel %vm1915, %v6708, %v6716
        %v6718 = vrot.slane %v4932, 1
        %v6719 = vsel %vm1915, %v6710, %v6718
        %v6720 = vrot.slane %v4933, 1
        %v6721 = vsel %vm1915, %v6712, %v6720
        %v6722 = vrot.slane %v4934, 1
        %v6723 = vsel %vm1915, %v6714, %v6722
        %v6724 = vrot.slane %v4935, 1
        %v6725 = vsel %vm1915, %v6716, %v6724
        %v6726 = vrot.slane %v4936, 1
        %v6727 = vsel %vm1915, %v6718, %v6726
        %v6728 = vrot.slane %v4937, 1
        %v6729 = vsel %vm1915, %v6720, %v6728
        %v6819 = vunpack.c.l.b16 %v6552
        %v6820 = vunpack.c.h.b16 %v6552
        %v6821 = vunpack.c.l.b16 %v6553
        %v6822 = vunpack.c.h.b16 %v6553
        %v6823 = vunpack.c.l.b16 %v6554
        %v6824 = vunpack.c.h.b16 %v6554
        %v6825 = vunpack.c.l.b16 %v6555
        %v6826 = vunpack.c.h.b16 %v6555
        %v6827 = vunpack.c.l.b16 %v6556
        %v6828 = vunpack.c.h.b16 %v6556
        %v6829 = vunpack.c.l.b16 %v6557
        %v6830 = vunpack.c.h.b16 %v6557
        %v6831 = vunpack.c.l.b16 %v6558
        %v6832 = vunpack.c.h.b16 %v6558
        %v6833 = vunpack.c.l.b16 %v6559
        %v6834 = vunpack.c.h.b16 %v6559
        %v6835 = vunpack.c.l.b16 %v6560
        %v6836 = vunpack.c.h.b16 %v6560
        %v6837 = vunpack.c.l.b16 %v6561
        %v6838 = vunpack.c.h.b16 %v6561
        %v6839 = vunpack.c.l.b16 %v6562
        %v6840 = vunpack.c.h.b16 %v6562
        %v6841 = vunpack.c.l.b16 %v6563
        %v6842 = vunpack.c.h.b16 %v6563
        %v6843 = vunpack.c.l.b16 %v6564
        %v6844 = vunpack.c.h.b16 %v6564
        %v6845 = vunpack.c.l.b16 %v6565
        %v6846 = vunpack.c.h.b16 %v6565
        %v6847 = vunpack.c.l.b16 %v6566
        %v6848 = vunpack.c.h.b16 %v6566
        %v6849 = vunpack.c.l.b16 %v6567
        %v6850 = vunpack.c.h.b16 %v6567
        %v6851 = vunpack.c.l.b16 %v6568
        %v6852 = vunpack.c.h.b16 %v6568
        %v6853 = vunpack.c.l.b16 %v6569
        %v6854 = vunpack.c.h.b16 %v6569
        %v6855 = vunpack.c.l.b16 %v6570
        %v6856 = vunpack.c.h.b16 %v6570
        %v6857 = vunpack.c.l.b16 %v6571
        %v6858 = vunpack.c.h.b16 %v6571
        %v6859 = vunpack.c.l.b16 %v6572
        %v6860 = vunpack.c.h.b16 %v6572
        %v6861 = vunpack.c.l.b16 %v6573
        %v6862 = vunpack.c.h.b16 %v6573
        %v6863 = vunpack.c.l.b16 %v6574
        %v6864 = vunpack.c.h.b16 %v6574
        %v6865 = vunpack.c.l.b16 %v6575
        %v6866 = vunpack.c.h.b16 %v6575
        %v6867 = vunpack.c.l.b16 %v6576
        %v6868 = vunpack.c.h.b16 %v6576
        %v6869 = vunpack.c.l.b16 %v6577
        %v6870 = vunpack.c.h.b16 %v6577
        %v6871 = vunpack.c.l.b16 %v6578
        %v6872 = vunpack.c.h.b16 %v6578
        %v6873 = vunpack.c.l.b16 %v6579
        %v6874 = vunpack.c.h.b16 %v6579
        %v6875 = vunpack.c.l.b16 %v6580
        %v6876 = vunpack.c.h.b16 %v6580
        %v6877 = vunpack.c.l.b16 %v6581
        %v6878 = vunpack.c.h.b16 %v6581
        %v6879 = vunpack.c.l.b16 %v6582
        %v6880 = vunpack.c.h.b16 %v6582
        %v6881 = vunpack.c.l.b16 %v6583
        %v6882 = vunpack.c.h.b16 %v6583
        %v6883 = vunpack.c.l.b16 %v6584
        %v6884 = vunpack.c.h.b16 %v6584
        %v6885 = vunpack.c.l.b16 %v6585
        %v6886 = vunpack.c.h.b16 %v6585
        %v6887 = vunpack.c.l.b16 %v6586
        %v6888 = vunpack.c.h.b16 %v6586
        %v6889 = vunpack.c.l.b16 %v6587
        %v6890 = vunpack.c.h.b16 %v6587
        %v6891 = vunpack.c.l.b16 %v6588
        %v6892 = vunpack.c.h.b16 %v6588
        %v6893 = vunpack.c.l.b16 %v6589
        %v6894 = vunpack.c.h.b16 %v6589
        %v6895 = vunpack.c.l.b16 %v6590
        %v6896 = vunpack.c.h.b16 %v6590
        %v6897 = vunpack.c.l.b16 %v6591
        %v6898 = vunpack.c.h.b16 %v6591
        %v6899 = vunpack.c.l.b16 %v6592
        %v6900 = vunpack.c.h.b16 %v6592
        %v6901 = vunpack.c.l.b16 %v6593
        %v6902 = vunpack.c.h.b16 %v6593
        %v6903 = vunpack.c.l.b16 %v6594
        %v6904 = vunpack.c.h.b16 %v6594
        %v6905 = vunpack.c.l.b16 %v6595
        %v6906 = vunpack.c.h.b16 %v6595
        %v6907 = vunpack.c.l.b16 %v6596
        %v6908 = vunpack.c.h.b16 %v6596
        %v6909 = vunpack.c.l.b16 %v6597
        %v6910 = vunpack.c.h.b16 %v6597
        %v6911 = vunpack.c.l.b16 %v6598
        %v6912 = vunpack.c.h.b16 %v6598
        %v6913 = vunpack.c.l.b16 %v6599
        %v6914 = vunpack.c.h.b16 %v6599
        %v6915 = vunpack.c.l.b16 %v6600
        %v6916 = vunpack.c.h.b16 %v6600
        %v6917 = vunpack.c.l.b16 %v6601
        %v6918 = vunpack.c.h.b16 %v6601
        %v6919 = vunpack.c.l.b16 %v6602
        %v6920 = vunpack.c.h.b16 %v6602
        %v6921 = vunpack.c.l.b16 %v6603
        %v6922 = vunpack.c.h.b16 %v6603
        %v6923 = vunpack.c.l.b16 %v6604
        %v6924 = vunpack.c.h.b16 %v6604
        %v6925 = vunpack.c.l.b16 %v6605
        %v6926 = vunpack.c.h.b16 %v6605
        %v6927 = vunpack.c.l.b16 %v6606
        %v6928 = vunpack.c.h.b16 %v6606
        %v6929 = vunpack.c.l.b16 %v6607
        %v6930 = vunpack.c.h.b16 %v6607
        %v6931 = vunpack.c.l.b16 %v6608
        %v6932 = vunpack.c.h.b16 %v6608
        %v6933 = vunpack.c.l.b16 %v6609
        %v6934 = vunpack.c.h.b16 %v6609
        %v6935 = vunpack.c.l.b16 %v6610
        %v6936 = vunpack.c.h.b16 %v6610
        %v6937 = vunpack.c.l.b16 %v6611
        %v6938 = vunpack.c.h.b16 %v6611
        %v6939 = vunpack.c.l.b16 %v6612
        %v6940 = vunpack.c.h.b16 %v6612
        %v6941 = vunpack.c.l.b16 %v6613
        %v6942 = vunpack.c.h.b16 %v6613
        %v6943 = vpack.c.b16 %v6821, %v6819
        %v6944 = vpack.c.b16 %v6822, %v6820
        %v6945 = vpack.c.b16 %v6825, %v6823
        %v6946 = vpack.c.b16 %v6826, %v6824
        %v6947 = vpack.c.b16 %v6829, %v6827
        %v6948 = vpack.c.b16 %v6830, %v6828
        %v6949 = vpack.c.b16 %v6833, %v6831
        %v6950 = vpack.c.b16 %v6834, %v6832
        %v6951 = vpack.c.b16 %v6837, %v6835
        %v6952 = vpack.c.b16 %v6838, %v6836
        %v6953 = vpack.c.b16 %v6841, %v6839
        %v6954 = vpack.c.b16 %v6842, %v6840
        %v6955 = vpack.c.b16 %v6845, %v6843
        %v6956 = vpack.c.b16 %v6846, %v6844
        %v6957 = vpack.c.b16 %v6849, %v6847
        %v6958 = vpack.c.b16 %v6850, %v6848
        %v6959 = vpack.c.b16 %v6853, %v6851
        %v6960 = vpack.c.b16 %v6854, %v6852
        %v6961 = vpack.c.b16 %v6857, %v6855
        %v6962 = vpack.c.b16 %v6858, %v6856
        %v6963 = vpack.c.b16 %v6861, %v6859
        %v6964 = vpack.c.b16 %v6862, %v6860
        %v6965 = vpack.c.b16 %v6865, %v6863
        %v6966 = vpack.c.b16 %v6866, %v6864
        %v6967 = vpack.c.b16 %v6869, %v6867
        %v6968 = vpack.c.b16 %v6870, %v6868
        %v6969 = vpack.c.b16 %v6873, %v6871
        %v6970 = vpack.c.b16 %v6874, %v6872
        %v6971 = vpack.c.b16 %v6877, %v6875
        %v6972 = vpack.c.b16 %v6878, %v6876
        %v6973 = vpack.c.b16 %v6881, %v6879
        %v6974 = vpack.c.b16 %v6882, %v6880
        %v6975 = vpack.c.b16 %v6885, %v6883
        %v6976 = vpack.c.b16 %v6886, %v6884
        %v6977 = vpack.c.b16 %v6889, %v6887
        %v6978 = vpack.c.b16 %v6890, %v6888
        %v6979 = vpack.c.b16 %v6893, %v6891
        %v6980 = vpack.c.b16 %v6894, %v6892
        %v6981 = vpack.c.b16 %v6897, %v6895
        %v6982 = vpack.c.b16 %v6898, %v6896
        %v6983 = vpack.c.b16 %v6901, %v6899
        %v6984 = vpack.c.b16 %v6902, %v6900
        %v6985 = vpack.c.b16 %v6905, %v6903
        %v6986 = vpack.c.b16 %v6906, %v6904
        %v6987 = vpack.c.b16 %v6909, %v6907
        %v6988 = vpack.c.b16 %v6910, %v6908
        %v6989 = vpack.c.b16 %v6913, %v6911
        %v6990 = vpack.c.b16 %v6914, %v6912
        %v6991 = vpack.c.b16 %v6917, %v6915
        %v6992 = vpack.c.b16 %v6918, %v6916
        %v6993 = vpack.c.b16 %v6921, %v6919
        %v6994 = vpack.c.b16 %v6922, %v6920
        %v6995 = vpack.c.b16 %v6925, %v6923
        %v6996 = vpack.c.b16 %v6926, %v6924
        %v6997 = vpack.c.b16 %v6929, %v6927
        %v6998 = vpack.c.b16 %v6930, %v6928
        %v6999 = vpack.c.b16 %v6933, %v6931
        %v7000 = vpack.c.b16 %v6934, %v6932
        %v7001 = vpack.c.b16 %v6937, %v6935
        %v7002 = vpack.c.b16 %v6938, %v6936
        %v7003 = vpack.c.b16 %v6941, %v6939
        %v7004 = vpack.c.b16 %v6942, %v6940
        %v7068 = vsel %vm4688, %v6665, 0
        %v7071 = vsel %vm4688, %v6673, 0
        %v7074 = vsel %vm4688, %v6681, 0
        %v7077 = vsel %vm4688, %v6689, 0
        %v7080 = vsel %vm4688, %v6697, 0
        %v7083 = vsel %vm4688, %v6705, 0
        %v7086 = vsel %vm4688, %v6713, 0
        %v7089 = vsel %vm4688, %v6721, 0
        %v7092 = vsel %vm4688, %v6729, 0
        %7094 = vmatprep.subr.bf16.mxu0 %v6944
        %7095 = vmatpush1.bf16.msra.mxu0 %v6943
        %7096 = vmatprep.subr.bf16.mxu0 %v6946
        %7097 = vmatpush1.bf16.msra.mxu0 %v6945
        %7098 = vmatprep.subr.bf16.mxu0 %v6948
        %7099 = vmatpush1.bf16.msra.mxu0 %v6947
        %7100 = vmatprep.subr.bf16.mxu0 %v6950
        %7101 = vmatpush1.bf16.msra.mxu0 %v6949
        %7102 = vmatprep.subr.bf16.mxu0 %v6952
        %7103 = vmatpush1.bf16.msra.mxu0 %v6951
        %7104 = vmatprep.subr.bf16.mxu0 %v6954
        %7105 = vmatpush1.bf16.msra.mxu0 %v6953
        %7106 = vmatprep.subr.bf16.mxu0 %v6956
        %7107 = vmatpush1.bf16.msra.mxu0 %v6955
        %7108 = vmatprep.subr.bf16.mxu0 %v6958
        %7109 = vmatpush1.bf16.msra.mxu0 %v6957
        %7110 = vmatprep.subr.bf16.mxu0 %v6960
        %7111 = vmatpush1.bf16.msra.mxu0 %v6959
        %7112 = vmatprep.subr.bf16.mxu0 %v6962
        %7113 = vmatpush1.bf16.msra.mxu0 %v6961
        %7114 = vmatprep.subr.bf16.mxu0 %v6964
        %7115 = vmatpush1.bf16.msra.mxu0 %v6963
        %7116 = vmatprep.subr.bf16.mxu0 %v6966
        %7117 = vmatpush1.bf16.msra.mxu0 %v6965
        %7118 = vmatprep.subr.bf16.mxu0 %v6968
        %7119 = vmatpush1.bf16.msra.mxu0 %v6967
        %7120 = vmatprep.subr.bf16.mxu0 %v6970
        %7121 = vmatpush1.bf16.msra.mxu0 %v6969
        %7122 = vmatprep.subr.bf16.mxu0 %v6972
        %7123 = vmatpush1.bf16.msra.mxu0 %v6971
        %7124 = vmatprep.subr.bf16.mxu0 %v6974
        %7125 = vmatpush1.bf16.msra.mxu0 %v6973
        %7126 = vmatprep.mubr.bf16.mxu0 %v6659
        %7127 = vmatmul.mubr.bf16.gmra.mrb[0].mxu0 %v6656
        %v7128 = vpop.f32.mrb[0].mxu0
        %v7129 = vadd.f32 0.0, %v7128
        %v7130 = vpop.f32.mrb[0].mxu0
        %v7131 = vadd.f32 0.0, %v7130
        %v7132 = vpop.f32.mrb[0].mxu0
        %v7133 = vadd.f32 0.0, %v7132
        %v7134 = vpop.f32.mrb[0].mxu0
        %v7135 = vadd.f32 0.0, %v7134
        %7136 = vmatprep.mubr.bf16.mxu0 %v6669
        %7137 = vmatmul.mubr.bf16.gmra.mrb[0].mxu0 %v6667
        %v7138 = vpop.f32.mrb[0].mxu0
        %v7139 = vadd.f32 0.0, %v7138
        %v7140 = vpop.f32.mrb[0].mxu0
        %v7141 = vadd.f32 0.0, %v7140
        %v7142 = vpop.f32.mrb[0].mxu0
        %v7143 = vadd.f32 0.0, %v7142
        %v7144 = vpop.f32.mrb[0].mxu0
        %v7145 = vadd.f32 0.0, %v7144
        %7146 = vmatprep.mubr.bf16.mxu0 %v6677
        %7147 = vmatmul.mubr.bf16.gmra.mrb[0].mxu0 %v6675
        %v7148 = vpop.f32.mrb[0].mxu0
        %v7149 = vadd.f32 0.0, %v7148
        %v7150 = vpop.f32.mrb[0].mxu0
        %v7151 = vadd.f32 0.0, %v7150
        %v7152 = vpop.f32.mrb[0].mxu0
        %v7153 = vadd.f32 0.0, %v7152
        %v7154 = vpop.f32.mrb[0].mxu0
        %v7155 = vadd.f32 0.0, %v7154
        %7156 = vmatprep.mubr.bf16.mxu0 %v6685
        %7157 = vmatmul.mubr.bf16.gmra.mrb[0].mxu0 %v6683
        %v7158 = vpop.f32.mrb[0].mxu0
        %v7159 = vadd.f32 0.0, %v7158
        %v7160 = vpop.f32.mrb[0].mxu0
        %v7161 = vadd.f32 0.0, %v7160
        %v7162 = vpop.f32.mrb[0].mxu0
        %v7163 = vadd.f32 0.0, %v7162
        %v7164 = vpop.f32.mrb[0].mxu0
        %v7165 = vadd.f32 0.0, %v7164
        %7166 = vmatprep.mubr.bf16.mxu0 %v6693
        %7167 = vmatmul.mubr.bf16.gmra.mrb[0].mxu0 %v6691
        %v7168 = vpop.f32.mrb[0].mxu0
        %v7169 = vadd.f32 0.0, %v7168
        %v7170 = vpop.f32.mrb[0].mxu0
        %v7171 = vadd.f32 0.0, %v7170
        %v7172 = vpop.f32.mrb[0].mxu0
        %v7173 = vadd.f32 0.0, %v7172
        %v7174 = vpop.f32.mrb[0].mxu0
        %v7175 = vadd.f32 0.0, %v7174
        %7176 = vmatprep.mubr.bf16.mxu0 %v6701
        %7177 = vmatmul.mubr.bf16.gmra.mrb[0].mxu0 %v6699
        %v7178 = vpop.f32.mrb[0].mxu0
        %v7179 = vadd.f32 0.0, %v7178
        %v7180 = vpop.f32.mrb[0].mxu0
        %v7181 = vadd.f32 0.0, %v7180
        %v7182 = vpop.f32.mrb[0].mxu0
        %v7183 = vadd.f32 0.0, %v7182
        %v7184 = vpop.f32.mrb[0].mxu0
        %v7185 = vadd.f32 0.0, %v7184
        %7186 = vmatprep.mubr.bf16.mxu0 %v6709
        %7187 = vmatmul.mubr.bf16.gmra.mrb[0].mxu0 %v6707
        %v7188 = vpop.f32.mrb[0].mxu0
        %v7189 = vadd.f32 0.0, %v7188
        %v7190 = vpop.f32.mrb[0].mxu0
        %v7191 = vadd.f32 0.0, %v7190
        %v7192 = vpop.f32.mrb[0].mxu0
        %v7193 = vadd.f32 0.0, %v7192
        %v7194 = vpop.f32.mrb[0].mxu0
        %v7195 = vadd.f32 0.0, %v7194
        %7196 = vmatprep.mubr.bf16.mxu0 %v6717
        %7197 = vmatmul.mubr.bf16.gmra.mrb[0].mxu0 %v6715
        %v7198 = vpop.f32.mrb[0].mxu0
        %v7199 = vadd.f32 0.0, %v7198
        %v7200 = vpop.f32.mrb[0].mxu0
        %v7201 = vadd.f32 0.0, %v7200
        %v7202 = vpop.f32.mrb[0].mxu0
        %v7203 = vadd.f32 0.0, %v7202
        %v7204 = vpop.f32.mrb[0].mxu0
        %v7205 = vadd.f32 0.0, %v7204
        %7206 = vmatprep.mubr.bf16.mxu0 %v6725
        %7207 = vmatmul.mubr.bf16.gmra.mrb[0].mxu0 %v6723
        %v7208 = vpop.f32.mrb[0].mxu0
        %v7209 = vadd.f32 0.0, %v7208
        %v7210 = vpop.f32.mrb[0].mxu0
        %v7211 = vadd.f32 0.0, %v7210
        %v7212 = vpop.f32.mrb[0].mxu0
        %v7213 = vadd.f32 0.0, %v7212
        %v7214 = vpop.f32.mrb[0].mxu0
        %v7215 = vadd.f32 0.0, %v7214
        %7216 = vdwg.mxu0
        %7217 = vmatprep.subr.bf16.mxu0 %v6976
        %7218 = vmatpush1.bf16.msra.mxu0 %v6975
        %7219 = vmatprep.subr.bf16.mxu0 %v6978
        %7220 = vmatpush1.bf16.msra.mxu0 %v6977
        %7221 = vmatprep.subr.bf16.mxu0 %v6980
        %7222 = vmatpush1.bf16.msra.mxu0 %v6979
        %7223 = vmatprep.subr.bf16.mxu0 %v6982
        %7224 = vmatpush1.bf16.msra.mxu0 %v6981
        %7225 = vmatprep.subr.bf16.mxu0 %v6984
        %7226 = vmatpush1.bf16.msra.mxu0 %v6983
        %7227 = vmatprep.subr.bf16.mxu0 %v6986
        %7228 = vmatpush1.bf16.msra.mxu0 %v6985
        %7229 = vmatprep.subr.bf16.mxu0 %v6988
        %7230 = vmatpush1.bf16.msra.mxu0 %v6987
        %7231 = vmatprep.subr.bf16.mxu0 %v6990
        %7232 = vmatpush1.bf16.msra.mxu0 %v6989
        %7233 = vmatprep.subr.bf16.mxu0 %v6992
        %7234 = vmatpush1.bf16.msra.mxu0 %v6991
        %7235 = vmatprep.subr.bf16.mxu0 %v6994
        %7236 = vmatpush1.bf16.msra.mxu0 %v6993
        %7237 = vmatprep.subr.bf16.mxu0 %v6996
        %7238 = vmatpush1.bf16.msra.mxu0 %v6995
        %7239 = vmatprep.subr.bf16.mxu0 %v6998
        %7240 = vmatpush1.bf16.msra.mxu0 %v6997
        %7241 = vmatprep.subr.bf16.mxu0 %v7000
        %7242 = vmatpush1.bf16.msra.mxu0 %v6999
        %7243 = vmatprep.subr.bf16.mxu0 %v7002
        %7244 = vmatpush1.bf16.msra.mxu0 %v7001
        %7245 = vmatprep.subr.bf16.mxu0 %v7004
        %7246 = vmatpush1.bf16.msra.mxu0 %v7003
        %7247 = vmatprep.subr.bf16.mxu0 0
        %7248 = vmatpush1.bf16.msra.mxu0 0
        %7249 = vmatprep.mubr.bf16.mxu0 %v7068
        %7250 = vmatmul.mubr.bf16.gmra.mrb[0].mxu0 %v6662
        %v7251 = vpop.f32.mrb[0].mxu0
        %v7252 = vadd.f32 %v7129, %v7251
        %v7253 = vpop.f32.mrb[0].mxu0
        %v7254 = vadd.f32 %v7131, %v7253
        %v7255 = vpop.f32.mrb[0].mxu0
        %v7256 = vadd.f32 %v7133, %v7255
        %v7257 = vpop.f32.mrb[0].mxu0
        %v7258 = vadd.f32 %v7135, %v7257
        %7259 = vmatprep.mubr.bf16.mxu0 %v7071
        %7260 = vmatmul.mubr.bf16.gmra.mrb[0].mxu0 %v6671
        %v7261 = vpop.f32.mrb[0].mxu0
        %v7262 = vadd.f32 %v7139, %v7261
        %v7263 = vpop.f32.mrb[0].mxu0
        %v7264 = vadd.f32 %v7141, %v7263
        %v7265 = vpop.f32.mrb[0].mxu0
        %v7266 = vadd.f32 %v7143, %v7265
        %v7267 = vpop.f32.mrb[0].mxu0
        %v7268 = vadd.f32 %v7145, %v7267
        %7269 = vmatprep.mubr.bf16.mxu0 %v7074
        %7270 = vmatmul.mubr.bf16.gmra.mrb[0].mxu0 %v6679
        %v7271 = vpop.f32.mrb[0].mxu0
        %v7272 = vadd.f32 %v7149, %v7271
        %v7273 = vpop.f32.mrb[0].mxu0
        %v7274 = vadd.f32 %v7151, %v7273
        %v7275 = vpop.f32.mrb[0].mxu0
        %v7276 = vadd.f32 %v7153, %v7275
        %v7277 = vpop.f32.mrb[0].mxu0
        %v7278 = vadd.f32 %v7155, %v7277
        %7279 = vmatprep.mubr.bf16.mxu0 %v7077
        %7280 = vmatmul.mubr.bf16.gmra.mrb[0].mxu0 %v6687
        %v7281 = vpop.f32.mrb[0].mxu0
        %v7282 = vadd.f32 %v7159, %v7281
        %v7283 = vpop.f32.mrb[0].mxu0
        %v7284 = vadd.f32 %v7161, %v7283
        %v7285 = vpop.f32.mrb[0].mxu0
        %v7286 = vadd.f32 %v7163, %v7285
        %v7287 = vpop.f32.mrb[0].mxu0
        %v7288 = vadd.f32 %v7165, %v7287
        %7289 = vmatprep.mubr.bf16.mxu0 %v7080
        %7290 = vmatmul.mubr.bf16.gmra.mrb[0].mxu0 %v6695
        %v7291 = vpop.f32.mrb[0].mxu0
        %v7292 = vadd.f32 %v7169, %v7291
        %v7293 = vpop.f32.mrb[0].mxu0
        %v7294 = vadd.f32 %v7171, %v7293
        %v7295 = vpop.f32.mrb[0].mxu0
        %v7296 = vadd.f32 %v7173, %v7295
        %v7297 = vpop.f32.mrb[0].mxu0
        %v7298 = vadd.f32 %v7175, %v7297
        %7299 = vmatprep.mubr.bf16.mxu0 %v7083
        %7300 = vmatmul.mubr.bf16.gmra.mrb[0].mxu0 %v6703
        %v7301 = vpop.f32.mrb[0].mxu0
        %v7302 = vadd.f32 %v7179, %v7301
        %v7303 = vpop.f32.mrb[0].mxu0
        %v7304 = vadd.f32 %v7181, %v7303
        %v7305 = vpop.f32.mrb[0].mxu0
        %v7306 = vadd.f32 %v7183, %v7305
        %v7307 = vpop.f32.mrb[0].mxu0
        %v7308 = vadd.f32 %v7185, %v7307
        %7309 = vmatprep.mubr.bf16.mxu0 %v7086
        %7310 = vmatmul.mubr.bf16.gmra.mrb[0].mxu0 %v6711
        %v7311 = vpop.f32.mrb[0].mxu0
        %v7312 = vadd.f32 %v7189, %v7311
        %v7313 = vpop.f32.mrb[0].mxu0
        %v7314 = vadd.f32 %v7191, %v7313
        %v7315 = vpop.f32.mrb[0].mxu0
        %v7316 = vadd.f32 %v7193, %v7315
        %v7317 = vpop.f32.mrb[0].mxu0
        %v7318 = vadd.f32 %v7195, %v7317
        %7319 = vmatprep.mubr.bf16.mxu0 %v7089
        %7320 = vmatmul.mubr.bf16.gmra.mrb[0].mxu0 %v6719
        %v7321 = vpop.f32.mrb[0].mxu0
        %v7322 = vadd.f32 %v7199, %v7321
        %v7323 = vpop.f32.mrb[0].mxu0
        %v7324 = vadd.f32 %v7201, %v7323
        %v7325 = vpop.f32.mrb[0].mxu0
        %v7326 = vadd.f32 %v7203, %v7325
        %v7327 = vpop.f32.mrb[0].mxu0
        %v7328 = vadd.f32 %v7205, %v7327
        %7329 = vmatprep.mubr.bf16.mxu0 %v7092
        %7330 = vmatmul.mubr.bf16.gmra.mrb[0].mxu0 %v6727
        %v7331 = vpop.f32.mrb[0].mxu0
        %v7332 = vadd.f32 %v7209, %v7331
        %v7333 = vpop.f32.mrb[0].mxu0
        %v7334 = vadd.f32 %v7211, %v7333
        %v7335 = vpop.f32.mrb[0].mxu0
        %v7336 = vadd.f32 %v7213, %v7335
        %v7337 = vpop.f32.mrb[0].mxu0
        %v7338 = vadd.f32 %v7215, %v7337
        %7339 = vdwg.mxu0
        %v7340 = vadd.f32 %v6463, %v7252
        %v7341 = vadd.f32 %v6465, %v7254
        %v7342 = vadd.f32 %v6467, %v7256
        %v7343 = vadd.f32 %v6469, %v7258
        %v7344 = vadd.f32 %v6473, %v7262
        %v7345 = vadd.f32 %v6475, %v7264
        %v7346 = vadd.f32 %v6477, %v7266
        %v7347 = vadd.f32 %v6479, %v7268
        %v7348 = vadd.f32 %v6483, %v7272
        %v7349 = vadd.f32 %v6485, %v7274
        %v7350 = vadd.f32 %v6487, %v7276
        %v7351 = vadd.f32 %v6489, %v7278
        %v7352 = vadd.f32 %v6493, %v7282
        %v7353 = vadd.f32 %v6495, %v7284
        %v7354 = vadd.f32 %v6497, %v7286
        %v7355 = vadd.f32 %v6499, %v7288
        %v7356 = vadd.f32 %v6503, %v7292
        %v7357 = vadd.f32 %v6505, %v7294
        %v7358 = vadd.f32 %v6507, %v7296
        %v7359 = vadd.f32 %v6509, %v7298
        %v7360 = vadd.f32 %v6513, %v7302
        %v7361 = vadd.f32 %v6515, %v7304
        %v7362 = vadd.f32 %v6517, %v7306
        %v7363 = vadd.f32 %v6519, %v7308
        %v7364 = vadd.f32 %v6523, %v7312
        %v7365 = vadd.f32 %v6525, %v7314
        %v7366 = vadd.f32 %v6527, %v7316
        %v7367 = vadd.f32 %v6529, %v7318
        %v7368 = vadd.f32 %v6533, %v7322
        %v7369 = vadd.f32 %v6535, %v7324
        %v7370 = vadd.f32 %v6537, %v7326
        %v7371 = vadd.f32 %v6539, %v7328
        %v7372 = vadd.f32 %v6543, %v7332
        %v7373 = vadd.f32 %v6545, %v7334
        %v7374 = vadd.f32 %v6547, %v7336
        %v7375 = vadd.f32 %v6549, %v7338
        %v7376 = vld [vmem:[%s5] sm:$0x3]
        %v7378 = vlaneseq
        %v7379 = vshrl.u32 %v7378, 7
        %v7380 = vsub.s32 0, %v7379
        %v7381 = vrot.slane %v7376, %v7380
        %v7382 = vlaneseq
        %v7383 = vshrl.u32 %v7382, 7
        %v7384 = vsub.s32 1, %v7383
        %v7385 = vrot.slane %v7376, %v7384
        %v7388 = vadd.f32 %v7340, %v7381
        %v7389 = vadd.f32 %v7341, %v7385
        %v7390 = vadd.f32 %v7342, %v7381
        %v7391 = vadd.f32 %v7343, %v7385
        %v7392 = vadd.f32 %v7344, %v7381
        %v7393 = vadd.f32 %v7345, %v7385
        %v7394 = vadd.f32 %v7346, %v7381
        %v7395 = vadd.f32 %v7347, %v7385
        %v7396 = vadd.f32 %v7348, %v7381
        %v7397 = vadd.f32 %v7349, %v7385
        %v7398 = vadd.f32 %v7350, %v7381
        %v7399 = vadd.f32 %v7351, %v7385
        %v7400 = vadd.f32 %v7352, %v7381
        %v7401 = vadd.f32 %v7353, %v7385
        %v7402 = vadd.f32 %v7354, %v7381
        %v7403 = vadd.f32 %v7355, %v7385
        %v7404 = vadd.f32 %v7356, %v7381
        %v7405 = vadd.f32 %v7357, %v7385
        %v7406 = vadd.f32 %v7358, %v7381
        %v7407 = vadd.f32 %v7359, %v7385
        %v7408 = vadd.f32 %v7360, %v7381
        %v7409 = vadd.f32 %v7361, %v7385
        %v7410 = vadd.f32 %v7362, %v7381
        %v7411 = vadd.f32 %v7363, %v7385
        %v7412 = vadd.f32 %v7364, %v7381
        %v7413 = vadd.f32 %v7365, %v7385
        %v7414 = vadd.f32 %v7366, %v7381
        %v7415 = vadd.f32 %v7367, %v7385
        %v7416 = vadd.f32 %v7368, %v7381
        %v7417 = vadd.f32 %v7369, %v7385
        %v7418 = vadd.f32 %v7370, %v7381
        %v7419 = vadd.f32 %v7371, %v7385
        %v7420 = vadd.f32 %v7372, %v7381
        %v7421 = vadd.f32 %v7373, %v7385
        %v7422 = vadd.f32 %v7374, %v7381
        %v7423 = vadd.f32 %v7375, %v7385
        %v7424 = vmax.f32 %v7388, 0.0
        %v7425 = vmax.f32 %v7389, 0.0
        %v7426 = vmax.f32 %v7390, 0.0
        %v7427 = vmax.f32 %v7391, 0.0
        %v7428 = vmax.f32 %v7392, 0.0
        %v7429 = vmax.f32 %v7393, 0.0
        %v7430 = vmax.f32 %v7394, 0.0
        %v7431 = vmax.f32 %v7395, 0.0
        %v7432 = vmax.f32 %v7396, 0.0
        %v7433 = vmax.f32 %v7397, 0.0
        %v7434 = vmax.f32 %v7398, 0.0
        %v7435 = vmax.f32 %v7399, 0.0
        %v7436 = vmax.f32 %v7400, 0.0
        %v7437 = vmax.f32 %v7401, 0.0
        %v7438 = vmax.f32 %v7402, 0.0
        %v7439 = vmax.f32 %v7403, 0.0
        %v7440 = vmax.f32 %v7404, 0.0
        %v7441 = vmax.f32 %v7405, 0.0
        %v7442 = vmax.f32 %v7406, 0.0
        %v7443 = vmax.f32 %v7407, 0.0
        %v7444 = vmax.f32 %v7408, 0.0
        %v7445 = vmax.f32 %v7409, 0.0
        %v7446 = vmax.f32 %v7410, 0.0
        %v7447 = vmax.f32 %v7411, 0.0
        %v7448 = vmax.f32 %v7412, 0.0
        %v7449 = vmax.f32 %v7413, 0.0
        %v7450 = vmax.f32 %v7414, 0.0
        %v7451 = vmax.f32 %v7415, 0.0
        %v7452 = vmax.f32 %v7416, 0.0
        %v7453 = vmax.f32 %v7417, 0.0
        %v7454 = vmax.f32 %v7418, 0.0
        %v7455 = vmax.f32 %v7419, 0.0
        %v7456 = vmax.f32 %v7420, 0.0
        %v7457 = vmax.f32 %v7421, 0.0
        %v7458 = vmax.f32 %v7422, 0.0
        %v7459 = vmax.f32 %v7423, 0.0
        %v7496 = vrot.slane %v7424, 1
        %v7497 = vrot.slane %v7426, 1
        %v7498 = vsel %vm3098, %v7496, %v7497
        %v7499 = vrot.slane %v7425, 1
        %v7500 = vrot.slane %v7427, 1
        %v7501 = vsel %vm3098, %v7499, %v7500
        %v7502 = vrot.slane %v7428, 1
        %v7503 = vsel %vm3098, %v7497, %v7502
        %v7504 = vrot.slane %v7429, 1
        %v7505 = vsel %vm3098, %v7500, %v7504
        %v7506 = vrot.slane %v7430, 1
        %v7507 = vsel %vm3098, %v7502, %v7506
        %v7508 = vrot.slane %v7431, 1
        %v7509 = vsel %vm3098, %v7504, %v7508
        %v7510 = vrot.slane %v7432, 1
        %v7511 = vsel %vm3098, %v7506, %v7510
        %v7512 = vrot.slane %v7433, 1
        %v7513 = vsel %vm3098, %v7508, %v7512
        %v7514 = vrot.slane %v7434, 1
        %v7515 = vsel %vm3098, %v7510, %v7514
        %v7516 = vrot.slane %v7435, 1
        %v7517 = vsel %vm3098, %v7512, %v7516
        %v7518 = vrot.slane %v7436, 1
        %v7519 = vsel %vm3098, %v7514, %v7518
        %v7520 = vrot.slane %v7437, 1
        %v7521 = vsel %vm3098, %v7516, %v7520
        %v7522 = vrot.slane %v7438, 1
        %v7523 = vsel %vm3098, %v7518, %v7522
        %v7524 = vrot.slane %v7439, 1
        %v7525 = vsel %vm3098, %v7520, %v7524
        %v7526 = vrot.slane %v7440, 1
        %v7527 = vsel %vm3098, %v7522, %v7526
        %v7528 = vrot.slane %v7441, 1
        %v7529 = vsel %vm3098, %v7524, %v7528
        %v7530 = vrot.slane %v7442, 1
        %v7531 = vsel %vm3098, %v7526, %v7530
        %v7532 = vrot.slane %v7443, 1
        %v7533 = vsel %vm3098, %v7528, %v7532
        %v7534 = vrot.slane %v7444, 1
        %v7535 = vsel %vm3098, %v7530, %v7534
        %v7536 = vrot.slane %v7445, 1
        %v7537 = vsel %vm3098, %v7532, %v7536
        %v7538 = vrot.slane %v7446, 1
        %v7539 = vsel %vm3098, %v7534, %v7538
        %v7540 = vrot.slane %v7447, 1
        %v7541 = vsel %vm3098, %v7536, %v7540
        %v7542 = vrot.slane %v7448, 1
        %v7543 = vsel %vm3098, %v7538, %v7542
        %v7544 = vrot.slane %v7449, 1
        %v7545 = vsel %vm3098, %v7540, %v7544
        %v7546 = vrot.slane %v7450, 1
        %v7547 = vsel %vm3098, %v7542, %v7546
        %v7548 = vrot.slane %v7451, 1
        %v7549 = vsel %vm3098, %v7544, %v7548
        %v7550 = vrot.slane %v7452, 1
        %v7551 = vsel %vm3098, %v7546, %v7550
        %v7552 = vrot.slane %v7453, 1
        %v7553 = vsel %vm3098, %v7548, %v7552
        %v7554 = vrot.slane %v7454, 1
        %v7555 = vsel %vm3098, %v7550, %v7554
        %v7556 = vrot.slane %v7455, 1
        %v7557 = vsel %vm3098, %v7552, %v7556
        %v7558 = vrot.slane %v7456, 1
        %v7559 = vsel %vm3098, %v7554, %v7558
        %v7560 = vrot.slane %v7457, 1
        %v7561 = vsel %vm3098, %v7556, %v7560
        %v7562 = vrot.slane %v7458, 1
        %v7563 = vsel %vm3098, %v7558, %v7562
        %v7564 = vrot.slane %v7459, 1
        %v7565 = vsel %vm3098, %v7560, %v7564
        %v7602 = vmax.f32 %v7424, %v7498
        %v7603 = vmax.f32 %v7425, %v7501
        %v7604 = vmax.f32 %v7426, %v7503
        %v7605 = vmax.f32 %v7427, %v7505
        %v7606 = vmax.f32 %v7428, %v7507
        %v7607 = vmax.f32 %v7429, %v7509
        %v7608 = vmax.f32 %v7430, %v7511
        %v7609 = vmax.f32 %v7431, %v7513
        %v7610 = vmax.f32 %v7432, %v7515
        %v7611 = vmax.f32 %v7433, %v7517
        %v7612 = vmax.f32 %v7434, %v7519
        %v7613 = vmax.f32 %v7435, %v7521
        %v7614 = vmax.f32 %v7436, %v7523
        %v7615 = vmax.f32 %v7437, %v7525
        %v7616 = vmax.f32 %v7438, %v7527
        %v7617 = vmax.f32 %v7439, %v7529
        %v7618 = vmax.f32 %v7440, %v7531
        %v7619 = vmax.f32 %v7441, %v7533
        %v7620 = vmax.f32 %v7442, %v7535
        %v7621 = vmax.f32 %v7443, %v7537
        %v7622 = vmax.f32 %v7444, %v7539
        %v7623 = vmax.f32 %v7445, %v7541
        %v7624 = vmax.f32 %v7446, %v7543
        %v7625 = vmax.f32 %v7447, %v7545
        %v7626 = vmax.f32 %v7448, %v7547
        %v7627 = vmax.f32 %v7449, %v7549
        %v7628 = vmax.f32 %v7450, %v7551
        %v7629 = vmax.f32 %v7451, %v7553
        %v7630 = vmax.f32 %v7452, %v7555
        %v7631 = vmax.f32 %v7453, %v7557
        %v7632 = vmax.f32 %v7454, %v7559
        %v7633 = vmax.f32 %v7455, %v7561
        %v7634 = vmax.f32 %v7456, %v7563
        %v7635 = vmax.f32 %v7457, %v7565
        %v7636 = vmax.f32 %v7458, %v7562
        %v7637 = vmax.f32 %v7459, %v7564
        %v7638 = vpack.c.bf16 %v7604, %v7602
        %v7639 = vpack.c.bf16 %v7605, %v7603
        %v7640 = vpack.c.bf16 %v7608, %v7606
        %v7641 = vpack.c.bf16 %v7609, %v7607
        %v7642 = vpack.c.bf16 %v7612, %v7610
        %v7643 = vpack.c.bf16 %v7613, %v7611
        %v7644 = vpack.c.bf16 %v7616, %v7614
        %v7645 = vpack.c.bf16 %v7617, %v7615
        %v7646 = vpack.c.bf16 %v7620, %v7618
        %v7647 = vpack.c.bf16 %v7621, %v7619
        %v7648 = vpack.c.bf16 %v7624, %v7622
        %v7649 = vpack.c.bf16 %v7625, %v7623
        %v7650 = vpack.c.bf16 %v7628, %v7626
        %v7651 = vpack.c.bf16 %v7629, %v7627
        %v7652 = vpack.c.bf16 %v7632, %v7630
        %v7653 = vpack.c.bf16 %v7633, %v7631
        %v7654 = vpack.c.bf16 %v7636, %v7634
        %v7655 = vpack.c.bf16 %v7637, %v7635
        %v7656 = vld [vmem:[%s6] sm:$0xff]
        %v7657 = vld [vmem:[%s6 + $0x8] sm:$0xff]
        %v7658 = vld [vmem:[%s6 + $0x10] sm:$0xff]
        %v7659 = vld [vmem:[%s6 + $0x18] sm:$0xff]
        %v7660 = vld [vmem:[%s6 + $0x20] sm:$0xff]
        %v7661 = vld [vmem:[%s6 + $0x28] sm:$0xff]
        %v7662 = vld [vmem:[%s6 + $0x30] sm:$0xff]
        %v7663 = vld [vmem:[%s6 + $0x38] sm:$0xff]
        %v7672 = vunpack.c.l.b16 %v7656
        %v7673 = vunpack.c.h.b16 %v7656
        %v7674 = vunpack.c.l.b16 %v7657
        %v7675 = vunpack.c.h.b16 %v7657
        %v7676 = vunpack.c.l.b16 %v7658
        %v7677 = vunpack.c.h.b16 %v7658
        %v7678 = vunpack.c.l.b16 %v7659
        %v7679 = vunpack.c.h.b16 %v7659
        %v7680 = vunpack.c.l.b16 %v7660
        %v7681 = vunpack.c.h.b16 %v7660
        %v7682 = vunpack.c.l.b16 %v7661
        %v7683 = vunpack.c.h.b16 %v7661
        %v7684 = vunpack.c.l.b16 %v7662
        %v7685 = vunpack.c.h.b16 %v7662
        %v7686 = vunpack.c.l.b16 %v7663
        %v7687 = vunpack.c.h.b16 %v7663
        %v7688 = vpack.c.b16 %v7674, %v7672
        %v7689 = vpack.c.b16 %v7675, %v7673
        %v7690 = vpack.c.b16 %v7678, %v7676
        %v7691 = vpack.c.b16 %v7679, %v7677
        %v7692 = vpack.c.b16 %v7682, %v7680
        %v7693 = vpack.c.b16 %v7683, %v7681
        %v7694 = vpack.c.b16 %v7686, %v7684
        %v7695 = vpack.c.b16 %v7687, %v7685
        %vm7700 = vcmask 121856
        %v7702 = vsel %vm7700, %v7689, 0
        %v7705 = vsel %vm7700, %v7691, 0
        %v7708 = vsel %vm7700, %v7693, 0
        %v7711 = vsel %vm7700, %v7695, 0
        %vm7713 = vcmask 1047552
        %v7714 = vsel %vm3098, 4294967295, 65535
        %v7715 = vsel %vm7713, %v7714, 0
        %v7717 = vand.u32 %v7654, %v7715
        %v7720 = vand.u32 %v7655, %v7715
        %7722 = vmatprep.subr.bf16.mxu0 %v7639
        %7723 = vmatpush1.bf16.msra.mxu0 %v7638
        %7724 = vmatprep.subr.bf16.mxu0 %v7641
        %7725 = vmatpush1.bf16.msra.mxu0 %v7640
        %7726 = vmatprep.subr.bf16.mxu0 %v7643
        %7727 = vmatpush1.bf16.msra.mxu0 %v7642
        %7728 = vmatprep.subr.bf16.mxu0 %v7645
        %7729 = vmatpush1.bf16.msra.mxu0 %v7644
        %7730 = vmatprep.subr.bf16.mxu0 %v7647
        %7731 = vmatpush1.bf16.msra.mxu0 %v7646
        %7732 = vmatprep.subr.bf16.mxu0 %v7649
        %7733 = vmatpush1.bf16.msra.mxu0 %v7648
        %7734 = vmatprep.subr.bf16.mxu0 %v7651
        %7735 = vmatpush1.bf16.msra.mxu0 %v7650
        %7736 = vmatprep.subr.bf16.mxu0 %v7653
        %7737 = vmatpush1.bf16.msra.mxu0 %v7652
        %7738 = vmatprep.subr.bf16.mxu0 %v7720
        %7739 = vmatpush1.bf16.msra.mxu0 %v7717
        %7740 = vmatprep.subr.bf16.mxu0 0
        %7741 = vmatpush1.bf16.msra.mxu0 0
        %7742 = vmatprep.subr.bf16.mxu0 0
        %7743 = vmatpush1.bf16.msra.mxu0 0
        %7744 = vmatprep.subr.bf16.mxu0 0
        %7745 = vmatpush1.bf16.msra.mxu0 0
        %7746 = vmatprep.subr.bf16.mxu0 0
        %7747 = vmatpush1.bf16.msra.mxu0 0
        %7748 = vmatprep.subr.bf16.mxu0 0
        %7749 = vmatpush1.bf16.msra.mxu0 0
        %7750 = vmatprep.subr.bf16.mxu0 0
        %7751 = vmatpush1.bf16.msra.mxu0 0
        %7752 = vmatprep.subr.bf16.mxu0 0
        %7753 = vmatpush1.bf16.msra.mxu0 0
        %7754 = vmatprep.mubr.bf16.mxu0 %v7702
        %7755 = vmatmul.mubr.bf16.gmra.mrb[0].mxu0 %v7688
        %v7756 = vpop.f32.mrb[0].mxu0
        %v7757 = vadd.f32 0.0, %v7756
        %v7758 = vpop.f32.mrb[0].mxu0
        %v7759 = vadd.f32 0.0, %v7758
        %v7760 = vpop.f32.mrb[0].mxu0
        %v7761 = vadd.f32 0.0, %v7760
        %v7762 = vpop.f32.mrb[0].mxu0
        %v7763 = vadd.f32 0.0, %v7762
        %7764 = vmatprep.mubr.bf16.mxu0 %v7705
        %7765 = vmatmul.mubr.bf16.gmra.mrb[0].mxu0 %v7690
        %v7766 = vpop.f32.mrb[0].mxu0
        %v7767 = vadd.f32 0.0, %v7766
        %v7768 = vpop.f32.mrb[0].mxu0
        %v7769 = vadd.f32 0.0, %v7768
        %v7770 = vpop.f32.mrb[0].mxu0
        %v7771 = vadd.f32 0.0, %v7770
        %v7772 = vpop.f32.mrb[0].mxu0
        %v7773 = vadd.f32 0.0, %v7772
        %7774 = vmatprep.mubr.bf16.mxu0 %v7708
        %7775 = vmatmul.mubr.bf16.gmra.mrb[0].mxu0 %v7692
        %v7776 = vpop.f32.mrb[0].mxu0
        %v7777 = vadd.f32 0.0, %v7776
        %v7778 = vpop.f32.mrb[0].mxu0
        %v7779 = vadd.f32 0.0, %v7778
        %v7780 = vpop.f32.mrb[0].mxu0
        %v7781 = vadd.f32 0.0, %v7780
        %v7782 = vpop.f32.mrb[0].mxu0
        %v7783 = vadd.f32 0.0, %v7782
        %7784 = vmatprep.mubr.bf16.mxu0 %v7711
        %7785 = vmatmul.mubr.bf16.gmra.mrb[0].mxu0 %v7694
        %v7786 = vpop.f32.mrb[0].mxu0
        %v7787 = vadd.f32 0.0, %v7786
        %v7788 = vpop.f32.mrb[0].mxu0
        %v7789 = vadd.f32 0.0, %v7788
        %v7790 = vpop.f32.mrb[0].mxu0
        %v7791 = vadd.f32 0.0, %v7790
        %v7792 = vpop.f32.mrb[0].mxu0
        %v7793 = vadd.f32 0.0, %v7792
        %7794 = vdwg.mxu0
        %7811 = vrot.lane.b32.xlu0 %v7757, 112
        %v7812 = vpop.permute.xlu0 %7811
        %7813 = vrot.lane.b32.xlu0 %v7759, 112
        %v7814 = vpop.permute.xlu0 %7813
        %7815 = vrot.lane.b32.xlu0 %v7761, 112
        %v7816 = vpop.permute.xlu0 %7815
        %7817 = vrot.lane.b32.xlu0 %v7763, 112
        %v7818 = vpop.permute.xlu0 %7817
        %7819 = vrot.lane.b32.xlu0 %v7767, 112
        %v7820 = vpop.permute.xlu0 %7819
        %7821 = vrot.lane.b32.xlu0 %v7769, 112
        %v7822 = vpop.permute.xlu0 %7821
        %7823 = vrot.lane.b32.xlu0 %v7771, 112
        %v7824 = vpop.permute.xlu0 %7823
        %7825 = vrot.lane.b32.xlu0 %v7773, 112
        %v7826 = vpop.permute.xlu0 %7825
        %7827 = vrot.lane.b32.xlu0 %v7777, 112
        %v7828 = vpop.permute.xlu0 %7827
        %7829 = vrot.lane.b32.xlu0 %v7779, 112
        %v7830 = vpop.permute.xlu0 %7829
        %7831 = vrot.lane.b32.xlu0 %v7781, 112
        %v7832 = vpop.permute.xlu0 %7831
        %7833 = vrot.lane.b32.xlu0 %v7783, 112
        %v7834 = vpop.permute.xlu0 %7833
        %7835 = vrot.lane.b32.xlu0 %v7787, 112
        %v7836 = vpop.permute.xlu0 %7835
        %7837 = vrot.lane.b32.xlu0 %v7789, 112
        %v7838 = vpop.permute.xlu0 %7837
        %7839 = vrot.lane.b32.xlu0 %v7791, 112
        %v7840 = vpop.permute.xlu0 %7839
        %7841 = vrot.lane.b32.xlu0 %v7793, 112
        %v7842 = vpop.permute.xlu0 %7841
        %v7843 = vsel %vm4688, %v7812, %v7814
        %v7844 = vsel %vm4688, %v7816, %v7818
        %v7845 = vsel %vm4688, %v7820, %v7822
        %v7846 = vsel %vm4688, %v7824, %v7826
        %v7847 = vsel %vm4688, %v7828, %v7830
        %v7848 = vsel %vm4688, %v7832, %v7834
        %v7849 = vsel %vm4688, %v7836, %v7838
        %v7850 = vsel %vm4688, %v7840, %v7842
        %v7867 = vmax.f32 %v7757, %v7843
        %v7868 = vmax.f32 %v7759, %v7814
        %v7869 = vmax.f32 %v7761, %v7844
        %v7870 = vmax.f32 %v7763, %v7818
        %v7871 = vmax.f32 %v7767, %v7845
        %v7872 = vmax.f32 %v7769, %v7822
        %v7873 = vmax.f32 %v7771, %v7846
        %v7874 = vmax.f32 %v7773, %v7826
        %v7875 = vmax.f32 %v7777, %v7847
        %v7876 = vmax.f32 %v7779, %v7830
        %v7877 = vmax.f32 %v7781, %v7848
        %v7878 = vmax.f32 %v7783, %v7834
        %v7879 = vmax.f32 %v7787, %v7849
        %v7880 = vmax.f32 %v7789, %v7838
        %v7881 = vmax.f32 %v7791, %v7850
        %v7882 = vmax.f32 %v7793, %v7842
        %v7883 = vpack.c.bf16 %v7869, %v7867
        %v7884 = vpack.c.bf16 %v7870, %v7868
        %v7885 = vpack.c.bf16 %v7873, %v7871
        %v7886 = vpack.c.bf16 %v7874, %v7872
        %v7887 = vpack.c.bf16 %v7877, %v7875
        %v7888 = vpack.c.bf16 %v7878, %v7876
        %v7889 = vpack.c.bf16 %v7881, %v7879
        %v7890 = vpack.c.bf16 %v7882, %v7880
        %v7891 = vld [vmem:[%s7] sm:$0xff]
        %v7892 = vld [vmem:[%s7 + $0x8] sm:$0xff]
        %v7893 = vld [vmem:[%s7 + $0x10] sm:$0xff]
        %v7894 = vld [vmem:[%s7 + $0x18] sm:$0xff]
        %v7895 = vld [vmem:[%s7 + $0x20] sm:$0xff]
        %v7896 = vld [vmem:[%s7 + $0x28] sm:$0xff]
        %v7897 = vld [vmem:[%s7 + $0x30] sm:$0xff]
        %v7898 = vld [vmem:[%s7 + $0x38] sm:$0xff]
        %v7899 = vld [vmem:[%s7 + $0x40] sm:$0xff]
        %v7900 = vld [vmem:[%s7 + $0x48] sm:$0xff]
        %v7901 = vld [vmem:[%s7 + $0x50] sm:$0xff]
        %v7902 = vld [vmem:[%s7 + $0x58] sm:$0xff]
        %v7903 = vld [vmem:[%s7 + $0x60] sm:$0xff]
        %v7904 = vld [vmem:[%s7 + $0x68] sm:$0xff]
        %v7905 = vld [vmem:[%s7 + $0x70] sm:$0xff]
        %v7906 = vld [vmem:[%s7 + $0x78] sm:$0xff]
        %v7907 = vld [vmem:[%s7 + $0x80] sm:$0xff]
        %v7908 = vld [vmem:[%s7 + $0x88] sm:$0xff]
        %v7909 = vld [vmem:[%s7 + $0x90] sm:$0xff]
        %v7910 = vld [vmem:[%s7 + $0x98] sm:$0xff]
        %v7911 = vld [vmem:[%s7 + $0xa0] sm:$0xff]
        %v7912 = vld [vmem:[%s7 + $0xa8] sm:$0xff]
        %v7913 = vld [vmem:[%s7 + $0xb0] sm:$0xff]
        %v7914 = vld [vmem:[%s7 + $0xb8] sm:$0xff]
        %v7915 = vld [vmem:[%s7 + $0xc0] sm:$0xff]
        %v7916 = vld [vmem:[%s7 + $0xc8] sm:$0xff]
        %v7917 = vld [vmem:[%s7 + $0xd0] sm:$0xff]
        %v7918 = vld [vmem:[%s7 + $0xd8] sm:$0xff]
        %v7919 = vld [vmem:[%s7 + $0xe0] sm:$0xff]
        %v7920 = vld [vmem:[%s7 + $0xe8] sm:$0xff]
        %v7921 = vld [vmem:[%s7 + $0xf0] sm:$0xff]
        %v7922 = vld [vmem:[%s7 + $0xf8] sm:$0xff]
        %v7923 = vld [vmem:[%s7 + $0x100] sm:$0xff]
        %v7924 = vld [vmem:[%s7 + $0x108] sm:$0xff]
        %v7925 = vld [vmem:[%s7 + $0x110] sm:$0xff]
        %v7926 = vld [vmem:[%s7 + $0x118] sm:$0xff]
        %v7927 = vld [vmem:[%s7 + $0x120] sm:$0xff]
        %v7928 = vld [vmem:[%s7 + $0x128] sm:$0xff]
        %v7929 = vld [vmem:[%s7 + $0x130] sm:$0xff]
        %v7930 = vld [vmem:[%s7 + $0x138] sm:$0xff]
        %v7931 = vld [vmem:[%s7 + $0x140] sm:$0xff]
        %v7932 = vld [vmem:[%s7 + $0x148] sm:$0xff]
        %v7933 = vld [vmem:[%s7 + $0x150] sm:$0xff]
        %v7934 = vld [vmem:[%s7 + $0x158] sm:$0xff]
        %v7935 = vld [vmem:[%s7 + $0x160] sm:$0xff]
        %v7936 = vld [vmem:[%s7 + $0x168] sm:$0xff]
        %v7937 = vld [vmem:[%s7 + $0x170] sm:$0xff]
        %v7938 = vld [vmem:[%s7 + $0x178] sm:$0xff]
        %v7939 = vld [vmem:[%s7 + $0x180] sm:$0xff]
        %v7940 = vld [vmem:[%s7 + $0x188] sm:$0xff]
        %v7941 = vld [vmem:[%s7 + $0x190] sm:$0xff]
        %v7942 = vld [vmem:[%s7 + $0x198] sm:$0xff]
        %v7943 = vld [vmem:[%s7 + $0x1a0] sm:$0xff]
        %v7944 = vld [vmem:[%s7 + $0x1a8] sm:$0xff]
        %v7945 = vld [vmem:[%s7 + $0x1b0] sm:$0xff]
        %v7946 = vld [vmem:[%s7 + $0x1b8] sm:$0xff]
        %v7947 = vld [vmem:[%s7 + $0x1c0] sm:$0xff]
        %v7948 = vld [vmem:[%s7 + $0x1c8] sm:$0xff]
        %v7949 = vld [vmem:[%s7 + $0x1d0] sm:$0xff]
        %v7950 = vld [vmem:[%s7 + $0x1d8] sm:$0xff]
        %v7951 = vld [vmem:[%s7 + $0x1e0] sm:$0xff]
        %v7952 = vld [vmem:[%s7 + $0x1e8] sm:$0xff]
        %v7953 = vld [vmem:[%s7 + $0x1f0] sm:$0xff]
        %v7954 = vld [vmem:[%s7 + $0x1f8] sm:$0xff]
        %v7955 = vld [vmem:[%s7 + $0x200] sm:$0xff]
        %v7956 = vld [vmem:[%s7 + $0x208] sm:$0xff]
        %v7957 = vld [vmem:[%s7 + $0x210] sm:$0xff]
        %v7958 = vld [vmem:[%s7 + $0x218] sm:$0xff]
        %v7959 = vld [vmem:[%s7 + $0x220] sm:$0xff]
        %v7960 = vld [vmem:[%s7 + $0x228] sm:$0xff]
        %v7961 = vld [vmem:[%s7 + $0x230] sm:$0xff]
        %v7962 = vld [vmem:[%s7 + $0x238] sm:$0xff]
        %v7963 = vld [vmem:[%s7 + $0x240] sm:$0xff]
        %v7964 = vld [vmem:[%s7 + $0x248] sm:$0xff]
        %v7965 = vld [vmem:[%s7 + $0x250] sm:$0xff]
        %v7966 = vld [vmem:[%s7 + $0x258] sm:$0xff]
        %v7967 = vld [vmem:[%s7 + $0x260] sm:$0xff]
        %v7968 = vld [vmem:[%s7 + $0x268] sm:$0xff]
        %v7969 = vld [vmem:[%s7 + $0x270] sm:$0xff]
        %v7970 = vld [vmem:[%s7 + $0x278] sm:$0xff]
        %v7971 = vld [vmem:[%s7 + $0x280] sm:$0xff]
        %v7972 = vld [vmem:[%s7 + $0x288] sm:$0xff]
        %v7973 = vld [vmem:[%s7 + $0x290] sm:$0xff]
        %v7974 = vld [vmem:[%s7 + $0x298] sm:$0xff]
        %v7975 = vld [vmem:[%s7 + $0x2a0] sm:$0xff]
        %v7976 = vld [vmem:[%s7 + $0x2a8] sm:$0xff]
        %v7977 = vld [vmem:[%s7 + $0x2b0] sm:$0xff]
        %v7978 = vld [vmem:[%s7 + $0x2b8] sm:$0xff]
        %v7979 = vld [vmem:[%s7 + $0x2c0] sm:$0xff]
        %v7980 = vld [vmem:[%s7 + $0x2c8] sm:$0xff]
        %v7981 = vld [vmem:[%s7 + $0x2d0] sm:$0xff]
        %v7982 = vld [vmem:[%s7 + $0x2d8] sm:$0xff]
        %v7983 = vld [vmem:[%s7 + $0x2e0] sm:$0xff]
        %v7984 = vld [vmem:[%s7 + $0x2e8] sm:$0xff]
        %v7985 = vld [vmem:[%s7 + $0x2f0] sm:$0xff]
        %v7986 = vld [vmem:[%s7 + $0x2f8] sm:$0xff]
        %v7987 = vld [vmem:[%s7 + $0x300] sm:$0xff]
        %v7988 = vld [vmem:[%s7 + $0x308] sm:$0xff]
        %v7989 = vld [vmem:[%s7 + $0x310] sm:$0xff]
        %v7990 = vld [vmem:[%s7 + $0x318] sm:$0xff]
        %v7991 = vld [vmem:[%s7 + $0x320] sm:$0xff]
        %v7992 = vld [vmem:[%s7 + $0x328] sm:$0xff]
        %v7993 = vld [vmem:[%s7 + $0x330] sm:$0xff]
        %v7994 = vld [vmem:[%s7 + $0x338] sm:$0xff]
        %v7995 = vld [vmem:[%s7 + $0x340] sm:$0xff]
        %v7996 = vld [vmem:[%s7 + $0x348] sm:$0xff]
        %v7997 = vld [vmem:[%s7 + $0x350] sm:$0xff]
        %v7998 = vld [vmem:[%s7 + $0x358] sm:$0xff]
        %v7999 = vld [vmem:[%s7 + $0x360] sm:$0xff]
        %v8000 = vld [vmem:[%s7 + $0x368] sm:$0xff]
        %v8001 = vld [vmem:[%s7 + $0x370] sm:$0xff]
        %v8002 = vld [vmem:[%s7 + $0x378] sm:$0xff]
        %v8003 = vld [vmem:[%s7 + $0x380] sm:$0xff]
        %v8004 = vld [vmem:[%s7 + $0x388] sm:$0xff]
        %v8005 = vld [vmem:[%s7 + $0x390] sm:$0xff]
        %v8006 = vld [vmem:[%s7 + $0x398] sm:$0xff]
        %v8007 = vld [vmem:[%s7 + $0x3a0] sm:$0xff]
        %v8008 = vld [vmem:[%s7 + $0x3a8] sm:$0xff]
        %v8009 = vld [vmem:[%s7 + $0x3b0] sm:$0xff]
        %v8010 = vld [vmem:[%s7 + $0x3b8] sm:$0xff]
        %v8011 = vld [vmem:[%s7 + $0x3c0] sm:$0xff]
        %v8012 = vld [vmem:[%s7 + $0x3c8] sm:$0xff]
        %v8013 = vld [vmem:[%s7 + $0x3d0] sm:$0xff]
        %v8014 = vld [vmem:[%s7 + $0x3d8] sm:$0xff]
        %v8015 = vld [vmem:[%s7 + $0x3e0] sm:$0xff]
        %v8016 = vld [vmem:[%s7 + $0x3e8] sm:$0xff]
        %v8017 = vld [vmem:[%s7 + $0x3f0] sm:$0xff]
        %v8018 = vld [vmem:[%s7 + $0x3f8] sm:$0xff]
        %v8019 = vld [vmem:[%s7 + $0x400] sm:$0xff]
        %v8020 = vld [vmem:[%s7 + $0x408] sm:$0xff]
        %v8021 = vld [vmem:[%s7 + $0x410] sm:$0xff]
        %v8022 = vld [vmem:[%s7 + $0x418] sm:$0xff]
        %v8023 = vld [vmem:[%s7 + $0x420] sm:$0xff]
        %v8024 = vld [vmem:[%s7 + $0x428] sm:$0xff]
        %v8025 = vld [vmem:[%s7 + $0x430] sm:$0xff]
        %v8026 = vld [vmem:[%s7 + $0x438] sm:$0xff]
        %v8027 = vld [vmem:[%s7 + $0x440] sm:$0xff]
        %v8028 = vld [vmem:[%s7 + $0x448] sm:$0xff]
        %v8029 = vld [vmem:[%s7 + $0x450] sm:$0xff]
        %v8030 = vld [vmem:[%s7 + $0x458] sm:$0xff]
        %v8031 = vld [vmem:[%s7 + $0x460] sm:$0xff]
        %v8032 = vld [vmem:[%s7 + $0x468] sm:$0xff]
        %v8033 = vld [vmem:[%s7 + $0x470] sm:$0xff]
        %v8034 = vld [vmem:[%s7 + $0x478] sm:$0xff]
        %v8035 = vld [vmem:[%s7 + $0x480] sm:$0xff]
        %v8036 = vld [vmem:[%s7 + $0x488] sm:$0xff]
        %v8037 = vld [vmem:[%s7 + $0x490] sm:$0xff]
        %v8038 = vld [vmem:[%s7 + $0x498] sm:$0xff]
        %v8039 = vld [vmem:[%s7 + $0x4a0] sm:$0xff]
        %v8040 = vld [vmem:[%s7 + $0x4a8] sm:$0xff]
        %v8041 = vld [vmem:[%s7 + $0x4b0] sm:$0xff]
        %v8042 = vld [vmem:[%s7 + $0x4b8] sm:$0xff]
        %v8043 = vld [vmem:[%s7 + $0x4c0] sm:$0xff]
        %v8044 = vld [vmem:[%s7 + $0x4c8] sm:$0xff]
        %v8045 = vld [vmem:[%s7 + $0x4d0] sm:$0xff]
        %v8046 = vld [vmem:[%s7 + $0x4d8] sm:$0xff]
        %v8047 = vld [vmem:[%s7 + $0x4e0] sm:$0xff]
        %v8048 = vld [vmem:[%s7 + $0x4e8] sm:$0xff]
        %v8049 = vld [vmem:[%s7 + $0x4f0] sm:$0xff]
        %v8050 = vld [vmem:[%s7 + $0x4f8] sm:$0xff]
        %v8051 = vld [vmem:[%s7 + $0x500] sm:$0xff]
        %v8052 = vld [vmem:[%s7 + $0x508] sm:$0xff]
        %v8053 = vld [vmem:[%s7 + $0x510] sm:$0xff]
        %v8054 = vld [vmem:[%s7 + $0x518] sm:$0xff]
        %v8055 = vld [vmem:[%s7 + $0x520] sm:$0xff]
        %v8056 = vld [vmem:[%s7 + $0x528] sm:$0xff]
        %v8057 = vld [vmem:[%s7 + $0x530] sm:$0xff]
        %v8058 = vld [vmem:[%s7 + $0x538] sm:$0xff]
        %v8059 = vld [vmem:[%s7 + $0x540] sm:$0xff]
        %v8060 = vld [vmem:[%s7 + $0x548] sm:$0xff]
        %v8061 = vld [vmem:[%s7 + $0x550] sm:$0xff]
        %v8062 = vld [vmem:[%s7 + $0x558] sm:$0xff]
        %v8063 = vld [vmem:[%s7 + $0x560] sm:$0xff]
        %v8064 = vld [vmem:[%s7 + $0x568] sm:$0xff]
        %v8065 = vld [vmem:[%s7 + $0x570] sm:$0xff]
        %v8066 = vld [vmem:[%s7 + $0x578] sm:$0xff]
        %v8067 = vld [vmem:[%s7 + $0x580] sm:$0xff]
        %v8068 = vld [vmem:[%s7 + $0x588] sm:$0xff]
        %v8069 = vld [vmem:[%s7 + $0x590] sm:$0xff]
        %v8070 = vld [vmem:[%s7 + $0x598] sm:$0xff]
        %v8071 = vld [vmem:[%s7 + $0x5a0] sm:$0xff]
        %v8072 = vld [vmem:[%s7 + $0x5a8] sm:$0xff]
        %v8073 = vld [vmem:[%s7 + $0x5b0] sm:$0xff]
        %v8074 = vld [vmem:[%s7 + $0x5b8] sm:$0xff]
        %v8075 = vld [vmem:[%s7 + $0x5c0] sm:$0xff]
        %v8076 = vld [vmem:[%s7 + $0x5c8] sm:$0xff]
        %v8077 = vld [vmem:[%s7 + $0x5d0] sm:$0xff]
        %v8078 = vld [vmem:[%s7 + $0x5d8] sm:$0xff]
        %v8079 = vld [vmem:[%s7 + $0x5e0] sm:$0xff]
        %v8080 = vld [vmem:[%s7 + $0x5e8] sm:$0xff]
        %v8081 = vld [vmem:[%s7 + $0x5f0] sm:$0xff]
        %v8082 = vld [vmem:[%s7 + $0x5f8] sm:$0xff]
        %v8083 = vld [vmem:[%s7 + $0x600] sm:$0xff]
        %v8084 = vld [vmem:[%s7 + $0x608] sm:$0xff]
        %v8085 = vld [vmem:[%s7 + $0x610] sm:$0xff]
        %v8086 = vld [vmem:[%s7 + $0x618] sm:$0xff]
        %v8087 = vld [vmem:[%s7 + $0x620] sm:$0xff]
        %v8088 = vld [vmem:[%s7 + $0x628] sm:$0xff]
        %v8089 = vld [vmem:[%s7 + $0x630] sm:$0xff]
        %v8090 = vld [vmem:[%s7 + $0x638] sm:$0xff]
        %v8091 = vld [vmem:[%s7 + $0x640] sm:$0xff]
        %v8092 = vld [vmem:[%s7 + $0x648] sm:$0xff]
        %v8093 = vld [vmem:[%s7 + $0x650] sm:$0xff]
        %v8094 = vld [vmem:[%s7 + $0x658] sm:$0xff]
        %v8095 = vld [vmem:[%s7 + $0x660] sm:$0xff]
        %v8096 = vld [vmem:[%s7 + $0x668] sm:$0xff]
        %v8097 = vld [vmem:[%s7 + $0x670] sm:$0xff]
        %v8098 = vld [vmem:[%s7 + $0x678] sm:$0xff]
        %v8099 = vld [vmem:[%s7 + $0x680] sm:$0xff]
        %v8100 = vld [vmem:[%s7 + $0x688] sm:$0xff]
        %v8101 = vld [vmem:[%s7 + $0x690] sm:$0xff]
        %v8102 = vld [vmem:[%s7 + $0x698] sm:$0xff]
        %v8103 = vld [vmem:[%s7 + $0x6a0] sm:$0xff]
        %v8104 = vld [vmem:[%s7 + $0x6a8] sm:$0xff]
        %v8105 = vld [vmem:[%s7 + $0x6b0] sm:$0xff]
        %v8106 = vld [vmem:[%s7 + $0x6b8] sm:$0xff]
        %v8107 = vld [vmem:[%s7 + $0x6c0] sm:$0xff]
        %v8108 = vld [vmem:[%s7 + $0x6c8] sm:$0xff]
        %v8109 = vld [vmem:[%s7 + $0x6d0] sm:$0xff]
        %v8110 = vld [vmem:[%s7 + $0x6d8] sm:$0xff]
        %v8111 = vld [vmem:[%s7 + $0x6e0] sm:$0xff]
        %v8112 = vld [vmem:[%s7 + $0x6e8] sm:$0xff]
        %v8113 = vld [vmem:[%s7 + $0x6f0] sm:$0xff]
        %v8114 = vld [vmem:[%s7 + $0x6f8] sm:$0xff]
        %v8115 = vld [vmem:[%s7 + $0x700] sm:$0xff]
        %v8116 = vld [vmem:[%s7 + $0x708] sm:$0xff]
        %v8117 = vld [vmem:[%s7 + $0x710] sm:$0xff]
        %v8118 = vld [vmem:[%s7 + $0x718] sm:$0xff]
        %v8119 = vld [vmem:[%s7 + $0x720] sm:$0xff]
        %v8120 = vld [vmem:[%s7 + $0x728] sm:$0xff]
        %v8121 = vld [vmem:[%s7 + $0x730] sm:$0xff]
        %v8122 = vld [vmem:[%s7 + $0x738] sm:$0xff]
        %v8123 = vld [vmem:[%s7 + $0x740] sm:$0xff]
        %v8124 = vld [vmem:[%s7 + $0x748] sm:$0xff]
        %v8125 = vld [vmem:[%s7 + $0x750] sm:$0xff]
        %v8126 = vld [vmem:[%s7 + $0x758] sm:$0xff]
        %v8127 = vld [vmem:[%s7 + $0x760] sm:$0xff]
        %v8128 = vld [vmem:[%s7 + $0x768] sm:$0xff]
        %v8129 = vld [vmem:[%s7 + $0x770] sm:$0xff]
        %v8130 = vld [vmem:[%s7 + $0x778] sm:$0xff]
        %v8371 = vunpack.c.l.b16 %v7891
        %v8372 = vunpack.c.h.b16 %v7891
        %v8373 = vunpack.c.l.b16 %v7892
        %v8374 = vunpack.c.h.b16 %v7892
        %v8375 = vunpack.c.l.b16 %v7893
        %v8376 = vunpack.c.h.b16 %v7893
        %v8377 = vunpack.c.l.b16 %v7894
        %v8378 = vunpack.c.h.b16 %v7894
        %v8379 = vunpack.c.l.b16 %v7895
        %v8380 = vunpack.c.h.b16 %v7895
        %v8381 = vunpack.c.l.b16 %v7896
        %v8382 = vunpack.c.h.b16 %v7896
        %v8383 = vunpack.c.l.b16 %v7897
        %v8384 = vunpack.c.h.b16 %v7897
        %v8385 = vunpack.c.l.b16 %v7898
        %v8386 = vunpack.c.h.b16 %v7898
        %v8387 = vunpack.c.l.b16 %v7899
        %v8388 = vunpack.c.h.b16 %v7899
        %v8389 = vunpack.c.l.b16 %v7900
        %v8390 = vunpack.c.h.b16 %v7900
        %v8391 = vunpack.c.l.b16 %v7901
        %v8392 = vunpack.c.h.b16 %v7901
        %v8393 = vunpack.c.l.b16 %v7902
        %v8394 = vunpack.c.h.b16 %v7902
        %v8395 = vunpack.c.l.b16 %v7903
        %v8396 = vunpack.c.h.b16 %v7903
        %v8397 = vunpack.c.l.b16 %v7904
        %v8398 = vunpack.c.h.b16 %v7904
        %v8399 = vunpack.c.l.b16 %v7905
        %v8400 = vunpack.c.h.b16 %v7905
        %v8401 = vunpack.c.l.b16 %v7906
        %v8402 = vunpack.c.h.b16 %v7906
        %v8403 = vunpack.c.l.b16 %v7907
        %v8404 = vunpack.c.h.b16 %v7907
        %v8405 = vunpack.c.l.b16 %v7908
        %v8406 = vunpack.c.h.b16 %v7908
        %v8407 = vunpack.c.l.b16 %v7909
        %v8408 = vunpack.c.h.b16 %v7909
        %v8409 = vunpack.c.l.b16 %v7910
        %v8410 = vunpack.c.h.b16 %v7910
        %v8411 = vunpack.c.l.b16 %v7911
        %v8412 = vunpack.c.h.b16 %v7911
        %v8413 = vunpack.c.l.b16 %v7912
        %v8414 = vunpack.c.h.b16 %v7912
        %v8415 = vunpack.c.l.b16 %v7913
        %v8416 = vunpack.c.h.b16 %v7913
        %v8417 = vunpack.c.l.b16 %v7914
        %v8418 = vunpack.c.h.b16 %v7914
        %v8419 = vunpack.c.l.b16 %v7915
        %v8420 = vunpack.c.h.b16 %v7915
        %v8421 = vunpack.c.l.b16 %v7916
        %v8422 = vunpack.c.h.b16 %v7916
        %v8423 = vunpack.c.l.b16 %v7917
        %v8424 = vunpack.c.h.b16 %v7917
        %v8425 = vunpack.c.l.b16 %v7918
        %v8426 = vunpack.c.h.b16 %v7918
        %v8427 = vunpack.c.l.b16 %v7919
        %v8428 = vunpack.c.h.b16 %v7919
        %v8429 = vunpack.c.l.b16 %v7920
        %v8430 = vunpack.c.h.b16 %v7920
        %v8431 = vunpack.c.l.b16 %v7921
        %v8432 = vunpack.c.h.b16 %v7921
        %v8433 = vunpack.c.l.b16 %v7922
        %v8434 = vunpack.c.h.b16 %v7922
        %v8435 = vunpack.c.l.b16 %v7923
        %v8436 = vunpack.c.h.b16 %v7923
        %v8437 = vunpack.c.l.b16 %v7924
        %v8438 = vunpack.c.h.b16 %v7924
        %v8439 = vunpack.c.l.b16 %v7925
        %v8440 = vunpack.c.h.b16 %v7925
        %v8441 = vunpack.c.l.b16 %v7926
        %v8442 = vunpack.c.h.b16 %v7926
        %v8443 = vunpack.c.l.b16 %v7927
        %v8444 = vunpack.c.h.b16 %v7927
        %v8445 = vunpack.c.l.b16 %v7928
        %v8446 = vunpack.c.h.b16 %v7928
        %v8447 = vunpack.c.l.b16 %v7929
        %v8448 = vunpack.c.h.b16 %v7929
        %v8449 = vunpack.c.l.b16 %v7930
        %v8450 = vunpack.c.h.b16 %v7930
        %v8451 = vunpack.c.l.b16 %v7931
        %v8452 = vunpack.c.h.b16 %v7931
        %v8453 = vunpack.c.l.b16 %v7932
        %v8454 = vunpack.c.h.b16 %v7932
        %v8455 = vunpack.c.l.b16 %v7933
        %v8456 = vunpack.c.h.b16 %v7933
        %v8457 = vunpack.c.l.b16 %v7934
        %v8458 = vunpack.c.h.b16 %v7934
        %v8459 = vunpack.c.l.b16 %v7935
        %v8460 = vunpack.c.h.b16 %v7935
        %v8461 = vunpack.c.l.b16 %v7936
        %v8462 = vunpack.c.h.b16 %v7936
        %v8463 = vunpack.c.l.b16 %v7937
        %v8464 = vunpack.c.h.b16 %v7937
        %v8465 = vunpack.c.l.b16 %v7938
        %v8466 = vunpack.c.h.b16 %v7938
        %v8467 = vunpack.c.l.b16 %v7939
        %v8468 = vunpack.c.h.b16 %v7939
        %v8469 = vunpack.c.l.b16 %v7940
        %v8470 = vunpack.c.h.b16 %v7940
        %v8471 = vunpack.c.l.b16 %v7941
        %v8472 = vunpack.c.h.b16 %v7941
        %v8473 = vunpack.c.l.b16 %v7942
        %v8474 = vunpack.c.h.b16 %v7942
        %v8475 = vunpack.c.l.b16 %v7943
        %v8476 = vunpack.c.h.b16 %v7943
        %v8477 = vunpack.c.l.b16 %v7944
        %v8478 = vunpack.c.h.b16 %v7944
        %v8479 = vunpack.c.l.b16 %v7945
        %v8480 = vunpack.c.h.b16 %v7945
        %v8481 = vunpack.c.l.b16 %v7946
        %v8482 = vunpack.c.h.b16 %v7946
        %v8483 = vunpack.c.l.b16 %v7947
        %v8484 = vunpack.c.h.b16 %v7947
        %v8485 = vunpack.c.l.b16 %v7948
        %v8486 = vunpack.c.h.b16 %v7948
        %v8487 = vunpack.c.l.b16 %v7949
        %v8488 = vunpack.c.h.b16 %v7949
        %v8489 = vunpack.c.l.b16 %v7950
        %v8490 = vunpack.c.h.b16 %v7950
        %v8491 = vunpack.c.l.b16 %v7951
        %v8492 = vunpack.c.h.b16 %v7951
        %v8493 = vunpack.c.l.b16 %v7952
        %v8494 = vunpack.c.h.b16 %v7952
        %v8495 = vunpack.c.l.b16 %v7953
        %v8496 = vunpack.c.h.b16 %v7953
        %v8497 = vunpack.c.l.b16 %v7954
        %v8498 = vunpack.c.h.b16 %v7954
        %v8499 = vunpack.c.l.b16 %v7955
        %v8500 = vunpack.c.h.b16 %v7955
        %v8501 = vunpack.c.l.b16 %v7956
        %v8502 = vunpack.c.h.b16 %v7956
        %v8503 = vunpack.c.l.b16 %v7957
        %v8504 = vunpack.c.h.b16 %v7957
        %v8505 = vunpack.c.l.b16 %v7958
        %v8506 = vunpack.c.h.b16 %v7958
        %v8507 = vunpack.c.l.b16 %v7959
        %v8508 = vunpack.c.h.b16 %v7959
        %v8509 = vunpack.c.l.b16 %v7960
        %v8510 = vunpack.c.h.b16 %v7960
        %v8511 = vunpack.c.l.b16 %v7961
        %v8512 = vunpack.c.h.b16 %v7961
        %v8513 = vunpack.c.l.b16 %v7962
        %v8514 = vunpack.c.h.b16 %v7962
        %v8515 = vunpack.c.l.b16 %v7963
        %v8516 = vunpack.c.h.b16 %v7963
        %v8517 = vunpack.c.l.b16 %v7964
        %v8518 = vunpack.c.h.b16 %v7964
        %v8519 = vunpack.c.l.b16 %v7965
        %v8520 = vunpack.c.h.b16 %v7965
        %v8521 = vunpack.c.l.b16 %v7966
        %v8522 = vunpack.c.h.b16 %v7966
        %v8523 = vunpack.c.l.b16 %v7967
        %v8524 = vunpack.c.h.b16 %v7967
        %v8525 = vunpack.c.l.b16 %v7968
        %v8526 = vunpack.c.h.b16 %v7968
        %v8527 = vunpack.c.l.b16 %v7969
        %v8528 = vunpack.c.h.b16 %v7969
        %v8529 = vunpack.c.l.b16 %v7970
        %v8530 = vunpack.c.h.b16 %v7970
        %v8531 = vunpack.c.l.b16 %v7971
        %v8532 = vunpack.c.h.b16 %v7971
        %v8533 = vunpack.c.l.b16 %v7972
        %v8534 = vunpack.c.h.b16 %v7972
        %v8535 = vunpack.c.l.b16 %v7973
        %v8536 = vunpack.c.h.b16 %v7973
        %v8537 = vunpack.c.l.b16 %v7974
        %v8538 = vunpack.c.h.b16 %v7974
        %v8539 = vunpack.c.l.b16 %v7975
        %v8540 = vunpack.c.h.b16 %v7975
        %v8541 = vunpack.c.l.b16 %v7976
        %v8542 = vunpack.c.h.b16 %v7976
        %v8543 = vunpack.c.l.b16 %v7977
        %v8544 = vunpack.c.h.b16 %v7977
        %v8545 = vunpack.c.l.b16 %v7978
        %v8546 = vunpack.c.h.b16 %v7978
        %v8547 = vunpack.c.l.b16 %v7979
        %v8548 = vunpack.c.h.b16 %v7979
        %v8549 = vunpack.c.l.b16 %v7980
        %v8550 = vunpack.c.h.b16 %v7980
        %v8551 = vunpack.c.l.b16 %v7981
        %v8552 = vunpack.c.h.b16 %v7981
        %v8553 = vunpack.c.l.b16 %v7982
        %v8554 = vunpack.c.h.b16 %v7982
        %v8555 = vunpack.c.l.b16 %v7983
        %v8556 = vunpack.c.h.b16 %v7983
        %v8557 = vunpack.c.l.b16 %v7984
        %v8558 = vunpack.c.h.b16 %v7984
        %v8559 = vunpack.c.l.b16 %v7985
        %v8560 = vunpack.c.h.b16 %v7985
        %v8561 = vunpack.c.l.b16 %v7986
        %v8562 = vunpack.c.h.b16 %v7986
        %v8563 = vunpack.c.l.b16 %v7987
        %v8564 = vunpack.c.h.b16 %v7987
        %v8565 = vunpack.c.l.b16 %v7988
        %v8566 = vunpack.c.h.b16 %v7988
        %v8567 = vunpack.c.l.b16 %v7989
        %v8568 = vunpack.c.h.b16 %v7989
        %v8569 = vunpack.c.l.b16 %v7990
        %v8570 = vunpack.c.h.b16 %v7990
        %v8571 = vunpack.c.l.b16 %v7991
        %v8572 = vunpack.c.h.b16 %v7991
        %v8573 = vunpack.c.l.b16 %v7992
        %v8574 = vunpack.c.h.b16 %v7992
        %v8575 = vunpack.c.l.b16 %v7993
        %v8576 = vunpack.c.h.b16 %v7993
        %v8577 = vunpack.c.l.b16 %v7994
        %v8578 = vunpack.c.h.b16 %v7994
        %v8579 = vunpack.c.l.b16 %v7995
        %v8580 = vunpack.c.h.b16 %v7995
        %v8581 = vunpack.c.l.b16 %v7996
        %v8582 = vunpack.c.h.b16 %v7996
        %v8583 = vunpack.c.l.b16 %v7997
        %v8584 = vunpack.c.h.b16 %v7997
        %v8585 = vunpack.c.l.b16 %v7998
        %v8586 = vunpack.c.h.b16 %v7998
        %v8587 = vunpack.c.l.b16 %v7999
        %v8588 = vunpack.c.h.b16 %v7999
        %v8589 = vunpack.c.l.b16 %v8000
        %v8590 = vunpack.c.h.b16 %v8000
        %v8591 = vunpack.c.l.b16 %v8001
        %v8592 = vunpack.c.h.b16 %v8001
        %v8593 = vunpack.c.l.b16 %v8002
        %v8594 = vunpack.c.h.b16 %v8002
        %v8595 = vunpack.c.l.b16 %v8003
        %v8596 = vunpack.c.h.b16 %v8003
        %v8597 = vunpack.c.l.b16 %v8004
        %v8598 = vunpack.c.h.b16 %v8004
        %v8599 = vunpack.c.l.b16 %v8005
        %v8600 = vunpack.c.h.b16 %v8005
        %v8601 = vunpack.c.l.b16 %v8006
        %v8602 = vunpack.c.h.b16 %v8006
        %v8603 = vunpack.c.l.b16 %v8007
        %v8604 = vunpack.c.h.b16 %v8007
        %v8605 = vunpack.c.l.b16 %v8008
        %v8606 = vunpack.c.h.b16 %v8008
        %v8607 = vunpack.c.l.b16 %v8009
        %v8608 = vunpack.c.h.b16 %v8009
        %v8609 = vunpack.c.l.b16 %v8010
        %v8610 = vunpack.c.h.b16 %v8010
        %v8611 = vunpack.c.l.b16 %v8011
        %v8612 = vunpack.c.h.b16 %v8011
        %v8613 = vunpack.c.l.b16 %v8012
        %v8614 = vunpack.c.h.b16 %v8012
        %v8615 = vunpack.c.l.b16 %v8013
        %v8616 = vunpack.c.h.b16 %v8013
        %v8617 = vunpack.c.l.b16 %v8014
        %v8618 = vunpack.c.h.b16 %v8014
        %v8619 = vunpack.c.l.b16 %v8015
        %v8620 = vunpack.c.h.b16 %v8015
        %v8621 = vunpack.c.l.b16 %v8016
        %v8622 = vunpack.c.h.b16 %v8016
        %v8623 = vunpack.c.l.b16 %v8017
        %v8624 = vunpack.c.h.b16 %v8017
        %v8625 = vunpack.c.l.b16 %v8018
        %v8626 = vunpack.c.h.b16 %v8018
        %v8627 = vunpack.c.l.b16 %v8019
        %v8628 = vunpack.c.h.b16 %v8019
        %v8629 = vunpack.c.l.b16 %v8020
        %v8630 = vunpack.c.h.b16 %v8020
        %v8631 = vunpack.c.l.b16 %v8021
        %v8632 = vunpack.c.h.b16 %v8021
        %v8633 = vunpack.c.l.b16 %v8022
        %v8634 = vunpack.c.h.b16 %v8022
        %v8635 = vunpack.c.l.b16 %v8023
        %v8636 = vunpack.c.h.b16 %v8023
        %v8637 = vunpack.c.l.b16 %v8024
        %v8638 = vunpack.c.h.b16 %v8024
        %v8639 = vunpack.c.l.b16 %v8025
        %v8640 = vunpack.c.h.b16 %v8025
        %v8641 = vunpack.c.l.b16 %v8026
        %v8642 = vunpack.c.h.b16 %v8026
        %v8643 = vunpack.c.l.b16 %v8027
        %v8644 = vunpack.c.h.b16 %v8027
        %v8645 = vunpack.c.l.b16 %v8028
        %v8646 = vunpack.c.h.b16 %v8028
        %v8647 = vunpack.c.l.b16 %v8029
        %v8648 = vunpack.c.h.b16 %v8029
        %v8649 = vunpack.c.l.b16 %v8030
        %v8650 = vunpack.c.h.b16 %v8030
        %v8651 = vunpack.c.l.b16 %v8031
        %v8652 = vunpack.c.h.b16 %v8031
        %v8653 = vunpack.c.l.b16 %v8032
        %v8654 = vunpack.c.h.b16 %v8032
        %v8655 = vunpack.c.l.b16 %v8033
        %v8656 = vunpack.c.h.b16 %v8033
        %v8657 = vunpack.c.l.b16 %v8034
        %v8658 = vunpack.c.h.b16 %v8034
        %v8659 = vunpack.c.l.b16 %v8035
        %v8660 = vunpack.c.h.b16 %v8035
        %v8661 = vunpack.c.l.b16 %v8036
        %v8662 = vunpack.c.h.b16 %v8036
        %v8663 = vunpack.c.l.b16 %v8037
        %v8664 = vunpack.c.h.b16 %v8037
        %v8665 = vunpack.c.l.b16 %v8038
        %v8666 = vunpack.c.h.b16 %v8038
        %v8667 = vunpack.c.l.b16 %v8039
        %v8668 = vunpack.c.h.b16 %v8039
        %v8669 = vunpack.c.l.b16 %v8040
        %v8670 = vunpack.c.h.b16 %v8040
        %v8671 = vunpack.c.l.b16 %v8041
        %v8672 = vunpack.c.h.b16 %v8041
        %v8673 = vunpack.c.l.b16 %v8042
        %v8674 = vunpack.c.h.b16 %v8042
        %v8675 = vunpack.c.l.b16 %v8043
        %v8676 = vunpack.c.h.b16 %v8043
        %v8677 = vunpack.c.l.b16 %v8044
        %v8678 = vunpack.c.h.b16 %v8044
        %v8679 = vunpack.c.l.b16 %v8045
        %v8680 = vunpack.c.h.b16 %v8045
        %v8681 = vunpack.c.l.b16 %v8046
        %v8682 = vunpack.c.h.b16 %v8046
        %v8683 = vunpack.c.l.b16 %v8047
        %v8684 = vunpack.c.h.b16 %v8047
        %v8685 = vunpack.c.l.b16 %v8048
        %v8686 = vunpack.c.h.b16 %v8048
        %v8687 = vunpack.c.l.b16 %v8049
        %v8688 = vunpack.c.h.b16 %v8049
        %v8689 = vunpack.c.l.b16 %v8050
        %v8690 = vunpack.c.h.b16 %v8050
        %v8691 = vunpack.c.l.b16 %v8051
        %v8692 = vunpack.c.h.b16 %v8051
        %v8693 = vunpack.c.l.b16 %v8052
        %v8694 = vunpack.c.h.b16 %v8052
        %v8695 = vunpack.c.l.b16 %v8053
        %v8696 = vunpack.c.h.b16 %v8053
        %v8697 = vunpack.c.l.b16 %v8054
        %v8698 = vunpack.c.h.b16 %v8054
        %v8699 = vunpack.c.l.b16 %v8055
        %v8700 = vunpack.c.h.b16 %v8055
        %v8701 = vunpack.c.l.b16 %v8056
        %v8702 = vunpack.c.h.b16 %v8056
        %v8703 = vunpack.c.l.b16 %v8057
        %v8704 = vunpack.c.h.b16 %v8057
        %v8705 = vunpack.c.l.b16 %v8058
        %v8706 = vunpack.c.h.b16 %v8058
        %v8707 = vunpack.c.l.b16 %v8059
        %v8708 = vunpack.c.h.b16 %v8059
        %v8709 = vunpack.c.l.b16 %v8060
        %v8710 = vunpack.c.h.b16 %v8060
        %v8711 = vunpack.c.l.b16 %v8061
        %v8712 = vunpack.c.h.b16 %v8061
        %v8713 = vunpack.c.l.b16 %v8062
        %v8714 = vunpack.c.h.b16 %v8062
        %v8715 = vunpack.c.l.b16 %v8063
        %v8716 = vunpack.c.h.b16 %v8063
        %v8717 = vunpack.c.l.b16 %v8064
        %v8718 = vunpack.c.h.b16 %v8064
        %v8719 = vunpack.c.l.b16 %v8065
        %v8720 = vunpack.c.h.b16 %v8065
        %v8721 = vunpack.c.l.b16 %v8066
        %v8722 = vunpack.c.h.b16 %v8066
        %v8723 = vunpack.c.l.b16 %v8067
        %v8724 = vunpack.c.h.b16 %v8067
        %v8725 = vunpack.c.l.b16 %v8068
        %v8726 = vunpack.c.h.b16 %v8068
        %v8727 = vunpack.c.l.b16 %v8069
        %v8728 = vunpack.c.h.b16 %v8069
        %v8729 = vunpack.c.l.b16 %v8070
        %v8730 = vunpack.c.h.b16 %v8070
        %v8731 = vunpack.c.l.b16 %v8071
        %v8732 = vunpack.c.h.b16 %v8071
        %v8733 = vunpack.c.l.b16 %v8072
        %v8734 = vunpack.c.h.b16 %v8072
        %v8735 = vunpack.c.l.b16 %v8073
        %v8736 = vunpack.c.h.b16 %v8073
        %v8737 = vunpack.c.l.b16 %v8074
        %v8738 = vunpack.c.h.b16 %v8074
        %v8739 = vunpack.c.l.b16 %v8075
        %v8740 = vunpack.c.h.b16 %v8075
        %v8741 = vunpack.c.l.b16 %v8076
        %v8742 = vunpack.c.h.b16 %v8076
        %v8743 = vunpack.c.l.b16 %v8077
        %v8744 = vunpack.c.h.b16 %v8077
        %v8745 = vunpack.c.l.b16 %v8078
        %v8746 = vunpack.c.h.b16 %v8078
        %v8747 = vunpack.c.l.b16 %v8079
        %v8748 = vunpack.c.h.b16 %v8079
        %v8749 = vunpack.c.l.b16 %v8080
        %v8750 = vunpack.c.h.b16 %v8080
        %v8751 = vunpack.c.l.b16 %v8081
        %v8752 = vunpack.c.h.b16 %v8081
        %v8753 = vunpack.c.l.b16 %v8082
        %v8754 = vunpack.c.h.b16 %v8082
        %v8755 = vunpack.c.l.b16 %v8083
        %v8756 = vunpack.c.h.b16 %v8083
        %v8757 = vunpack.c.l.b16 %v8084
        %v8758 = vunpack.c.h.b16 %v8084
        %v8759 = vunpack.c.l.b16 %v8085
        %v8760 = vunpack.c.h.b16 %v8085
        %v8761 = vunpack.c.l.b16 %v8086
        %v8762 = vunpack.c.h.b16 %v8086
        %v8763 = vunpack.c.l.b16 %v8087
        %v8764 = vunpack.c.h.b16 %v8087
        %v8765 = vunpack.c.l.b16 %v8088
        %v8766 = vunpack.c.h.b16 %v8088
        %v8767 = vunpack.c.l.b16 %v8089
        %v8768 = vunpack.c.h.b16 %v8089
        %v8769 = vunpack.c.l.b16 %v8090
        %v8770 = vunpack.c.h.b16 %v8090
        %v8771 = vunpack.c.l.b16 %v8091
        %v8772 = vunpack.c.h.b16 %v8091
        %v8773 = vunpack.c.l.b16 %v8092
        %v8774 = vunpack.c.h.b16 %v8092
        %v8775 = vunpack.c.l.b16 %v8093
        %v8776 = vunpack.c.h.b16 %v8093
        %v8777 = vunpack.c.l.b16 %v8094
        %v8778 = vunpack.c.h.b16 %v8094
        %v8779 = vunpack.c.l.b16 %v8095
        %v8780 = vunpack.c.h.b16 %v8095
        %v8781 = vunpack.c.l.b16 %v8096
        %v8782 = vunpack.c.h.b16 %v8096
        %v8783 = vunpack.c.l.b16 %v8097
        %v8784 = vunpack.c.h.b16 %v8097
        %v8785 = vunpack.c.l.b16 %v8098
        %v8786 = vunpack.c.h.b16 %v8098
        %v8787 = vunpack.c.l.b16 %v8099
        %v8788 = vunpack.c.h.b16 %v8099
        %v8789 = vunpack.c.l.b16 %v8100
        %v8790 = vunpack.c.h.b16 %v8100
        %v8791 = vunpack.c.l.b16 %v8101
        %v8792 = vunpack.c.h.b16 %v8101
        %v8793 = vunpack.c.l.b16 %v8102
        %v8794 = vunpack.c.h.b16 %v8102
        %v8795 = vunpack.c.l.b16 %v8103
        %v8796 = vunpack.c.h.b16 %v8103
        %v8797 = vunpack.c.l.b16 %v8104
        %v8798 = vunpack.c.h.b16 %v8104
        %v8799 = vunpack.c.l.b16 %v8105
        %v8800 = vunpack.c.h.b16 %v8105
        %v8801 = vunpack.c.l.b16 %v8106
        %v8802 = vunpack.c.h.b16 %v8106
        %v8803 = vunpack.c.l.b16 %v8107
        %v8804 = vunpack.c.h.b16 %v8107
        %v8805 = vunpack.c.l.b16 %v8108
        %v8806 = vunpack.c.h.b16 %v8108
        %v8807 = vunpack.c.l.b16 %v8109
        %v8808 = vunpack.c.h.b16 %v8109
        %v8809 = vunpack.c.l.b16 %v8110
        %v8810 = vunpack.c.h.b16 %v8110
        %v8811 = vunpack.c.l.b16 %v8111
        %v8812 = vunpack.c.h.b16 %v8111
        %v8813 = vunpack.c.l.b16 %v8112
        %v8814 = vunpack.c.h.b16 %v8112
        %v8815 = vunpack.c.l.b16 %v8113
        %v8816 = vunpack.c.h.b16 %v8113
        %v8817 = vunpack.c.l.b16 %v8114
        %v8818 = vunpack.c.h.b16 %v8114
        %v8819 = vunpack.c.l.b16 %v8115
        %v8820 = vunpack.c.h.b16 %v8115
        %v8821 = vunpack.c.l.b16 %v8116
        %v8822 = vunpack.c.h.b16 %v8116
        %v8823 = vunpack.c.l.b16 %v8117
        %v8824 = vunpack.c.h.b16 %v8117
        %v8825 = vunpack.c.l.b16 %v8118
        %v8826 = vunpack.c.h.b16 %v8118
        %v8827 = vunpack.c.l.b16 %v8119
        %v8828 = vunpack.c.h.b16 %v8119
        %v8829 = vunpack.c.l.b16 %v8120
        %v8830 = vunpack.c.h.b16 %v8120
        %v8831 = vunpack.c.l.b16 %v8121
        %v8832 = vunpack.c.h.b16 %v8121
        %v8833 = vunpack.c.l.b16 %v8122
        %v8834 = vunpack.c.h.b16 %v8122
        %v8835 = vunpack.c.l.b16 %v8123
        %v8836 = vunpack.c.h.b16 %v8123
        %v8837 = vunpack.c.l.b16 %v8124
        %v8838 = vunpack.c.h.b16 %v8124
        %v8839 = vunpack.c.l.b16 %v8125
        %v8840 = vunpack.c.h.b16 %v8125
        %v8841 = vunpack.c.l.b16 %v8126
        %v8842 = vunpack.c.h.b16 %v8126
        %v8843 = vunpack.c.l.b16 %v8127
        %v8844 = vunpack.c.h.b16 %v8127
        %v8845 = vunpack.c.l.b16 %v8128
        %v8846 = vunpack.c.h.b16 %v8128
        %v8847 = vunpack.c.l.b16 %v8129
        %v8848 = vunpack.c.h.b16 %v8129
        %v8849 = vunpack.c.l.b16 %v8130
        %v8850 = vunpack.c.h.b16 %v8130
        %v8851 = vpack.c.b16 %v8387, %v8371
        %v8852 = vpack.c.b16 %v8388, %v8372
        %v8853 = vpack.c.b16 %v8389, %v8373
        %v8854 = vpack.c.b16 %v8390, %v8374
        %v8855 = vpack.c.b16 %v8391, %v8375
        %v8856 = vpack.c.b16 %v8392, %v8376
        %v8857 = vpack.c.b16 %v8393, %v8377
        %v8858 = vpack.c.b16 %v8394, %v8378
        %v8859 = vpack.c.b16 %v8395, %v8379
        %v8860 = vpack.c.b16 %v8396, %v8380
        %v8861 = vpack.c.b16 %v8397, %v8381
        %v8862 = vpack.c.b16 %v8398, %v8382
        %v8863 = vpack.c.b16 %v8399, %v8383
        %v8864 = vpack.c.b16 %v8400, %v8384
        %v8865 = vpack.c.b16 %v8401, %v8385
        %v8866 = vpack.c.b16 %v8402, %v8386
        %v8867 = vpack.c.b16 %v8419, %v8403
        %v8868 = vpack.c.b16 %v8420, %v8404
        %v8869 = vpack.c.b16 %v8421, %v8405
        %v8870 = vpack.c.b16 %v8422, %v8406
        %v8871 = vpack.c.b16 %v8423, %v8407
        %v8872 = vpack.c.b16 %v8424, %v8408
        %v8873 = vpack.c.b16 %v8425, %v8409
        %v8874 = vpack.c.b16 %v8426, %v8410
        %v8875 = vpack.c.b16 %v8427, %v8411
        %v8876 = vpack.c.b16 %v8428, %v8412
        %v8877 = vpack.c.b16 %v8429, %v8413
        %v8878 = vpack.c.b16 %v8430, %v8414
        %v8879 = vpack.c.b16 %v8431, %v8415
        %v8880 = vpack.c.b16 %v8432, %v8416
        %v8881 = vpack.c.b16 %v8433, %v8417
        %v8882 = vpack.c.b16 %v8434, %v8418
        %v8883 = vpack.c.b16 %v8451, %v8435
        %v8884 = vpack.c.b16 %v8452, %v8436
        %v8885 = vpack.c.b16 %v8453, %v8437
        %v8886 = vpack.c.b16 %v8454, %v8438
        %v8887 = vpack.c.b16 %v8455, %v8439
        %v8888 = vpack.c.b16 %v8456, %v8440
        %v8889 = vpack.c.b16 %v8457, %v8441
        %v8890 = vpack.c.b16 %v8458, %v8442
        %v8891 = vpack.c.b16 %v8459, %v8443
        %v8892 = vpack.c.b16 %v8460, %v8444
        %v8893 = vpack.c.b16 %v8461, %v8445
        %v8894 = vpack.c.b16 %v8462, %v8446
        %v8895 = vpack.c.b16 %v8463, %v8447
        %v8896 = vpack.c.b16 %v8464, %v8448
        %v8897 = vpack.c.b16 %v8465, %v8449
        %v8898 = vpack.c.b16 %v8466, %v8450
        %v8899 = vpack.c.b16 %v8483, %v8467
        %v8900 = vpack.c.b16 %v8484, %v8468
        %v8901 = vpack.c.b16 %v8485, %v8469
        %v8902 = vpack.c.b16 %v8486, %v8470
        %v8903 = vpack.c.b16 %v8487, %v8471
        %v8904 = vpack.c.b16 %v8488, %v8472
        %v8905 = vpack.c.b16 %v8489, %v8473
        %v8906 = vpack.c.b16 %v8490, %v8474
        %v8907 = vpack.c.b16 %v8491, %v8475
        %v8908 = vpack.c.b16 %v8492, %v8476
        %v8909 = vpack.c.b16 %v8493, %v8477
        %v8910 = vpack.c.b16 %v8494, %v8478
        %v8911 = vpack.c.b16 %v8495, %v8479
        %v8912 = vpack.c.b16 %v8496, %v8480
        %v8913 = vpack.c.b16 %v8497, %v8481
        %v8914 = vpack.c.b16 %v8498, %v8482
        %v8915 = vpack.c.b16 %v8515, %v8499
        %v8916 = vpack.c.b16 %v8516, %v8500
        %v8917 = vpack.c.b16 %v8517, %v8501
        %v8918 = vpack.c.b16 %v8518, %v8502
        %v8919 = vpack.c.b16 %v8519, %v8503
        %v8920 = vpack.c.b16 %v8520, %v8504
        %v8921 = vpack.c.b16 %v8521, %v8505
        %v8922 = vpack.c.b16 %v8522, %v8506
        %v8923 = vpack.c.b16 %v8523, %v8507
        %v8924 = vpack.c.b16 %v8524, %v8508
        %v8925 = vpack.c.b16 %v8525, %v8509
        %v8926 = vpack.c.b16 %v8526, %v8510
        %v8927 = vpack.c.b16 %v8527, %v8511
        %v8928 = vpack.c.b16 %v8528, %v8512
        %v8929 = vpack.c.b16 %v8529, %v8513
        %v8930 = vpack.c.b16 %v8530, %v8514
        %v8931 = vpack.c.b16 %v8547, %v8531
        %v8932 = vpack.c.b16 %v8548, %v8532
        %v8933 = vpack.c.b16 %v8549, %v8533
        %v8934 = vpack.c.b16 %v8550, %v8534
        %v8935 = vpack.c.b16 %v8551, %v8535
        %v8936 = vpack.c.b16 %v8552, %v8536
        %v8937 = vpack.c.b16 %v8553, %v8537
        %v8938 = vpack.c.b16 %v8554, %v8538
        %v8939 = vpack.c.b16 %v8555, %v8539
        %v8940 = vpack.c.b16 %v8556, %v8540
        %v8941 = vpack.c.b16 %v8557, %v8541
        %v8942 = vpack.c.b16 %v8558, %v8542
        %v8943 = vpack.c.b16 %v8559, %v8543
        %v8944 = vpack.c.b16 %v8560, %v8544
        %v8945 = vpack.c.b16 %v8561, %v8545
        %v8946 = vpack.c.b16 %v8562, %v8546
        %v8947 = vpack.c.b16 %v8579, %v8563
        %v8948 = vpack.c.b16 %v8580, %v8564
        %v8949 = vpack.c.b16 %v8581, %v8565
        %v8950 = vpack.c.b16 %v8582, %v8566
        %v8951 = vpack.c.b16 %v8583, %v8567
        %v8952 = vpack.c.b16 %v8584, %v8568
        %v8953 = vpack.c.b16 %v8585, %v8569
        %v8954 = vpack.c.b16 %v8586, %v8570
        %v8955 = vpack.c.b16 %v8587, %v8571
        %v8956 = vpack.c.b16 %v8588, %v8572
        %v8957 = vpack.c.b16 %v8589, %v8573
        %v8958 = vpack.c.b16 %v8590, %v8574
        %v8959 = vpack.c.b16 %v8591, %v8575
        %v8960 = vpack.c.b16 %v8592, %v8576
        %v8961 = vpack.c.b16 %v8593, %v8577
        %v8962 = vpack.c.b16 %v8594, %v8578
        %v8963 = vpack.c.b16 %v8611, %v8595
        %v8964 = vpack.c.b16 %v8612, %v8596
        %v8965 = vpack.c.b16 %v8613, %v8597
        %v8966 = vpack.c.b16 %v8614, %v8598
        %v8967 = vpack.c.b16 %v8615, %v8599
        %v8968 = vpack.c.b16 %v8616, %v8600
        %v8969 = vpack.c.b16 %v8617, %v8601
        %v8970 = vpack.c.b16 %v8618, %v8602
        %v8971 = vpack.c.b16 %v8619, %v8603
        %v8972 = vpack.c.b16 %v8620, %v8604
        %v8973 = vpack.c.b16 %v8621, %v8605
        %v8974 = vpack.c.b16 %v8622, %v8606
        %v8975 = vpack.c.b16 %v8623, %v8607
        %v8976 = vpack.c.b16 %v8624, %v8608
        %v8977 = vpack.c.b16 %v8625, %v8609
        %v8978 = vpack.c.b16 %v8626, %v8610
        %v8979 = vpack.c.b16 %v8643, %v8627
        %v8980 = vpack.c.b16 %v8644, %v8628
        %v8981 = vpack.c.b16 %v8645, %v8629
        %v8982 = vpack.c.b16 %v8646, %v8630
        %v8983 = vpack.c.b16 %v8647, %v8631
        %v8984 = vpack.c.b16 %v8648, %v8632
        %v8985 = vpack.c.b16 %v8649, %v8633
        %v8986 = vpack.c.b16 %v8650, %v8634
        %v8987 = vpack.c.b16 %v8651, %v8635
        %v8988 = vpack.c.b16 %v8652, %v8636
        %v8989 = vpack.c.b16 %v8653, %v8637
        %v8990 = vpack.c.b16 %v8654, %v8638
        %v8991 = vpack.c.b16 %v8655, %v8639
        %v8992 = vpack.c.b16 %v8656, %v8640
        %v8993 = vpack.c.b16 %v8657, %v8641
        %v8994 = vpack.c.b16 %v8658, %v8642
        %v8995 = vpack.c.b16 %v8675, %v8659
        %v8996 = vpack.c.b16 %v8676, %v8660
        %v8997 = vpack.c.b16 %v8677, %v8661
        %v8998 = vpack.c.b16 %v8678, %v8662
        %v8999 = vpack.c.b16 %v8679, %v8663
        %v9000 = vpack.c.b16 %v8680, %v8664
        %v9001 = vpack.c.b16 %v8681, %v8665
        %v9002 = vpack.c.b16 %v8682, %v8666
        %v9003 = vpack.c.b16 %v8683, %v8667
        %v9004 = vpack.c.b16 %v8684, %v8668
        %v9005 = vpack.c.b16 %v8685, %v8669
        %v9006 = vpack.c.b16 %v8686, %v8670
        %v9007 = vpack.c.b16 %v8687, %v8671
        %v9008 = vpack.c.b16 %v8688, %v8672
        %v9009 = vpack.c.b16 %v8689, %v8673
        %v9010 = vpack.c.b16 %v8690, %v8674
        %v9011 = vpack.c.b16 %v8707, %v8691
        %v9012 = vpack.c.b16 %v8708, %v8692
        %v9013 = vpack.c.b16 %v8709, %v8693
        %v9014 = vpack.c.b16 %v8710, %v8694
        %v9015 = vpack.c.b16 %v8711, %v8695
        %v9016 = vpack.c.b16 %v8712, %v8696
        %v9017 = vpack.c.b16 %v8713, %v8697
        %v9018 = vpack.c.b16 %v8714, %v8698
        %v9019 = vpack.c.b16 %v8715, %v8699
        %v9020 = vpack.c.b16 %v8716, %v8700
        %v9021 = vpack.c.b16 %v8717, %v8701
        %v9022 = vpack.c.b16 %v8718, %v8702
        %v9023 = vpack.c.b16 %v8719, %v8703
        %v9024 = vpack.c.b16 %v8720, %v8704
        %v9025 = vpack.c.b16 %v8721, %v8705
        %v9026 = vpack.c.b16 %v8722, %v8706
        %v9027 = vpack.c.b16 %v8739, %v8723
        %v9028 = vpack.c.b16 %v8740, %v8724
        %v9029 = vpack.c.b16 %v8741, %v8725
        %v9030 = vpack.c.b16 %v8742, %v8726
        %v9031 = vpack.c.b16 %v8743, %v8727
        %v9032 = vpack.c.b16 %v8744, %v8728
        %v9033 = vpack.c.b16 %v8745, %v8729
        %v9034 = vpack.c.b16 %v8746, %v8730
        %v9035 = vpack.c.b16 %v8747, %v8731
        %v9036 = vpack.c.b16 %v8748, %v8732
        %v9037 = vpack.c.b16 %v8749, %v8733
        %v9038 = vpack.c.b16 %v8750, %v8734
        %v9039 = vpack.c.b16 %v8751, %v8735
        %v9040 = vpack.c.b16 %v8752, %v8736
        %v9041 = vpack.c.b16 %v8753, %v8737
        %v9042 = vpack.c.b16 %v8754, %v8738
        %v9043 = vpack.c.b16 %v8771, %v8755
        %v9044 = vpack.c.b16 %v8772, %v8756
        %v9045 = vpack.c.b16 %v8773, %v8757
        %v9046 = vpack.c.b16 %v8774, %v8758
        %v9047 = vpack.c.b16 %v8775, %v8759
        %v9048 = vpack.c.b16 %v8776, %v8760
        %v9049 = vpack.c.b16 %v8777, %v8761
        %v9050 = vpack.c.b16 %v8778, %v8762
        %v9051 = vpack.c.b16 %v8779, %v8763
        %v9052 = vpack.c.b16 %v8780, %v8764
        %v9053 = vpack.c.b16 %v8781, %v8765
        %v9054 = vpack.c.b16 %v8782, %v8766
        %v9055 = vpack.c.b16 %v8783, %v8767
        %v9056 = vpack.c.b16 %v8784, %v8768
        %v9057 = vpack.c.b16 %v8785, %v8769
        %v9058 = vpack.c.b16 %v8786, %v8770
        %v9059 = vpack.c.b16 %v8803, %v8787
        %v9060 = vpack.c.b16 %v8804, %v8788
        %v9061 = vpack.c.b16 %v8805, %v8789
        %v9062 = vpack.c.b16 %v8806, %v8790
        %v9063 = vpack.c.b16 %v8807, %v8791
        %v9064 = vpack.c.b16 %v8808, %v8792
        %v9065 = vpack.c.b16 %v8809, %v8793
        %v9066 = vpack.c.b16 %v8810, %v8794
        %v9067 = vpack.c.b16 %v8811, %v8795
        %v9068 = vpack.c.b16 %v8812, %v8796
        %v9069 = vpack.c.b16 %v8813, %v8797
        %v9070 = vpack.c.b16 %v8814, %v8798
        %v9071 = vpack.c.b16 %v8815, %v8799
        %v9072 = vpack.c.b16 %v8816, %v8800
        %v9073 = vpack.c.b16 %v8817, %v8801
        %v9074 = vpack.c.b16 %v8818, %v8802
        %v9075 = vpack.c.b16 %v8835, %v8819
        %v9076 = vpack.c.b16 %v8836, %v8820
        %v9077 = vpack.c.b16 %v8837, %v8821
        %v9078 = vpack.c.b16 %v8838, %v8822
        %v9079 = vpack.c.b16 %v8839, %v8823
        %v9080 = vpack.c.b16 %v8840, %v8824
        %v9081 = vpack.c.b16 %v8841, %v8825
        %v9082 = vpack.c.b16 %v8842, %v8826
        %v9083 = vpack.c.b16 %v8843, %v8827
        %v9084 = vpack.c.b16 %v8844, %v8828
        %v9085 = vpack.c.b16 %v8845, %v8829
        %v9086 = vpack.c.b16 %v8846, %v8830
        %v9087 = vpack.c.b16 %v8847, %v8831
        %v9088 = vpack.c.b16 %v8848, %v8832
        %v9089 = vpack.c.b16 %v8849, %v8833
        %v9090 = vpack.c.b16 %v8850, %v8834
        %v9332 = vsel %vm4688, %v7884, 0
        %v9335 = vsel %vm4688, %v7886, 0
        %v9338 = vsel %vm4688, %v7888, 0
        %v9341 = vsel %vm4688, %v7890, 0
        %9343 = vmatprep.subr.bf16.mxu0 %v8852
        %9344 = vmatpush1.bf16.msra.mxu0 %v8851
        %9345 = vmatprep.subr.bf16.mxu0 %v8868
        %9346 = vmatpush1.bf16.msra.mxu0 %v8867
        %9347 = vmatprep.subr.bf16.mxu0 %v8884
        %9348 = vmatpush1.bf16.msra.mxu0 %v8883
        %9349 = vmatprep.subr.bf16.mxu0 %v8900
        %9350 = vmatpush1.bf16.msra.mxu0 %v8899
        %9351 = vmatprep.subr.bf16.mxu0 %v8916
        %9352 = vmatpush1.bf16.msra.mxu0 %v8915
        %9353 = vmatprep.subr.bf16.mxu0 %v8932
        %9354 = vmatpush1.bf16.msra.mxu0 %v8931
        %9355 = vmatprep.subr.bf16.mxu0 %v8948
        %9356 = vmatpush1.bf16.msra.mxu0 %v8947
        %9357 = vmatprep.subr.bf16.mxu0 %v8964
        %9358 = vmatpush1.bf16.msra.mxu0 %v8963
        %9359 = vmatprep.subr.bf16.mxu0 %v8980
        %9360 = vmatpush1.bf16.msra.mxu0 %v8979
        %9361 = vmatprep.subr.bf16.mxu0 %v8996
        %9362 = vmatpush1.bf16.msra.mxu0 %v8995
        %9363 = vmatprep.subr.bf16.mxu0 %v9012
        %9364 = vmatpush1.bf16.msra.mxu0 %v9011
        %9365 = vmatprep.subr.bf16.mxu0 %v9028
        %9366 = vmatpush1.bf16.msra.mxu0 %v9027
        %9367 = vmatprep.subr.bf16.mxu0 %v9044
        %9368 = vmatpush1.bf16.msra.mxu0 %v9043
        %9369 = vmatprep.subr.bf16.mxu0 %v9060
        %9370 = vmatpush1.bf16.msra.mxu0 %v9059
        %9371 = vmatprep.subr.bf16.mxu0 %v9076
        %9372 = vmatpush1.bf16.msra.mxu0 %v9075
        %9373 = vmatprep.subr.bf16.mxu0 0
        %9374 = vmatpush1.bf16.msra.mxu0 0
        %9375 = vmatprep.mubr.bf16.mxu0 %v9332
        %9376 = vmatmul.mubr.bf16.gmra.mrb[0].mxu0 %v7883
        %v9377 = vpop.f32.mrb[0].mxu0
        %v9378 = vadd.f32 0.0, %v9377
        %v9379 = vpop.f32.mrb[0].mxu0
        %v9380 = vadd.f32 0.0, %v9379
        %v9381 = vpop.f32.mrb[0].mxu0
        %v9382 = vpop.f32.mrb[0].mxu0
        %9383 = vmatprep.mubr.bf16.mxu0 %v9335
        %9384 = vmatmul.mubr.bf16.gmra.mrb[0].mxu0 %v7885
        %v9385 = vpop.f32.mrb[0].mxu0
        %v9386 = vpop.f32.mrb[0].mxu0
        %v9387 = vpop.f32.mrb[0].mxu0
        %v9388 = vpop.f32.mrb[0].mxu0
        %9389 = vmatprep.mubr.bf16.mxu0 %v9338
        %9390 = vmatmul.mubr.bf16.gmra.mrb[0].mxu0 %v7887
        %v9391 = vpop.f32.mrb[0].mxu0
        %v9392 = vpop.f32.mrb[0].mxu0
        %v9393 = vpop.f32.mrb[0].mxu0
        %v9394 = vpop.f32.mrb[0].mxu0
        %9395 = vmatprep.mubr.bf16.mxu0 %v9341
        %9396 = vmatmul.mubr.bf16.gmra.mrb[0].mxu0 %v7889
        %v9397 = vpop.f32.mrb[0].mxu0
        %v9398 = vpop.f32.mrb[0].mxu0
        %v9399 = vpop.f32.mrb[0].mxu0
        %v9400 = vpop.f32.mrb[0].mxu0
        %9401 = vdwg.mxu0
        %9402 = vmatprep.subr.bf16.mxu0 %v8854
        %9403 = vmatpush1.bf16.msra.mxu0 %v8853
        %9404 = vmatprep.subr.bf16.mxu0 %v8870
        %9405 = vmatpush1.bf16.msra.mxu0 %v8869
        %9406 = vmatprep.subr.bf16.mxu0 %v8886
        %9407 = vmatpush1.bf16.msra.mxu0 %v8885
        %9408 = vmatprep.subr.bf16.mxu0 %v8902
        %9409 = vmatpush1.bf16.msra.mxu0 %v8901
        %9410 = vmatprep.subr.bf16.mxu0 %v8918
        %9411 = vmatpush1.bf16.msra.mxu0 %v8917
        %9412 = vmatprep.subr.bf16.mxu0 %v8934
        %9413 = vmatpush1.bf16.msra.mxu0 %v8933
        %9414 = vmatprep.subr.bf16.mxu0 %v8950
        %9415 = vmatpush1.bf16.msra.mxu0 %v8949
        %9416 = vmatprep.subr.bf16.mxu0 %v8966
        %9417 = vmatpush1.bf16.msra.mxu0 %v8965
        %9418 = vmatprep.subr.bf16.mxu0 %v8982
        %9419 = vmatpush1.bf16.msra.mxu0 %v8981
        %9420 = vmatprep.subr.bf16.mxu0 %v8998
        %9421 = vmatpush1.bf16.msra.mxu0 %v8997
        %9422 = vmatprep.subr.bf16.mxu0 %v9014
        %9423 = vmatpush1.bf16.msra.mxu0 %v9013
        %9424 = vmatprep.subr.bf16.mxu0 %v9030
        %9425 = vmatpush1.bf16.msra.mxu0 %v9029
        %9426 = vmatprep.subr.bf16.mxu0 %v9046
        %9427 = vmatpush1.bf16.msra.mxu0 %v9045
        %9428 = vmatprep.subr.bf16.mxu0 %v9062
        %9429 = vmatpush1.bf16.msra.mxu0 %v9061
        %9430 = vmatprep.subr.bf16.mxu0 %v9078
        %9431 = vmatpush1.bf16.msra.mxu0 %v9077
        %9432 = vmatprep.subr.bf16.mxu0 0
        %9433 = vmatpush1.bf16.msra.mxu0 0
        %9434 = vmatprep.mubr.bf16.mxu0 %v9332
        %9435 = vmatmul.mubr.bf16.gmra.mrb[0].mxu0 %v7883
        %v9436 = vpop.f32.mrb[0].mxu0
        %v9437 = vpop.f32.mrb[0].mxu0
        %v9438 = vpop.f32.mrb[0].mxu0
        %v9439 = vadd.f32 0.0, %v9438
        %v9440 = vpop.f32.mrb[0].mxu0
        %v9441 = vadd.f32 0.0, %v9440
        %9442 = vmatprep.mubr.bf16.mxu0 %v9335
        %9443 = vmatmul.mubr.bf16.gmra.mrb[0].mxu0 %v7885
        %v9444 = vpop.f32.mrb[0].mxu0
        %v9445 = vpop.f32.mrb[0].mxu0
        %v9446 = vpop.f32.mrb[0].mxu0
        %v9447 = vpop.f32.mrb[0].mxu0
        %9448 = vmatprep.mubr.bf16.mxu0 %v9338
        %9449 = vmatmul.mubr.bf16.gmra.mrb[0].mxu0 %v7887
        %v9450 = vpop.f32.mrb[0].mxu0
        %v9451 = vpop.f32.mrb[0].mxu0
        %v9452 = vpop.f32.mrb[0].mxu0
        %v9453 = vpop.f32.mrb[0].mxu0
        %9454 = vmatprep.mubr.bf16.mxu0 %v9341
        %9455 = vmatmul.mubr.bf16.gmra.mrb[0].mxu0 %v7889
        %v9456 = vpop.f32.mrb[0].mxu0
        %v9457 = vpop.f32.mrb[0].mxu0
        %v9458 = vpop.f32.mrb[0].mxu0
        %v9459 = vpop.f32.mrb[0].mxu0
        %9460 = vdwg.mxu0
        %9461 = vmatprep.subr.bf16.mxu0 %v8856
        %9462 = vmatpush1.bf16.msra.mxu0 %v8855
        %9463 = vmatprep.subr.bf16.mxu0 %v8872
        %9464 = vmatpush1.bf16.msra.mxu0 %v8871
        %9465 = vmatprep.subr.bf16.mxu0 %v8888
        %9466 = vmatpush1.bf16.msra.mxu0 %v8887
        %9467 = vmatprep.subr.bf16.mxu0 %v8904
        %9468 = vmatpush1.bf16.msra.mxu0 %v8903
        %9469 = vmatprep.subr.bf16.mxu0 %v8920
        %9470 = vmatpush1.bf16.msra.mxu0 %v8919
        %9471 = vmatprep.subr.bf16.mxu0 %v8936
        %9472 = vmatpush1.bf16.msra.mxu0 %v8935
        %9473 = vmatprep.subr.bf16.mxu0 %v8952
        %9474 = vmatpush1.bf16.msra.mxu0 %v8951
        %9475 = vmatprep.subr.bf16.mxu0 %v8968
        %9476 = vmatpush1.bf16.msra.mxu0 %v8967
        %9477 = vmatprep.subr.bf16.mxu0 %v8984
        %9478 = vmatpush1.bf16.msra.mxu0 %v8983
        %9479 = vmatprep.subr.bf16.mxu0 %v9000
        %9480 = vmatpush1.bf16.msra.mxu0 %v8999
        %9481 = vmatprep.subr.bf16.mxu0 %v9016
        %9482 = vmatpush1.bf16.msra.mxu0 %v9015
        %9483 = vmatprep.subr.bf16.mxu0 %v9032
        %9484 = vmatpush1.bf16.msra.mxu0 %v9031
        %9485 = vmatprep.subr.bf16.mxu0 %v9048
        %9486 = vmatpush1.bf16.msra.mxu0 %v9047
        %9487 = vmatprep.subr.bf16.mxu0 %v9064
        %9488 = vmatpush1.bf16.msra.mxu0 %v9063
        %9489 = vmatprep.subr.bf16.mxu0 %v9080
        %9490 = vmatpush1.bf16.msra.mxu0 %v9079
        %9491 = vmatprep.subr.bf16.mxu0 0
        %9492 = vmatpush1.bf16.msra.mxu0 0
        %9493 = vmatprep.mubr.bf16.mxu0 %v9332
        %9494 = vmatmul.mubr.bf16.gmra.mrb[0].mxu0 %v7883
        %v9495 = vpop.f32.mrb[0].mxu0
        %v9496 = vpop.f32.mrb[0].mxu0
        %v9497 = vpop.f32.mrb[0].mxu0
        %v9498 = vpop.f32.mrb[0].mxu0
        %9499 = vmatprep.mubr.bf16.mxu0 %v9335
        %9500 = vmatmul.mubr.bf16.gmra.mrb[0].mxu0 %v7885
        %v9501 = vpop.f32.mrb[0].mxu0
        %v9502 = vadd.f32 0.0, %v9501
        %v9503 = vpop.f32.mrb[0].mxu0
        %v9504 = vadd.f32 0.0, %v9503
        %v9505 = vpop.f32.mrb[0].mxu0
        %v9506 = vpop.f32.mrb[0].mxu0
        %9507 = vmatprep.mubr.bf16.mxu0 %v9338
        %9508 = vmatmul.mubr.bf16.gmra.mrb[0].mxu0 %v7887
        %v9509 = vpop.f32.mrb[0].mxu0
        %v9510 = vpop.f32.mrb[0].mxu0
        %v9511 = vpop.f32.mrb[0].mxu0
        %v9512 = vpop.f32.mrb[0].mxu0
        %9513 = vmatprep.mubr.bf16.mxu0 %v9341
        %9514 = vmatmul.mubr.bf16.gmra.mrb[0].mxu0 %v7889
        %v9515 = vpop.f32.mrb[0].mxu0
        %v9516 = vpop.f32.mrb[0].mxu0
        %v9517 = vpop.f32.mrb[0].mxu0
        %v9518 = vpop.f32.mrb[0].mxu0
        %9519 = vdwg.mxu0
        %9520 = vmatprep.subr.bf16.mxu0 %v8858
        %9521 = vmatpush1.bf16.msra.mxu0 %v8857
        %9522 = vmatprep.subr.bf16.mxu0 %v8874
        %9523 = vmatpush1.bf16.msra.mxu0 %v8873
        %9524 = vmatprep.subr.bf16.mxu0 %v8890
        %9525 = vmatpush1.bf16.msra.mxu0 %v8889
        %9526 = vmatprep.subr.bf16.mxu0 %v8906
        %9527 = vmatpush1.bf16.msra.mxu0 %v8905
        %9528 = vmatprep.subr.bf16.mxu0 %v8922
        %9529 = vmatpush1.bf16.msra.mxu0 %v8921
        %9530 = vmatprep.subr.bf16.mxu0 %v8938
        %9531 = vmatpush1.bf16.msra.mxu0 %v8937
        %9532 = vmatprep.subr.bf16.mxu0 %v8954
        %9533 = vmatpush1.bf16.msra.mxu0 %v8953
        %9534 = vmatprep.subr.bf16.mxu0 %v8970
        %9535 = vmatpush1.bf16.msra.mxu0 %v8969
        %9536 = vmatprep.subr.bf16.mxu0 %v8986
        %9537 = vmatpush1.bf16.msra.mxu0 %v8985
        %9538 = vmatprep.subr.bf16.mxu0 %v9002
        %9539 = vmatpush1.bf16.msra.mxu0 %v9001
        %9540 = vmatprep.subr.bf16.mxu0 %v9018
        %9541 = vmatpush1.bf16.msra.mxu0 %v9017
        %9542 = vmatprep.subr.bf16.mxu0 %v9034
        %9543 = vmatpush1.bf16.msra.mxu0 %v9033
        %9544 = vmatprep.subr.bf16.mxu0 %v9050
        %9545 = vmatpush1.bf16.msra.mxu0 %v9049
        %9546 = vmatprep.subr.bf16.mxu0 %v9066
        %9547 = vmatpush1.bf16.msra.mxu0 %v9065
        %9548 = vmatprep.subr.bf16.mxu0 %v9082
        %9549 = vmatpush1.bf16.msra.mxu0 %v9081
        %9550 = vmatprep.subr.bf16.mxu0 0
        %9551 = vmatpush1.bf16.msra.mxu0 0
        %9552 = vmatprep.mubr.bf16.mxu0 %v9332
        %9553 = vmatmul.mubr.bf16.gmra.mrb[0].mxu0 %v7883
        %v9554 = vpop.f32.mrb[0].mxu0
        %v9555 = vpop.f32.mrb[0].mxu0
        %v9556 = vpop.f32.mrb[0].mxu0
        %v9557 = vpop.f32.mrb[0].mxu0
        %9558 = vmatprep.mubr.bf16.mxu0 %v9335
        %9559 = vmatmul.mubr.bf16.gmra.mrb[0].mxu0 %v7885
        %v9560 = vpop.f32.mrb[0].mxu0
        %v9561 = vpop.f32.mrb[0].mxu0
        %v9562 = vpop.f32.mrb[0].mxu0
        %v9563 = vadd.f32 0.0, %v9562
        %v9564 = vpop.f32.mrb[0].mxu0
        %v9565 = vadd.f32 0.0, %v9564
        %9566 = vmatprep.mubr.bf16.mxu0 %v9338
        %9567 = vmatmul.mubr.bf16.gmra.mrb[0].mxu0 %v7887
        %v9568 = vpop.f32.mrb[0].mxu0
        %v9569 = vpop.f32.mrb[0].mxu0
        %v9570 = vpop.f32.mrb[0].mxu0
        %v9571 = vpop.f32.mrb[0].mxu0
        %9572 = vmatprep.mubr.bf16.mxu0 %v9341
        %9573 = vmatmul.mubr.bf16.gmra.mrb[0].mxu0 %v7889
        %v9574 = vpop.f32.mrb[0].mxu0
        %v9575 = vpop.f32.mrb[0].mxu0
        %v9576 = vpop.f32.mrb[0].mxu0
        %v9577 = vpop.f32.mrb[0].mxu0
        %9578 = vdwg.mxu0
        %9579 = vmatprep.subr.bf16.mxu0 %v8860
        %9580 = vmatpush1.bf16.msra.mxu0 %v8859
        %9581 = vmatprep.subr.bf16.mxu0 %v8876
        %9582 = vmatpush1.bf16.msra.mxu0 %v8875
        %9583 = vmatprep.subr.bf16.mxu0 %v8892
        %9584 = vmatpush1.bf16.msra.mxu0 %v8891
        %9585 = vmatprep.subr.bf16.mxu0 %v8908
        %9586 = vmatpush1.bf16.msra.mxu0 %v8907
        %9587 = vmatprep.subr.bf16.mxu0 %v8924
        %9588 = vmatpush1.bf16.msra.mxu0 %v8923
        %9589 = vmatprep.subr.bf16.mxu0 %v8940
        %9590 = vmatpush1.bf16.msra.mxu0 %v8939
        %9591 = vmatprep.subr.bf16.mxu0 %v8956
        %9592 = vmatpush1.bf16.msra.mxu0 %v8955
        %9593 = vmatprep.subr.bf16.mxu0 %v8972
        %9594 = vmatpush1.bf16.msra.mxu0 %v8971
        %9595 = vmatprep.subr.bf16.mxu0 %v8988
        %9596 = vmatpush1.bf16.msra.mxu0 %v8987
        %9597 = vmatprep.subr.bf16.mxu0 %v9004
        %9598 = vmatpush1.bf16.msra.mxu0 %v9003
        %9599 = vmatprep.subr.bf16.mxu0 %v9020
        %9600 = vmatpush1.bf16.msra.mxu0 %v9019
        %9601 = vmatprep.subr.bf16.mxu0 %v9036
        %9602 = vmatpush1.bf16.msra.mxu0 %v9035
        %9603 = vmatprep.subr.bf16.mxu0 %v9052
        %9604 = vmatpush1.bf16.msra.mxu0 %v9051
        %9605 = vmatprep.subr.bf16.mxu0 %v9068
        %9606 = vmatpush1.bf16.msra.mxu0 %v9067
        %9607 = vmatprep.subr.bf16.mxu0 %v9084
        %9608 = vmatpush1.bf16.msra.mxu0 %v9083
        %9609 = vmatprep.subr.bf16.mxu0 0
        %9610 = vmatpush1.bf16.msra.mxu0 0
        %9611 = vmatprep.mubr.bf16.mxu0 %v9332
        %9612 = vmatmul.mubr.bf16.gmra.mrb[0].mxu0 %v7883
        %v9613 = vpop.f32.mrb[0].mxu0
        %v9614 = vpop.f32.mrb[0].mxu0
        %v9615 = vpop.f32.mrb[0].mxu0
        %v9616 = vpop.f32.mrb[0].mxu0
        %9617 = vmatprep.mubr.bf16.mxu0 %v9335
        %9618 = vmatmul.mubr.bf16.gmra.mrb[0].mxu0 %v7885
        %v9619 = vpop.f32.mrb[0].mxu0
        %v9620 = vpop.f32.mrb[0].mxu0
        %v9621 = vpop.f32.mrb[0].mxu0
        %v9622 = vpop.f32.mrb[0].mxu0
        %9623 = vmatprep.mubr.bf16.mxu0 %v9338
        %9624 = vmatmul.mubr.bf16.gmra.mrb[0].mxu0 %v7887
        %v9625 = vpop.f32.mrb[0].mxu0
        %v9626 = vadd.f32 0.0, %v9625
        %v9627 = vpop.f32.mrb[0].mxu0
        %v9628 = vadd.f32 0.0, %v9627
        %v9629 = vpop.f32.mrb[0].mxu0
        %v9630 = vpop.f32.mrb[0].mxu0
        %9631 = vmatprep.mubr.bf16.mxu0 %v9341
        %9632 = vmatmul.mubr.bf16.gmra.mrb[0].mxu0 %v7889
        %v9633 = vpop.f32.mrb[0].mxu0
        %v9634 = vpop.f32.mrb[0].mxu0
        %v9635 = vpop.f32.mrb[0].mxu0
        %v9636 = vpop.f32.mrb[0].mxu0
        %9637 = vdwg.mxu0
        %9638 = vmatprep.subr.bf16.mxu0 %v8862
        %9639 = vmatpush1.bf16.msra.mxu0 %v8861
        %9640 = vmatprep.subr.bf16.mxu0 %v8878
        %9641 = vmatpush1.bf16.msra.mxu0 %v8877
        %9642 = vmatprep.subr.bf16.mxu0 %v8894
        %9643 = vmatpush1.bf16.msra.mxu0 %v8893
        %9644 = vmatprep.subr.bf16.mxu0 %v8910
        %9645 = vmatpush1.bf16.msra.mxu0 %v8909
        %9646 = vmatprep.subr.bf16.mxu0 %v8926
        %9647 = vmatpush1.bf16.msra.mxu0 %v8925
        %9648 = vmatprep.subr.bf16.mxu0 %v8942
        %9649 = vmatpush1.bf16.msra.mxu0 %v8941
        %9650 = vmatprep.subr.bf16.mxu0 %v8958
        %9651 = vmatpush1.bf16.msra.mxu0 %v8957
        %9652 = vmatprep.subr.bf16.mxu0 %v8974
        %9653 = vmatpush1.bf16.msra.mxu0 %v8973
        %9654 = vmatprep.subr.bf16.mxu0 %v8990
        %9655 = vmatpush1.bf16.msra.mxu0 %v8989
        %9656 = vmatprep.subr.bf16.mxu0 %v9006
        %9657 = vmatpush1.bf16.msra.mxu0 %v9005
        %9658 = vmatprep.subr.bf16.mxu0 %v9022
        %9659 = vmatpush1.bf16.msra.mxu0 %v9021
        %9660 = vmatprep.subr.bf16.mxu0 %v9038
        %9661 = vmatpush1.bf16.msra.mxu0 %v9037
        %9662 = vmatprep.subr.bf16.mxu0 %v9054
        %9663 = vmatpush1.bf16.msra.mxu0 %v9053
        %9664 = vmatprep.subr.bf16.mxu0 %v9070
        %9665 = vmatpush1.bf16.msra.mxu0 %v9069
        %9666 = vmatprep.subr.bf16.mxu0 %v9086
        %9667 = vmatpush1.bf16.msra.mxu0 %v9085
        %9668 = vmatprep.subr.bf16.mxu0 0
        %9669 = vmatpush1.bf16.msra.mxu0 0
        %9670 = vmatprep.mubr.bf16.mxu0 %v9332
        %9671 = vmatmul.mubr.bf16.gmra.mrb[0].mxu0 %v7883
        %v9672 = vpop.f32.mrb[0].mxu0
        %v9673 = vpop.f32.mrb[0].mxu0
        %v9674 = vpop.f32.mrb[0].mxu0
        %v9675 = vpop.f32.mrb[0].mxu0
        %9676 = vmatprep.mubr.bf16.mxu0 %v9335
        %9677 = vmatmul.mubr.bf16.gmra.mrb[0].mxu0 %v7885
        %v9678 = vpop.f32.mrb[0].mxu0
        %v9679 = vpop.f32.mrb[0].mxu0
        %v9680 = vpop.f32.mrb[0].mxu0
        %v9681 = vpop.f32.mrb[0].mxu0
        %9682 = vmatprep.mubr.bf16.mxu0 %v9338
        %9683 = vmatmul.mubr.bf16.gmra.mrb[0].mxu0 %v7887
        %v9684 = vpop.f32.mrb[0].mxu0
        %v9685 = vpop.f32.mrb[0].mxu0
        %v9686 = vpop.f32.mrb[0].mxu0
        %v9687 = vadd.f32 0.0, %v9686
        %v9688 = vpop.f32.mrb[0].mxu0
        %v9689 = vadd.f32 0.0, %v9688
        %9690 = vmatprep.mubr.bf16.mxu0 %v9341
        %9691 = vmatmul.mubr.bf16.gmra.mrb[0].mxu0 %v7889
        %v9692 = vpop.f32.mrb[0].mxu0
        %v9693 = vpop.f32.mrb[0].mxu0
        %v9694 = vpop.f32.mrb[0].mxu0
        %v9695 = vpop.f32.mrb[0].mxu0
        %9696 = vdwg.mxu0
        %9697 = vmatprep.subr.bf16.mxu0 %v8864
        %9698 = vmatpush1.bf16.msra.mxu0 %v8863
        %9699 = vmatprep.subr.bf16.mxu0 %v8880
        %9700 = vmatpush1.bf16.msra.mxu0 %v8879
        %9701 = vmatprep.subr.bf16.mxu0 %v8896
        %9702 = vmatpush1.bf16.msra.mxu0 %v8895
        %9703 = vmatprep.subr.bf16.mxu0 %v8912
        %9704 = vmatpush1.bf16.msra.mxu0 %v8911
        %9705 = vmatprep.subr.bf16.mxu0 %v8928
        %9706 = vmatpush1.bf16.msra.mxu0 %v8927
        %9707 = vmatprep.subr.bf16.mxu0 %v8944
        %9708 = vmatpush1.bf16.msra.mxu0 %v8943
        %9709 = vmatprep.subr.bf16.mxu0 %v8960
        %9710 = vmatpush1.bf16.msra.mxu0 %v8959
        %9711 = vmatprep.subr.bf16.mxu0 %v8976
        %9712 = vmatpush1.bf16.msra.mxu0 %v8975
        %9713 = vmatprep.subr.bf16.mxu0 %v8992
        %9714 = vmatpush1.bf16.msra.mxu0 %v8991
        %9715 = vmatprep.subr.bf16.mxu0 %v9008
        %9716 = vmatpush1.bf16.msra.mxu0 %v9007
        %9717 = vmatprep.subr.bf16.mxu0 %v9024
        %9718 = vmatpush1.bf16.msra.mxu0 %v9023
        %9719 = vmatprep.subr.bf16.mxu0 %v9040
        %9720 = vmatpush1.bf16.msra.mxu0 %v9039
        %9721 = vmatprep.subr.bf16.mxu0 %v9056
        %9722 = vmatpush1.bf16.msra.mxu0 %v9055
        %9723 = vmatprep.subr.bf16.mxu0 %v9072
        %9724 = vmatpush1.bf16.msra.mxu0 %v9071
        %9725 = vmatprep.subr.bf16.mxu0 %v9088
        %9726 = vmatpush1.bf16.msra.mxu0 %v9087
        %9727 = vmatprep.subr.bf16.mxu0 0
        %9728 = vmatpush1.bf16.msra.mxu0 0
        %9729 = vmatprep.mubr.bf16.mxu0 %v9332
        %9730 = vmatmul.mubr.bf16.gmra.mrb[0].mxu0 %v7883
        %v9731 = vpop.f32.mrb[0].mxu0
        %v9732 = vpop.f32.mrb[0].mxu0
        %v9733 = vpop.f32.mrb[0].mxu0
        %v9734 = vpop.f32.mrb[0].mxu0
        %9735 = vmatprep.mubr.bf16.mxu0 %v9335
        %9736 = vmatmul.mubr.bf16.gmra.mrb[0].mxu0 %v7885
        %v9737 = vpop.f32.mrb[0].mxu0
        %v9738 = vpop.f32.mrb[0].mxu0
        %v9739 = vpop.f32.mrb[0].mxu0
        %v9740 = vpop.f32.mrb[0].mxu0
        %9741 = vmatprep.mubr.bf16.mxu0 %v9338
        %9742 = vmatmul.mubr.bf16.gmra.mrb[0].mxu0 %v7887
        %v9743 = vpop.f32.mrb[0].mxu0
        %v9744 = vpop.f32.mrb[0].mxu0
        %v9745 = vpop.f32.mrb[0].mxu0
        %v9746 = vpop.f32.mrb[0].mxu0
        %9747 = vmatprep.mubr.bf16.mxu0 %v9341
        %9748 = vmatmul.mubr.bf16.gmra.mrb[0].mxu0 %v7889
        %v9749 = vpop.f32.mrb[0].mxu0
        %v9750 = vadd.f32 0.0, %v9749
        %v9751 = vpop.f32.mrb[0].mxu0
        %v9752 = vadd.f32 0.0, %v9751
        %v9753 = vpop.f32.mrb[0].mxu0
        %v9754 = vpop.f32.mrb[0].mxu0
        %9755 = vdwg.mxu0
        %9756 = vmatprep.subr.bf16.mxu0 %v8866
        %9757 = vmatpush1.bf16.msra.mxu0 %v8865
        %9758 = vmatprep.subr.bf16.mxu0 %v8882
        %9759 = vmatpush1.bf16.msra.mxu0 %v8881
        %9760 = vmatprep.subr.bf16.mxu0 %v8898
        %9761 = vmatpush1.bf16.msra.mxu0 %v8897
        %9762 = vmatprep.subr.bf16.mxu0 %v8914
        %9763 = vmatpush1.bf16.msra.mxu0 %v8913
        %9764 = vmatprep.subr.bf16.mxu0 %v8930
        %9765 = vmatpush1.bf16.msra.mxu0 %v8929
        %9766 = vmatprep.subr.bf16.mxu0 %v8946
        %9767 = vmatpush1.bf16.msra.mxu0 %v8945
        %9768 = vmatprep.subr.bf16.mxu0 %v8962
        %9769 = vmatpush1.bf16.msra.mxu0 %v8961
        %9770 = vmatprep.subr.bf16.mxu0 %v8978
        %9771 = vmatpush1.bf16.msra.mxu0 %v8977
        %9772 = vmatprep.subr.bf16.mxu0 %v8994
        %9773 = vmatpush1.bf16.msra.mxu0 %v8993
        %9774 = vmatprep.subr.bf16.mxu0 %v9010
        %9775 = vmatpush1.bf16.msra.mxu0 %v9009
        %9776 = vmatprep.subr.bf16.mxu0 %v9026
        %9777 = vmatpush1.bf16.msra.mxu0 %v9025
        %9778 = vmatprep.subr.bf16.mxu0 %v9042
        %9779 = vmatpush1.bf16.msra.mxu0 %v9041
        %9780 = vmatprep.subr.bf16.mxu0 %v9058
        %9781 = vmatpush1.bf16.msra.mxu0 %v9057
        %9782 = vmatprep.subr.bf16.mxu0 %v9074
        %9783 = vmatpush1.bf16.msra.mxu0 %v9073
        %9784 = vmatprep.subr.bf16.mxu0 %v9090
        %9785 = vmatpush1.bf16.msra.mxu0 %v9089
        %9786 = vmatprep.subr.bf16.mxu0 0
        %9787 = vmatpush1.bf16.msra.mxu0 0
        %9788 = vmatprep.mubr.bf16.mxu0 %v9332
        %9789 = vmatmul.mubr.bf16.gmra.mrb[0].mxu0 %v7883
        %v9790 = vpop.f32.mrb[0].mxu0
        %v9791 = vpop.f32.mrb[0].mxu0
        %v9792 = vpop.f32.mrb[0].mxu0
        %v9793 = vpop.f32.mrb[0].mxu0
        %9794 = vmatprep.mubr.bf16.mxu0 %v9335
        %9795 = vmatmul.mubr.bf16.gmra.mrb[0].mxu0 %v7885
        %v9796 = vpop.f32.mrb[0].mxu0
        %v9797 = vpop.f32.mrb[0].mxu0
        %v9798 = vpop.f32.mrb[0].mxu0
        %v9799 = vpop.f32.mrb[0].mxu0
        %9800 = vmatprep.mubr.bf16.mxu0 %v9338
        %9801 = vmatmul.mubr.bf16.gmra.mrb[0].mxu0 %v7887
        %v9802 = vpop.f32.mrb[0].mxu0
        %v9803 = vpop.f32.mrb[0].mxu0
        %v9804 = vpop.f32.mrb[0].mxu0
        %v9805 = vpop.f32.mrb[0].mxu0
        %9806 = vmatprep.mubr.bf16.mxu0 %v9341
        %9807 = vmatmul.mubr.bf16.gmra.mrb[0].mxu0 %v7889
        %v9808 = vpop.f32.mrb[0].mxu0
        %v9809 = vpop.f32.mrb[0].mxu0
        %v9810 = vpop.f32.mrb[0].mxu0
        %v9811 = vadd.f32 0.0, %v9810
        %v9812 = vpop.f32.mrb[0].mxu0
        %v9813 = vadd.f32 0.0, %v9812
        %9814 = vdwg.mxu0
        %v9815 = vld [vmem:[%s8] sm:$0x3]
        %v9817 = vlaneseq
        %v9818 = vshrl.u32 %v9817, 7
        %v9819 = vsub.s32 0, %v9818
        %v9820 = vrot.slane %v9815, %v9819
        %v9821 = vlaneseq
        %v9822 = vshrl.u32 %v9821, 7
        %v9823 = vsub.s32 1, %v9822
        %v9824 = vrot.slane %v9815, %v9823
        %v9827 = vadd.f32 %v9820, %v9378
        %v9828 = vadd.f32 %v9824, %v9380
        %v9829 = vadd.f32 %v9827, %v9439
        %v9830 = vadd.f32 %v9828, %v9441
        %v9831 = vadd.f32 %v9829, %v9502
        %v9832 = vadd.f32 %v9830, %v9504
        %v9833 = vadd.f32 %v9831, %v9563
        %v9834 = vadd.f32 %v9832, %v9565
        %v9835 = vadd.f32 %v9833, %v9626
        %v9836 = vadd.f32 %v9834, %v9628
        %v9837 = vadd.f32 %v9835, %v9687
        %v9838 = vadd.f32 %v9836, %v9689
        %v9839 = vadd.f32 %v9837, %v9750
        %v9840 = vadd.f32 %v9838, %v9752
        %v9841 = vadd.f32 %v9839, %v9811
        %v9842 = vadd.f32 %v9840, %v9813
        %v9843 = vmax.f32 %v9841, 0.0
        %v9844 = vmax.f32 %v9842, 0.0
        %v9845 = vpack.c.bf16 %v9843, %v9843
        %v9846 = vpack.c.bf16 %v9844, %v9844
        %v9847 = vld [vmem:[%s9] sm:$0xf]
        %v9848 = vld [vmem:[%s9 + $0x4] sm:$0xf]
        %v9849 = vld [vmem:[%s9 + $0x8] sm:$0xf]
        %v9850 = vld [vmem:[%s9 + $0xc] sm:$0xf]
        %v9851 = vld [vmem:[%s9 + $0x10] sm:$0xf]
        %v9852 = vld [vmem:[%s9 + $0x14] sm:$0xf]
        %v9853 = vld [vmem:[%s9 + $0x18] sm:$0xf]
        %v9854 = vld [vmem:[%s9 + $0x1c] sm:$0xf]
        %v9855 = vld [vmem:[%s9 + $0x20] sm:$0xf]
        %v9856 = vld [vmem:[%s9 + $0x24] sm:$0xf]
        %v9857 = vld [vmem:[%s9 + $0x28] sm:$0xf]
        %v9858 = vld [vmem:[%s9 + $0x2c] sm:$0xf]
        %v9859 = vld [vmem:[%s9 + $0x30] sm:$0xf]
        %v9860 = vld [vmem:[%s9 + $0x34] sm:$0xf]
        %v9861 = vld [vmem:[%s9 + $0x38] sm:$0xf]
        %v9862 = vld [vmem:[%s9 + $0x3c] sm:$0xf]
        %v9863 = vld [vmem:[%s9 + $0x40] sm:$0xf]
        %v9864 = vld [vmem:[%s9 + $0x44] sm:$0xf]
        %v9865 = vld [vmem:[%s9 + $0x48] sm:$0xf]
        %v9866 = vld [vmem:[%s9 + $0x4c] sm:$0xf]
        %v9867 = vld [vmem:[%s9 + $0x50] sm:$0xf]
        %v9868 = vld [vmem:[%s9 + $0x54] sm:$0xf]
        %v9869 = vld [vmem:[%s9 + $0x58] sm:$0xf]
        %v9870 = vld [vmem:[%s9 + $0x5c] sm:$0xf]
        %v9871 = vld [vmem:[%s9 + $0x60] sm:$0xf]
        %v9872 = vld [vmem:[%s9 + $0x64] sm:$0xf]
        %v9873 = vld [vmem:[%s9 + $0x68] sm:$0xf]
        %v9874 = vld [vmem:[%s9 + $0x6c] sm:$0xf]
        %v9875 = vld [vmem:[%s9 + $0x70] sm:$0xf]
        %v9876 = vld [vmem:[%s9 + $0x74] sm:$0xf]
        %v9877 = vld [vmem:[%s9 + $0x78] sm:$0xf]
        %v9878 = vld [vmem:[%s9 + $0x7c] sm:$0xf]
        %v9879 = vld [vmem:[%s10] sm:$0x1]
        %v9881 = vlaneseq
        %v9882 = vshrl.u32 %v9881, 7
        %v9883 = vsub.s32 0, %v9882
        %v9884 = vrot.slane %v9879, %v9883
        %v9918 = vunpack.c.l.b16 %v9847
        %v9919 = vunpack.c.l.b16 %v9848
        %v9920 = vunpack.c.l.b16 %v9849
        %v9921 = vunpack.c.l.b16 %v9850
        %v9922 = vunpack.c.l.b16 %v9851
        %v9923 = vunpack.c.l.b16 %v9852
        %v9924 = vunpack.c.l.b16 %v9853
        %v9925 = vunpack.c.l.b16 %v9854
        %v9926 = vunpack.c.l.b16 %v9855
        %v9927 = vunpack.c.l.b16 %v9856
        %v9928 = vunpack.c.l.b16 %v9857
        %v9929 = vunpack.c.l.b16 %v9858
        %v9930 = vunpack.c.l.b16 %v9859
        %v9931 = vunpack.c.l.b16 %v9860
        %v9932 = vunpack.c.l.b16 %v9861
        %v9933 = vunpack.c.l.b16 %v9862
        %v9934 = vunpack.c.l.b16 %v9863
        %v9935 = vunpack.c.l.b16 %v9864
        %v9936 = vunpack.c.l.b16 %v9865
        %v9937 = vunpack.c.l.b16 %v9866
        %v9938 = vunpack.c.l.b16 %v9867
        %v9939 = vunpack.c.l.b16 %v9868
        %v9940 = vunpack.c.l.b16 %v9869
        %v9941 = vunpack.c.l.b16 %v9870
        %v9942 = vunpack.c.l.b16 %v9871
        %v9943 = vunpack.c.l.b16 %v9872
        %v9944 = vunpack.c.l.b16 %v9873
        %v9945 = vunpack.c.l.b16 %v9874
        %v9946 = vunpack.c.l.b16 %v9875
        %v9947 = vunpack.c.l.b16 %v9876
        %v9948 = vunpack.c.l.b16 %v9877
        %v9949 = vunpack.c.l.b16 %v9878
        %v9950 = vpack.c.b16 %v9919, %v9918
        %v9951 = vpack.c.b16 %v9921, %v9920
        %v9952 = vpack.c.b16 %v9923, %v9922
        %v9953 = vpack.c.b16 %v9925, %v9924
        %v9954 = vpack.c.b16 %v9927, %v9926
        %v9955 = vpack.c.b16 %v9929, %v9928
        %v9956 = vpack.c.b16 %v9931, %v9930
        %v9957 = vpack.c.b16 %v9933, %v9932
        %v9958 = vpack.c.b16 %v9935, %v9934
        %v9959 = vpack.c.b16 %v9937, %v9936
        %v9960 = vpack.c.b16 %v9939, %v9938
        %v9961 = vpack.c.b16 %v9941, %v9940
        %v9962 = vpack.c.b16 %v9943, %v9942
        %v9963 = vpack.c.b16 %v9945, %v9944
        %v9964 = vpack.c.b16 %v9947, %v9946
        %v9965 = vpack.c.b16 %v9949, %v9948
        %9982 = vmatprep.subr.bf16.mxu0 0
        %9983 = vmatpush1.bf16.msra.mxu0 %v9950
        %9984 = vmatprep.subr.bf16.mxu0 0
        %9985 = vmatpush1.bf16.msra.mxu0 %v9951
        %9986 = vmatprep.subr.bf16.mxu0 0
        %9987 = vmatpush1.bf16.msra.mxu0 %v9952
        %9988 = vmatprep.subr.bf16.mxu0 0
        %9989 = vmatpush1.bf16.msra.mxu0 %v9953
        %9990 = vmatprep.subr.bf16.mxu0 0
        %9991 = vmatpush1.bf16.msra.mxu0 %v9954
        %9992 = vmatprep.subr.bf16.mxu0 0
        %9993 = vmatpush1.bf16.msra.mxu0 %v9955
        %9994 = vmatprep.subr.bf16.mxu0 0
        %9995 = vmatpush1.bf16.msra.mxu0 %v9956
        %9996 = vmatprep.subr.bf16.mxu0 0
        %9997 = vmatpush1.bf16.msra.mxu0 %v9957
        %9998 = vmatprep.subr.bf16.mxu0 0
        %9999 = vmatpush1.bf16.msra.mxu0 %v9958
        %10000 = vmatprep.subr.bf16.mxu0 0
        %10001 = vmatpush1.bf16.msra.mxu0 %v9959
        %10002 = vmatprep.subr.bf16.mxu0 0
        %10003 = vmatpush1.bf16.msra.mxu0 %v9960
        %10004 = vmatprep.subr.bf16.mxu0 0
        %10005 = vmatpush1.bf16.msra.mxu0 %v9961
        %10006 = vmatprep.subr.bf16.mxu0 0
        %10007 = vmatpush1.bf16.msra.mxu0 %v9962
        %10008 = vmatprep.subr.bf16.mxu0 0
        %10009 = vmatpush1.bf16.msra.mxu0 %v9963
        %10010 = vmatprep.subr.bf16.mxu0 0
        %10011 = vmatpush1.bf16.msra.mxu0 %v9964
        %10012 = vmatprep.subr.bf16.mxu0 0
        %10013 = vmatpush1.bf16.msra.mxu0 %v9965
        %10014 = vmatprep.mubr.bf16.mxu0 %v9846
        %10015 = vmatmul.mubr.bf16.gmra.mrb[0].mxu0 %v9845
        %v10016 = vpop.f32.mrb[0].mxu0
        %v10017 = vadd.f32 %v9884, %v10016
        %v10018 = vpop.f32.mrb[0].mxu0
        %v10019 = vpop.f32.mrb[0].mxu0
        %v10020 = vpop.f32.mrb[0].mxu0
        %10021 = vdwg.mxu0
        %10022 = vst [vmem:[%s380] sm:$0xff] %v10017
        %s10023 = sand.u32 %s269, 1
        %s10024 = scalar_lea.sflag [#allocation3], %s10023
        %s10025 = sand.u32 %s269, 1
        %s10026 = smul.addr %s10025, 8
        %s10027 = scalar_lea.vmem [#allocation2], %s10026
        // Predicated region
        $region65: #{light_nn_forward.1} parent=63 // pred_check
          %p10028 = pneg %p279
        $region66: #{light_nn_forward.1} parent=63 // pred_check_branch
          %10030 = sbr.rel (%p10028) target = $region68
        $region67: #{light_nn_forward.1} parent=63 // pred_region
          %s10032 = ssub.s32 128, 128
          %10033 = vsyncadd %s10024, %s10032
          %s10034 = smul.addr %s25, 128
          %s10035 = scalar_lea.hbm %s11, %s10034
          %s10037 = sshll.u32 %s10027, 4
          %s10038 = int_to_ptr.vmem [resolvable:$true] %s10037
          %10040 = dma.vmem_to_hbm [thread:$0]  %s10038, 128, %s10035, %s10024
        $region68: #{light_nn_forward.1} parent=63 // pred_fallthru
          _
      $region64: #{light_nn_forward.1} parent=5 // pred_fallthru
        _
      %p10041 = scmp.le.s32.totalorder 2, %s20
      // Predicated region
      $region69: #{light_nn_forward.1} parent=5 // pred_check
        %p10042 = pneg %p10041
      $region70: #{light_nn_forward.1} parent=5 // pred_check_branch
        %10044 = sbr.rel (%p10042) target = $region72
      $region71: #{light_nn_forward.1} parent=5 // pred_region
        %s10045 = ssub.s32 %s20, 2
        // Predicated region
        $region73: #{light_nn_forward.1} parent=71 // pred_check
          %p10046 = pneg %p285
        $region74: #{light_nn_forward.1} parent=71 // pred_check_branch
          %10048 = sbr.rel (%p10046) target = $region76
        $region75: #{light_nn_forward.1} parent=71 // pred_region
          %s10049 = sand.u32 %s270, 1
          %s10050 = scalar_lea.sflag [#allocation3], %s10049
          %s10051 = sand.u32 %s270, 1
          %s10052 = smul.addr %s10051, 8
          %s10053 = scalar_lea.vmem [#allocation2], %s10052
          %10054 = dma.done %s10050, 128
        $region76: #{light_nn_forward.1} parent=71 // pred_fallthru
          _
      $region72: #{light_nn_forward.1} parent=5 // pred_fallthru
        _
    $region6: #{light_nn_forward.1} parent=1 // loop_footer
      %s24 = sadd.s32 1, %s20
    $region7: #{light_nn_forward.1} parent=1 // loop_footer_branch
      %19 = sbr.rel target = $region3
    $region8: #{light_nn_forward.1} parent=1 // loop_exit
      _
    %10055 = vsyncpa [#allocation3], 1
    %s10056 = scalar_lea.sflag [#allocation3], 1
    %10057 = vsyncpa %s10056, 1

</llo_original>
